<compile_context>
chip_gen: v7x
topology: tpu7x:2x2x1
jax: 0.10.0
libtpu: 0.0.40
codegen_flags: <defaults>
</compile_context>

<pallas_src>
import functools

import jax
import jax.numpy as jnp
import numpy as np
from jax import lax
from jax.experimental import pallas as pl
from jax.experimental.pallas import tpu as pltpu

_BN_EPS = 1e-5


def _vmem():
    return pl.BlockSpec(memory_space=pltpu.MemorySpace.VMEM)


# ----------------------------------------------------------------------------
# In-kernel helpers (f32 math)
# ----------------------------------------------------------------------------
def _ptelu(x):
    return x * jnp.tanh(jnp.exp(x))  # alpha = beta = 1


def _bn_scale_bias(s, ss, count, gamma, beta):
    """Single-pass train-mode BatchNorm: returns (scale, bias) with y = x*scale+bias."""
    mean = s / count
    var = ss / count - mean * mean            # biased variance
    inv = lax.rsqrt(var + _BN_EPS)
    scale = gamma * inv
    bias = beta - mean * scale
    return scale, bias


# ----------------------------------------------------------------------------
# The single fused UIB kernel
# ----------------------------------------------------------------------------
def _uib_fused_kernel(*refs, cfg):
    (K1, K2, s1, s2, s_tot, N, Cin, E, Cout,
     H1, W1, Ho, Wo, Hy, Wyp) = cfg
    f32 = jnp.float32
    n_xph = s_tot * s_tot                 # input phases (composite stride)
    n_yph = s2 * s2                       # phases of the expand activation (middle stride)

    it = iter(refs)
    xph = [next(it)[...].astype(f32) for _ in range(n_xph)]      # (N, Q, Qw, Cin)
    msk = [next(it)[...] for _ in range(n_yph)]                   # (N*Hy*Wyp, 1) f32 in {0,1}
    if K1:
        w1 = next(it)[...].astype(f32)                            # (K1, K1, Cin)
        g1 = next(it)[...]; b1 = next(it)[...]                    # (1, Cin)
    we = next(it)[...]                                            # (Cin, E) bf16
    g2 = next(it)[...]; b2 = next(it)[...]                        # (1, E)
    if K2:
        w2 = next(it)[...].astype(f32)                            # (K2, K2, E)
        g3 = next(it)[...]; b3 = next(it)[...]                    # (1, E)
    wp = next(it)[...]                                            # (E, Cout) bf16
    g4 = next(it)[...]; b4 = next(it)[...]                        # (1, Cout)
    out_ref = next(it)

    M_ph = N * Hy * Wyp                   # rows of one phase slab (2D view)
    M1 = N * H1 * W1                      # real pixels feeding BN1 / BN2
    M2 = N * Ho * Wo                      # rows of the block output

    # ---- stage 1: start depthwise conv, produced directly in middle-stride phase
    #      order; every tap is a contiguous static slice of an input phase. ----
    xshift = {}

    def x_slab(src, qw0):                 # hoist: one sublane shift per distinct col offset
        key = (src, qw0)
        if key not in xshift:
            xshift[key] = xph[src][:, :, qw0:qw0 + Wyp, :]
        return xshift[key]

    d1 = []                               # per y-phase, (M_ph, Cin) f32
    if K1:
        sum1 = jnp.zeros((1, Cin), f32)
        ssq1 = jnp.zeros((1, Cin), f32)
    for a in range(s2):
        for b in range(s2):
            if K1:
                acc = jnp.zeros((N, Hy, Wyp, Cin), f32)
                for k1w in range(K1):
                    cw = s1 * b + k1w
                    for k1h in range(K1):
                        ch = s1 * a + k1h
                        src = (ch % s_tot) * s_tot + (cw % s_tot)
                        slab = x_slab(src, cw // s_tot)
                        acc = acc + slab[:, ch // s_tot:ch // s_tot + Hy, :, :] * w1[k1h, k1w, :]
            else:
                acc = xph[a * s_tot + b][:, :Hy, :Wyp, :]
            v = acc.reshape(M_ph, Cin)     # Wyp % 8 == 0 -> layout-trivial reshape
            d1.append(v)
            if K1:
                vm = v * msk[a * s2 + b]
                sum1 = sum1 + jnp.sum(vm, axis=0, keepdims=True)
                ssq1 = ssq1 + jnp.sum(vm * vm, axis=0, keepdims=True)
    if K1:
        sc1, bi1 = _bn_scale_bias(sum1, ssq1, M1, g1, b1)

    # ---- stage 2: expand 1x1 (MXU, bf16 operands / f32 acc) + BN2 stats ----
    z = []
    sum2 = jnp.zeros((1, E), f32)
    ssq2 = jnp.zeros((1, E), f32)
    for i in range(n_yph):
        v = d1[i]
        if K1:
            v = v * sc1 + bi1                                     # fused BN1 apply
        zz = jnp.dot(v.astype(jnp.bfloat16), we, preferred_element_type=f32)
        z.append(zz)
        zm = zz * msk[i]
        sum2 = sum2 + jnp.sum(zm, axis=0, keepdims=True)
        ssq2 = ssq2 + jnp.sum(zm * zm, axis=0, keepdims=True)
    sc2, bi2 = _bn_scale_bias(sum2, ssq2, M1, g2, b2)

    # ---- stage 3: BN2 apply, zero the conv-padding positions, PTeLU ----
    y4 = []
    for i in range(n_yph):
        yy = _ptelu((z[i] * sc2 + bi2) * msk[i])                  # PTeLU(0) == 0
        y4.append(yy.reshape(N, Hy, Wyp, E))

    # ---- stage 4: middle depthwise conv (strided outputs only) -> BN3 -> PTeLU ----
    if K2:
        yshift = {}

        def y_slab(i_ph, qw):
            key = (i_ph, qw)
            if key not in yshift:
                yshift[key] = y4[i_ph][:, :, qw:qw + Wo, :]
            return yshift[key]

        acc2 = jnp.zeros((N, Ho, Wo, E), f32)
        for k2w in range(K2):
            for k2h in range(K2):
                slab = y_slab((k2h % s2) * s2 + (k2w % s2), k2w // s2)
                acc2 = acc2 + slab[:, k2h // s2:k2h // s2 + Ho, :, :] * w2[k2h, k2w, :]
        u = acc2.reshape(M2, E)
        sum3 = jnp.sum(u, axis=0, keepdims=True)
        ssq3 = jnp.sum(u * u, axis=0, keepdims=True)
        sc3, bi3 = _bn_scale_bias(sum3, ssq3, M2, g3, b3)
        u = _ptelu(u * sc3 + bi3)
    else:
        u = y4[0][:, :, :Wo, :].reshape(M2, E)

    # ---- stage 5: projection 1x1 (MXU) -> BN4 ----
    p = jnp.dot(u.astype(jnp.bfloat16), wp, preferred_element_type=f32)
    sum4 = jnp.sum(p, axis=0, keepdims=True)
    ssq4 = jnp.sum(p * p, axis=0, keepdims=True)
    sc4, bi4 = _bn_scale_bias(sum4, ssq4, M2, g4, b4)
    out_ref[...] = (p * sc4 + bi4).astype(out_ref.dtype)


# ----------------------------------------------------------------------------
# Glue: geometry, pad + composite-stride phase split, masks, pallas_call wrapper
# ----------------------------------------------------------------------------
def _uib_geometry(H, W, K1, K2, s1, s2):
    p1 = (K1 - 1) // 2 if K1 else 0
    p2 = (K2 - 1) // 2 if K2 else 0
    H1 = (H - 1) // s1 + 1 if K1 else H          # start-dw output spatial
    W1 = (W - 1) // s1 + 1 if K1 else W
    Ho = (H1 - 1) // s2 + 1 if K2 else H1        # block output spatial
    Wo = (W1 - 1) // s2 + 1 if K2 else W1
    q2 = (K2 - 1) // s2 if K2 else 0             # extra rows/cols for middle-dw taps
    Hy = Ho + q2
    Wyp = -(-(Wo + q2) // 8) * 8                 # pad second-minor dim to a multiple of 8
    s_tot = s1 * s2
    qoff = (s1 * (s2 - 1) + (K1 - 1 if K1 else 0)) // s_tot
    Q, Qw = Hy + qoff, Wyp + qoff
    P = s1 * p2 + p1                              # combined "same" pad on the raw input
    return dict(p1=p1, p2=p2, H1=H1, W1=W1, Ho=Ho, Wo=Wo, Hy=Hy, Wyp=Wyp,
                s_tot=s_tot, Q=Q, Qw=Qw, P=P)


def uib_forward(x_nchw, params, *, start_dw_kernel_size, middle_dw_kernel_size,
                middle_dw_downsample, stride):
    K1, K2 = start_dw_kernel_size, middle_dw_kernel_size
    s1 = (1 if middle_dw_downsample else stride) if K1 else 1
    s2 = (stride if middle_dw_downsample else 1) if K2 else 1
    N, Cin, H, W = x_nchw.shape
    E = params["w_expand"].shape[1]
    Cout = params["w_proj"].shape[1]
    g = _uib_geometry(H, W, K1, K2, s1, s2)
    H1, W1, Ho, Wo = g["H1"], g["W1"], g["Ho"], g["Wo"]
    Hy, Wyp, p2 = g["Hy"], g["Wyp"], g["p2"]
    s_tot, Q, Qw, P = g["s_tot"], g["Q"], g["Qw"], g["P"]

    # TODO(synk): keep the surrounding network in NHWC to drop these boundary transposes.
    x = jnp.transpose(x_nchw, (0, 2, 3, 1))      # NCHW -> NHWC

    # Pad once for BOTH convs and phase-split by the composite stride so every
    # in-kernel depthwise tap is a contiguous static slice (input read from HBM once).
    pad_b, pad_r = s_tot * Q - H - P, s_tot * Qw - W - P
    assert pad_b >= 0 and pad_r >= 0
    xpad = jnp.pad(x, ((0, 0), (P, pad_b), (P, pad_r), (0, 0)))
    xph = [xpad[:, a::s_tot, b::s_tot, :] for a in range(s_tot) for b in range(s_tot)]

    # 0/1 masks marking which phase-slab positions are real (non-padding) pixels of the
    # expand activation; built host-side with numpy and passed as tiny dense inputs.
    masks = []
    for a in range(s2):
        for b in range(s2):
            ru = s2 * np.arange(Hy) + a - p2
            rv = s2 * np.arange(Wyp) + b - p2
            m = (((ru >= 0) & (ru < H1))[:, None] & ((rv >= 0) & (rv < W1))[None, :])
            m = np.broadcast_to(m[None], (N, Hy, Wyp)).reshape(N * Hy * Wyp, 1)
            masks.append(jnp.asarray(m, dtype=jnp.float32))

    def v2(t):
        return t.reshape(1, -1)

    args = list(xph) + masks
    if K1:
        args += [params["w_start"], v2(params["bn_start"][0]), v2(params["bn_start"][1])]
    args += [params["w_expand"].astype(jnp.bfloat16),        # pre-cast MXU operands
             v2(params["bn_expand"][0]), v2(params["bn_expand"][1])]
    if K2:
        args += [params["w_middle"], v2(params["bn_middle"][0]), v2(params["bn_middle"][1])]
    args += [params["w_proj"].astype(jnp.bfloat16),
             v2(params["bn_proj"][0]), v2(params["bn_proj"][1])]

    cfg = (K1, K2, s1, s2, s_tot, N, Cin, E, Cout, H1, W1, Ho, Wo, Hy, Wyp)
    out2d = pl.pallas_call(
        functools.partial(_uib_fused_kernel, cfg=cfg),
        out_shape=jax.ShapeDtypeStruct((N * Ho * Wo, Cout), x.dtype),
        in_specs=[_vmem()] * len(args),
        out_specs=_vmem(),
        compiler_params=pltpu.CompilerParams(vmem_limit_bytes=32 * 1024 * 1024),
    )(*args)
    out = out2d.reshape(N, Ho, Wo, Cout)
    return jnp.transpose(out, (0, 3, 1, 2))      # NHWC -> NCHW


# ----------------------------------------------------------------------------
# Module: parameter init
# ----------------------------------------------------------------------------
def make_divisible(value, divisor, min_value=None, round_down_protect=True):
    if min_value is None:
        min_value = divisor
    new_value = max(min_value, int(value + divisor / 2) // divisor * divisor)
    if round_down_protect and new_value < 0.9 * value:
        new_value += divisor
    return int(new_value)


def init_uib_params(key, in_channels, out_channels, start_k, middle_k, expand_ratio):
    expand = make_divisible(in_channels * expand_ratio, 8)
    keys = jax.random.split(key, 8)

    def bn(k, c):
        kg, kb = jax.random.split(k)
        gamma = 1.0 + 0.1 * jax.random.normal(kg, (c,), jnp.float32)
        beta = 0.1 * jax.random.normal(kb, (c,), jnp.float32)
        return gamma, beta

    params = {}
    if start_k:
        params["w_start"] = 0.2 * jax.random.normal(keys[0], (start_k, start_k, in_channels), jnp.float32)
        params["bn_start"] = bn(keys[1], in_channels)
    params["w_expand"] = jax.random.normal(keys[2], (in_channels, expand), jnp.float32) / np.sqrt(in_channels)
    params["bn_expand"] = bn(keys[3], expand)
    if middle_k:
        params["w_middle"] = 0.2 * jax.random.normal(keys[4], (middle_k, middle_k, expand), jnp.float32)
        params["bn_middle"] = bn(keys[5], expand)
    params["w_proj"] = jax.random.normal(keys[6], (expand, out_channels), jnp.float32) / np.sqrt(expand)
    params["bn_proj"] = bn(keys[7], out_channels)
    return params, expand


# ----------------------------------------------------------------------------
# Pure-JAX reference (mirrors the bf16-operand / f32-accumulate MXU 1x1 convs)
# ----------------------------------------------------------------------------
def _ref_bn(x, gamma, beta):
    mean = jnp.mean(x, axis=(0, 1, 2), keepdims=True)
    var = jnp.mean((x - mean) ** 2, axis=(0, 1, 2), keepdims=True)
    return (x - mean) * jax.lax.rsqrt(var + _BN_EPS) * gamma + beta


def _ref_ptelu(x):
    return x * jnp.tanh(jnp.exp(x))


def _ref_dw(x, w, stride):
    K = w.shape[0]
    C = x.shape[-1]
    p = (K - 1) // 2
    rhs = w[:, :, None, :]  # HWIO with I = 1
    return lax.conv_general_dilated(
        x, rhs, (stride, stride), ((p, p), (p, p)),
        dimension_numbers=("NHWC", "HWIO", "NHWC"), feature_group_count=C,
        precision=lax.Precision.HIGHEST)


def _ref_pw(x, w):
    xb = x.astype(jnp.bfloat16).astype(jnp.float32)
    wb = w.astype(jnp.bfloat16).astype(jnp.float32)
    return jnp.einsum("nhwc,cd->nhwd", xb, wb, precision=lax.Precision.HIGHEST)


def uib_forward_ref(x_nchw, params, *, start_dw_kernel_size, middle_dw_kernel_size,
                    middle_dw_downsample, stride):
    x = jnp.transpose(x_nchw, (0, 2, 3, 1))
    if start_dw_kernel_size:
        s = stride if not middle_dw_downsample else 1
        x = _ref_bn(_ref_dw(x, params["w_start"], s), *params["bn_start"])
    x = _ref_ptelu(_ref_bn(_ref_pw(x, params["w_expand"]), *params["bn_expand"]))
    if middle_dw_kernel_size:
        s = stride if middle_dw_downsample else 1
        x = _ref_ptelu(_ref_bn(_ref_dw(x, params["w_middle"], s), *params["bn_middle"]))
    x = _ref_bn(_ref_pw(x, params["w_proj"]), *params["bn_proj"])
    return jnp.transpose(x, (0, 3, 1, 2))


# ----------------------------------------------------------------------------
if __name__ == "__main__":
    # Block config (typical MobileNetV4 UIB block)
    in_channels = 8
    out_channels = 16
    start_dw_kernel_size = 3
    middle_dw_kernel_size = 3
    middle_dw_downsample = True
    stride = 2
    expand_ratio = 4.0

    key = jax.random.PRNGKey(0)
    kx, kp = jax.random.split(key)
    x = jax.random.normal(kx, (2, in_channels, 16, 16), jnp.float32)  # NCHW like PyTorch

    params, expand = init_uib_params(kp, in_channels, out_channels,
                                     start_dw_kernel_size, middle_dw_kernel_size,
                                     expand_ratio)

    cfg = dict(start_dw_kernel_size=start_dw_kernel_size,
               middle_dw_kernel_size=middle_dw_kernel_size,
               middle_dw_downsample=middle_dw_downsample,
               stride=stride)

    fwd = jax.jit(functools.partial(uib_forward, **cfg))
    out = jax.block_until_ready(fwd(x, params))

    ref = jax.block_until_ready(uib_forward_ref(x, params, **cfg))

    assert out.shape == (2, out_channels, 8, 8), out.shape
    assert np.all(np.isfinite(np.asarray(out)))
    np.testing.assert_allclose(np.asarray(out), np.asarray(ref), rtol=2e-3, atol=2e-3)
    print("KERNEL_OK")
</pallas_src>

<mosaic_0001>
module attributes {stable_mosaic.version = 11 : i64} {
  func.func @_uib_fused_kernel(%arg0: memref<2x10x17x8xf32, #tpu.memory_space<vmem>>, %arg1: memref<2x10x17x8xf32, #tpu.memory_space<vmem>>, %arg2: memref<2x10x17x8xf32, #tpu.memory_space<vmem>>, %arg3: memref<2x10x17x8xf32, #tpu.memory_space<vmem>>, %arg4: memref<288x1xf32, #tpu.memory_space<vmem>>, %arg5: memref<288x1xf32, #tpu.memory_space<vmem>>, %arg6: memref<288x1xf32, #tpu.memory_space<vmem>>, %arg7: memref<288x1xf32, #tpu.memory_space<vmem>>, %arg8: memref<3x3x8xf32, #tpu.memory_space<vmem>>, %arg9: memref<1x8xf32, #tpu.memory_space<vmem>>, %arg10: memref<1x8xf32, #tpu.memory_space<vmem>>, %arg11: memref<8x32xbf16, #tpu.memory_space<vmem>>, %arg12: memref<1x32xf32, #tpu.memory_space<vmem>>, %arg13: memref<1x32xf32, #tpu.memory_space<vmem>>, %arg14: memref<3x3x32xf32, #tpu.memory_space<vmem>>, %arg15: memref<1x32xf32, #tpu.memory_space<vmem>>, %arg16: memref<1x32xf32, #tpu.memory_space<vmem>>, %arg17: memref<32x16xbf16, #tpu.memory_space<vmem>>, %arg18: memref<1x16xf32, #tpu.memory_space<vmem>>, %arg19: memref<1x16xf32, #tpu.memory_space<vmem>>, %arg20: memref<128x16xf32, #tpu.memory_space<vmem>>) attributes {dimension_semantics = [], scalar_prefetch = 0 : i64, scratch_operands = 0 : i64, tpu.core_type = #tpu.core_type<tc>} {
    %c0 = arith.constant 0 : index
    %c0_0 = arith.constant 0 : index
    %c0_1 = arith.constant 0 : index
    %c0_2 = arith.constant 0 : index
    %0 = vector.load %arg0[%c0, %c0_0, %c0_1, %c0_2] : memref<2x10x17x8xf32, #tpu.memory_space<vmem>>, vector<2x10x17x8xf32>
    %c0_3 = arith.constant 0 : index
    %c0_4 = arith.constant 0 : index
    %c0_5 = arith.constant 0 : index
    %c0_6 = arith.constant 0 : index
    %1 = vector.load %arg1[%c0_3, %c0_4, %c0_5, %c0_6] : memref<2x10x17x8xf32, #tpu.memory_space<vmem>>, vector<2x10x17x8xf32>
    %c0_7 = arith.constant 0 : index
    %c0_8 = arith.constant 0 : index
    %c0_9 = arith.constant 0 : index
    %c0_10 = arith.constant 0 : index
    %2 = vector.load %arg2[%c0_7, %c0_8, %c0_9, %c0_10] : memref<2x10x17x8xf32, #tpu.memory_space<vmem>>, vector<2x10x17x8xf32>
    %c0_11 = arith.constant 0 : index
    %c0_12 = arith.constant 0 : index
    %c0_13 = arith.constant 0 : index
    %c0_14 = arith.constant 0 : index
    %3 = vector.load %arg3[%c0_11, %c0_12, %c0_13, %c0_14] : memref<2x10x17x8xf32, #tpu.memory_space<vmem>>, vector<2x10x17x8xf32>
    %c0_15 = arith.constant 0 : index
    %c0_16 = arith.constant 0 : index
    %4 = vector.load %arg4[%c0_15, %c0_16] : memref<288x1xf32, #tpu.memory_space<vmem>>, vector<288x1xf32>
    %c0_17 = arith.constant 0 : index
    %c0_18 = arith.constant 0 : index
    %5 = vector.load %arg5[%c0_17, %c0_18] : memref<288x1xf32, #tpu.memory_space<vmem>>, vector<288x1xf32>
    %c0_19 = arith.constant 0 : index
    %c0_20 = arith.constant 0 : index
    %6 = vector.load %arg6[%c0_19, %c0_20] : memref<288x1xf32, #tpu.memory_space<vmem>>, vector<288x1xf32>
    %c0_21 = arith.constant 0 : index
    %c0_22 = arith.constant 0 : index
    %7 = vector.load %arg7[%c0_21, %c0_22] : memref<288x1xf32, #tpu.memory_space<vmem>>, vector<288x1xf32>
    %c0_23 = arith.constant 0 : index
    %c0_24 = arith.constant 0 : index
    %c0_25 = arith.constant 0 : index
    %8 = vector.load %arg8[%c0_23, %c0_24, %c0_25] : memref<3x3x8xf32, #tpu.memory_space<vmem>>, vector<3x3x8xf32>
    %c0_26 = arith.constant 0 : index
    %c0_27 = arith.constant 0 : index
    %9 = vector.load %arg9[%c0_26, %c0_27] : memref<1x8xf32, #tpu.memory_space<vmem>>, vector<1x8xf32>
    %c0_28 = arith.constant 0 : index
    %c0_29 = arith.constant 0 : index
    %10 = vector.load %arg10[%c0_28, %c0_29] : memref<1x8xf32, #tpu.memory_space<vmem>>, vector<1x8xf32>
    %c0_30 = arith.constant 0 : index
    %c0_31 = arith.constant 0 : index
    %11 = vector.load %arg11[%c0_30, %c0_31] : memref<8x32xbf16, #tpu.memory_space<vmem>>, vector<8x32xbf16>
    %c0_32 = arith.constant 0 : index
    %c0_33 = arith.constant 0 : index
    %12 = vector.load %arg12[%c0_32, %c0_33] : memref<1x32xf32, #tpu.memory_space<vmem>>, vector<1x32xf32>
    %c0_34 = arith.constant 0 : index
    %c0_35 = arith.constant 0 : index
    %13 = vector.load %arg13[%c0_34, %c0_35] : memref<1x32xf32, #tpu.memory_space<vmem>>, vector<1x32xf32>
    %c0_36 = arith.constant 0 : index
    %c0_37 = arith.constant 0 : index
    %c0_38 = arith.constant 0 : index
    %14 = vector.load %arg14[%c0_36, %c0_37, %c0_38] : memref<3x3x32xf32, #tpu.memory_space<vmem>>, vector<3x3x32xf32>
    %c0_39 = arith.constant 0 : index
    %c0_40 = arith.constant 0 : index
    %15 = vector.load %arg15[%c0_39, %c0_40] : memref<1x32xf32, #tpu.memory_space<vmem>>, vector<1x32xf32>
    %c0_41 = arith.constant 0 : index
    %c0_42 = arith.constant 0 : index
    %16 = vector.load %arg16[%c0_41, %c0_42] : memref<1x32xf32, #tpu.memory_space<vmem>>, vector<1x32xf32>
    %c0_43 = arith.constant 0 : index
    %c0_44 = arith.constant 0 : index
    %17 = vector.load %arg17[%c0_43, %c0_44] : memref<32x16xbf16, #tpu.memory_space<vmem>>, vector<32x16xbf16>
    %c0_45 = arith.constant 0 : index
    %c0_46 = arith.constant 0 : index
    %18 = vector.load %arg18[%c0_45, %c0_46] : memref<1x16xf32, #tpu.memory_space<vmem>>, vector<1x16xf32>
    %c0_47 = arith.constant 0 : index
    %c0_48 = arith.constant 0 : index
    %19 = vector.load %arg19[%c0_47, %c0_48] : memref<1x16xf32, #tpu.memory_space<vmem>>, vector<1x16xf32>
    %cst = arith.constant 0.000000e+00 : f32
    %20 = vector.broadcast %cst : f32 to vector<1x8xf32>
    %cst_49 = arith.constant 0.000000e+00 : f32
    %21 = vector.broadcast %cst_49 : f32 to vector<1x8xf32>
    %cst_50 = arith.constant 0.000000e+00 : f32
    %22 = vector.broadcast %cst_50 : f32 to vector<2x9x16x8xf32>
    %23 = vector.extract_strided_slice %0 {offsets = [0, 0, 0, 0], sizes = [2, 10, 16, 8], strides = [1, 1, 1, 1]} : vector<2x10x17x8xf32> to vector<2x10x16x8xf32>
    %24 = vector.extract_strided_slice %23 {offsets = [0, 0, 0, 0], sizes = [2, 9, 16, 8], strides = [1, 1, 1, 1]} : vector<2x10x16x8xf32> to vector<2x9x16x8xf32>
    %25 = vector.extract_strided_slice %8 {offsets = [0, 0, 0], sizes = [1, 1, 8], strides = [1, 1, 1]} : vector<3x3x8xf32> to vector<1x1x8xf32>
    %26 = vector.shape_cast %25 : vector<1x1x8xf32> to vector<8xf32>
    %27 = vector.shape_cast %26 : vector<8xf32> to vector<1x1x1x8xf32>
    %28 = vector.broadcast %27 : vector<1x1x1x8xf32> to vector<2x9x16x8xf32>
    %29 = arith.mulf %24, %28 : vector<2x9x16x8xf32>
    %30 = arith.addf %22, %29 : vector<2x9x16x8xf32>
    %31 = vector.extract_strided_slice %2 {offsets = [0, 0, 0, 0], sizes = [2, 10, 16, 8], strides = [1, 1, 1, 1]} : vector<2x10x17x8xf32> to vector<2x10x16x8xf32>
    %32 = vector.extract_strided_slice %31 {offsets = [0, 0, 0, 0], sizes = [2, 9, 16, 8], strides = [1, 1, 1, 1]} : vector<2x10x16x8xf32> to vector<2x9x16x8xf32>
    %33 = vector.extract_strided_slice %8 {offsets = [1, 0, 0], sizes = [1, 1, 8], strides = [1, 1, 1]} : vector<3x3x8xf32> to vector<1x1x8xf32>
    %34 = vector.shape_cast %33 : vector<1x1x8xf32> to vector<8xf32>
    %35 = vector.shape_cast %34 : vector<8xf32> to vector<1x1x1x8xf32>
    %36 = vector.broadcast %35 : vector<1x1x1x8xf32> to vector<2x9x16x8xf32>
    %37 = arith.mulf %32, %36 : vector<2x9x16x8xf32>
    %38 = arith.addf %30, %37 : vector<2x9x16x8xf32>
    %39 = vector.extract_strided_slice %23 {offsets = [0, 1, 0, 0], sizes = [2, 9, 16, 8], strides = [1, 1, 1, 1]} : vector<2x10x16x8xf32> to vector<2x9x16x8xf32>
    %40 = vector.extract_strided_slice %8 {offsets = [2, 0, 0], sizes = [1, 1, 8], strides = [1, 1, 1]} : vector<3x3x8xf32> to vector<1x1x8xf32>
    %41 = vector.shape_cast %40 : vector<1x1x8xf32> to vector<8xf32>
    %42 = vector.shape_cast %41 : vector<8xf32> to vector<1x1x1x8xf32>
    %43 = vector.broadcast %42 : vector<1x1x1x8xf32> to vector<2x9x16x8xf32>
    %44 = arith.mulf %39, %43 : vector<2x9x16x8xf32>
    %45 = arith.addf %38, %44 : vector<2x9x16x8xf32>
    %46 = vector.extract_strided_slice %1 {offsets = [0, 0, 0, 0], sizes = [2, 10, 16, 8], strides = [1, 1, 1, 1]} : vector<2x10x17x8xf32> to vector<2x10x16x8xf32>
    %47 = vector.extract_strided_slice %46 {offsets = [0, 0, 0, 0], sizes = [2, 9, 16, 8], strides = [1, 1, 1, 1]} : vector<2x10x16x8xf32> to vector<2x9x16x8xf32>
    %48 = vector.extract_strided_slice %8 {offsets = [0, 1, 0], sizes = [1, 1, 8], strides = [1, 1, 1]} : vector<3x3x8xf32> to vector<1x1x8xf32>
    %49 = vector.shape_cast %48 : vector<1x1x8xf32> to vector<8xf32>
    %50 = vector.shape_cast %49 : vector<8xf32> to vector<1x1x1x8xf32>
    %51 = vector.broadcast %50 : vector<1x1x1x8xf32> to vector<2x9x16x8xf32>
    %52 = arith.mulf %47, %51 : vector<2x9x16x8xf32>
    %53 = arith.addf %45, %52 : vector<2x9x16x8xf32>
    %54 = vector.extract_strided_slice %3 {offsets = [0, 0, 0, 0], sizes = [2, 10, 16, 8], strides = [1, 1, 1, 1]} : vector<2x10x17x8xf32> to vector<2x10x16x8xf32>
    %55 = vector.extract_strided_slice %54 {offsets = [0, 0, 0, 0], sizes = [2, 9, 16, 8], strides = [1, 1, 1, 1]} : vector<2x10x16x8xf32> to vector<2x9x16x8xf32>
    %56 = vector.extract_strided_slice %8 {offsets = [1, 1, 0], sizes = [1, 1, 8], strides = [1, 1, 1]} : vector<3x3x8xf32> to vector<1x1x8xf32>
    %57 = vector.shape_cast %56 : vector<1x1x8xf32> to vector<8xf32>
    %58 = vector.shape_cast %57 : vector<8xf32> to vector<1x1x1x8xf32>
    %59 = vector.broadcast %58 : vector<1x1x1x8xf32> to vector<2x9x16x8xf32>
    %60 = arith.mulf %55, %59 : vector<2x9x16x8xf32>
    %61 = arith.addf %53, %60 : vector<2x9x16x8xf32>
    %62 = vector.extract_strided_slice %46 {offsets = [0, 1, 0, 0], sizes = [2, 9, 16, 8], strides = [1, 1, 1, 1]} : vector<2x10x16x8xf32> to vector<2x9x16x8xf32>
    %63 = vector.extract_strided_slice %8 {offsets = [2, 1, 0], sizes = [1, 1, 8], strides = [1, 1, 1]} : vector<3x3x8xf32> to vector<1x1x8xf32>
    %64 = vector.shape_cast %63 : vector<1x1x8xf32> to vector<8xf32>
    %65 = vector.shape_cast %64 : vector<8xf32> to vector<1x1x1x8xf32>
    %66 = vector.broadcast %65 : vector<1x1x1x8xf32> to vector<2x9x16x8xf32>
    %67 = arith.mulf %62, %66 : vector<2x9x16x8xf32>
    %68 = arith.addf %61, %67 : vector<2x9x16x8xf32>
    %69 = vector.extract_strided_slice %0 {offsets = [0, 0, 1, 0], sizes = [2, 10, 16, 8], strides = [1, 1, 1, 1]} : vector<2x10x17x8xf32> to vector<2x10x16x8xf32>
    %70 = vector.extract_strided_slice %69 {offsets = [0, 0, 0, 0], sizes = [2, 9, 16, 8], strides = [1, 1, 1, 1]} : vector<2x10x16x8xf32> to vector<2x9x16x8xf32>
    %71 = vector.extract_strided_slice %8 {offsets = [0, 2, 0], sizes = [1, 1, 8], strides = [1, 1, 1]} : vector<3x3x8xf32> to vector<1x1x8xf32>
    %72 = vector.shape_cast %71 : vector<1x1x8xf32> to vector<8xf32>
    %73 = vector.shape_cast %72 : vector<8xf32> to vector<1x1x1x8xf32>
    %74 = vector.broadcast %73 : vector<1x1x1x8xf32> to vector<2x9x16x8xf32>
    %75 = arith.mulf %70, %74 : vector<2x9x16x8xf32>
    %76 = arith.addf %68, %75 : vector<2x9x16x8xf32>
    %77 = vector.extract_strided_slice %2 {offsets = [0, 0, 1, 0], sizes = [2, 10, 16, 8], strides = [1, 1, 1, 1]} : vector<2x10x17x8xf32> to vector<2x10x16x8xf32>
    %78 = vector.extract_strided_slice %77 {offsets = [0, 0, 0, 0], sizes = [2, 9, 16, 8], strides = [1, 1, 1, 1]} : vector<2x10x16x8xf32> to vector<2x9x16x8xf32>
    %79 = vector.extract_strided_slice %8 {offsets = [1, 2, 0], sizes = [1, 1, 8], strides = [1, 1, 1]} : vector<3x3x8xf32> to vector<1x1x8xf32>
    %80 = vector.shape_cast %79 : vector<1x1x8xf32> to vector<8xf32>
    %81 = vector.shape_cast %80 : vector<8xf32> to vector<1x1x1x8xf32>
    %82 = vector.broadcast %81 : vector<1x1x1x8xf32> to vector<2x9x16x8xf32>
    %83 = arith.mulf %78, %82 : vector<2x9x16x8xf32>
    %84 = arith.addf %76, %83 : vector<2x9x16x8xf32>
    %85 = vector.extract_strided_slice %69 {offsets = [0, 1, 0, 0], sizes = [2, 9, 16, 8], strides = [1, 1, 1, 1]} : vector<2x10x16x8xf32> to vector<2x9x16x8xf32>
    %86 = vector.extract_strided_slice %8 {offsets = [2, 2, 0], sizes = [1, 1, 8], strides = [1, 1, 1]} : vector<3x3x8xf32> to vector<1x1x8xf32>
    %87 = vector.shape_cast %86 : vector<1x1x8xf32> to vector<8xf32>
    %88 = vector.shape_cast %87 : vector<8xf32> to vector<1x1x1x8xf32>
    %89 = vector.broadcast %88 : vector<1x1x1x8xf32> to vector<2x9x16x8xf32>
    %90 = arith.mulf %85, %89 : vector<2x9x16x8xf32>
    %91 = arith.addf %84, %90 : vector<2x9x16x8xf32>
    %92 = vector.shape_cast %91 : vector<2x9x16x8xf32> to vector<288x8xf32>
    %93 = vector.broadcast %4 : vector<288x1xf32> to vector<288x8xf32>
    %94 = arith.mulf %92, %93 : vector<288x8xf32>
    %cst_51 = arith.constant dense<0.000000e+00> : vector<8xf32>
    %95 = vector.multi_reduction <add>, %94, %cst_51 [0] : vector<288x8xf32> to vector<8xf32>
    %96 = vector.shape_cast %95 : vector<8xf32> to vector<1x8xf32>
    %97 = arith.addf %20, %96 : vector<1x8xf32>
    %98 = arith.mulf %94, %94 : vector<288x8xf32>
    %cst_52 = arith.constant dense<0.000000e+00> : vector<8xf32>
    %99 = vector.multi_reduction <add>, %98, %cst_52 [0] : vector<288x8xf32> to vector<8xf32>
    %100 = vector.shape_cast %99 : vector<8xf32> to vector<1x8xf32>
    %101 = arith.addf %21, %100 : vector<1x8xf32>
    %cst_53 = arith.constant 0.000000e+00 : f32
    %102 = vector.broadcast %cst_53 : f32 to vector<2x9x16x8xf32>
    %103 = vector.extract_strided_slice %46 {offsets = [0, 0, 0, 0], sizes = [2, 9, 16, 8], strides = [1, 1, 1, 1]} : vector<2x10x16x8xf32> to vector<2x9x16x8xf32>
    %104 = vector.extract_strided_slice %8 {offsets = [0, 0, 0], sizes = [1, 1, 8], strides = [1, 1, 1]} : vector<3x3x8xf32> to vector<1x1x8xf32>
    %105 = vector.shape_cast %104 : vector<1x1x8xf32> to vector<8xf32>
    %106 = vector.shape_cast %105 : vector<8xf32> to vector<1x1x1x8xf32>
    %107 = vector.broadcast %106 : vector<1x1x1x8xf32> to vector<2x9x16x8xf32>
    %108 = arith.mulf %103, %107 : vector<2x9x16x8xf32>
    %109 = arith.addf %102, %108 : vector<2x9x16x8xf32>
    %110 = vector.extract_strided_slice %54 {offsets = [0, 0, 0, 0], sizes = [2, 9, 16, 8], strides = [1, 1, 1, 1]} : vector<2x10x16x8xf32> to vector<2x9x16x8xf32>
    %111 = vector.extract_strided_slice %8 {offsets = [1, 0, 0], sizes = [1, 1, 8], strides = [1, 1, 1]} : vector<3x3x8xf32> to vector<1x1x8xf32>
    %112 = vector.shape_cast %111 : vector<1x1x8xf32> to vector<8xf32>
    %113 = vector.shape_cast %112 : vector<8xf32> to vector<1x1x1x8xf32>
    %114 = vector.broadcast %113 : vector<1x1x1x8xf32> to vector<2x9x16x8xf32>
    %115 = arith.mulf %110, %114 : vector<2x9x16x8xf32>
    %116 = arith.addf %109, %115 : vector<2x9x16x8xf32>
    %117 = vector.extract_strided_slice %46 {offsets = [0, 1, 0, 0], sizes = [2, 9, 16, 8], strides = [1, 1, 1, 1]} : vector<2x10x16x8xf32> to vector<2x9x16x8xf32>
    %118 = vector.extract_strided_slice %8 {offsets = [2, 0, 0], sizes = [1, 1, 8], strides = [1, 1, 1]} : vector<3x3x8xf32> to vector<1x1x8xf32>
    %119 = vector.shape_cast %118 : vector<1x1x8xf32> to vector<8xf32>
    %120 = vector.shape_cast %119 : vector<8xf32> to vector<1x1x1x8xf32>
    %121 = vector.broadcast %120 : vector<1x1x1x8xf32> to vector<2x9x16x8xf32>
    %122 = arith.mulf %117, %121 : vector<2x9x16x8xf32>
    %123 = arith.addf %116, %122 : vector<2x9x16x8xf32>
    %124 = vector.extract_strided_slice %69 {offsets = [0, 0, 0, 0], sizes = [2, 9, 16, 8], strides = [1, 1, 1, 1]} : vector<2x10x16x8xf32> to vector<2x9x16x8xf32>
    %125 = vector.extract_strided_slice %8 {offsets = [0, 1, 0], sizes = [1, 1, 8], strides = [1, 1, 1]} : vector<3x3x8xf32> to vector<1x1x8xf32>
    %126 = vector.shape_cast %125 : vector<1x1x8xf32> to vector<8xf32>
    %127 = vector.shape_cast %126 : vector<8xf32> to vector<1x1x1x8xf32>
    %128 = vector.broadcast %127 : vector<1x1x1x8xf32> to vector<2x9x16x8xf32>
    %129 = arith.mulf %124, %128 : vector<2x9x16x8xf32>
    %130 = arith.addf %123, %129 : vector<2x9x16x8xf32>
    %131 = vector.extract_strided_slice %77 {offsets = [0, 0, 0, 0], sizes = [2, 9, 16, 8], strides = [1, 1, 1, 1]} : vector<2x10x16x8xf32> to vector<2x9x16x8xf32>
    %132 = vector.extract_strided_slice %8 {offsets = [1, 1, 0], sizes = [1, 1, 8], strides = [1, 1, 1]} : vector<3x3x8xf32> to vector<1x1x8xf32>
    %133 = vector.shape_cast %132 : vector<1x1x8xf32> to vector<8xf32>
    %134 = vector.shape_cast %133 : vector<8xf32> to vector<1x1x1x8xf32>
    %135 = vector.broadcast %134 : vector<1x1x1x8xf32> to vector<2x9x16x8xf32>
    %136 = arith.mulf %131, %135 : vector<2x9x16x8xf32>
    %137 = arith.addf %130, %136 : vector<2x9x16x8xf32>
    %138 = vector.extract_strided_slice %69 {offsets = [0, 1, 0, 0], sizes = [2, 9, 16, 8], strides = [1, 1, 1, 1]} : vector<2x10x16x8xf32> to vector<2x9x16x8xf32>
    %139 = vector.extract_strided_slice %8 {offsets = [2, 1, 0], sizes = [1, 1, 8], strides = [1, 1, 1]} : vector<3x3x8xf32> to vector<1x1x8xf32>
    %140 = vector.shape_cast %139 : vector<1x1x8xf32> to vector<8xf32>
    %141 = vector.shape_cast %140 : vector<8xf32> to vector<1x1x1x8xf32>
    %142 = vector.broadcast %141 : vector<1x1x1x8xf32> to vector<2x9x16x8xf32>
    %143 = arith.mulf %138, %142 : vector<2x9x16x8xf32>
    %144 = arith.addf %137, %143 : vector<2x9x16x8xf32>
    %145 = vector.extract_strided_slice %1 {offsets = [0, 0, 1, 0], sizes = [2, 10, 16, 8], strides = [1, 1, 1, 1]} : vector<2x10x17x8xf32> to vector<2x10x16x8xf32>
    %146 = vector.extract_strided_slice %145 {offsets = [0, 0, 0, 0], sizes = [2, 9, 16, 8], strides = [1, 1, 1, 1]} : vector<2x10x16x8xf32> to vector<2x9x16x8xf32>
    %147 = vector.extract_strided_slice %8 {offsets = [0, 2, 0], sizes = [1, 1, 8], strides = [1, 1, 1]} : vector<3x3x8xf32> to vector<1x1x8xf32>
    %148 = vector.shape_cast %147 : vector<1x1x8xf32> to vector<8xf32>
    %149 = vector.shape_cast %148 : vector<8xf32> to vector<1x1x1x8xf32>
    %150 = vector.broadcast %149 : vector<1x1x1x8xf32> to vector<2x9x16x8xf32>
    %151 = arith.mulf %146, %150 : vector<2x9x16x8xf32>
    %152 = arith.addf %144, %151 : vector<2x9x16x8xf32>
    %153 = vector.extract_strided_slice %3 {offsets = [0, 0, 1, 0], sizes = [2, 10, 16, 8], strides = [1, 1, 1, 1]} : vector<2x10x17x8xf32> to vector<2x10x16x8xf32>
    %154 = vector.extract_strided_slice %153 {offsets = [0, 0, 0, 0], sizes = [2, 9, 16, 8], strides = [1, 1, 1, 1]} : vector<2x10x16x8xf32> to vector<2x9x16x8xf32>
    %155 = vector.extract_strided_slice %8 {offsets = [1, 2, 0], sizes = [1, 1, 8], strides = [1, 1, 1]} : vector<3x3x8xf32> to vector<1x1x8xf32>
    %156 = vector.shape_cast %155 : vector<1x1x8xf32> to vector<8xf32>
    %157 = vector.shape_cast %156 : vector<8xf32> to vector<1x1x1x8xf32>
    %158 = vector.broadcast %157 : vector<1x1x1x8xf32> to vector<2x9x16x8xf32>
    %159 = arith.mulf %154, %158 : vector<2x9x16x8xf32>
    %160 = arith.addf %152, %159 : vector<2x9x16x8xf32>
    %161 = vector.extract_strided_slice %145 {offsets = [0, 1, 0, 0], sizes = [2, 9, 16, 8], strides = [1, 1, 1, 1]} : vector<2x10x16x8xf32> to vector<2x9x16x8xf32>
    %162 = vector.extract_strided_slice %8 {offsets = [2, 2, 0], sizes = [1, 1, 8], strides = [1, 1, 1]} : vector<3x3x8xf32> to vector<1x1x8xf32>
    %163 = vector.shape_cast %162 : vector<1x1x8xf32> to vector<8xf32>
    %164 = vector.shape_cast %163 : vector<8xf32> to vector<1x1x1x8xf32>
    %165 = vector.broadcast %164 : vector<1x1x1x8xf32> to vector<2x9x16x8xf32>
    %166 = arith.mulf %161, %165 : vector<2x9x16x8xf32>
    %167 = arith.addf %160, %166 : vector<2x9x16x8xf32>
    %168 = vector.shape_cast %167 : vector<2x9x16x8xf32> to vector<288x8xf32>
    %169 = vector.broadcast %5 : vector<288x1xf32> to vector<288x8xf32>
    %170 = arith.mulf %168, %169 : vector<288x8xf32>
    %cst_54 = arith.constant dense<0.000000e+00> : vector<8xf32>
    %171 = vector.multi_reduction <add>, %170, %cst_54 [0] : vector<288x8xf32> to vector<8xf32>
    %172 = vector.shape_cast %171 : vector<8xf32> to vector<1x8xf32>
    %173 = arith.addf %97, %172 : vector<1x8xf32>
    %174 = arith.mulf %170, %170 : vector<288x8xf32>
    %cst_55 = arith.constant dense<0.000000e+00> : vector<8xf32>
    %175 = vector.multi_reduction <add>, %174, %cst_55 [0] : vector<288x8xf32> to vector<8xf32>
    %176 = vector.shape_cast %175 : vector<8xf32> to vector<1x8xf32>
    %177 = arith.addf %101, %176 : vector<1x8xf32>
    %cst_56 = arith.constant 0.000000e+00 : f32
    %178 = vector.broadcast %cst_56 : f32 to vector<2x9x16x8xf32>
    %179 = vector.extract_strided_slice %31 {offsets = [0, 0, 0, 0], sizes = [2, 9, 16, 8], strides = [1, 1, 1, 1]} : vector<2x10x16x8xf32> to vector<2x9x16x8xf32>
    %180 = vector.extract_strided_slice %8 {offsets = [0, 0, 0], sizes = [1, 1, 8], strides = [1, 1, 1]} : vector<3x3x8xf32> to vector<1x1x8xf32>
    %181 = vector.shape_cast %180 : vector<1x1x8xf32> to vector<8xf32>
    %182 = vector.shape_cast %181 : vector<8xf32> to vector<1x1x1x8xf32>
    %183 = vector.broadcast %182 : vector<1x1x1x8xf32> to vector<2x9x16x8xf32>
    %184 = arith.mulf %179, %183 : vector<2x9x16x8xf32>
    %185 = arith.addf %178, %184 : vector<2x9x16x8xf32>
    %186 = vector.extract_strided_slice %23 {offsets = [0, 1, 0, 0], sizes = [2, 9, 16, 8], strides = [1, 1, 1, 1]} : vector<2x10x16x8xf32> to vector<2x9x16x8xf32>
    %187 = vector.extract_strided_slice %8 {offsets = [1, 0, 0], sizes = [1, 1, 8], strides = [1, 1, 1]} : vector<3x3x8xf32> to vector<1x1x8xf32>
    %188 = vector.shape_cast %187 : vector<1x1x8xf32> to vector<8xf32>
    %189 = vector.shape_cast %188 : vector<8xf32> to vector<1x1x1x8xf32>
    %190 = vector.broadcast %189 : vector<1x1x1x8xf32> to vector<2x9x16x8xf32>
    %191 = arith.mulf %186, %190 : vector<2x9x16x8xf32>
    %192 = arith.addf %185, %191 : vector<2x9x16x8xf32>
    %193 = vector.extract_strided_slice %31 {offsets = [0, 1, 0, 0], sizes = [2, 9, 16, 8], strides = [1, 1, 1, 1]} : vector<2x10x16x8xf32> to vector<2x9x16x8xf32>
    %194 = vector.extract_strided_slice %8 {offsets = [2, 0, 0], sizes = [1, 1, 8], strides = [1, 1, 1]} : vector<3x3x8xf32> to vector<1x1x8xf32>
    %195 = vector.shape_cast %194 : vector<1x1x8xf32> to vector<8xf32>
    %196 = vector.shape_cast %195 : vector<8xf32> to vector<1x1x1x8xf32>
    %197 = vector.broadcast %196 : vector<1x1x1x8xf32> to vector<2x9x16x8xf32>
    %198 = arith.mulf %193, %197 : vector<2x9x16x8xf32>
    %199 = arith.addf %192, %198 : vector<2x9x16x8xf32>
    %200 = vector.extract_strided_slice %54 {offsets = [0, 0, 0, 0], sizes = [2, 9, 16, 8], strides = [1, 1, 1, 1]} : vector<2x10x16x8xf32> to vector<2x9x16x8xf32>
    %201 = vector.extract_strided_slice %8 {offsets = [0, 1, 0], sizes = [1, 1, 8], strides = [1, 1, 1]} : vector<3x3x8xf32> to vector<1x1x8xf32>
    %202 = vector.shape_cast %201 : vector<1x1x8xf32> to vector<8xf32>
    %203 = vector.shape_cast %202 : vector<8xf32> to vector<1x1x1x8xf32>
    %204 = vector.broadcast %203 : vector<1x1x1x8xf32> to vector<2x9x16x8xf32>
    %205 = arith.mulf %200, %204 : vector<2x9x16x8xf32>
    %206 = arith.addf %199, %205 : vector<2x9x16x8xf32>
    %207 = vector.extract_strided_slice %46 {offsets = [0, 1, 0, 0], sizes = [2, 9, 16, 8], strides = [1, 1, 1, 1]} : vector<2x10x16x8xf32> to vector<2x9x16x8xf32>
    %208 = vector.extract_strided_slice %8 {offsets = [1, 1, 0], sizes = [1, 1, 8], strides = [1, 1, 1]} : vector<3x3x8xf32> to vector<1x1x8xf32>
    %209 = vector.shape_cast %208 : vector<1x1x8xf32> to vector<8xf32>
    %210 = vector.shape_cast %209 : vector<8xf32> to vector<1x1x1x8xf32>
    %211 = vector.broadcast %210 : vector<1x1x1x8xf32> to vector<2x9x16x8xf32>
    %212 = arith.mulf %207, %211 : vector<2x9x16x8xf32>
    %213 = arith.addf %206, %212 : vector<2x9x16x8xf32>
    %214 = vector.extract_strided_slice %54 {offsets = [0, 1, 0, 0], sizes = [2, 9, 16, 8], strides = [1, 1, 1, 1]} : vector<2x10x16x8xf32> to vector<2x9x16x8xf32>
    %215 = vector.extract_strided_slice %8 {offsets = [2, 1, 0], sizes = [1, 1, 8], strides = [1, 1, 1]} : vector<3x3x8xf32> to vector<1x1x8xf32>
    %216 = vector.shape_cast %215 : vector<1x1x8xf32> to vector<8xf32>
    %217 = vector.shape_cast %216 : vector<8xf32> to vector<1x1x1x8xf32>
    %218 = vector.broadcast %217 : vector<1x1x1x8xf32> to vector<2x9x16x8xf32>
    %219 = arith.mulf %214, %218 : vector<2x9x16x8xf32>
    %220 = arith.addf %213, %219 : vector<2x9x16x8xf32>
    %221 = vector.extract_strided_slice %77 {offsets = [0, 0, 0, 0], sizes = [2, 9, 16, 8], strides = [1, 1, 1, 1]} : vector<2x10x16x8xf32> to vector<2x9x16x8xf32>
    %222 = vector.extract_strided_slice %8 {offsets = [0, 2, 0], sizes = [1, 1, 8], strides = [1, 1, 1]} : vector<3x3x8xf32> to vector<1x1x8xf32>
    %223 = vector.shape_cast %222 : vector<1x1x8xf32> to vector<8xf32>
    %224 = vector.shape_cast %223 : vector<8xf32> to vector<1x1x1x8xf32>
    %225 = vector.broadcast %224 : vector<1x1x1x8xf32> to vector<2x9x16x8xf32>
    %226 = arith.mulf %221, %225 : vector<2x9x16x8xf32>
    %227 = arith.addf %220, %226 : vector<2x9x16x8xf32>
    %228 = vector.extract_strided_slice %69 {offsets = [0, 1, 0, 0], sizes = [2, 9, 16, 8], strides = [1, 1, 1, 1]} : vector<2x10x16x8xf32> to vector<2x9x16x8xf32>
    %229 = vector.extract_strided_slice %8 {offsets = [1, 2, 0], sizes = [1, 1, 8], strides = [1, 1, 1]} : vector<3x3x8xf32> to vector<1x1x8xf32>
    %230 = vector.shape_cast %229 : vector<1x1x8xf32> to vector<8xf32>
    %231 = vector.shape_cast %230 : vector<8xf32> to vector<1x1x1x8xf32>
    %232 = vector.broadcast %231 : vector<1x1x1x8xf32> to vector<2x9x16x8xf32>
    %233 = arith.mulf %228, %232 : vector<2x9x16x8xf32>
    %234 = arith.addf %227, %233 : vector<2x9x16x8xf32>
    %235 = vector.extract_strided_slice %77 {offsets = [0, 1, 0, 0], sizes = [2, 9, 16, 8], strides = [1, 1, 1, 1]} : vector<2x10x16x8xf32> to vector<2x9x16x8xf32>
    %236 = vector.extract_strided_slice %8 {offsets = [2, 2, 0], sizes = [1, 1, 8], strides = [1, 1, 1]} : vector<3x3x8xf32> to vector<1x1x8xf32>
    %237 = vector.shape_cast %236 : vector<1x1x8xf32> to vector<8xf32>
    %238 = vector.shape_cast %237 : vector<8xf32> to vector<1x1x1x8xf32>
    %239 = vector.broadcast %238 : vector<1x1x1x8xf32> to vector<2x9x16x8xf32>
    %240 = arith.mulf %235, %239 : vector<2x9x16x8xf32>
    %241 = arith.addf %234, %240 : vector<2x9x16x8xf32>
    %242 = vector.shape_cast %241 : vector<2x9x16x8xf32> to vector<288x8xf32>
    %243 = vector.broadcast %6 : vector<288x1xf32> to vector<288x8xf32>
    %244 = arith.mulf %242, %243 : vector<288x8xf32>
    %cst_57 = arith.constant dense<0.000000e+00> : vector<8xf32>
    %245 = vector.multi_reduction <add>, %244, %cst_57 [0] : vector<288x8xf32> to vector<8xf32>
    %246 = vector.shape_cast %245 : vector<8xf32> to vector<1x8xf32>
    %247 = arith.addf %173, %246 : vector<1x8xf32>
    %248 = arith.mulf %244, %244 : vector<288x8xf32>
    %cst_58 = arith.constant dense<0.000000e+00> : vector<8xf32>
    %249 = vector.multi_reduction <add>, %248, %cst_58 [0] : vector<288x8xf32> to vector<8xf32>
    %250 = vector.shape_cast %249 : vector<8xf32> to vector<1x8xf32>
    %251 = arith.addf %177, %250 : vector<1x8xf32>
    %cst_59 = arith.constant 0.000000e+00 : f32
    %252 = vector.broadcast %cst_59 : f32 to vector<2x9x16x8xf32>
    %253 = vector.extract_strided_slice %54 {offsets = [0, 0, 0, 0], sizes = [2, 9, 16, 8], strides = [1, 1, 1, 1]} : vector<2x10x16x8xf32> to vector<2x9x16x8xf32>
    %254 = vector.extract_strided_slice %8 {offsets = [0, 0, 0], sizes = [1, 1, 8], strides = [1, 1, 1]} : vector<3x3x8xf32> to vector<1x1x8xf32>
    %255 = vector.shape_cast %254 : vector<1x1x8xf32> to vector<8xf32>
    %256 = vector.shape_cast %255 : vector<8xf32> to vector<1x1x1x8xf32>
    %257 = vector.broadcast %256 : vector<1x1x1x8xf32> to vector<2x9x16x8xf32>
    %258 = arith.mulf %253, %257 : vector<2x9x16x8xf32>
    %259 = arith.addf %252, %258 : vector<2x9x16x8xf32>
    %260 = vector.extract_strided_slice %46 {offsets = [0, 1, 0, 0], sizes = [2, 9, 16, 8], strides = [1, 1, 1, 1]} : vector<2x10x16x8xf32> to vector<2x9x16x8xf32>
    %261 = vector.extract_strided_slice %8 {offsets = [1, 0, 0], sizes = [1, 1, 8], strides = [1, 1, 1]} : vector<3x3x8xf32> to vector<1x1x8xf32>
    %262 = vector.shape_cast %261 : vector<1x1x8xf32> to vector<8xf32>
    %263 = vector.shape_cast %262 : vector<8xf32> to vector<1x1x1x8xf32>
    %264 = vector.broadcast %263 : vector<1x1x1x8xf32> to vector<2x9x16x8xf32>
    %265 = arith.mulf %260, %264 : vector<2x9x16x8xf32>
    %266 = arith.addf %259, %265 : vector<2x9x16x8xf32>
    %267 = vector.extract_strided_slice %54 {offsets = [0, 1, 0, 0], sizes = [2, 9, 16, 8], strides = [1, 1, 1, 1]} : vector<2x10x16x8xf32> to vector<2x9x16x8xf32>
    %268 = vector.extract_strided_slice %8 {offsets = [2, 0, 0], sizes = [1, 1, 8], strides = [1, 1, 1]} : vector<3x3x8xf32> to vector<1x1x8xf32>
    %269 = vector.shape_cast %268 : vector<1x1x8xf32> to vector<8xf32>
    %270 = vector.shape_cast %269 : vector<8xf32> to vector<1x1x1x8xf32>
    %271 = vector.broadcast %270 : vector<1x1x1x8xf32> to vector<2x9x16x8xf32>
    %272 = arith.mulf %267, %271 : vector<2x9x16x8xf32>
    %273 = arith.addf %266, %272 : vector<2x9x16x8xf32>
    %274 = vector.extract_strided_slice %77 {offsets = [0, 0, 0, 0], sizes = [2, 9, 16, 8], strides = [1, 1, 1, 1]} : vector<2x10x16x8xf32> to vector<2x9x16x8xf32>
    %275 = vector.extract_strided_slice %8 {offsets = [0, 1, 0], sizes = [1, 1, 8], strides = [1, 1, 1]} : vector<3x3x8xf32> to vector<1x1x8xf32>
    %276 = vector.shape_cast %275 : vector<1x1x8xf32> to vector<8xf32>
    %277 = vector.shape_cast %276 : vector<8xf32> to vector<1x1x1x8xf32>
    %278 = vector.broadcast %277 : vector<1x1x1x8xf32> to vector<2x9x16x8xf32>
    %279 = arith.mulf %274, %278 : vector<2x9x16x8xf32>
    %280 = arith.addf %273, %279 : vector<2x9x16x8xf32>
    %281 = vector.extract_strided_slice %69 {offsets = [0, 1, 0, 0], sizes = [2, 9, 16, 8], strides = [1, 1, 1, 1]} : vector<2x10x16x8xf32> to vector<2x9x16x8xf32>
    %282 = vector.extract_strided_slice %8 {offsets = [1, 1, 0], sizes = [1, 1, 8], strides = [1, 1, 1]} : vector<3x3x8xf32> to vector<1x1x8xf32>
    %283 = vector.shape_cast %282 : vector<1x1x8xf32> to vector<8xf32>
    %284 = vector.shape_cast %283 : vector<8xf32> to vector<1x1x1x8xf32>
    %285 = vector.broadcast %284 : vector<1x1x1x8xf32> to vector<2x9x16x8xf32>
    %286 = arith.mulf %281, %285 : vector<2x9x16x8xf32>
    %287 = arith.addf %280, %286 : vector<2x9x16x8xf32>
    %288 = vector.extract_strided_slice %77 {offsets = [0, 1, 0, 0], sizes = [2, 9, 16, 8], strides = [1, 1, 1, 1]} : vector<2x10x16x8xf32> to vector<2x9x16x8xf32>
    %289 = vector.extract_strided_slice %8 {offsets = [2, 1, 0], sizes = [1, 1, 8], strides = [1, 1, 1]} : vector<3x3x8xf32> to vector<1x1x8xf32>
    %290 = vector.shape_cast %289 : vector<1x1x8xf32> to vector<8xf32>
    %291 = vector.shape_cast %290 : vector<8xf32> to vector<1x1x1x8xf32>
    %292 = vector.broadcast %291 : vector<1x1x1x8xf32> to vector<2x9x16x8xf32>
    %293 = arith.mulf %288, %292 : vector<2x9x16x8xf32>
    %294 = arith.addf %287, %293 : vector<2x9x16x8xf32>
    %295 = vector.extract_strided_slice %153 {offsets = [0, 0, 0, 0], sizes = [2, 9, 16, 8], strides = [1, 1, 1, 1]} : vector<2x10x16x8xf32> to vector<2x9x16x8xf32>
    %296 = vector.extract_strided_slice %8 {offsets = [0, 2, 0], sizes = [1, 1, 8], strides = [1, 1, 1]} : vector<3x3x8xf32> to vector<1x1x8xf32>
    %297 = vector.shape_cast %296 : vector<1x1x8xf32> to vector<8xf32>
    %298 = vector.shape_cast %297 : vector<8xf32> to vector<1x1x1x8xf32>
    %299 = vector.broadcast %298 : vector<1x1x1x8xf32> to vector<2x9x16x8xf32>
    %300 = arith.mulf %295, %299 : vector<2x9x16x8xf32>
    %301 = arith.addf %294, %300 : vector<2x9x16x8xf32>
    %302 = vector.extract_strided_slice %145 {offsets = [0, 1, 0, 0], sizes = [2, 9, 16, 8], strides = [1, 1, 1, 1]} : vector<2x10x16x8xf32> to vector<2x9x16x8xf32>
    %303 = vector.extract_strided_slice %8 {offsets = [1, 2, 0], sizes = [1, 1, 8], strides = [1, 1, 1]} : vector<3x3x8xf32> to vector<1x1x8xf32>
    %304 = vector.shape_cast %303 : vector<1x1x8xf32> to vector<8xf32>
    %305 = vector.shape_cast %304 : vector<8xf32> to vector<1x1x1x8xf32>
    %306 = vector.broadcast %305 : vector<1x1x1x8xf32> to vector<2x9x16x8xf32>
    %307 = arith.mulf %302, %306 : vector<2x9x16x8xf32>
    %308 = arith.addf %301, %307 : vector<2x9x16x8xf32>
    %309 = vector.extract_strided_slice %153 {offsets = [0, 1, 0, 0], sizes = [2, 9, 16, 8], strides = [1, 1, 1, 1]} : vector<2x10x16x8xf32> to vector<2x9x16x8xf32>
    %310 = vector.extract_strided_slice %8 {offsets = [2, 2, 0], sizes = [1, 1, 8], strides = [1, 1, 1]} : vector<3x3x8xf32> to vector<1x1x8xf32>
    %311 = vector.shape_cast %310 : vector<1x1x8xf32> to vector<8xf32>
    %312 = vector.shape_cast %311 : vector<8xf32> to vector<1x1x1x8xf32>
    %313 = vector.broadcast %312 : vector<1x1x1x8xf32> to vector<2x9x16x8xf32>
    %314 = arith.mulf %309, %313 : vector<2x9x16x8xf32>
    %315 = arith.addf %308, %314 : vector<2x9x16x8xf32>
    %316 = vector.shape_cast %315 : vector<2x9x16x8xf32> to vector<288x8xf32>
    %317 = vector.broadcast %7 : vector<288x1xf32> to vector<288x8xf32>
    %318 = arith.mulf %316, %317 : vector<288x8xf32>
    %cst_60 = arith.constant dense<0.000000e+00> : vector<8xf32>
    %319 = vector.multi_reduction <add>, %318, %cst_60 [0] : vector<288x8xf32> to vector<8xf32>
    %320 = vector.shape_cast %319 : vector<8xf32> to vector<1x8xf32>
    %321 = arith.addf %247, %320 : vector<1x8xf32>
    %322 = arith.mulf %318, %318 : vector<288x8xf32>
    %cst_61 = arith.constant dense<0.000000e+00> : vector<8xf32>
    %323 = vector.multi_reduction <add>, %322, %cst_61 [0] : vector<288x8xf32> to vector<8xf32>
    %324 = vector.shape_cast %323 : vector<8xf32> to vector<1x8xf32>
    %325 = arith.addf %251, %324 : vector<1x8xf32>
    %cst_62 = arith.constant 5.120000e+02 : f32
    %326 = vector.broadcast %cst_62 : f32 to vector<1x8xf32>
    %327 = arith.divf %321, %326 : vector<1x8xf32>
    %cst_63 = arith.constant 5.120000e+02 : f32
    %328 = vector.broadcast %cst_63 : f32 to vector<1x8xf32>
    %329 = arith.divf %325, %328 : vector<1x8xf32>
    %330 = arith.mulf %327, %327 : vector<1x8xf32>
    %331 = arith.subf %329, %330 : vector<1x8xf32>
    %cst_64 = arith.constant 9.99999974E-6 : f32
    %332 = vector.broadcast %cst_64 : f32 to vector<1x8xf32>
    %333 = arith.addf %331, %332 : vector<1x8xf32>
    %334 = math.rsqrt %333 : vector<1x8xf32>
    %335 = arith.mulf %9, %334 : vector<1x8xf32>
    %336 = arith.mulf %327, %335 : vector<1x8xf32>
    %337 = arith.subf %10, %336 : vector<1x8xf32>
    %cst_65 = arith.constant 0.000000e+00 : f32
    %338 = vector.broadcast %cst_65 : f32 to vector<1x32xf32>
    %cst_66 = arith.constant 0.000000e+00 : f32
    %339 = vector.broadcast %cst_66 : f32 to vector<1x32xf32>
    %340 = vector.broadcast %335 : vector<1x8xf32> to vector<288x8xf32>
    %341 = arith.mulf %92, %340 : vector<288x8xf32>
    %342 = vector.broadcast %337 : vector<1x8xf32> to vector<288x8xf32>
    %343 = arith.addf %341, %342 : vector<288x8xf32>
    %344 = arith.truncf %343 : vector<288x8xf32> to vector<288x8xbf16>
    %cst_67 = arith.constant dense<0.000000e+00> : vector<288x32xf32>
    %345 = tpu.matmul %344, %11, %cst_67 {dimension_numbers = #tpu.dot_dimension_numbers<[1], [0], [0], [1], [0, 0, 1, 1], [], []>} : vector<288x8xbf16>, vector<8x32xbf16>, vector<288x32xf32> -> vector<288x32xf32>
    %346 = vector.broadcast %4 : vector<288x1xf32> to vector<288x32xf32>
    %347 = arith.mulf %345, %346 : vector<288x32xf32>
    %cst_68 = arith.constant dense<0.000000e+00> : vector<32xf32>
    %348 = vector.multi_reduction <add>, %347, %cst_68 [0] : vector<288x32xf32> to vector<32xf32>
    %349 = vector.shape_cast %348 : vector<32xf32> to vector<1x32xf32>
    %350 = arith.addf %338, %349 : vector<1x32xf32>
    %351 = arith.mulf %347, %347 : vector<288x32xf32>
    %cst_69 = arith.constant dense<0.000000e+00> : vector<32xf32>
    %352 = vector.multi_reduction <add>, %351, %cst_69 [0] : vector<288x32xf32> to vector<32xf32>
    %353 = vector.shape_cast %352 : vector<32xf32> to vector<1x32xf32>
    %354 = arith.addf %339, %353 : vector<1x32xf32>
    %355 = vector.broadcast %335 : vector<1x8xf32> to vector<288x8xf32>
    %356 = arith.mulf %168, %355 : vector<288x8xf32>
    %357 = vector.broadcast %337 : vector<1x8xf32> to vector<288x8xf32>
    %358 = arith.addf %356, %357 : vector<288x8xf32>
    %359 = arith.truncf %358 : vector<288x8xf32> to vector<288x8xbf16>
    %cst_70 = arith.constant dense<0.000000e+00> : vector<288x32xf32>
    %360 = tpu.matmul %359, %11, %cst_70 {dimension_numbers = #tpu.dot_dimension_numbers<[1], [0], [0], [1], [0, 0, 1, 1], [], []>} : vector<288x8xbf16>, vector<8x32xbf16>, vector<288x32xf32> -> vector<288x32xf32>
    %361 = vector.broadcast %5 : vector<288x1xf32> to vector<288x32xf32>
    %362 = arith.mulf %360, %361 : vector<288x32xf32>
    %cst_71 = arith.constant dense<0.000000e+00> : vector<32xf32>
    %363 = vector.multi_reduction <add>, %362, %cst_71 [0] : vector<288x32xf32> to vector<32xf32>
    %364 = vector.shape_cast %363 : vector<32xf32> to vector<1x32xf32>
    %365 = arith.addf %350, %364 : vector<1x32xf32>
    %366 = arith.mulf %362, %362 : vector<288x32xf32>
    %cst_72 = arith.constant dense<0.000000e+00> : vector<32xf32>
    %367 = vector.multi_reduction <add>, %366, %cst_72 [0] : vector<288x32xf32> to vector<32xf32>
    %368 = vector.shape_cast %367 : vector<32xf32> to vector<1x32xf32>
    %369 = arith.addf %354, %368 : vector<1x32xf32>
    %370 = vector.broadcast %335 : vector<1x8xf32> to vector<288x8xf32>
    %371 = arith.mulf %242, %370 : vector<288x8xf32>
    %372 = vector.broadcast %337 : vector<1x8xf32> to vector<288x8xf32>
    %373 = arith.addf %371, %372 : vector<288x8xf32>
    %374 = arith.truncf %373 : vector<288x8xf32> to vector<288x8xbf16>
    %cst_73 = arith.constant dense<0.000000e+00> : vector<288x32xf32>
    %375 = tpu.matmul %374, %11, %cst_73 {dimension_numbers = #tpu.dot_dimension_numbers<[1], [0], [0], [1], [0, 0, 1, 1], [], []>} : vector<288x8xbf16>, vector<8x32xbf16>, vector<288x32xf32> -> vector<288x32xf32>
    %376 = vector.broadcast %6 : vector<288x1xf32> to vector<288x32xf32>
    %377 = arith.mulf %375, %376 : vector<288x32xf32>
    %cst_74 = arith.constant dense<0.000000e+00> : vector<32xf32>
    %378 = vector.multi_reduction <add>, %377, %cst_74 [0] : vector<288x32xf32> to vector<32xf32>
    %379 = vector.shape_cast %378 : vector<32xf32> to vector<1x32xf32>
    %380 = arith.addf %365, %379 : vector<1x32xf32>
    %381 = arith.mulf %377, %377 : vector<288x32xf32>
    %cst_75 = arith.constant dense<0.000000e+00> : vector<32xf32>
    %382 = vector.multi_reduction <add>, %381, %cst_75 [0] : vector<288x32xf32> to vector<32xf32>
    %383 = vector.shape_cast %382 : vector<32xf32> to vector<1x32xf32>
    %384 = arith.addf %369, %383 : vector<1x32xf32>
    %385 = vector.broadcast %335 : vector<1x8xf32> to vector<288x8xf32>
    %386 = arith.mulf %316, %385 : vector<288x8xf32>
    %387 = vector.broadcast %337 : vector<1x8xf32> to vector<288x8xf32>
    %388 = arith.addf %386, %387 : vector<288x8xf32>
    %389 = arith.truncf %388 : vector<288x8xf32> to vector<288x8xbf16>
    %cst_76 = arith.constant dense<0.000000e+00> : vector<288x32xf32>
    %390 = tpu.matmul %389, %11, %cst_76 {dimension_numbers = #tpu.dot_dimension_numbers<[1], [0], [0], [1], [0, 0, 1, 1], [], []>} : vector<288x8xbf16>, vector<8x32xbf16>, vector<288x32xf32> -> vector<288x32xf32>
    %391 = vector.broadcast %7 : vector<288x1xf32> to vector<288x32xf32>
    %392 = arith.mulf %390, %391 : vector<288x32xf32>
    %cst_77 = arith.constant dense<0.000000e+00> : vector<32xf32>
    %393 = vector.multi_reduction <add>, %392, %cst_77 [0] : vector<288x32xf32> to vector<32xf32>
    %394 = vector.shape_cast %393 : vector<32xf32> to vector<1x32xf32>
    %395 = arith.addf %380, %394 : vector<1x32xf32>
    %396 = arith.mulf %392, %392 : vector<288x32xf32>
    %cst_78 = arith.constant dense<0.000000e+00> : vector<32xf32>
    %397 = vector.multi_reduction <add>, %396, %cst_78 [0] : vector<288x32xf32> to vector<32xf32>
    %398 = vector.shape_cast %397 : vector<32xf32> to vector<1x32xf32>
    %399 = arith.addf %384, %398 : vector<1x32xf32>
    %cst_79 = arith.constant 5.120000e+02 : f32
    %400 = vector.broadcast %cst_79 : f32 to vector<1x32xf32>
    %401 = arith.divf %395, %400 : vector<1x32xf32>
    %cst_80 = arith.constant 5.120000e+02 : f32
    %402 = vector.broadcast %cst_80 : f32 to vector<1x32xf32>
    %403 = arith.divf %399, %402 : vector<1x32xf32>
    %404 = arith.mulf %401, %401 : vector<1x32xf32>
    %405 = arith.subf %403, %404 : vector<1x32xf32>
    %cst_81 = arith.constant 9.99999974E-6 : f32
    %406 = vector.broadcast %cst_81 : f32 to vector<1x32xf32>
    %407 = arith.addf %405, %406 : vector<1x32xf32>
    %408 = math.rsqrt %407 : vector<1x32xf32>
    %409 = arith.mulf %12, %408 : vector<1x32xf32>
    %410 = arith.mulf %401, %409 : vector<1x32xf32>
    %411 = arith.subf %13, %410 : vector<1x32xf32>
    %412 = vector.broadcast %409 : vector<1x32xf32> to vector<288x32xf32>
    %413 = arith.mulf %345, %412 : vector<288x32xf32>
    %414 = vector.broadcast %411 : vector<1x32xf32> to vector<288x32xf32>
    %415 = arith.addf %413, %414 : vector<288x32xf32>
    %416 = vector.broadcast %4 : vector<288x1xf32> to vector<288x32xf32>
    %417 = arith.mulf %415, %416 : vector<288x32xf32>
    %418 = math.exp %417 : vector<288x32xf32>
    %419 = math.tanh %418 : vector<288x32xf32>
    %420 = arith.mulf %417, %419 : vector<288x32xf32>
    %421 = vector.shape_cast %420 : vector<288x32xf32> to vector<2x9x16x32xf32>
    %422 = vector.broadcast %409 : vector<1x32xf32> to vector<288x32xf32>
    %423 = arith.mulf %360, %422 : vector<288x32xf32>
    %424 = vector.broadcast %411 : vector<1x32xf32> to vector<288x32xf32>
    %425 = arith.addf %423, %424 : vector<288x32xf32>
    %426 = vector.broadcast %5 : vector<288x1xf32> to vector<288x32xf32>
    %427 = arith.mulf %425, %426 : vector<288x32xf32>
    %428 = math.exp %427 : vector<288x32xf32>
    %429 = math.tanh %428 : vector<288x32xf32>
    %430 = arith.mulf %427, %429 : vector<288x32xf32>
    %431 = vector.shape_cast %430 : vector<288x32xf32> to vector<2x9x16x32xf32>
    %432 = vector.broadcast %409 : vector<1x32xf32> to vector<288x32xf32>
    %433 = arith.mulf %375, %432 : vector<288x32xf32>
    %434 = vector.broadcast %411 : vector<1x32xf32> to vector<288x32xf32>
    %435 = arith.addf %433, %434 : vector<288x32xf32>
    %436 = vector.broadcast %6 : vector<288x1xf32> to vector<288x32xf32>
    %437 = arith.mulf %435, %436 : vector<288x32xf32>
    %438 = math.exp %437 : vector<288x32xf32>
    %439 = math.tanh %438 : vector<288x32xf32>
    %440 = arith.mulf %437, %439 : vector<288x32xf32>
    %441 = vector.shape_cast %440 : vector<288x32xf32> to vector<2x9x16x32xf32>
    %442 = vector.broadcast %409 : vector<1x32xf32> to vector<288x32xf32>
    %443 = arith.mulf %390, %442 : vector<288x32xf32>
    %444 = vector.broadcast %411 : vector<1x32xf32> to vector<288x32xf32>
    %445 = arith.addf %443, %444 : vector<288x32xf32>
    %446 = vector.broadcast %7 : vector<288x1xf32> to vector<288x32xf32>
    %447 = arith.mulf %445, %446 : vector<288x32xf32>
    %448 = math.exp %447 : vector<288x32xf32>
    %449 = math.tanh %448 : vector<288x32xf32>
    %450 = arith.mulf %447, %449 : vector<288x32xf32>
    %451 = vector.shape_cast %450 : vector<288x32xf32> to vector<2x9x16x32xf32>
    %cst_82 = arith.constant 0.000000e+00 : f32
    %452 = vector.broadcast %cst_82 : f32 to vector<2x8x8x32xf32>
    %453 = vector.extract_strided_slice %421 {offsets = [0, 0, 0, 0], sizes = [2, 9, 8, 32], strides = [1, 1, 1, 1]} : vector<2x9x16x32xf32> to vector<2x9x8x32xf32>
    %454 = vector.extract_strided_slice %453 {offsets = [0, 0, 0, 0], sizes = [2, 8, 8, 32], strides = [1, 1, 1, 1]} : vector<2x9x8x32xf32> to vector<2x8x8x32xf32>
    %455 = vector.extract_strided_slice %14 {offsets = [0, 0, 0], sizes = [1, 1, 32], strides = [1, 1, 1]} : vector<3x3x32xf32> to vector<1x1x32xf32>
    %456 = vector.shape_cast %455 : vector<1x1x32xf32> to vector<32xf32>
    %457 = vector.shape_cast %456 : vector<32xf32> to vector<1x1x1x32xf32>
    %458 = vector.broadcast %457 : vector<1x1x1x32xf32> to vector<2x8x8x32xf32>
    %459 = arith.mulf %454, %458 : vector<2x8x8x32xf32>
    %460 = arith.addf %452, %459 : vector<2x8x8x32xf32>
    %461 = vector.extract_strided_slice %441 {offsets = [0, 0, 0, 0], sizes = [2, 9, 8, 32], strides = [1, 1, 1, 1]} : vector<2x9x16x32xf32> to vector<2x9x8x32xf32>
    %462 = vector.extract_strided_slice %461 {offsets = [0, 0, 0, 0], sizes = [2, 8, 8, 32], strides = [1, 1, 1, 1]} : vector<2x9x8x32xf32> to vector<2x8x8x32xf32>
    %463 = vector.extract_strided_slice %14 {offsets = [1, 0, 0], sizes = [1, 1, 32], strides = [1, 1, 1]} : vector<3x3x32xf32> to vector<1x1x32xf32>
    %464 = vector.shape_cast %463 : vector<1x1x32xf32> to vector<32xf32>
    %465 = vector.shape_cast %464 : vector<32xf32> to vector<1x1x1x32xf32>
    %466 = vector.broadcast %465 : vector<1x1x1x32xf32> to vector<2x8x8x32xf32>
    %467 = arith.mulf %462, %466 : vector<2x8x8x32xf32>
    %468 = arith.addf %460, %467 : vector<2x8x8x32xf32>
    %469 = vector.extract_strided_slice %453 {offsets = [0, 1, 0, 0], sizes = [2, 8, 8, 32], strides = [1, 1, 1, 1]} : vector<2x9x8x32xf32> to vector<2x8x8x32xf32>
    %470 = vector.extract_strided_slice %14 {offsets = [2, 0, 0], sizes = [1, 1, 32], strides = [1, 1, 1]} : vector<3x3x32xf32> to vector<1x1x32xf32>
    %471 = vector.shape_cast %470 : vector<1x1x32xf32> to vector<32xf32>
    %472 = vector.shape_cast %471 : vector<32xf32> to vector<1x1x1x32xf32>
    %473 = vector.broadcast %472 : vector<1x1x1x32xf32> to vector<2x8x8x32xf32>
    %474 = arith.mulf %469, %473 : vector<2x8x8x32xf32>
    %475 = arith.addf %468, %474 : vector<2x8x8x32xf32>
    %476 = vector.extract_strided_slice %431 {offsets = [0, 0, 0, 0], sizes = [2, 9, 8, 32], strides = [1, 1, 1, 1]} : vector<2x9x16x32xf32> to vector<2x9x8x32xf32>
    %477 = vector.extract_strided_slice %476 {offsets = [0, 0, 0, 0], sizes = [2, 8, 8, 32], strides = [1, 1, 1, 1]} : vector<2x9x8x32xf32> to vector<2x8x8x32xf32>
    %478 = vector.extract_strided_slice %14 {offsets = [0, 1, 0], sizes = [1, 1, 32], strides = [1, 1, 1]} : vector<3x3x32xf32> to vector<1x1x32xf32>
    %479 = vector.shape_cast %478 : vector<1x1x32xf32> to vector<32xf32>
    %480 = vector.shape_cast %479 : vector<32xf32> to vector<1x1x1x32xf32>
    %481 = vector.broadcast %480 : vector<1x1x1x32xf32> to vector<2x8x8x32xf32>
    %482 = arith.mulf %477, %481 : vector<2x8x8x32xf32>
    %483 = arith.addf %475, %482 : vector<2x8x8x32xf32>
    %484 = vector.extract_strided_slice %451 {offsets = [0, 0, 0, 0], sizes = [2, 9, 8, 32], strides = [1, 1, 1, 1]} : vector<2x9x16x32xf32> to vector<2x9x8x32xf32>
    %485 = vector.extract_strided_slice %484 {offsets = [0, 0, 0, 0], sizes = [2, 8, 8, 32], strides = [1, 1, 1, 1]} : vector<2x9x8x32xf32> to vector<2x8x8x32xf32>
    %486 = vector.extract_strided_slice %14 {offsets = [1, 1, 0], sizes = [1, 1, 32], strides = [1, 1, 1]} : vector<3x3x32xf32> to vector<1x1x32xf32>
    %487 = vector.shape_cast %486 : vector<1x1x32xf32> to vector<32xf32>
    %488 = vector.shape_cast %487 : vector<32xf32> to vector<1x1x1x32xf32>
    %489 = vector.broadcast %488 : vector<1x1x1x32xf32> to vector<2x8x8x32xf32>
    %490 = arith.mulf %485, %489 : vector<2x8x8x32xf32>
    %491 = arith.addf %483, %490 : vector<2x8x8x32xf32>
    %492 = vector.extract_strided_slice %476 {offsets = [0, 1, 0, 0], sizes = [2, 8, 8, 32], strides = [1, 1, 1, 1]} : vector<2x9x8x32xf32> to vector<2x8x8x32xf32>
    %493 = vector.extract_strided_slice %14 {offsets = [2, 1, 0], sizes = [1, 1, 32], strides = [1, 1, 1]} : vector<3x3x32xf32> to vector<1x1x32xf32>
    %494 = vector.shape_cast %493 : vector<1x1x32xf32> to vector<32xf32>
    %495 = vector.shape_cast %494 : vector<32xf32> to vector<1x1x1x32xf32>
    %496 = vector.broadcast %495 : vector<1x1x1x32xf32> to vector<2x8x8x32xf32>
    %497 = arith.mulf %492, %496 : vector<2x8x8x32xf32>
    %498 = arith.addf %491, %497 : vector<2x8x8x32xf32>
    %499 = vector.extract_strided_slice %421 {offsets = [0, 0, 1, 0], sizes = [2, 9, 8, 32], strides = [1, 1, 1, 1]} : vector<2x9x16x32xf32> to vector<2x9x8x32xf32>
    %500 = vector.extract_strided_slice %499 {offsets = [0, 0, 0, 0], sizes = [2, 8, 8, 32], strides = [1, 1, 1, 1]} : vector<2x9x8x32xf32> to vector<2x8x8x32xf32>
    %501 = vector.extract_strided_slice %14 {offsets = [0, 2, 0], sizes = [1, 1, 32], strides = [1, 1, 1]} : vector<3x3x32xf32> to vector<1x1x32xf32>
    %502 = vector.shape_cast %501 : vector<1x1x32xf32> to vector<32xf32>
    %503 = vector.shape_cast %502 : vector<32xf32> to vector<1x1x1x32xf32>
    %504 = vector.broadcast %503 : vector<1x1x1x32xf32> to vector<2x8x8x32xf32>
    %505 = arith.mulf %500, %504 : vector<2x8x8x32xf32>
    %506 = arith.addf %498, %505 : vector<2x8x8x32xf32>
    %507 = vector.extract_strided_slice %441 {offsets = [0, 0, 1, 0], sizes = [2, 9, 8, 32], strides = [1, 1, 1, 1]} : vector<2x9x16x32xf32> to vector<2x9x8x32xf32>
    %508 = vector.extract_strided_slice %507 {offsets = [0, 0, 0, 0], sizes = [2, 8, 8, 32], strides = [1, 1, 1, 1]} : vector<2x9x8x32xf32> to vector<2x8x8x32xf32>
    %509 = vector.extract_strided_slice %14 {offsets = [1, 2, 0], sizes = [1, 1, 32], strides = [1, 1, 1]} : vector<3x3x32xf32> to vector<1x1x32xf32>
    %510 = vector.shape_cast %509 : vector<1x1x32xf32> to vector<32xf32>
    %511 = vector.shape_cast %510 : vector<32xf32> to vector<1x1x1x32xf32>
    %512 = vector.broadcast %511 : vector<1x1x1x32xf32> to vector<2x8x8x32xf32>
    %513 = arith.mulf %508, %512 : vector<2x8x8x32xf32>
    %514 = arith.addf %506, %513 : vector<2x8x8x32xf32>
    %515 = vector.extract_strided_slice %499 {offsets = [0, 1, 0, 0], sizes = [2, 8, 8, 32], strides = [1, 1, 1, 1]} : vector<2x9x8x32xf32> to vector<2x8x8x32xf32>
    %516 = vector.extract_strided_slice %14 {offsets = [2, 2, 0], sizes = [1, 1, 32], strides = [1, 1, 1]} : vector<3x3x32xf32> to vector<1x1x32xf32>
    %517 = vector.shape_cast %516 : vector<1x1x32xf32> to vector<32xf32>
    %518 = vector.shape_cast %517 : vector<32xf32> to vector<1x1x1x32xf32>
    %519 = vector.broadcast %518 : vector<1x1x1x32xf32> to vector<2x8x8x32xf32>
    %520 = arith.mulf %515, %519 : vector<2x8x8x32xf32>
    %521 = arith.addf %514, %520 : vector<2x8x8x32xf32>
    %522 = vector.shape_cast %521 : vector<2x8x8x32xf32> to vector<128x32xf32>
    %cst_83 = arith.constant dense<0.000000e+00> : vector<32xf32>
    %523 = vector.multi_reduction <add>, %522, %cst_83 [0] : vector<128x32xf32> to vector<32xf32>
    %524 = vector.shape_cast %523 : vector<32xf32> to vector<1x32xf32>
    %525 = arith.mulf %522, %522 : vector<128x32xf32>
    %cst_84 = arith.constant dense<0.000000e+00> : vector<32xf32>
    %526 = vector.multi_reduction <add>, %525, %cst_84 [0] : vector<128x32xf32> to vector<32xf32>
    %527 = vector.shape_cast %526 : vector<32xf32> to vector<1x32xf32>
    %cst_85 = arith.constant 1.280000e+02 : f32
    %528 = vector.broadcast %cst_85 : f32 to vector<1x32xf32>
    %529 = arith.divf %524, %528 : vector<1x32xf32>
    %cst_86 = arith.constant 1.280000e+02 : f32
    %530 = vector.broadcast %cst_86 : f32 to vector<1x32xf32>
    %531 = arith.divf %527, %530 : vector<1x32xf32>
    %532 = arith.mulf %529, %529 : vector<1x32xf32>
    %533 = arith.subf %531, %532 : vector<1x32xf32>
    %cst_87 = arith.constant 9.99999974E-6 : f32
    %534 = vector.broadcast %cst_87 : f32 to vector<1x32xf32>
    %535 = arith.addf %533, %534 : vector<1x32xf32>
    %536 = math.rsqrt %535 : vector<1x32xf32>
    %537 = arith.mulf %15, %536 : vector<1x32xf32>
    %538 = arith.mulf %529, %537 : vector<1x32xf32>
    %539 = arith.subf %16, %538 : vector<1x32xf32>
    %540 = vector.broadcast %537 : vector<1x32xf32> to vector<128x32xf32>
    %541 = arith.mulf %522, %540 : vector<128x32xf32>
    %542 = vector.broadcast %539 : vector<1x32xf32> to vector<128x32xf32>
    %543 = arith.addf %541, %542 : vector<128x32xf32>
    %544 = math.exp %543 : vector<128x32xf32>
    %545 = math.tanh %544 : vector<128x32xf32>
    %546 = arith.mulf %543, %545 : vector<128x32xf32>
    %547 = arith.truncf %546 : vector<128x32xf32> to vector<128x32xbf16>
    %cst_88 = arith.constant dense<0.000000e+00> : vector<128x16xf32>
    %548 = tpu.matmul %547, %17, %cst_88 {dimension_numbers = #tpu.dot_dimension_numbers<[1], [0], [0], [1], [0, 0, 1, 1], [], []>} : vector<128x32xbf16>, vector<32x16xbf16>, vector<128x16xf32> -> vector<128x16xf32>
    %cst_89 = arith.constant dense<0.000000e+00> : vector<16xf32>
    %549 = vector.multi_reduction <add>, %548, %cst_89 [0] : vector<128x16xf32> to vector<16xf32>
    %550 = vector.shape_cast %549 : vector<16xf32> to vector<1x16xf32>
    %551 = arith.mulf %548, %548 : vector<128x16xf32>
    %cst_90 = arith.constant dense<0.000000e+00> : vector<16xf32>
    %552 = vector.multi_reduction <add>, %551, %cst_90 [0] : vector<128x16xf32> to vector<16xf32>
    %553 = vector.shape_cast %552 : vector<16xf32> to vector<1x16xf32>
    %cst_91 = arith.constant 1.280000e+02 : f32
    %554 = vector.broadcast %cst_91 : f32 to vector<1x16xf32>
    %555 = arith.divf %550, %554 : vector<1x16xf32>
    %cst_92 = arith.constant 1.280000e+02 : f32
    %556 = vector.broadcast %cst_92 : f32 to vector<1x16xf32>
    %557 = arith.divf %553, %556 : vector<1x16xf32>
    %558 = arith.mulf %555, %555 : vector<1x16xf32>
    %559 = arith.subf %557, %558 : vector<1x16xf32>
    %cst_93 = arith.constant 9.99999974E-6 : f32
    %560 = vector.broadcast %cst_93 : f32 to vector<1x16xf32>
    %561 = arith.addf %559, %560 : vector<1x16xf32>
    %562 = math.rsqrt %561 : vector<1x16xf32>
    %563 = arith.mulf %18, %562 : vector<1x16xf32>
    %564 = arith.mulf %555, %563 : vector<1x16xf32>
    %565 = arith.subf %19, %564 : vector<1x16xf32>
    %566 = vector.broadcast %563 : vector<1x16xf32> to vector<128x16xf32>
    %567 = arith.mulf %548, %566 : vector<128x16xf32>
    %568 = vector.broadcast %565 : vector<1x16xf32> to vector<128x16xf32>
    %569 = arith.addf %567, %568 : vector<128x16xf32>
    %c0_94 = arith.constant 0 : index
    %c0_95 = arith.constant 0 : index
    %570 = vector.load %arg20[%c0_94, %c0_95] : memref<128x16xf32, #tpu.memory_space<vmem>>, vector<128x16xf32>
    tpu.vector_store %arg20[%c0_94, %c0_95], %569 {strides = array<i32>} : memref<128x16xf32, #tpu.memory_space<vmem>>, vector<128x16xf32>,
    return
  }
}

</mosaic_0001>

<llo_original>
// kernel: uib_forward.1
$region0: #{uib_forward.1}
  #allocation0 [shape = 'u32[]', space=smem, size = 0x4, offset = 0x4, fixed_abs, tag = 'smem constant byte address 0x4 - core index']
  #allocation1 [shape = 'u32[144,128]{1,0:T(1,128)}', space=vmem, size = 0x12000, scoped, tag = 'internal scratch']
  %s0 = inlined_call_operand.vmem [shape: f32[2,10,17,8], index: 0, kind: input, shape index: {}]
  %s1 = inlined_call_operand.vmem [shape: f32[2,10,17,8], index: 1, kind: input, shape index: {}]
  %s2 = inlined_call_operand.vmem [shape: f32[2,10,17,8], index: 2, kind: input, shape index: {}]
  %s3 = inlined_call_operand.vmem [shape: f32[2,10,17,8], index: 3, kind: input, shape index: {}]
  %s4 = inlined_call_operand.vmem [shape: f32[288,1], index: 4, kind: input, shape index: {}]
  %s5 = inlined_call_operand.vmem [shape: f32[288,1], index: 5, kind: input, shape index: {}]
  %s6 = inlined_call_operand.vmem [shape: f32[288,1], index: 6, kind: input, shape index: {}]
  %s7 = inlined_call_operand.vmem [shape: f32[288,1], index: 7, kind: input, shape index: {}]
  %s8 = inlined_call_operand.vmem [shape: f32[3,3,8], index: 8, kind: input, shape index: {}]
  %s9 = inlined_call_operand.vmem [shape: f32[1,8], index: 9, kind: input, shape index: {}]
  %s10 = inlined_call_operand.vmem [shape: f32[1,8], index: 10, kind: input, shape index: {}]
  %s11 = inlined_call_operand.vmem [shape: bf16[8,32], index: 11, kind: input, shape index: {}]
  %s12 = inlined_call_operand.vmem [shape: f32[1,32], index: 12, kind: input, shape index: {}]
  %s13 = inlined_call_operand.vmem [shape: f32[1,32], index: 13, kind: input, shape index: {}]
  %s14 = inlined_call_operand.vmem [shape: f32[3,3,32], index: 14, kind: input, shape index: {}]
  %s15 = inlined_call_operand.vmem [shape: f32[1,32], index: 15, kind: input, shape index: {}]
  %s16 = inlined_call_operand.vmem [shape: f32[1,32], index: 16, kind: input, shape index: {}]
  %s17 = inlined_call_operand.vmem [shape: bf16[32,16], index: 17, kind: input, shape index: {}]
  %s18 = inlined_call_operand.vmem [shape: f32[1,16], index: 18, kind: input, shape index: {}]
  %s19 = inlined_call_operand.vmem [shape: f32[1,16], index: 19, kind: input, shape index: {}]
  %s20 = inlined_call_operand.hbm [shape: f32[128,16], index: 20, kind: output, shape index: {}]
  %s21 = sld [smem:[#allocation0]]
  $region90: #{uib_forward.1} parent=0
    _
  %s23 = ssub.s32 1, %s21
  %s24 = scalar_select 0, %s23, %s21
  $region1: #{uib_forward.1} parent=0
    #allocation2 [shape = 'u8[65536]{0}', space=vmem, size = 0x10000, scoped, tag = 'output window, operand 0, single buffered']
    #allocation3 [shape = 's32[1]{0}', space=sflag, size = 0x4, scoped, tag = 'scoped memory for uib_forward.1']
    %25 = vsyncpa [#allocation3], 0
    // Predicated region
    $region2: #{uib_forward.1} parent=1 // pred_check
      _
    $region3: #{uib_forward.1} parent=1 // pred_check_branch
      %27 = sbr.rel (0) target = $region5
    $region4: #{uib_forward.1} parent=1 // pred_region
      _
    $region5: #{uib_forward.1} parent=1 // pred_fallthru
      _
    // Predicated region
    $region6: #{uib_forward.1} parent=1 // pred_check
      _
    $region7: #{uib_forward.1} parent=1 // pred_check_branch
      %29 = sbr.rel (0) target = $region9
    $region8: #{uib_forward.1} parent=1 // pred_region
      _
    $region9: #{uib_forward.1} parent=1 // pred_fallthru
      _
    // Predicated region
    $region10: #{uib_forward.1} parent=1 // pred_check
      _
    $region11: #{uib_forward.1} parent=1 // pred_check_branch
      %31 = sbr.rel (0) target = $region13
    $region12: #{uib_forward.1} parent=1 // pred_region
      _
    $region13: #{uib_forward.1} parent=1 // pred_fallthru
      _
    // Predicated region
    $region14: #{uib_forward.1} parent=1 // pred_check
      _
    $region15: #{uib_forward.1} parent=1 // pred_check_branch
      %33 = sbr.rel (0) target = $region17
    $region16: #{uib_forward.1} parent=1 // pred_region
      _
    $region17: #{uib_forward.1} parent=1 // pred_fallthru
      _
    // Predicated region
    $region18: #{uib_forward.1} parent=1 // pred_check
      _
    $region19: #{uib_forward.1} parent=1 // pred_check_branch
      %35 = sbr.rel (0) target = $region21
    $region20: #{uib_forward.1} parent=1 // pred_region
      _
    $region21: #{uib_forward.1} parent=1 // pred_fallthru
      _
    // Predicated region
    $region22: #{uib_forward.1} parent=1 // pred_check
      _
    $region23: #{uib_forward.1} parent=1 // pred_check_branch
      %37 = sbr.rel (0) target = $region25
    $region24: #{uib_forward.1} parent=1 // pred_region
      _
    $region25: #{uib_forward.1} parent=1 // pred_fallthru
      _
    // Predicated region
    $region26: #{uib_forward.1} parent=1 // pred_check
      _
    $region27: #{uib_forward.1} parent=1 // pred_check_branch
      %39 = sbr.rel (0) target = $region29
    $region28: #{uib_forward.1} parent=1 // pred_region
      _
    $region29: #{uib_forward.1} parent=1 // pred_fallthru
      _
    // Predicated region
    $region30: #{uib_forward.1} parent=1 // pred_check
      _
    $region31: #{uib_forward.1} parent=1 // pred_check_branch
      %41 = sbr.rel (0) target = $region33
    $region32: #{uib_forward.1} parent=1 // pred_region
      _
    $region33: #{uib_forward.1} parent=1 // pred_fallthru
      _
    // Predicated region
    $region34: #{uib_forward.1} parent=1 // pred_check
      _
    $region35: #{uib_forward.1} parent=1 // pred_check_branch
      %43 = sbr.rel (0) target = $region37
    $region36: #{uib_forward.1} parent=1 // pred_region
      _
    $region37: #{uib_forward.1} parent=1 // pred_fallthru
      _
    // Predicated region
    $region38: #{uib_forward.1} parent=1 // pred_check
      _
    $region39: #{uib_forward.1} parent=1 // pred_check_branch
      %45 = sbr.rel (0) target = $region41
    $region40: #{uib_forward.1} parent=1 // pred_region
      _
    $region41: #{uib_forward.1} parent=1 // pred_fallthru
      _
    // Predicated region
    $region42: #{uib_forward.1} parent=1 // pred_check
      _
    $region43: #{uib_forward.1} parent=1 // pred_check_branch
      %47 = sbr.rel (0) target = $region45
    $region44: #{uib_forward.1} parent=1 // pred_region
      _
    $region45: #{uib_forward.1} parent=1 // pred_fallthru
      _
    // Predicated region
    $region46: #{uib_forward.1} parent=1 // pred_check
      _
    $region47: #{uib_forward.1} parent=1 // pred_check_branch
      %49 = sbr.rel (0) target = $region49
    $region48: #{uib_forward.1} parent=1 // pred_region
      _
    $region49: #{uib_forward.1} parent=1 // pred_fallthru
      _
    // Predicated region
    $region50: #{uib_forward.1} parent=1 // pred_check
      _
    $region51: #{uib_forward.1} parent=1 // pred_check_branch
      %51 = sbr.rel (0) target = $region53
    $region52: #{uib_forward.1} parent=1 // pred_region
      _
    $region53: #{uib_forward.1} parent=1 // pred_fallthru
      _
    // Predicated region
    $region54: #{uib_forward.1} parent=1 // pred_check
      _
    $region55: #{uib_forward.1} parent=1 // pred_check_branch
      %53 = sbr.rel (0) target = $region57
    $region56: #{uib_forward.1} parent=1 // pred_region
      _
    $region57: #{uib_forward.1} parent=1 // pred_fallthru
      _
    // Predicated region
    $region58: #{uib_forward.1} parent=1 // pred_check
      _
    $region59: #{uib_forward.1} parent=1 // pred_check_branch
      %55 = sbr.rel (0) target = $region61
    $region60: #{uib_forward.1} parent=1 // pred_region
      _
    $region61: #{uib_forward.1} parent=1 // pred_fallthru
      _
    // Predicated region
    $region62: #{uib_forward.1} parent=1 // pred_check
      _
    $region63: #{uib_forward.1} parent=1 // pred_check_branch
      %57 = sbr.rel (0) target = $region65
    $region64: #{uib_forward.1} parent=1 // pred_region
      _
    $region65: #{uib_forward.1} parent=1 // pred_fallthru
      _
    // Predicated region
    $region66: #{uib_forward.1} parent=1 // pred_check
      _
    $region67: #{uib_forward.1} parent=1 // pred_check_branch
      %59 = sbr.rel (0) target = $region69
    $region68: #{uib_forward.1} parent=1 // pred_region
      _
    $region69: #{uib_forward.1} parent=1 // pred_fallthru
      _
    // Predicated region
    $region70: #{uib_forward.1} parent=1 // pred_check
      _
    $region71: #{uib_forward.1} parent=1 // pred_check_branch
      %61 = sbr.rel (0) target = $region73
    $region72: #{uib_forward.1} parent=1 // pred_region
      _
    $region73: #{uib_forward.1} parent=1 // pred_fallthru
      _
    // Predicated region
    $region74: #{uib_forward.1} parent=1 // pred_check
      _
    $region75: #{uib_forward.1} parent=1 // pred_check_branch
      %63 = sbr.rel (0) target = $region77
    $region76: #{uib_forward.1} parent=1 // pred_region
      _
    $region77: #{uib_forward.1} parent=1 // pred_fallthru
      _
    // Predicated region
    $region78: #{uib_forward.1} parent=1 // pred_check
      _
    $region79: #{uib_forward.1} parent=1 // pred_check_branch
      %65 = sbr.rel (0) target = $region81
    $region80: #{uib_forward.1} parent=1 // pred_region
      _
    $region81: #{uib_forward.1} parent=1 // pred_fallthru
      _
    %v67 = vld [vmem:[%s0] sm:$0xff]
    %v68 = vld [vmem:[%s0 + $0x8] sm:$0xff]
    %v69 = vld [vmem:[%s0 + $0x10] sm:$0x1]
    %v70 = vld [vmem:[%s0 + $0x18] sm:$0xff]
    %v71 = vld [vmem:[%s0 + $0x20] sm:$0xff]
    %v72 = vld [vmem:[%s0 + $0x28] sm:$0x1]
    %v73 = vld [vmem:[%s0 + $0x30] sm:$0xff]
    %v74 = vld [vmem:[%s0 + $0x38] sm:$0xff]
    %v75 = vld [vmem:[%s0 + $0x40] sm:$0x1]
    %v76 = vld [vmem:[%s0 + $0x48] sm:$0xff]
    %v77 = vld [vmem:[%s0 + $0x50] sm:$0xff]
    %v78 = vld [vmem:[%s0 + $0x58] sm:$0x1]
    %v79 = vld [vmem:[%s0 + $0x60] sm:$0xff]
    %v80 = vld [vmem:[%s0 + $0x68] sm:$0xff]
    %v81 = vld [vmem:[%s0 + $0x70] sm:$0x1]
    %v82 = vld [vmem:[%s0 + $0x78] sm:$0xff]
    %v83 = vld [vmem:[%s0 + $0x80] sm:$0xff]
    %v84 = vld [vmem:[%s0 + $0x88] sm:$0x1]
    %v85 = vld [vmem:[%s0 + $0x90] sm:$0xff]
    %v86 = vld [vmem:[%s0 + $0x98] sm:$0xff]
    %v87 = vld [vmem:[%s0 + $0xa0] sm:$0x1]
    %v88 = vld [vmem:[%s0 + $0xa8] sm:$0xff]
    %v89 = vld [vmem:[%s0 + $0xb0] sm:$0xff]
    %v90 = vld [vmem:[%s0 + $0xb8] sm:$0x1]
    %v91 = vld [vmem:[%s0 + $0xc0] sm:$0xff]
    %v92 = vld [vmem:[%s0 + $0xc8] sm:$0xff]
    %v93 = vld [vmem:[%s0 + $0xd0] sm:$0x1]
    %v94 = vld [vmem:[%s0 + $0xd8] sm:$0xff]
    %v95 = vld [vmem:[%s0 + $0xe0] sm:$0xff]
    %v96 = vld [vmem:[%s0 + $0xe8] sm:$0x1]
    %v97 = vld [vmem:[%s0 + $0xf0] sm:$0xff]
    %v98 = vld [vmem:[%s0 + $0xf8] sm:$0xff]
    %v99 = vld [vmem:[%s0 + $0x100] sm:$0x1]
    %v100 = vld [vmem:[%s0 + $0x108] sm:$0xff]
    %v101 = vld [vmem:[%s0 + $0x110] sm:$0xff]
    %v102 = vld [vmem:[%s0 + $0x118] sm:$0x1]
    %v103 = vld [vmem:[%s0 + $0x120] sm:$0xff]
    %v104 = vld [vmem:[%s0 + $0x128] sm:$0xff]
    %v105 = vld [vmem:[%s0 + $0x130] sm:$0x1]
    %v106 = vld [vmem:[%s0 + $0x138] sm:$0xff]
    %v107 = vld [vmem:[%s0 + $0x140] sm:$0xff]
    %v108 = vld [vmem:[%s0 + $0x148] sm:$0x1]
    %v109 = vld [vmem:[%s0 + $0x150] sm:$0xff]
    %v110 = vld [vmem:[%s0 + $0x158] sm:$0xff]
    %v111 = vld [vmem:[%s0 + $0x160] sm:$0x1]
    %v112 = vld [vmem:[%s0 + $0x168] sm:$0xff]
    %v113 = vld [vmem:[%s0 + $0x170] sm:$0xff]
    %v114 = vld [vmem:[%s0 + $0x178] sm:$0x1]
    %v115 = vld [vmem:[%s0 + $0x180] sm:$0xff]
    %v116 = vld [vmem:[%s0 + $0x188] sm:$0xff]
    %v117 = vld [vmem:[%s0 + $0x190] sm:$0x1]
    %v118 = vld [vmem:[%s0 + $0x198] sm:$0xff]
    %v119 = vld [vmem:[%s0 + $0x1a0] sm:$0xff]
    %v120 = vld [vmem:[%s0 + $0x1a8] sm:$0x1]
    %v121 = vld [vmem:[%s0 + $0x1b0] sm:$0xff]
    %v122 = vld [vmem:[%s0 + $0x1b8] sm:$0xff]
    %v123 = vld [vmem:[%s0 + $0x1c0] sm:$0x1]
    %v124 = vld [vmem:[%s0 + $0x1c8] sm:$0xff]
    %v125 = vld [vmem:[%s0 + $0x1d0] sm:$0xff]
    %v126 = vld [vmem:[%s0 + $0x1d8] sm:$0x1]
    %v127 = vld [vmem:[%s1] sm:$0xff]
    %v128 = vld [vmem:[%s1 + $0x8] sm:$0xff]
    %v129 = vld [vmem:[%s1 + $0x10] sm:$0x1]
    %v130 = vld [vmem:[%s1 + $0x18] sm:$0xff]
    %v131 = vld [vmem:[%s1 + $0x20] sm:$0xff]
    %v132 = vld [vmem:[%s1 + $0x28] sm:$0x1]
    %v133 = vld [vmem:[%s1 + $0x30] sm:$0xff]
    %v134 = vld [vmem:[%s1 + $0x38] sm:$0xff]
    %v135 = vld [vmem:[%s1 + $0x40] sm:$0x1]
    %v136 = vld [vmem:[%s1 + $0x48] sm:$0xff]
    %v137 = vld [vmem:[%s1 + $0x50] sm:$0xff]
    %v138 = vld [vmem:[%s1 + $0x58] sm:$0x1]
    %v139 = vld [vmem:[%s1 + $0x60] sm:$0xff]
    %v140 = vld [vmem:[%s1 + $0x68] sm:$0xff]
    %v141 = vld [vmem:[%s1 + $0x70] sm:$0x1]
    %v142 = vld [vmem:[%s1 + $0x78] sm:$0xff]
    %v143 = vld [vmem:[%s1 + $0x80] sm:$0xff]
    %v144 = vld [vmem:[%s1 + $0x88] sm:$0x1]
    %v145 = vld [vmem:[%s1 + $0x90] sm:$0xff]
    %v146 = vld [vmem:[%s1 + $0x98] sm:$0xff]
    %v147 = vld [vmem:[%s1 + $0xa0] sm:$0x1]
    %v148 = vld [vmem:[%s1 + $0xa8] sm:$0xff]
    %v149 = vld [vmem:[%s1 + $0xb0] sm:$0xff]
    %v150 = vld [vmem:[%s1 + $0xb8] sm:$0x1]
    %v151 = vld [vmem:[%s1 + $0xc0] sm:$0xff]
    %v152 = vld [vmem:[%s1 + $0xc8] sm:$0xff]
    %v153 = vld [vmem:[%s1 + $0xd0] sm:$0x1]
    %v154 = vld [vmem:[%s1 + $0xd8] sm:$0xff]
    %v155 = vld [vmem:[%s1 + $0xe0] sm:$0xff]
    %v156 = vld [vmem:[%s1 + $0xe8] sm:$0x1]
    %v157 = vld [vmem:[%s1 + $0xf0] sm:$0xff]
    %v158 = vld [vmem:[%s1 + $0xf8] sm:$0xff]
    %v159 = vld [vmem:[%s1 + $0x100] sm:$0x1]
    %v160 = vld [vmem:[%s1 + $0x108] sm:$0xff]
    %v161 = vld [vmem:[%s1 + $0x110] sm:$0xff]
    %v162 = vld [vmem:[%s1 + $0x118] sm:$0x1]
    %v163 = vld [vmem:[%s1 + $0x120] sm:$0xff]
    %v164 = vld [vmem:[%s1 + $0x128] sm:$0xff]
    %v165 = vld [vmem:[%s1 + $0x130] sm:$0x1]
    %v166 = vld [vmem:[%s1 + $0x138] sm:$0xff]
    %v167 = vld [vmem:[%s1 + $0x140] sm:$0xff]
    %v168 = vld [vmem:[%s1 + $0x148] sm:$0x1]
    %v169 = vld [vmem:[%s1 + $0x150] sm:$0xff]
    %v170 = vld [vmem:[%s1 + $0x158] sm:$0xff]
    %v171 = vld [vmem:[%s1 + $0x160] sm:$0x1]
    %v172 = vld [vmem:[%s1 + $0x168] sm:$0xff]
    %v173 = vld [vmem:[%s1 + $0x170] sm:$0xff]
    %v174 = vld [vmem:[%s1 + $0x178] sm:$0x1]
    %v175 = vld [vmem:[%s1 + $0x180] sm:$0xff]
    %v176 = vld [vmem:[%s1 + $0x188] sm:$0xff]
    %v177 = vld [vmem:[%s1 + $0x190] sm:$0x1]
    %v178 = vld [vmem:[%s1 + $0x198] sm:$0xff]
    %v179 = vld [vmem:[%s1 + $0x1a0] sm:$0xff]
    %v180 = vld [vmem:[%s1 + $0x1a8] sm:$0x1]
    %v181 = vld [vmem:[%s1 + $0x1b0] sm:$0xff]
    %v182 = vld [vmem:[%s1 + $0x1b8] sm:$0xff]
    %v183 = vld [vmem:[%s1 + $0x1c0] sm:$0x1]
    %v184 = vld [vmem:[%s1 + $0x1c8] sm:$0xff]
    %v185 = vld [vmem:[%s1 + $0x1d0] sm:$0xff]
    %v186 = vld [vmem:[%s1 + $0x1d8] sm:$0x1]
    %v187 = vld [vmem:[%s2] sm:$0xff]
    %v188 = vld [vmem:[%s2 + $0x8] sm:$0xff]
    %v189 = vld [vmem:[%s2 + $0x10] sm:$0x1]
    %v190 = vld [vmem:[%s2 + $0x18] sm:$0xff]
    %v191 = vld [vmem:[%s2 + $0x20] sm:$0xff]
    %v192 = vld [vmem:[%s2 + $0x28] sm:$0x1]
    %v193 = vld [vmem:[%s2 + $0x30] sm:$0xff]
    %v194 = vld [vmem:[%s2 + $0x38] sm:$0xff]
    %v195 = vld [vmem:[%s2 + $0x40] sm:$0x1]
    %v196 = vld [vmem:[%s2 + $0x48] sm:$0xff]
    %v197 = vld [vmem:[%s2 + $0x50] sm:$0xff]
    %v198 = vld [vmem:[%s2 + $0x58] sm:$0x1]
    %v199 = vld [vmem:[%s2 + $0x60] sm:$0xff]
    %v200 = vld [vmem:[%s2 + $0x68] sm:$0xff]
    %v201 = vld [vmem:[%s2 + $0x70] sm:$0x1]
    %v202 = vld [vmem:[%s2 + $0x78] sm:$0xff]
    %v203 = vld [vmem:[%s2 + $0x80] sm:$0xff]
    %v204 = vld [vmem:[%s2 + $0x88] sm:$0x1]
    %v205 = vld [vmem:[%s2 + $0x90] sm:$0xff]
    %v206 = vld [vmem:[%s2 + $0x98] sm:$0xff]
    %v207 = vld [vmem:[%s2 + $0xa0] sm:$0x1]
    %v208 = vld [vmem:[%s2 + $0xa8] sm:$0xff]
    %v209 = vld [vmem:[%s2 + $0xb0] sm:$0xff]
    %v210 = vld [vmem:[%s2 + $0xb8] sm:$0x1]
    %v211 = vld [vmem:[%s2 + $0xc0] sm:$0xff]
    %v212 = vld [vmem:[%s2 + $0xc8] sm:$0xff]
    %v213 = vld [vmem:[%s2 + $0xd0] sm:$0x1]
    %v214 = vld [vmem:[%s2 + $0xd8] sm:$0xff]
    %v215 = vld [vmem:[%s2 + $0xe0] sm:$0xff]
    %v216 = vld [vmem:[%s2 + $0xe8] sm:$0x1]
    %v217 = vld [vmem:[%s2 + $0xf0] sm:$0xff]
    %v218 = vld [vmem:[%s2 + $0xf8] sm:$0xff]
    %v219 = vld [vmem:[%s2 + $0x100] sm:$0x1]
    %v220 = vld [vmem:[%s2 + $0x108] sm:$0xff]
    %v221 = vld [vmem:[%s2 + $0x110] sm:$0xff]
    %v222 = vld [vmem:[%s2 + $0x118] sm:$0x1]
    %v223 = vld [vmem:[%s2 + $0x120] sm:$0xff]
    %v224 = vld [vmem:[%s2 + $0x128] sm:$0xff]
    %v225 = vld [vmem:[%s2 + $0x130] sm:$0x1]
    %v226 = vld [vmem:[%s2 + $0x138] sm:$0xff]
    %v227 = vld [vmem:[%s2 + $0x140] sm:$0xff]
    %v228 = vld [vmem:[%s2 + $0x148] sm:$0x1]
    %v229 = vld [vmem:[%s2 + $0x150] sm:$0xff]
    %v230 = vld [vmem:[%s2 + $0x158] sm:$0xff]
    %v231 = vld [vmem:[%s2 + $0x160] sm:$0x1]
    %v232 = vld [vmem:[%s2 + $0x168] sm:$0xff]
    %v233 = vld [vmem:[%s2 + $0x170] sm:$0xff]
    %v234 = vld [vmem:[%s2 + $0x178] sm:$0x1]
    %v235 = vld [vmem:[%s2 + $0x180] sm:$0xff]
    %v236 = vld [vmem:[%s2 + $0x188] sm:$0xff]
    %v237 = vld [vmem:[%s2 + $0x190] sm:$0x1]
    %v238 = vld [vmem:[%s2 + $0x198] sm:$0xff]
    %v239 = vld [vmem:[%s2 + $0x1a0] sm:$0xff]
    %v240 = vld [vmem:[%s2 + $0x1a8] sm:$0x1]
    %v241 = vld [vmem:[%s2 + $0x1b0] sm:$0xff]
    %v242 = vld [vmem:[%s2 + $0x1b8] sm:$0xff]
    %v243 = vld [vmem:[%s2 + $0x1c0] sm:$0x1]
    %v244 = vld [vmem:[%s2 + $0x1c8] sm:$0xff]
    %v245 = vld [vmem:[%s2 + $0x1d0] sm:$0xff]
    %v246 = vld [vmem:[%s2 + $0x1d8] sm:$0x1]
    %v247 = vld [vmem:[%s3] sm:$0xff]
    %v248 = vld [vmem:[%s3 + $0x8] sm:$0xff]
    %v249 = vld [vmem:[%s3 + $0x10] sm:$0x1]
    %v250 = vld [vmem:[%s3 + $0x18] sm:$0xff]
    %v251 = vld [vmem:[%s3 + $0x20] sm:$0xff]
    %v252 = vld [vmem:[%s3 + $0x28] sm:$0x1]
    %v253 = vld [vmem:[%s3 + $0x30] sm:$0xff]
    %v254 = vld [vmem:[%s3 + $0x38] sm:$0xff]
    %v255 = vld [vmem:[%s3 + $0x40] sm:$0x1]
    %v256 = vld [vmem:[%s3 + $0x48] sm:$0xff]
    %v257 = vld [vmem:[%s3 + $0x50] sm:$0xff]
    %v258 = vld [vmem:[%s3 + $0x58] sm:$0x1]
    %v259 = vld [vmem:[%s3 + $0x60] sm:$0xff]
    %v260 = vld [vmem:[%s3 + $0x68] sm:$0xff]
    %v261 = vld [vmem:[%s3 + $0x70] sm:$0x1]
    %v262 = vld [vmem:[%s3 + $0x78] sm:$0xff]
    %v263 = vld [vmem:[%s3 + $0x80] sm:$0xff]
    %v264 = vld [vmem:[%s3 + $0x88] sm:$0x1]
    %v265 = vld [vmem:[%s3 + $0x90] sm:$0xff]
    %v266 = vld [vmem:[%s3 + $0x98] sm:$0xff]
    %v267 = vld [vmem:[%s3 + $0xa0] sm:$0x1]
    %v268 = vld [vmem:[%s3 + $0xa8] sm:$0xff]
    %v269 = vld [vmem:[%s3 + $0xb0] sm:$0xff]
    %v270 = vld [vmem:[%s3 + $0xb8] sm:$0x1]
    %v271 = vld [vmem:[%s3 + $0xc0] sm:$0xff]
    %v272 = vld [vmem:[%s3 + $0xc8] sm:$0xff]
    %v273 = vld [vmem:[%s3 + $0xd0] sm:$0x1]
    %v274 = vld [vmem:[%s3 + $0xd8] sm:$0xff]
    %v275 = vld [vmem:[%s3 + $0xe0] sm:$0xff]
    %v276 = vld [vmem:[%s3 + $0xe8] sm:$0x1]
    %v277 = vld [vmem:[%s3 + $0xf0] sm:$0xff]
    %v278 = vld [vmem:[%s3 + $0xf8] sm:$0xff]
    %v279 = vld [vmem:[%s3 + $0x100] sm:$0x1]
    %v280 = vld [vmem:[%s3 + $0x108] sm:$0xff]
    %v281 = vld [vmem:[%s3 + $0x110] sm:$0xff]
    %v282 = vld [vmem:[%s3 + $0x118] sm:$0x1]
    %v283 = vld [vmem:[%s3 + $0x120] sm:$0xff]
    %v284 = vld [vmem:[%s3 + $0x128] sm:$0xff]
    %v285 = vld [vmem:[%s3 + $0x130] sm:$0x1]
    %v286 = vld [vmem:[%s3 + $0x138] sm:$0xff]
    %v287 = vld [vmem:[%s3 + $0x140] sm:$0xff]
    %v288 = vld [vmem:[%s3 + $0x148] sm:$0x1]
    %v289 = vld [vmem:[%s3 + $0x150] sm:$0xff]
    %v290 = vld [vmem:[%s3 + $0x158] sm:$0xff]
    %v291 = vld [vmem:[%s3 + $0x160] sm:$0x1]
    %v292 = vld [vmem:[%s3 + $0x168] sm:$0xff]
    %v293 = vld [vmem:[%s3 + $0x170] sm:$0xff]
    %v294 = vld [vmem:[%s3 + $0x178] sm:$0x1]
    %v295 = vld [vmem:[%s3 + $0x180] sm:$0xff]
    %v296 = vld [vmem:[%s3 + $0x188] sm:$0xff]
    %v297 = vld [vmem:[%s3 + $0x190] sm:$0x1]
    %v298 = vld [vmem:[%s3 + $0x198] sm:$0xff]
    %v299 = vld [vmem:[%s3 + $0x1a0] sm:$0xff]
    %v300 = vld [vmem:[%s3 + $0x1a8] sm:$0x1]
    %v301 = vld [vmem:[%s3 + $0x1b0] sm:$0xff]
    %v302 = vld [vmem:[%s3 + $0x1b8] sm:$0xff]
    %v303 = vld [vmem:[%s3 + $0x1c0] sm:$0x1]
    %v304 = vld [vmem:[%s3 + $0x1c8] sm:$0xff]
    %v305 = vld [vmem:[%s3 + $0x1d0] sm:$0xff]
    %v306 = vld [vmem:[%s3 + $0x1d8] sm:$0x1]
    %v307 = vld [vmem:[%s4] sm:$0xff]
    %v308 = vld [vmem:[%s4 + $0x8] sm:$0xff]
    %v309 = vld [vmem:[%s4 + $0x10] sm:$0xff]
    %v310 = vld [vmem:[%s4 + $0x18] sm:$0xff]
    %v311 = vld [vmem:[%s4 + $0x20] sm:$0xff]
    %v312 = vld [vmem:[%s4 + $0x28] sm:$0xff]
    %v313 = vld [vmem:[%s4 + $0x30] sm:$0xff]
    %v314 = vld [vmem:[%s4 + $0x38] sm:$0xff]
    %v315 = vld [vmem:[%s4 + $0x40] sm:$0xff]
    %v316 = vld [vmem:[%s4 + $0x48] sm:$0xff]
    %v317 = vld [vmem:[%s4 + $0x50] sm:$0xff]
    %v318 = vld [vmem:[%s4 + $0x58] sm:$0xff]
    %v319 = vld [vmem:[%s4 + $0x60] sm:$0xff]
    %v320 = vld [vmem:[%s4 + $0x68] sm:$0xff]
    %v321 = vld [vmem:[%s4 + $0x70] sm:$0xff]
    %v322 = vld [vmem:[%s4 + $0x78] sm:$0xff]
    %v323 = vld [vmem:[%s4 + $0x80] sm:$0xff]
    %v324 = vld [vmem:[%s4 + $0x88] sm:$0xff]
    %v325 = vld [vmem:[%s4 + $0x90] sm:$0xff]
    %v326 = vld [vmem:[%s4 + $0x98] sm:$0xff]
    %v327 = vld [vmem:[%s4 + $0xa0] sm:$0xff]
    %v328 = vld [vmem:[%s4 + $0xa8] sm:$0xff]
    %v329 = vld [vmem:[%s4 + $0xb0] sm:$0xff]
    %v330 = vld [vmem:[%s4 + $0xb8] sm:$0xff]
    %v331 = vld [vmem:[%s4 + $0xc0] sm:$0xff]
    %v332 = vld [vmem:[%s4 + $0xc8] sm:$0xff]
    %v333 = vld [vmem:[%s4 + $0xd0] sm:$0xff]
    %v334 = vld [vmem:[%s4 + $0xd8] sm:$0xff]
    %v335 = vld [vmem:[%s4 + $0xe0] sm:$0xff]
    %v336 = vld [vmem:[%s4 + $0xe8] sm:$0xff]
    %v337 = vld [vmem:[%s4 + $0xf0] sm:$0xff]
    %v338 = vld [vmem:[%s4 + $0xf8] sm:$0xff]
    %v339 = vld [vmem:[%s4 + $0x100] sm:$0xff]
    %v340 = vld [vmem:[%s4 + $0x108] sm:$0xff]
    %v341 = vld [vmem:[%s4 + $0x110] sm:$0xff]
    %v342 = vld [vmem:[%s4 + $0x118] sm:$0xff]
    %v343 = vld [vmem:[%s5] sm:$0xff]
    %v344 = vld [vmem:[%s5 + $0x8] sm:$0xff]
    %v345 = vld [vmem:[%s5 + $0x10] sm:$0xff]
    %v346 = vld [vmem:[%s5 + $0x18] sm:$0xff]
    %v347 = vld [vmem:[%s5 + $0x20] sm:$0xff]
    %v348 = vld [vmem:[%s5 + $0x28] sm:$0xff]
    %v349 = vld [vmem:[%s5 + $0x30] sm:$0xff]
    %v350 = vld [vmem:[%s5 + $0x38] sm:$0xff]
    %v351 = vld [vmem:[%s5 + $0x40] sm:$0xff]
    %v352 = vld [vmem:[%s5 + $0x48] sm:$0xff]
    %v353 = vld [vmem:[%s5 + $0x50] sm:$0xff]
    %v354 = vld [vmem:[%s5 + $0x58] sm:$0xff]
    %v355 = vld [vmem:[%s5 + $0x60] sm:$0xff]
    %v356 = vld [vmem:[%s5 + $0x68] sm:$0xff]
    %v357 = vld [vmem:[%s5 + $0x70] sm:$0xff]
    %v358 = vld [vmem:[%s5 + $0x78] sm:$0xff]
    %v359 = vld [vmem:[%s5 + $0x80] sm:$0xff]
    %v360 = vld [vmem:[%s5 + $0x88] sm:$0xff]
    %v361 = vld [vmem:[%s5 + $0x90] sm:$0xff]
    %v362 = vld [vmem:[%s5 + $0x98] sm:$0xff]
    %v363 = vld [vmem:[%s5 + $0xa0] sm:$0xff]
    %v364 = vld [vmem:[%s5 + $0xa8] sm:$0xff]
    %v365 = vld [vmem:[%s5 + $0xb0] sm:$0xff]
    %v366 = vld [vmem:[%s5 + $0xb8] sm:$0xff]
    %v367 = vld [vmem:[%s5 + $0xc0] sm:$0xff]
    %v368 = vld [vmem:[%s5 + $0xc8] sm:$0xff]
    %v369 = vld [vmem:[%s5 + $0xd0] sm:$0xff]
    %v370 = vld [vmem:[%s5 + $0xd8] sm:$0xff]
    %v371 = vld [vmem:[%s5 + $0xe0] sm:$0xff]
    %v372 = vld [vmem:[%s5 + $0xe8] sm:$0xff]
    %v373 = vld [vmem:[%s5 + $0xf0] sm:$0xff]
    %v374 = vld [vmem:[%s5 + $0xf8] sm:$0xff]
    %v375 = vld [vmem:[%s5 + $0x100] sm:$0xff]
    %v376 = vld [vmem:[%s5 + $0x108] sm:$0xff]
    %v377 = vld [vmem:[%s5 + $0x110] sm:$0xff]
    %v378 = vld [vmem:[%s5 + $0x118] sm:$0xff]
    %v379 = vld [vmem:[%s6] sm:$0xff]
    %v380 = vld [vmem:[%s6 + $0x8] sm:$0xff]
    %v381 = vld [vmem:[%s6 + $0x10] sm:$0xff]
    %v382 = vld [vmem:[%s6 + $0x18] sm:$0xff]
    %v383 = vld [vmem:[%s6 + $0x20] sm:$0xff]
    %v384 = vld [vmem:[%s6 + $0x28] sm:$0xff]
    %v385 = vld [vmem:[%s6 + $0x30] sm:$0xff]
    %v386 = vld [vmem:[%s6 + $0x38] sm:$0xff]
    %v387 = vld [vmem:[%s6 + $0x40] sm:$0xff]
    %v388 = vld [vmem:[%s6 + $0x48] sm:$0xff]
    %v389 = vld [vmem:[%s6 + $0x50] sm:$0xff]
    %v390 = vld [vmem:[%s6 + $0x58] sm:$0xff]
    %v391 = vld [vmem:[%s6 + $0x60] sm:$0xff]
    %v392 = vld [vmem:[%s6 + $0x68] sm:$0xff]
    %v393 = vld [vmem:[%s6 + $0x70] sm:$0xff]
    %v394 = vld [vmem:[%s6 + $0x78] sm:$0xff]
    %v395 = vld [vmem:[%s6 + $0x80] sm:$0xff]
    %v396 = vld [vmem:[%s6 + $0x88] sm:$0xff]
    %v397 = vld [vmem:[%s6 + $0x90] sm:$0xff]
    %v398 = vld [vmem:[%s6 + $0x98] sm:$0xff]
    %v399 = vld [vmem:[%s6 + $0xa0] sm:$0xff]
    %v400 = vld [vmem:[%s6 + $0xa8] sm:$0xff]
    %v401 = vld [vmem:[%s6 + $0xb0] sm:$0xff]
    %v402 = vld [vmem:[%s6 + $0xb8] sm:$0xff]
    %v403 = vld [vmem:[%s6 + $0xc0] sm:$0xff]
    %v404 = vld [vmem:[%s6 + $0xc8] sm:$0xff]
    %v405 = vld [vmem:[%s6 + $0xd0] sm:$0xff]
    %v406 = vld [vmem:[%s6 + $0xd8] sm:$0xff]
    %v407 = vld [vmem:[%s6 + $0xe0] sm:$0xff]
    %v408 = vld [vmem:[%s6 + $0xe8] sm:$0xff]
    %v409 = vld [vmem:[%s6 + $0xf0] sm:$0xff]
    %v410 = vld [vmem:[%s6 + $0xf8] sm:$0xff]
    %v411 = vld [vmem:[%s6 + $0x100] sm:$0xff]
    %v412 = vld [vmem:[%s6 + $0x108] sm:$0xff]
    %v413 = vld [vmem:[%s6 + $0x110] sm:$0xff]
    %v414 = vld [vmem:[%s6 + $0x118] sm:$0xff]
    %v415 = vld [vmem:[%s7] sm:$0xff]
    %v416 = vld [vmem:[%s7 + $0x8] sm:$0xff]
    %v417 = vld [vmem:[%s7 + $0x10] sm:$0xff]
    %v418 = vld [vmem:[%s7 + $0x18] sm:$0xff]
    %v419 = vld [vmem:[%s7 + $0x20] sm:$0xff]
    %v420 = vld [vmem:[%s7 + $0x28] sm:$0xff]
    %v421 = vld [vmem:[%s7 + $0x30] sm:$0xff]
    %v422 = vld [vmem:[%s7 + $0x38] sm:$0xff]
    %v423 = vld [vmem:[%s7 + $0x40] sm:$0xff]
    %v424 = vld [vmem:[%s7 + $0x48] sm:$0xff]
    %v425 = vld [vmem:[%s7 + $0x50] sm:$0xff]
    %v426 = vld [vmem:[%s7 + $0x58] sm:$0xff]
    %v427 = vld [vmem:[%s7 + $0x60] sm:$0xff]
    %v428 = vld [vmem:[%s7 + $0x68] sm:$0xff]
    %v429 = vld [vmem:[%s7 + $0x70] sm:$0xff]
    %v430 = vld [vmem:[%s7 + $0x78] sm:$0xff]
    %v431 = vld [vmem:[%s7 + $0x80] sm:$0xff]
    %v432 = vld [vmem:[%s7 + $0x88] sm:$0xff]
    %v433 = vld [vmem:[%s7 + $0x90] sm:$0xff]
    %v434 = vld [vmem:[%s7 + $0x98] sm:$0xff]
    %v435 = vld [vmem:[%s7 + $0xa0] sm:$0xff]
    %v436 = vld [vmem:[%s7 + $0xa8] sm:$0xff]
    %v437 = vld [vmem:[%s7 + $0xb0] sm:$0xff]
    %v438 = vld [vmem:[%s7 + $0xb8] sm:$0xff]
    %v439 = vld [vmem:[%s7 + $0xc0] sm:$0xff]
    %v440 = vld [vmem:[%s7 + $0xc8] sm:$0xff]
    %v441 = vld [vmem:[%s7 + $0xd0] sm:$0xff]
    %v442 = vld [vmem:[%s7 + $0xd8] sm:$0xff]
    %v443 = vld [vmem:[%s7 + $0xe0] sm:$0xff]
    %v444 = vld [vmem:[%s7 + $0xe8] sm:$0xff]
    %v445 = vld [vmem:[%s7 + $0xf0] sm:$0xff]
    %v446 = vld [vmem:[%s7 + $0xf8] sm:$0xff]
    %v447 = vld [vmem:[%s7 + $0x100] sm:$0xff]
    %v448 = vld [vmem:[%s7 + $0x108] sm:$0xff]
    %v449 = vld [vmem:[%s7 + $0x110] sm:$0xff]
    %v450 = vld [vmem:[%s7 + $0x118] sm:$0xff]
    %v451 = vld [vmem:[%s8] sm:$0x7]
    %v452 = vld [vmem:[%s8 + $0x4] sm:$0x7]
    %v453 = vld [vmem:[%s8 + $0x8] sm:$0x7]
    %v454 = vld [vmem:[%s9] sm:$0x1]
    %v455 = vld [vmem:[%s10] sm:$0x1]
    %v456 = vld [vmem:[%s11] sm:$0xf]
    %v457 = vld [vmem:[%s12] sm:$0x1]
    %v458 = vld [vmem:[%s13] sm:$0x1]
    %v459 = vld [vmem:[%s14] sm:$0x7]
    %v460 = vld [vmem:[%s14 + $0x4] sm:$0x7]
    %v461 = vld [vmem:[%s14 + $0x8] sm:$0x7]
    %v462 = vld [vmem:[%s15] sm:$0x1]
    %v463 = vld [vmem:[%s16] sm:$0x1]
    %v464 = vld [vmem:[%s17] sm:$0xf]
    %v465 = vld [vmem:[%s17 + $0x4] sm:$0xf]
    %v466 = vld [vmem:[%s17 + $0x8] sm:$0xf]
    %v467 = vld [vmem:[%s17 + $0xc] sm:$0xf]
    %v468 = vld [vmem:[%s18] sm:$0x1]
    %v469 = vld [vmem:[%s19] sm:$0x1]
    %v470 = vlaneseq
    %v471 = vshrl.u32 %v470, 7
    %v472 = vsub.s32 0, %v471
    %v473 = vrot.slane %v451, %v472
    %v474 = vmul.f32 %v67, %v473
    %v475 = vmul.f32 %v68, %v473
    %v476 = vmul.f32 %v70, %v473
    %v477 = vmul.f32 %v71, %v473
    %v478 = vmul.f32 %v73, %v473
    %v479 = vmul.f32 %v74, %v473
    %v480 = vmul.f32 %v76, %v473
    %v481 = vmul.f32 %v77, %v473
    %v482 = vmul.f32 %v79, %v473
    %v483 = vmul.f32 %v80, %v473
    %v484 = vmul.f32 %v82, %v473
    %v485 = vmul.f32 %v83, %v473
    %v486 = vmul.f32 %v85, %v473
    %v487 = vmul.f32 %v86, %v473
    %v488 = vmul.f32 %v88, %v473
    %v489 = vmul.f32 %v89, %v473
    %v490 = vmul.f32 %v91, %v473
    %v491 = vmul.f32 %v92, %v473
    %v492 = vmul.f32 %v97, %v473
    %v493 = vmul.f32 %v98, %v473
    %v494 = vmul.f32 %v100, %v473
    %v495 = vmul.f32 %v101, %v473
    %v496 = vmul.f32 %v103, %v473
    %v497 = vmul.f32 %v104, %v473
    %v498 = vmul.f32 %v106, %v473
    %v499 = vmul.f32 %v107, %v473
    %v500 = vmul.f32 %v109, %v473
    %v501 = vmul.f32 %v110, %v473
    %v502 = vmul.f32 %v112, %v473
    %v503 = vmul.f32 %v113, %v473
    %v504 = vmul.f32 %v115, %v473
    %v505 = vmul.f32 %v116, %v473
    %v506 = vmul.f32 %v118, %v473
    %v507 = vmul.f32 %v119, %v473
    %v508 = vmul.f32 %v121, %v473
    %v509 = vmul.f32 %v122, %v473
    %v510 = vadd.f32 %v474, 0.0
    %v511 = vadd.f32 %v475, 0.0
    %v512 = vadd.f32 %v476, 0.0
    %v513 = vadd.f32 %v477, 0.0
    %v514 = vadd.f32 %v478, 0.0
    %v515 = vadd.f32 %v479, 0.0
    %v516 = vadd.f32 %v480, 0.0
    %v517 = vadd.f32 %v481, 0.0
    %v518 = vadd.f32 %v482, 0.0
    %v519 = vadd.f32 %v483, 0.0
    %v520 = vadd.f32 %v484, 0.0
    %v521 = vadd.f32 %v485, 0.0
    %v522 = vadd.f32 %v486, 0.0
    %v523 = vadd.f32 %v487, 0.0
    %v524 = vadd.f32 %v488, 0.0
    %v525 = vadd.f32 %v489, 0.0
    %v526 = vadd.f32 %v490, 0.0
    %v527 = vadd.f32 %v491, 0.0
    %v528 = vadd.f32 %v492, 0.0
    %v529 = vadd.f32 %v493, 0.0
    %v530 = vadd.f32 %v494, 0.0
    %v531 = vadd.f32 %v495, 0.0
    %v532 = vadd.f32 %v496, 0.0
    %v533 = vadd.f32 %v497, 0.0
    %v534 = vadd.f32 %v498, 0.0
    %v535 = vadd.f32 %v499, 0.0
    %v536 = vadd.f32 %v500, 0.0
    %v537 = vadd.f32 %v501, 0.0
    %v538 = vadd.f32 %v502, 0.0
    %v539 = vadd.f32 %v503, 0.0
    %v540 = vadd.f32 %v504, 0.0
    %v541 = vadd.f32 %v505, 0.0
    %v542 = vadd.f32 %v506, 0.0
    %v543 = vadd.f32 %v507, 0.0
    %v544 = vadd.f32 %v508, 0.0
    %v545 = vadd.f32 %v509, 0.0
    %v546 = vlaneseq
    %v547 = vshrl.u32 %v546, 7
    %v548 = vsub.s32 0, %v547
    %v549 = vrot.slane %v452, %v548
    %v550 = vmul.f32 %v187, %v549
    %v551 = vmul.f32 %v188, %v549
    %v552 = vmul.f32 %v190, %v549
    %v553 = vmul.f32 %v191, %v549
    %v554 = vmul.f32 %v193, %v549
    %v555 = vmul.f32 %v194, %v549
    %v556 = vmul.f32 %v196, %v549
    %v557 = vmul.f32 %v197, %v549
    %v558 = vmul.f32 %v199, %v549
    %v559 = vmul.f32 %v200, %v549
    %v560 = vmul.f32 %v202, %v549
    %v561 = vmul.f32 %v203, %v549
    %v562 = vmul.f32 %v205, %v549
    %v563 = vmul.f32 %v206, %v549
    %v564 = vmul.f32 %v208, %v549
    %v565 = vmul.f32 %v209, %v549
    %v566 = vmul.f32 %v211, %v549
    %v567 = vmul.f32 %v212, %v549
    %v568 = vmul.f32 %v217, %v549
    %v569 = vmul.f32 %v218, %v549
    %v570 = vmul.f32 %v220, %v549
    %v571 = vmul.f32 %v221, %v549
    %v572 = vmul.f32 %v223, %v549
    %v573 = vmul.f32 %v224, %v549
    %v574 = vmul.f32 %v226, %v549
    %v575 = vmul.f32 %v227, %v549
    %v576 = vmul.f32 %v229, %v549
    %v577 = vmul.f32 %v230, %v549
    %v578 = vmul.f32 %v232, %v549
    %v579 = vmul.f32 %v233, %v549
    %v580 = vmul.f32 %v235, %v549
    %v581 = vmul.f32 %v236, %v549
    %v582 = vmul.f32 %v238, %v549
    %v583 = vmul.f32 %v239, %v549
    %v584 = vmul.f32 %v241, %v549
    %v585 = vmul.f32 %v242, %v549
    %v586 = vadd.f32 %v510, %v550
    %v587 = vadd.f32 %v511, %v551
    %v588 = vadd.f32 %v512, %v552
    %v589 = vadd.f32 %v513, %v553
    %v590 = vadd.f32 %v514, %v554
    %v591 = vadd.f32 %v515, %v555
    %v592 = vadd.f32 %v516, %v556
    %v593 = vadd.f32 %v517, %v557
    %v594 = vadd.f32 %v518, %v558
    %v595 = vadd.f32 %v519, %v559
    %v596 = vadd.f32 %v520, %v560
    %v597 = vadd.f32 %v521, %v561
    %v598 = vadd.f32 %v522, %v562
    %v599 = vadd.f32 %v523, %v563
    %v600 = vadd.f32 %v524, %v564
    %v601 = vadd.f32 %v525, %v565
    %v602 = vadd.f32 %v526, %v566
    %v603 = vadd.f32 %v527, %v567
    %v604 = vadd.f32 %v528, %v568
    %v605 = vadd.f32 %v529, %v569
    %v606 = vadd.f32 %v530, %v570
    %v607 = vadd.f32 %v531, %v571
    %v608 = vadd.f32 %v532, %v572
    %v609 = vadd.f32 %v533, %v573
    %v610 = vadd.f32 %v534, %v574
    %v611 = vadd.f32 %v535, %v575
    %v612 = vadd.f32 %v536, %v576
    %v613 = vadd.f32 %v537, %v577
    %v614 = vadd.f32 %v538, %v578
    %v615 = vadd.f32 %v539, %v579
    %v616 = vadd.f32 %v540, %v580
    %v617 = vadd.f32 %v541, %v581
    %v618 = vadd.f32 %v542, %v582
    %v619 = vadd.f32 %v543, %v583
    %v620 = vadd.f32 %v544, %v584
    %v621 = vadd.f32 %v545, %v585
    %v622 = vlaneseq
    %v623 = vshrl.u32 %v622, 7
    %v624 = vsub.s32 0, %v623
    %v625 = vrot.slane %v453, %v624
    %v626 = vmul.f32 %v70, %v625
    %v627 = vmul.f32 %v71, %v625
    %v628 = vmul.f32 %v73, %v625
    %v629 = vmul.f32 %v74, %v625
    %v630 = vmul.f32 %v76, %v625
    %v631 = vmul.f32 %v77, %v625
    %v632 = vmul.f32 %v79, %v625
    %v633 = vmul.f32 %v80, %v625
    %v634 = vmul.f32 %v82, %v625
    %v635 = vmul.f32 %v83, %v625
    %v636 = vmul.f32 %v85, %v625
    %v637 = vmul.f32 %v86, %v625
    %v638 = vmul.f32 %v88, %v625
    %v639 = vmul.f32 %v89, %v625
    %v640 = vmul.f32 %v91, %v625
    %v641 = vmul.f32 %v92, %v625
    %v642 = vmul.f32 %v94, %v625
    %v643 = vmul.f32 %v95, %v625
    %v644 = vmul.f32 %v100, %v625
    %v645 = vmul.f32 %v101, %v625
    %v646 = vmul.f32 %v103, %v625
    %v647 = vmul.f32 %v104, %v625
    %v648 = vmul.f32 %v106, %v625
    %v649 = vmul.f32 %v107, %v625
    %v650 = vmul.f32 %v109, %v625
    %v651 = vmul.f32 %v110, %v625
    %v652 = vmul.f32 %v112, %v625
    %v653 = vmul.f32 %v113, %v625
    %v654 = vmul.f32 %v115, %v625
    %v655 = vmul.f32 %v116, %v625
    %v656 = vmul.f32 %v118, %v625
    %v657 = vmul.f32 %v119, %v625
    %v658 = vmul.f32 %v121, %v625
    %v659 = vmul.f32 %v122, %v625
    %v660 = vmul.f32 %v124, %v625
    %v661 = vmul.f32 %v125, %v625
    %v662 = vadd.f32 %v586, %v626
    %v663 = vadd.f32 %v587, %v627
    %v664 = vadd.f32 %v588, %v628
    %v665 = vadd.f32 %v589, %v629
    %v666 = vadd.f32 %v590, %v630
    %v667 = vadd.f32 %v591, %v631
    %v668 = vadd.f32 %v592, %v632
    %v669 = vadd.f32 %v593, %v633
    %v670 = vadd.f32 %v594, %v634
    %v671 = vadd.f32 %v595, %v635
    %v672 = vadd.f32 %v596, %v636
    %v673 = vadd.f32 %v597, %v637
    %v674 = vadd.f32 %v598, %v638
    %v675 = vadd.f32 %v599, %v639
    %v676 = vadd.f32 %v600, %v640
    %v677 = vadd.f32 %v601, %v641
    %v678 = vadd.f32 %v602, %v642
    %v679 = vadd.f32 %v603, %v643
    %v680 = vadd.f32 %v604, %v644
    %v681 = vadd.f32 %v605, %v645
    %v682 = vadd.f32 %v606, %v646
    %v683 = vadd.f32 %v607, %v647
    %v684 = vadd.f32 %v608, %v648
    %v685 = vadd.f32 %v609, %v649
    %v686 = vadd.f32 %v610, %v650
    %v687 = vadd.f32 %v611, %v651
    %v688 = vadd.f32 %v612, %v652
    %v689 = vadd.f32 %v613, %v653
    %v690 = vadd.f32 %v614, %v654
    %v691 = vadd.f32 %v615, %v655
    %v692 = vadd.f32 %v616, %v656
    %v693 = vadd.f32 %v617, %v657
    %v694 = vadd.f32 %v618, %v658
    %v695 = vadd.f32 %v619, %v659
    %v696 = vadd.f32 %v620, %v660
    %v697 = vadd.f32 %v621, %v661
    %v698 = vlaneseq
    %v699 = vshrl.u32 %v698, 7
    %v700 = vsub.s32 1, %v699
    %v701 = vrot.slane %v451, %v700
    %v702 = vmul.f32 %v127, %v701
    %v703 = vmul.f32 %v128, %v701
    %v704 = vmul.f32 %v130, %v701
    %v705 = vmul.f32 %v131, %v701
    %v706 = vmul.f32 %v133, %v701
    %v707 = vmul.f32 %v134, %v701
    %v708 = vmul.f32 %v136, %v701
    %v709 = vmul.f32 %v137, %v701
    %v710 = vmul.f32 %v139, %v701
    %v711 = vmul.f32 %v140, %v701
    %v712 = vmul.f32 %v142, %v701
    %v713 = vmul.f32 %v143, %v701
    %v714 = vmul.f32 %v145, %v701
    %v715 = vmul.f32 %v146, %v701
    %v716 = vmul.f32 %v148, %v701
    %v717 = vmul.f32 %v149, %v701
    %v718 = vmul.f32 %v151, %v701
    %v719 = vmul.f32 %v152, %v701
    %v720 = vmul.f32 %v157, %v701
    %v721 = vmul.f32 %v158, %v701
    %v722 = vmul.f32 %v160, %v701
    %v723 = vmul.f32 %v161, %v701
    %v724 = vmul.f32 %v163, %v701
    %v725 = vmul.f32 %v164, %v701
    %v726 = vmul.f32 %v166, %v701
    %v727 = vmul.f32 %v167, %v701
    %v728 = vmul.f32 %v169, %v701
    %v729 = vmul.f32 %v170, %v701
    %v730 = vmul.f32 %v172, %v701
    %v731 = vmul.f32 %v173, %v701
    %v732 = vmul.f32 %v175, %v701
    %v733 = vmul.f32 %v176, %v701
    %v734 = vmul.f32 %v178, %v701
    %v735 = vmul.f32 %v179, %v701
    %v736 = vmul.f32 %v181, %v701
    %v737 = vmul.f32 %v182, %v701
    %v738 = vadd.f32 %v662, %v702
    %v739 = vadd.f32 %v663, %v703
    %v740 = vadd.f32 %v664, %v704
    %v741 = vadd.f32 %v665, %v705
    %v742 = vadd.f32 %v666, %v706
    %v743 = vadd.f32 %v667, %v707
    %v744 = vadd.f32 %v668, %v708
    %v745 = vadd.f32 %v669, %v709
    %v746 = vadd.f32 %v670, %v710
    %v747 = vadd.f32 %v671, %v711
    %v748 = vadd.f32 %v672, %v712
    %v749 = vadd.f32 %v673, %v713
    %v750 = vadd.f32 %v674, %v714
    %v751 = vadd.f32 %v675, %v715
    %v752 = vadd.f32 %v676, %v716
    %v753 = vadd.f32 %v677, %v717
    %v754 = vadd.f32 %v678, %v718
    %v755 = vadd.f32 %v679, %v719
    %v756 = vadd.f32 %v680, %v720
    %v757 = vadd.f32 %v681, %v721
    %v758 = vadd.f32 %v682, %v722
    %v759 = vadd.f32 %v683, %v723
    %v760 = vadd.f32 %v684, %v724
    %v761 = vadd.f32 %v685, %v725
    %v762 = vadd.f32 %v686, %v726
    %v763 = vadd.f32 %v687, %v727
    %v764 = vadd.f32 %v688, %v728
    %v765 = vadd.f32 %v689, %v729
    %v766 = vadd.f32 %v690, %v730
    %v767 = vadd.f32 %v691, %v731
    %v768 = vadd.f32 %v692, %v732
    %v769 = vadd.f32 %v693, %v733
    %v770 = vadd.f32 %v694, %v734
    %v771 = vadd.f32 %v695, %v735
    %v772 = vadd.f32 %v696, %v736
    %v773 = vadd.f32 %v697, %v737
    %v774 = vlaneseq
    %v775 = vshrl.u32 %v774, 7
    %v776 = vsub.s32 1, %v775
    %v777 = vrot.slane %v452, %v776
    %v778 = vmul.f32 %v247, %v777
    %v779 = vmul.f32 %v248, %v777
    %v780 = vmul.f32 %v250, %v777
    %v781 = vmul.f32 %v251, %v777
    %v782 = vmul.f32 %v253, %v777
    %v783 = vmul.f32 %v254, %v777
    %v784 = vmul.f32 %v256, %v777
    %v785 = vmul.f32 %v257, %v777
    %v786 = vmul.f32 %v259, %v777
    %v787 = vmul.f32 %v260, %v777
    %v788 = vmul.f32 %v262, %v777
    %v789 = vmul.f32 %v263, %v777
    %v790 = vmul.f32 %v265, %v777
    %v791 = vmul.f32 %v266, %v777
    %v792 = vmul.f32 %v268, %v777
    %v793 = vmul.f32 %v269, %v777
    %v794 = vmul.f32 %v271, %v777
    %v795 = vmul.f32 %v272, %v777
    %v796 = vmul.f32 %v277, %v777
    %v797 = vmul.f32 %v278, %v777
    %v798 = vmul.f32 %v280, %v777
    %v799 = vmul.f32 %v281, %v777
    %v800 = vmul.f32 %v283, %v777
    %v801 = vmul.f32 %v284, %v777
    %v802 = vmul.f32 %v286, %v777
    %v803 = vmul.f32 %v287, %v777
    %v804 = vmul.f32 %v289, %v777
    %v805 = vmul.f32 %v290, %v777
    %v806 = vmul.f32 %v292, %v777
    %v807 = vmul.f32 %v293, %v777
    %v808 = vmul.f32 %v295, %v777
    %v809 = vmul.f32 %v296, %v777
    %v810 = vmul.f32 %v298, %v777
    %v811 = vmul.f32 %v299, %v777
    %v812 = vmul.f32 %v301, %v777
    %v813 = vmul.f32 %v302, %v777
    %v814 = vadd.f32 %v738, %v778
    %v815 = vadd.f32 %v739, %v779
    %v816 = vadd.f32 %v740, %v780
    %v817 = vadd.f32 %v741, %v781
    %v818 = vadd.f32 %v742, %v782
    %v819 = vadd.f32 %v743, %v783
    %v820 = vadd.f32 %v744, %v784
    %v821 = vadd.f32 %v745, %v785
    %v822 = vadd.f32 %v746, %v786
    %v823 = vadd.f32 %v747, %v787
    %v824 = vadd.f32 %v748, %v788
    %v825 = vadd.f32 %v749, %v789
    %v826 = vadd.f32 %v750, %v790
    %v827 = vadd.f32 %v751, %v791
    %v828 = vadd.f32 %v752, %v792
    %v829 = vadd.f32 %v753, %v793
    %v830 = vadd.f32 %v754, %v794
    %v831 = vadd.f32 %v755, %v795
    %v832 = vadd.f32 %v756, %v796
    %v833 = vadd.f32 %v757, %v797
    %v834 = vadd.f32 %v758, %v798
    %v835 = vadd.f32 %v759, %v799
    %v836 = vadd.f32 %v760, %v800
    %v837 = vadd.f32 %v761, %v801
    %v838 = vadd.f32 %v762, %v802
    %v839 = vadd.f32 %v763, %v803
    %v840 = vadd.f32 %v764, %v804
    %v841 = vadd.f32 %v765, %v805
    %v842 = vadd.f32 %v766, %v806
    %v843 = vadd.f32 %v767, %v807
    %v844 = vadd.f32 %v768, %v808
    %v845 = vadd.f32 %v769, %v809
    %v846 = vadd.f32 %v770, %v810
    %v847 = vadd.f32 %v771, %v811
    %v848 = vadd.f32 %v772, %v812
    %v849 = vadd.f32 %v773, %v813
    %v850 = vlaneseq
    %v851 = vshrl.u32 %v850, 7
    %v852 = vsub.s32 1, %v851
    %v853 = vrot.slane %v453, %v852
    %v854 = vmul.f32 %v130, %v853
    %v855 = vmul.f32 %v131, %v853
    %v856 = vmul.f32 %v133, %v853
    %v857 = vmul.f32 %v134, %v853
    %v858 = vmul.f32 %v136, %v853
    %v859 = vmul.f32 %v137, %v853
    %v860 = vmul.f32 %v139, %v853
    %v861 = vmul.f32 %v140, %v853
    %v862 = vmul.f32 %v142, %v853
    %v863 = vmul.f32 %v143, %v853
    %v864 = vmul.f32 %v145, %v853
    %v865 = vmul.f32 %v146, %v853
    %v866 = vmul.f32 %v148, %v853
    %v867 = vmul.f32 %v149, %v853
    %v868 = vmul.f32 %v151, %v853
    %v869 = vmul.f32 %v152, %v853
    %v870 = vmul.f32 %v154, %v853
    %v871 = vmul.f32 %v155, %v853
    %v872 = vmul.f32 %v160, %v853
    %v873 = vmul.f32 %v161, %v853
    %v874 = vmul.f32 %v163, %v853
    %v875 = vmul.f32 %v164, %v853
    %v876 = vmul.f32 %v166, %v853
    %v877 = vmul.f32 %v167, %v853
    %v878 = vmul.f32 %v169, %v853
    %v879 = vmul.f32 %v170, %v853
    %v880 = vmul.f32 %v172, %v853
    %v881 = vmul.f32 %v173, %v853
    %v882 = vmul.f32 %v175, %v853
    %v883 = vmul.f32 %v176, %v853
    %v884 = vmul.f32 %v178, %v853
    %v885 = vmul.f32 %v179, %v853
    %v886 = vmul.f32 %v181, %v853
    %v887 = vmul.f32 %v182, %v853
    %v888 = vmul.f32 %v184, %v853
    %v889 = vmul.f32 %v185, %v853
    %v890 = vadd.f32 %v814, %v854
    %v891 = vadd.f32 %v815, %v855
    %v892 = vadd.f32 %v816, %v856
    %v893 = vadd.f32 %v817, %v857
    %v894 = vadd.f32 %v818, %v858
    %v895 = vadd.f32 %v819, %v859
    %v896 = vadd.f32 %v820, %v860
    %v897 = vadd.f32 %v821, %v861
    %v898 = vadd.f32 %v822, %v862
    %v899 = vadd.f32 %v823, %v863
    %v900 = vadd.f32 %v824, %v864
    %v901 = vadd.f32 %v825, %v865
    %v902 = vadd.f32 %v826, %v866
    %v903 = vadd.f32 %v827, %v867
    %v904 = vadd.f32 %v828, %v868
    %v905 = vadd.f32 %v829, %v869
    %v906 = vadd.f32 %v830, %v870
    %v907 = vadd.f32 %v831, %v871
    %v908 = vadd.f32 %v832, %v872
    %v909 = vadd.f32 %v833, %v873
    %v910 = vadd.f32 %v834, %v874
    %v911 = vadd.f32 %v835, %v875
    %v912 = vadd.f32 %v836, %v876
    %v913 = vadd.f32 %v837, %v877
    %v914 = vadd.f32 %v838, %v878
    %v915 = vadd.f32 %v839, %v879
    %v916 = vadd.f32 %v840, %v880
    %v917 = vadd.f32 %v841, %v881
    %v918 = vadd.f32 %v842, %v882
    %v919 = vadd.f32 %v843, %v883
    %v920 = vadd.f32 %v844, %v884
    %v921 = vadd.f32 %v845, %v885
    %v922 = vadd.f32 %v846, %v886
    %v923 = vadd.f32 %v847, %v887
    %v924 = vadd.f32 %v848, %v888
    %v925 = vadd.f32 %v849, %v889
    %v926 = vlaneseq
    %v927 = vshrl.u32 %v926, 7
    %v928 = vsub.s32 2, %v927
    %v929 = vrot.slane %v451, %v928
    %v930 = vmul.f32 %v67, %v929
    %v931 = vmul.f32 %v68, %v929
    %v932 = vmul.f32 %v69, %v929
    %v933 = vmul.f32 %v70, %v929
    %v934 = vmul.f32 %v71, %v929
    %v935 = vmul.f32 %v72, %v929
    %v936 = vmul.f32 %v73, %v929
    %v937 = vmul.f32 %v74, %v929
    %v938 = vmul.f32 %v75, %v929
    %v939 = vmul.f32 %v76, %v929
    %v940 = vmul.f32 %v77, %v929
    %v941 = vmul.f32 %v78, %v929
    %v942 = vmul.f32 %v79, %v929
    %v943 = vmul.f32 %v80, %v929
    %v944 = vmul.f32 %v81, %v929
    %v945 = vmul.f32 %v82, %v929
    %v946 = vmul.f32 %v83, %v929
    %v947 = vmul.f32 %v84, %v929
    %v948 = vmul.f32 %v85, %v929
    %v949 = vmul.f32 %v86, %v929
    %v950 = vmul.f32 %v87, %v929
    %v951 = vmul.f32 %v88, %v929
    %v952 = vmul.f32 %v89, %v929
    %v953 = vmul.f32 %v90, %v929
    %v954 = vmul.f32 %v91, %v929
    %v955 = vmul.f32 %v92, %v929
    %v956 = vmul.f32 %v93, %v929
    %v957 = vmul.f32 %v97, %v929
    %v958 = vmul.f32 %v98, %v929
    %v959 = vmul.f32 %v99, %v929
    %v960 = vmul.f32 %v100, %v929
    %v961 = vmul.f32 %v101, %v929
    %v962 = vmul.f32 %v102, %v929
    %v963 = vmul.f32 %v103, %v929
    %v964 = vmul.f32 %v104, %v929
    %v965 = vmul.f32 %v105, %v929
    %v966 = vmul.f32 %v106, %v929
    %v967 = vmul.f32 %v107, %v929
    %v968 = vmul.f32 %v108, %v929
    %v969 = vmul.f32 %v109, %v929
    %v970 = vmul.f32 %v110, %v929
    %v971 = vmul.f32 %v111, %v929
    %v972 = vmul.f32 %v112, %v929
    %v973 = vmul.f32 %v113, %v929
    %v974 = vmul.f32 %v114, %v929
    %v975 = vmul.f32 %v115, %v929
    %v976 = vmul.f32 %v116, %v929
    %v977 = vmul.f32 %v117, %v929
    %v978 = vmul.f32 %v118, %v929
    %v979 = vmul.f32 %v119, %v929
    %v980 = vmul.f32 %v120, %v929
    %v981 = vmul.f32 %v121, %v929
    %v982 = vmul.f32 %v122, %v929
    %v983 = vmul.f32 %v123, %v929
    %vm1038 = vcmask 1046528
    %v1039 = vrot.slane %v930, 1
    %v1040 = vrot.slane %v931, 1
    %v1041 = vsel %vm1038, %v1039, %v1040
    %v1042 = vrot.slane %v932, 1
    %v1043 = vsel %vm1038, %v1040, %v1042
    %v1044 = vrot.slane %v933, 1
    %v1045 = vrot.slane %v934, 1
    %v1046 = vsel %vm1038, %v1044, %v1045
    %v1047 = vrot.slane %v935, 1
    %v1048 = vsel %vm1038, %v1045, %v1047
    %v1049 = vrot.slane %v936, 1
    %v1050 = vrot.slane %v937, 1
    %v1051 = vsel %vm1038, %v1049, %v1050
    %v1052 = vrot.slane %v938, 1
    %v1053 = vsel %vm1038, %v1050, %v1052
    %v1054 = vrot.slane %v939, 1
    %v1055 = vrot.slane %v940, 1
    %v1056 = vsel %vm1038, %v1054, %v1055
    %v1057 = vrot.slane %v941, 1
    %v1058 = vsel %vm1038, %v1055, %v1057
    %v1059 = vrot.slane %v942, 1
    %v1060 = vrot.slane %v943, 1
    %v1061 = vsel %vm1038, %v1059, %v1060
    %v1062 = vrot.slane %v944, 1
    %v1063 = vsel %vm1038, %v1060, %v1062
    %v1064 = vrot.slane %v945, 1
    %v1065 = vrot.slane %v946, 1
    %v1066 = vsel %vm1038, %v1064, %v1065
    %v1067 = vrot.slane %v947, 1
    %v1068 = vsel %vm1038, %v1065, %v1067
    %v1069 = vrot.slane %v948, 1
    %v1070 = vrot.slane %v949, 1
    %v1071 = vsel %vm1038, %v1069, %v1070
    %v1072 = vrot.slane %v950, 1
    %v1073 = vsel %vm1038, %v1070, %v1072
    %v1074 = vrot.slane %v951, 1
    %v1075 = vrot.slane %v952, 1
    %v1076 = vsel %vm1038, %v1074, %v1075
    %v1077 = vrot.slane %v953, 1
    %v1078 = vsel %vm1038, %v1075, %v1077
    %v1079 = vrot.slane %v954, 1
    %v1080 = vrot.slane %v955, 1
    %v1081 = vsel %vm1038, %v1079, %v1080
    %v1082 = vrot.slane %v956, 1
    %v1083 = vsel %vm1038, %v1080, %v1082
    %v1084 = vrot.slane %v957, 1
    %v1085 = vrot.slane %v958, 1
    %v1086 = vsel %vm1038, %v1084, %v1085
    %v1087 = vrot.slane %v959, 1
    %v1088 = vsel %vm1038, %v1085, %v1087
    %v1089 = vrot.slane %v960, 1
    %v1090 = vrot.slane %v961, 1
    %v1091 = vsel %vm1038, %v1089, %v1090
    %v1092 = vrot.slane %v962, 1
    %v1093 = vsel %vm1038, %v1090, %v1092
    %v1094 = vrot.slane %v963, 1
    %v1095 = vrot.slane %v964, 1
    %v1096 = vsel %vm1038, %v1094, %v1095
    %v1097 = vrot.slane %v965, 1
    %v1098 = vsel %vm1038, %v1095, %v1097
    %v1099 = vrot.slane %v966, 1
    %v1100 = vrot.slane %v967, 1
    %v1101 = vsel %vm1038, %v1099, %v1100
    %v1102 = vrot.slane %v968, 1
    %v1103 = vsel %vm1038, %v1100, %v1102
    %v1104 = vrot.slane %v969, 1
    %v1105 = vrot.slane %v970, 1
    %v1106 = vsel %vm1038, %v1104, %v1105
    %v1107 = vrot.slane %v971, 1
    %v1108 = vsel %vm1038, %v1105, %v1107
    %v1109 = vrot.slane %v972, 1
    %v1110 = vrot.slane %v973, 1
    %v1111 = vsel %vm1038, %v1109, %v1110
    %v1112 = vrot.slane %v974, 1
    %v1113 = vsel %vm1038, %v1110, %v1112
    %v1114 = vrot.slane %v975, 1
    %v1115 = vrot.slane %v976, 1
    %v1116 = vsel %vm1038, %v1114, %v1115
    %v1117 = vrot.slane %v977, 1
    %v1118 = vsel %vm1038, %v1115, %v1117
    %v1119 = vrot.slane %v978, 1
    %v1120 = vrot.slane %v979, 1
    %v1121 = vsel %vm1038, %v1119, %v1120
    %v1122 = vrot.slane %v980, 1
    %v1123 = vsel %vm1038, %v1120, %v1122
    %v1124 = vrot.slane %v981, 1
    %v1125 = vrot.slane %v982, 1
    %v1126 = vsel %vm1038, %v1124, %v1125
    %v1127 = vrot.slane %v983, 1
    %v1128 = vsel %vm1038, %v1125, %v1127
    %v1165 = vadd.f32 %v890, %v1041
    %v1166 = vadd.f32 %v891, %v1043
    %v1167 = vadd.f32 %v892, %v1046
    %v1168 = vadd.f32 %v893, %v1048
    %v1169 = vadd.f32 %v894, %v1051
    %v1170 = vadd.f32 %v895, %v1053
    %v1171 = vadd.f32 %v896, %v1056
    %v1172 = vadd.f32 %v897, %v1058
    %v1173 = vadd.f32 %v898, %v1061
    %v1174 = vadd.f32 %v899, %v1063
    %v1175 = vadd.f32 %v900, %v1066
    %v1176 = vadd.f32 %v901, %v1068
    %v1177 = vadd.f32 %v902, %v1071
    %v1178 = vadd.f32 %v903, %v1073
    %v1179 = vadd.f32 %v904, %v1076
    %v1180 = vadd.f32 %v905, %v1078
    %v1181 = vadd.f32 %v906, %v1081
    %v1182 = vadd.f32 %v907, %v1083
    %v1183 = vadd.f32 %v908, %v1086
    %v1184 = vadd.f32 %v909, %v1088
    %v1185 = vadd.f32 %v910, %v1091
    %v1186 = vadd.f32 %v911, %v1093
    %v1187 = vadd.f32 %v912, %v1096
    %v1188 = vadd.f32 %v913, %v1098
    %v1189 = vadd.f32 %v914, %v1101
    %v1190 = vadd.f32 %v915, %v1103
    %v1191 = vadd.f32 %v916, %v1106
    %v1192 = vadd.f32 %v917, %v1108
    %v1193 = vadd.f32 %v918, %v1111
    %v1194 = vadd.f32 %v919, %v1113
    %v1195 = vadd.f32 %v920, %v1116
    %v1196 = vadd.f32 %v921, %v1118
    %v1197 = vadd.f32 %v922, %v1121
    %v1198 = vadd.f32 %v923, %v1123
    %v1199 = vadd.f32 %v924, %v1126
    %v1200 = vadd.f32 %v925, %v1128
    %v1201 = vlaneseq
    %v1202 = vshrl.u32 %v1201, 7
    %v1203 = vsub.s32 2, %v1202
    %v1204 = vrot.slane %v452, %v1203
    %v1205 = vmul.f32 %v187, %v1204
    %v1206 = vmul.f32 %v188, %v1204
    %v1207 = vmul.f32 %v189, %v1204
    %v1208 = vmul.f32 %v190, %v1204
    %v1209 = vmul.f32 %v191, %v1204
    %v1210 = vmul.f32 %v192, %v1204
    %v1211 = vmul.f32 %v193, %v1204
    %v1212 = vmul.f32 %v194, %v1204
    %v1213 = vmul.f32 %v195, %v1204
    %v1214 = vmul.f32 %v196, %v1204
    %v1215 = vmul.f32 %v197, %v1204
    %v1216 = vmul.f32 %v198, %v1204
    %v1217 = vmul.f32 %v199, %v1204
    %v1218 = vmul.f32 %v200, %v1204
    %v1219 = vmul.f32 %v201, %v1204
    %v1220 = vmul.f32 %v202, %v1204
    %v1221 = vmul.f32 %v203, %v1204
    %v1222 = vmul.f32 %v204, %v1204
    %v1223 = vmul.f32 %v205, %v1204
    %v1224 = vmul.f32 %v206, %v1204
    %v1225 = vmul.f32 %v207, %v1204
    %v1226 = vmul.f32 %v208, %v1204
    %v1227 = vmul.f32 %v209, %v1204
    %v1228 = vmul.f32 %v210, %v1204
    %v1229 = vmul.f32 %v211, %v1204
    %v1230 = vmul.f32 %v212, %v1204
    %v1231 = vmul.f32 %v213, %v1204
    %v1232 = vmul.f32 %v217, %v1204
    %v1233 = vmul.f32 %v218, %v1204
    %v1234 = vmul.f32 %v219, %v1204
    %v1235 = vmul.f32 %v220, %v1204
    %v1236 = vmul.f32 %v221, %v1204
    %v1237 = vmul.f32 %v222, %v1204
    %v1238 = vmul.f32 %v223, %v1204
    %v1239 = vmul.f32 %v224, %v1204
    %v1240 = vmul.f32 %v225, %v1204
    %v1241 = vmul.f32 %v226, %v1204
    %v1242 = vmul.f32 %v227, %v1204
    %v1243 = vmul.f32 %v228, %v1204
    %v1244 = vmul.f32 %v229, %v1204
    %v1245 = vmul.f32 %v230, %v1204
    %v1246 = vmul.f32 %v231, %v1204
    %v1247 = vmul.f32 %v232, %v1204
    %v1248 = vmul.f32 %v233, %v1204
    %v1249 = vmul.f32 %v234, %v1204
    %v1250 = vmul.f32 %v235, %v1204
    %v1251 = vmul.f32 %v236, %v1204
    %v1252 = vmul.f32 %v237, %v1204
    %v1253 = vmul.f32 %v238, %v1204
    %v1254 = vmul.f32 %v239, %v1204
    %v1255 = vmul.f32 %v240, %v1204
    %v1256 = vmul.f32 %v241, %v1204
    %v1257 = vmul.f32 %v242, %v1204
    %v1258 = vmul.f32 %v243, %v1204
    %v1313 = vrot.slane %v1205, 1
    %v1314 = vrot.slane %v1206, 1
    %v1315 = vsel %vm1038, %v1313, %v1314
    %v1316 = vrot.slane %v1207, 1
    %v1317 = vsel %vm1038, %v1314, %v1316
    %v1318 = vrot.slane %v1208, 1
    %v1319 = vrot.slane %v1209, 1
    %v1320 = vsel %vm1038, %v1318, %v1319
    %v1321 = vrot.slane %v1210, 1
    %v1322 = vsel %vm1038, %v1319, %v1321
    %v1323 = vrot.slane %v1211, 1
    %v1324 = vrot.slane %v1212, 1
    %v1325 = vsel %vm1038, %v1323, %v1324
    %v1326 = vrot.slane %v1213, 1
    %v1327 = vsel %vm1038, %v1324, %v1326
    %v1328 = vrot.slane %v1214, 1
    %v1329 = vrot.slane %v1215, 1
    %v1330 = vsel %vm1038, %v1328, %v1329
    %v1331 = vrot.slane %v1216, 1
    %v1332 = vsel %vm1038, %v1329, %v1331
    %v1333 = vrot.slane %v1217, 1
    %v1334 = vrot.slane %v1218, 1
    %v1335 = vsel %vm1038, %v1333, %v1334
    %v1336 = vrot.slane %v1219, 1
    %v1337 = vsel %vm1038, %v1334, %v1336
    %v1338 = vrot.slane %v1220, 1
    %v1339 = vrot.slane %v1221, 1
    %v1340 = vsel %vm1038, %v1338, %v1339
    %v1341 = vrot.slane %v1222, 1
    %v1342 = vsel %vm1038, %v1339, %v1341
    %v1343 = vrot.slane %v1223, 1
    %v1344 = vrot.slane %v1224, 1
    %v1345 = vsel %vm1038, %v1343, %v1344
    %v1346 = vrot.slane %v1225, 1
    %v1347 = vsel %vm1038, %v1344, %v1346
    %v1348 = vrot.slane %v1226, 1
    %v1349 = vrot.slane %v1227, 1
    %v1350 = vsel %vm1038, %v1348, %v1349
    %v1351 = vrot.slane %v1228, 1
    %v1352 = vsel %vm1038, %v1349, %v1351
    %v1353 = vrot.slane %v1229, 1
    %v1354 = vrot.slane %v1230, 1
    %v1355 = vsel %vm1038, %v1353, %v1354
    %v1356 = vrot.slane %v1231, 1
    %v1357 = vsel %vm1038, %v1354, %v1356
    %v1358 = vrot.slane %v1232, 1
    %v1359 = vrot.slane %v1233, 1
    %v1360 = vsel %vm1038, %v1358, %v1359
    %v1361 = vrot.slane %v1234, 1
    %v1362 = vsel %vm1038, %v1359, %v1361
    %v1363 = vrot.slane %v1235, 1
    %v1364 = vrot.slane %v1236, 1
    %v1365 = vsel %vm1038, %v1363, %v1364
    %v1366 = vrot.slane %v1237, 1
    %v1367 = vsel %vm1038, %v1364, %v1366
    %v1368 = vrot.slane %v1238, 1
    %v1369 = vrot.slane %v1239, 1
    %v1370 = vsel %vm1038, %v1368, %v1369
    %v1371 = vrot.slane %v1240, 1
    %v1372 = vsel %vm1038, %v1369, %v1371
    %v1373 = vrot.slane %v1241, 1
    %v1374 = vrot.slane %v1242, 1
    %v1375 = vsel %vm1038, %v1373, %v1374
    %v1376 = vrot.slane %v1243, 1
    %v1377 = vsel %vm1038, %v1374, %v1376
    %v1378 = vrot.slane %v1244, 1
    %v1379 = vrot.slane %v1245, 1
    %v1380 = vsel %vm1038, %v1378, %v1379
    %v1381 = vrot.slane %v1246, 1
    %v1382 = vsel %vm1038, %v1379, %v1381
    %v1383 = vrot.slane %v1247, 1
    %v1384 = vrot.slane %v1248, 1
    %v1385 = vsel %vm1038, %v1383, %v1384
    %v1386 = vrot.slane %v1249, 1
    %v1387 = vsel %vm1038, %v1384, %v1386
    %v1388 = vrot.slane %v1250, 1
    %v1389 = vrot.slane %v1251, 1
    %v1390 = vsel %vm1038, %v1388, %v1389
    %v1391 = vrot.slane %v1252, 1
    %v1392 = vsel %vm1038, %v1389, %v1391
    %v1393 = vrot.slane %v1253, 1
    %v1394 = vrot.slane %v1254, 1
    %v1395 = vsel %vm1038, %v1393, %v1394
    %v1396 = vrot.slane %v1255, 1
    %v1397 = vsel %vm1038, %v1394, %v1396
    %v1398 = vrot.slane %v1256, 1
    %v1399 = vrot.slane %v1257, 1
    %v1400 = vsel %vm1038, %v1398, %v1399
    %v1401 = vrot.slane %v1258, 1
    %v1402 = vsel %vm1038, %v1399, %v1401
    %v1439 = vadd.f32 %v1165, %v1315
    %v1440 = vadd.f32 %v1166, %v1317
    %v1441 = vadd.f32 %v1167, %v1320
    %v1442 = vadd.f32 %v1168, %v1322
    %v1443 = vadd.f32 %v1169, %v1325
    %v1444 = vadd.f32 %v1170, %v1327
    %v1445 = vadd.f32 %v1171, %v1330
    %v1446 = vadd.f32 %v1172, %v1332
    %v1447 = vadd.f32 %v1173, %v1335
    %v1448 = vadd.f32 %v1174, %v1337
    %v1449 = vadd.f32 %v1175, %v1340
    %v1450 = vadd.f32 %v1176, %v1342
    %v1451 = vadd.f32 %v1177, %v1345
    %v1452 = vadd.f32 %v1178, %v1347
    %v1453 = vadd.f32 %v1179, %v1350
    %v1454 = vadd.f32 %v1180, %v1352
    %v1455 = vadd.f32 %v1181, %v1355
    %v1456 = vadd.f32 %v1182, %v1357
    %v1457 = vadd.f32 %v1183, %v1360
    %v1458 = vadd.f32 %v1184, %v1362
    %v1459 = vadd.f32 %v1185, %v1365
    %v1460 = vadd.f32 %v1186, %v1367
    %v1461 = vadd.f32 %v1187, %v1370
    %v1462 = vadd.f32 %v1188, %v1372
    %v1463 = vadd.f32 %v1189, %v1375
    %v1464 = vadd.f32 %v1190, %v1377
    %v1465 = vadd.f32 %v1191, %v1380
    %v1466 = vadd.f32 %v1192, %v1382
    %v1467 = vadd.f32 %v1193, %v1385
    %v1468 = vadd.f32 %v1194, %v1387
    %v1469 = vadd.f32 %v1195, %v1390
    %v1470 = vadd.f32 %v1196, %v1392
    %v1471 = vadd.f32 %v1197, %v1395
    %v1472 = vadd.f32 %v1198, %v1397
    %v1473 = vadd.f32 %v1199, %v1400
    %v1474 = vadd.f32 %v1200, %v1402
    %v1475 = vlaneseq
    %v1476 = vshrl.u32 %v1475, 7
    %v1477 = vsub.s32 2, %v1476
    %v1478 = vrot.slane %v453, %v1477
    %v1479 = vmul.f32 %v70, %v1478
    %v1480 = vmul.f32 %v71, %v1478
    %v1481 = vmul.f32 %v72, %v1478
    %v1482 = vmul.f32 %v73, %v1478
    %v1483 = vmul.f32 %v74, %v1478
    %v1484 = vmul.f32 %v75, %v1478
    %v1485 = vmul.f32 %v76, %v1478
    %v1486 = vmul.f32 %v77, %v1478
    %v1487 = vmul.f32 %v78, %v1478
    %v1488 = vmul.f32 %v79, %v1478
    %v1489 = vmul.f32 %v80, %v1478
    %v1490 = vmul.f32 %v81, %v1478
    %v1491 = vmul.f32 %v82, %v1478
    %v1492 = vmul.f32 %v83, %v1478
    %v1493 = vmul.f32 %v84, %v1478
    %v1494 = vmul.f32 %v85, %v1478
    %v1495 = vmul.f32 %v86, %v1478
    %v1496 = vmul.f32 %v87, %v1478
    %v1497 = vmul.f32 %v88, %v1478
    %v1498 = vmul.f32 %v89, %v1478
    %v1499 = vmul.f32 %v90, %v1478
    %v1500 = vmul.f32 %v91, %v1478
    %v1501 = vmul.f32 %v92, %v1478
    %v1502 = vmul.f32 %v93, %v1478
    %v1503 = vmul.f32 %v94, %v1478
    %v1504 = vmul.f32 %v95, %v1478
    %v1505 = vmul.f32 %v96, %v1478
    %v1506 = vmul.f32 %v100, %v1478
    %v1507 = vmul.f32 %v101, %v1478
    %v1508 = vmul.f32 %v102, %v1478
    %v1509 = vmul.f32 %v103, %v1478
    %v1510 = vmul.f32 %v104, %v1478
    %v1511 = vmul.f32 %v105, %v1478
    %v1512 = vmul.f32 %v106, %v1478
    %v1513 = vmul.f32 %v107, %v1478
    %v1514 = vmul.f32 %v108, %v1478
    %v1515 = vmul.f32 %v109, %v1478
    %v1516 = vmul.f32 %v110, %v1478
    %v1517 = vmul.f32 %v111, %v1478
    %v1518 = vmul.f32 %v112, %v1478
    %v1519 = vmul.f32 %v113, %v1478
    %v1520 = vmul.f32 %v114, %v1478
    %v1521 = vmul.f32 %v115, %v1478
    %v1522 = vmul.f32 %v116, %v1478
    %v1523 = vmul.f32 %v117, %v1478
    %v1524 = vmul.f32 %v118, %v1478
    %v1525 = vmul.f32 %v119, %v1478
    %v1526 = vmul.f32 %v120, %v1478
    %v1527 = vmul.f32 %v121, %v1478
    %v1528 = vmul.f32 %v122, %v1478
    %v1529 = vmul.f32 %v123, %v1478
    %v1530 = vmul.f32 %v124, %v1478
    %v1531 = vmul.f32 %v125, %v1478
    %v1532 = vmul.f32 %v126, %v1478
    %v1587 = vrot.slane %v1479, 1
    %v1588 = vrot.slane %v1480, 1
    %v1589 = vsel %vm1038, %v1587, %v1588
    %v1590 = vrot.slane %v1481, 1
    %v1591 = vsel %vm1038, %v1588, %v1590
    %v1592 = vrot.slane %v1482, 1
    %v1593 = vrot.slane %v1483, 1
    %v1594 = vsel %vm1038, %v1592, %v1593
    %v1595 = vrot.slane %v1484, 1
    %v1596 = vsel %vm1038, %v1593, %v1595
    %v1597 = vrot.slane %v1485, 1
    %v1598 = vrot.slane %v1486, 1
    %v1599 = vsel %vm1038, %v1597, %v1598
    %v1600 = vrot.slane %v1487, 1
    %v1601 = vsel %vm1038, %v1598, %v1600
    %v1602 = vrot.slane %v1488, 1
    %v1603 = vrot.slane %v1489, 1
    %v1604 = vsel %vm1038, %v1602, %v1603
    %v1605 = vrot.slane %v1490, 1
    %v1606 = vsel %vm1038, %v1603, %v1605
    %v1607 = vrot.slane %v1491, 1
    %v1608 = vrot.slane %v1492, 1
    %v1609 = vsel %vm1038, %v1607, %v1608
    %v1610 = vrot.slane %v1493, 1
    %v1611 = vsel %vm1038, %v1608, %v1610
    %v1612 = vrot.slane %v1494, 1
    %v1613 = vrot.slane %v1495, 1
    %v1614 = vsel %vm1038, %v1612, %v1613
    %v1615 = vrot.slane %v1496, 1
    %v1616 = vsel %vm1038, %v1613, %v1615
    %v1617 = vrot.slane %v1497, 1
    %v1618 = vrot.slane %v1498, 1
    %v1619 = vsel %vm1038, %v1617, %v1618
    %v1620 = vrot.slane %v1499, 1
    %v1621 = vsel %vm1038, %v1618, %v1620
    %v1622 = vrot.slane %v1500, 1
    %v1623 = vrot.slane %v1501, 1
    %v1624 = vsel %vm1038, %v1622, %v1623
    %v1625 = vrot.slane %v1502, 1
    %v1626 = vsel %vm1038, %v1623, %v1625
    %v1627 = vrot.slane %v1503, 1
    %v1628 = vrot.slane %v1504, 1
    %v1629 = vsel %vm1038, %v1627, %v1628
    %v1630 = vrot.slane %v1505, 1
    %v1631 = vsel %vm1038, %v1628, %v1630
    %v1632 = vrot.slane %v1506, 1
    %v1633 = vrot.slane %v1507, 1
    %v1634 = vsel %vm1038, %v1632, %v1633
    %v1635 = vrot.slane %v1508, 1
    %v1636 = vsel %vm1038, %v1633, %v1635
    %v1637 = vrot.slane %v1509, 1
    %v1638 = vrot.slane %v1510, 1
    %v1639 = vsel %vm1038, %v1637, %v1638
    %v1640 = vrot.slane %v1511, 1
    %v1641 = vsel %vm1038, %v1638, %v1640
    %v1642 = vrot.slane %v1512, 1
    %v1643 = vrot.slane %v1513, 1
    %v1644 = vsel %vm1038, %v1642, %v1643
    %v1645 = vrot.slane %v1514, 1
    %v1646 = vsel %vm1038, %v1643, %v1645
    %v1647 = vrot.slane %v1515, 1
    %v1648 = vrot.slane %v1516, 1
    %v1649 = vsel %vm1038, %v1647, %v1648
    %v1650 = vrot.slane %v1517, 1
    %v1651 = vsel %vm1038, %v1648, %v1650
    %v1652 = vrot.slane %v1518, 1
    %v1653 = vrot.slane %v1519, 1
    %v1654 = vsel %vm1038, %v1652, %v1653
    %v1655 = vrot.slane %v1520, 1
    %v1656 = vsel %vm1038, %v1653, %v1655
    %v1657 = vrot.slane %v1521, 1
    %v1658 = vrot.slane %v1522, 1
    %v1659 = vsel %vm1038, %v1657, %v1658
    %v1660 = vrot.slane %v1523, 1
    %v1661 = vsel %vm1038, %v1658, %v1660
    %v1662 = vrot.slane %v1524, 1
    %v1663 = vrot.slane %v1525, 1
    %v1664 = vsel %vm1038, %v1662, %v1663
    %v1665 = vrot.slane %v1526, 1
    %v1666 = vsel %vm1038, %v1663, %v1665
    %v1667 = vrot.slane %v1527, 1
    %v1668 = vrot.slane %v1528, 1
    %v1669 = vsel %vm1038, %v1667, %v1668
    %v1670 = vrot.slane %v1529, 1
    %v1671 = vsel %vm1038, %v1668, %v1670
    %v1672 = vrot.slane %v1530, 1
    %v1673 = vrot.slane %v1531, 1
    %v1674 = vsel %vm1038, %v1672, %v1673
    %v1675 = vrot.slane %v1532, 1
    %v1676 = vsel %vm1038, %v1673, %v1675
    %v1713 = vadd.f32 %v1439, %v1589
    %v1714 = vadd.f32 %v1440, %v1591
    %v1715 = vadd.f32 %v1441, %v1594
    %v1716 = vadd.f32 %v1442, %v1596
    %v1717 = vadd.f32 %v1443, %v1599
    %v1718 = vadd.f32 %v1444, %v1601
    %v1719 = vadd.f32 %v1445, %v1604
    %v1720 = vadd.f32 %v1446, %v1606
    %v1721 = vadd.f32 %v1447, %v1609
    %v1722 = vadd.f32 %v1448, %v1611
    %v1723 = vadd.f32 %v1449, %v1614
    %v1724 = vadd.f32 %v1450, %v1616
    %v1725 = vadd.f32 %v1451, %v1619
    %v1726 = vadd.f32 %v1452, %v1621
    %v1727 = vadd.f32 %v1453, %v1624
    %v1728 = vadd.f32 %v1454, %v1626
    %v1729 = vadd.f32 %v1455, %v1629
    %v1730 = vadd.f32 %v1456, %v1631
    %v1731 = vadd.f32 %v1457, %v1634
    %v1732 = vadd.f32 %v1458, %v1636
    %v1733 = vadd.f32 %v1459, %v1639
    %v1734 = vadd.f32 %v1460, %v1641
    %v1735 = vadd.f32 %v1461, %v1644
    %v1736 = vadd.f32 %v1462, %v1646
    %v1737 = vadd.f32 %v1463, %v1649
    %v1738 = vadd.f32 %v1464, %v1651
    %v1739 = vadd.f32 %v1465, %v1654
    %v1740 = vadd.f32 %v1466, %v1656
    %v1741 = vadd.f32 %v1467, %v1659
    %v1742 = vadd.f32 %v1468, %v1661
    %v1743 = vadd.f32 %v1469, %v1664
    %v1744 = vadd.f32 %v1470, %v1666
    %v1745 = vadd.f32 %v1471, %v1669
    %v1746 = vadd.f32 %v1472, %v1671
    %v1747 = vadd.f32 %v1473, %v1674
    %v1748 = vadd.f32 %v1474, %v1676
    %1750 = vset.pattern.permute.xlu0 0
    %1751 = vperm.xlu0 %1750, %v307
    %v1752 = vpop.permute.xlu0 %1751
    %1755 = vset.pattern.permute.xlu0 0
    %1756 = vperm.xlu0 %1755, %v308
    %v1757 = vpop.permute.xlu0 %1756
    %1760 = vset.pattern.permute.xlu0 0
    %1761 = vperm.xlu0 %1760, %v309
    %v1762 = vpop.permute.xlu0 %1761
    %1765 = vset.pattern.permute.xlu0 0
    %1766 = vperm.xlu0 %1765, %v310
    %v1767 = vpop.permute.xlu0 %1766
    %1770 = vset.pattern.permute.xlu0 0
    %1771 = vperm.xlu0 %1770, %v311
    %v1772 = vpop.permute.xlu0 %1771
    %1775 = vset.pattern.permute.xlu0 0
    %1776 = vperm.xlu0 %1775, %v312
    %v1777 = vpop.permute.xlu0 %1776
    %1780 = vset.pattern.permute.xlu0 0
    %1781 = vperm.xlu0 %1780, %v313
    %v1782 = vpop.permute.xlu0 %1781
    %1785 = vset.pattern.permute.xlu0 0
    %1786 = vperm.xlu0 %1785, %v314
    %v1787 = vpop.permute.xlu0 %1786
    %1790 = vset.pattern.permute.xlu0 0
    %1791 = vperm.xlu0 %1790, %v315
    %v1792 = vpop.permute.xlu0 %1791
    %1795 = vset.pattern.permute.xlu0 0
    %1796 = vperm.xlu0 %1795, %v316
    %v1797 = vpop.permute.xlu0 %1796
    %1800 = vset.pattern.permute.xlu0 0
    %1801 = vperm.xlu0 %1800, %v317
    %v1802 = vpop.permute.xlu0 %1801
    %1805 = vset.pattern.permute.xlu0 0
    %1806 = vperm.xlu0 %1805, %v318
    %v1807 = vpop.permute.xlu0 %1806
    %1810 = vset.pattern.permute.xlu0 0
    %1811 = vperm.xlu0 %1810, %v319
    %v1812 = vpop.permute.xlu0 %1811
    %1815 = vset.pattern.permute.xlu0 0
    %1816 = vperm.xlu0 %1815, %v320
    %v1817 = vpop.permute.xlu0 %1816
    %1820 = vset.pattern.permute.xlu0 0
    %1821 = vperm.xlu0 %1820, %v321
    %v1822 = vpop.permute.xlu0 %1821
    %1825 = vset.pattern.permute.xlu0 0
    %1826 = vperm.xlu0 %1825, %v322
    %v1827 = vpop.permute.xlu0 %1826
    %1830 = vset.pattern.permute.xlu0 0
    %1831 = vperm.xlu0 %1830, %v323
    %v1832 = vpop.permute.xlu0 %1831
    %1835 = vset.pattern.permute.xlu0 0
    %1836 = vperm.xlu0 %1835, %v324
    %v1837 = vpop.permute.xlu0 %1836
    %1840 = vset.pattern.permute.xlu0 0
    %1841 = vperm.xlu0 %1840, %v325
    %v1842 = vpop.permute.xlu0 %1841
    %1845 = vset.pattern.permute.xlu0 0
    %1846 = vperm.xlu0 %1845, %v326
    %v1847 = vpop.permute.xlu0 %1846
    %1850 = vset.pattern.permute.xlu0 0
    %1851 = vperm.xlu0 %1850, %v327
    %v1852 = vpop.permute.xlu0 %1851
    %1855 = vset.pattern.permute.xlu0 0
    %1856 = vperm.xlu0 %1855, %v328
    %v1857 = vpop.permute.xlu0 %1856
    %1860 = vset.pattern.permute.xlu0 0
    %1861 = vperm.xlu0 %1860, %v329
    %v1862 = vpop.permute.xlu0 %1861
    %1865 = vset.pattern.permute.xlu0 0
    %1866 = vperm.xlu0 %1865, %v330
    %v1867 = vpop.permute.xlu0 %1866
    %1870 = vset.pattern.permute.xlu0 0
    %1871 = vperm.xlu0 %1870, %v331
    %v1872 = vpop.permute.xlu0 %1871
    %1875 = vset.pattern.permute.xlu0 0
    %1876 = vperm.xlu0 %1875, %v332
    %v1877 = vpop.permute.xlu0 %1876
    %1880 = vset.pattern.permute.xlu0 0
    %1881 = vperm.xlu0 %1880, %v333
    %v1882 = vpop.permute.xlu0 %1881
    %1885 = vset.pattern.permute.xlu0 0
    %1886 = vperm.xlu0 %1885, %v334
    %v1887 = vpop.permute.xlu0 %1886
    %1890 = vset.pattern.permute.xlu0 0
    %1891 = vperm.xlu0 %1890, %v335
    %v1892 = vpop.permute.xlu0 %1891
    %1895 = vset.pattern.permute.xlu0 0
    %1896 = vperm.xlu0 %1895, %v336
    %v1897 = vpop.permute.xlu0 %1896
    %1900 = vset.pattern.permute.xlu0 0
    %1901 = vperm.xlu0 %1900, %v337
    %v1902 = vpop.permute.xlu0 %1901
    %1905 = vset.pattern.permute.xlu0 0
    %1906 = vperm.xlu0 %1905, %v338
    %v1907 = vpop.permute.xlu0 %1906
    %1910 = vset.pattern.permute.xlu0 0
    %1911 = vperm.xlu0 %1910, %v339
    %v1912 = vpop.permute.xlu0 %1911
    %1915 = vset.pattern.permute.xlu0 0
    %1916 = vperm.xlu0 %1915, %v340
    %v1917 = vpop.permute.xlu0 %1916
    %1920 = vset.pattern.permute.xlu0 0
    %1921 = vperm.xlu0 %1920, %v341
    %v1922 = vpop.permute.xlu0 %1921
    %1925 = vset.pattern.permute.xlu0 0
    %1926 = vperm.xlu0 %1925, %v342
    %v1927 = vpop.permute.xlu0 %1926
    %v1929 = vmul.f32 %v1713, %v1752
    %v1930 = vmul.f32 %v1714, %v1757
    %v1931 = vmul.f32 %v1715, %v1762
    %v1932 = vmul.f32 %v1716, %v1767
    %v1933 = vmul.f32 %v1717, %v1772
    %v1934 = vmul.f32 %v1718, %v1777
    %v1935 = vmul.f32 %v1719, %v1782
    %v1936 = vmul.f32 %v1720, %v1787
    %v1937 = vmul.f32 %v1721, %v1792
    %v1938 = vmul.f32 %v1722, %v1797
    %v1939 = vmul.f32 %v1723, %v1802
    %v1940 = vmul.f32 %v1724, %v1807
    %v1941 = vmul.f32 %v1725, %v1812
    %v1942 = vmul.f32 %v1726, %v1817
    %v1943 = vmul.f32 %v1727, %v1822
    %v1944 = vmul.f32 %v1728, %v1827
    %v1945 = vmul.f32 %v1729, %v1832
    %v1946 = vmul.f32 %v1730, %v1837
    %v1947 = vmul.f32 %v1731, %v1842
    %v1948 = vmul.f32 %v1732, %v1847
    %v1949 = vmul.f32 %v1733, %v1852
    %v1950 = vmul.f32 %v1734, %v1857
    %v1951 = vmul.f32 %v1735, %v1862
    %v1952 = vmul.f32 %v1736, %v1867
    %v1953 = vmul.f32 %v1737, %v1872
    %v1954 = vmul.f32 %v1738, %v1877
    %v1955 = vmul.f32 %v1739, %v1882
    %v1956 = vmul.f32 %v1740, %v1887
    %v1957 = vmul.f32 %v1741, %v1892
    %v1958 = vmul.f32 %v1742, %v1897
    %v1959 = vmul.f32 %v1743, %v1902
    %v1960 = vmul.f32 %v1744, %v1907
    %v1961 = vmul.f32 %v1745, %v1912
    %v1962 = vmul.f32 %v1746, %v1917
    %v1963 = vmul.f32 %v1747, %v1922
    %v1964 = vmul.f32 %v1748, %v1927
    %vm1965 = vcmask 64512
    %v1966 = vsel %vm1965, %v1929, 0.0
    %v1967 = vsel %vm1965, %v1930, 0.0
    %v1968 = vadd.f32 %v1966, %v1967
    %v1969 = vsel %vm1965, %v1931, 0.0
    %v1970 = vadd.f32 %v1968, %v1969
    %v1971 = vsel %vm1965, %v1932, 0.0
    %v1972 = vadd.f32 %v1970, %v1971
    %v1973 = vsel %vm1965, %v1933, 0.0
    %v1974 = vadd.f32 %v1972, %v1973
    %v1975 = vsel %vm1965, %v1934, 0.0
    %v1976 = vadd.f32 %v1974, %v1975
    %v1977 = vsel %vm1965, %v1935, 0.0
    %v1978 = vadd.f32 %v1976, %v1977
    %v1979 = vsel %vm1965, %v1936, 0.0
    %v1980 = vadd.f32 %v1978, %v1979
    %v1981 = vsel %vm1965, %v1937, 0.0
    %v1982 = vadd.f32 %v1980, %v1981
    %v1983 = vsel %vm1965, %v1938, 0.0
    %v1984 = vadd.f32 %v1982, %v1983
    %v1985 = vsel %vm1965, %v1939, 0.0
    %v1986 = vadd.f32 %v1984, %v1985
    %v1987 = vsel %vm1965, %v1940, 0.0
    %v1988 = vadd.f32 %v1986, %v1987
    %v1989 = vsel %vm1965, %v1941, 0.0
    %v1990 = vadd.f32 %v1988, %v1989
    %v1991 = vsel %vm1965, %v1942, 0.0
    %v1992 = vadd.f32 %v1990, %v1991
    %v1993 = vsel %vm1965, %v1943, 0.0
    %v1994 = vadd.f32 %v1992, %v1993
    %v1995 = vsel %vm1965, %v1944, 0.0
    %v1996 = vadd.f32 %v1994, %v1995
    %v1997 = vsel %vm1965, %v1945, 0.0
    %v1998 = vadd.f32 %v1996, %v1997
    %v1999 = vsel %vm1965, %v1946, 0.0
    %v2000 = vadd.f32 %v1998, %v1999
    %v2001 = vsel %vm1965, %v1947, 0.0
    %v2002 = vadd.f32 %v2000, %v2001
    %v2003 = vsel %vm1965, %v1948, 0.0
    %v2004 = vadd.f32 %v2002, %v2003
    %v2005 = vsel %vm1965, %v1949, 0.0
    %v2006 = vadd.f32 %v2004, %v2005
    %v2007 = vsel %vm1965, %v1950, 0.0
    %v2008 = vadd.f32 %v2006, %v2007
    %v2009 = vsel %vm1965, %v1951, 0.0
    %v2010 = vadd.f32 %v2008, %v2009
    %v2011 = vsel %vm1965, %v1952, 0.0
    %v2012 = vadd.f32 %v2010, %v2011
    %v2013 = vsel %vm1965, %v1953, 0.0
    %v2014 = vadd.f32 %v2012, %v2013
    %v2015 = vsel %vm1965, %v1954, 0.0
    %v2016 = vadd.f32 %v2014, %v2015
    %v2017 = vsel %vm1965, %v1955, 0.0
    %v2018 = vadd.f32 %v2016, %v2017
    %v2019 = vsel %vm1965, %v1956, 0.0
    %v2020 = vadd.f32 %v2018, %v2019
    %v2021 = vsel %vm1965, %v1957, 0.0
    %v2022 = vadd.f32 %v2020, %v2021
    %v2023 = vsel %vm1965, %v1958, 0.0
    %v2024 = vadd.f32 %v2022, %v2023
    %v2025 = vsel %vm1965, %v1959, 0.0
    %v2026 = vadd.f32 %v2024, %v2025
    %v2027 = vsel %vm1965, %v1960, 0.0
    %v2028 = vadd.f32 %v2026, %v2027
    %v2029 = vsel %vm1965, %v1961, 0.0
    %v2030 = vadd.f32 %v2028, %v2029
    %v2031 = vsel %vm1965, %v1962, 0.0
    %v2032 = vadd.f32 %v2030, %v2031
    %v2033 = vsel %vm1965, %v1963, 0.0
    %v2034 = vadd.f32 %v2032, %v2033
    %v2035 = vsel %vm1965, %v1964, 0.0
    %v2036 = vadd.f32 %v2034, %v2035
    %v2037 = vrot.slane %v2036, 4
    %v2038 = vadd.f32 %v2036, %v2037
    %v2039 = vrot.slane %v2038, 2
    %v2040 = vadd.f32 %v2038, %v2039
    %v2041 = vrot.slane %v2040, 1
    %v2042 = vadd.f32 %v2040, %v2041
    %v2043 = vadd.f32 %v2042, 0.0
    %v2044 = vmul.f32 %v1929, %v1929
    %v2045 = vmul.f32 %v1930, %v1930
    %v2046 = vmul.f32 %v1931, %v1931
    %v2047 = vmul.f32 %v1932, %v1932
    %v2048 = vmul.f32 %v1933, %v1933
    %v2049 = vmul.f32 %v1934, %v1934
    %v2050 = vmul.f32 %v1935, %v1935
    %v2051 = vmul.f32 %v1936, %v1936
    %v2052 = vmul.f32 %v1937, %v1937
    %v2053 = vmul.f32 %v1938, %v1938
    %v2054 = vmul.f32 %v1939, %v1939
    %v2055 = vmul.f32 %v1940, %v1940
    %v2056 = vmul.f32 %v1941, %v1941
    %v2057 = vmul.f32 %v1942, %v1942
    %v2058 = vmul.f32 %v1943, %v1943
    %v2059 = vmul.f32 %v1944, %v1944
    %v2060 = vmul.f32 %v1945, %v1945
    %v2061 = vmul.f32 %v1946, %v1946
    %v2062 = vmul.f32 %v1947, %v1947
    %v2063 = vmul.f32 %v1948, %v1948
    %v2064 = vmul.f32 %v1949, %v1949
    %v2065 = vmul.f32 %v1950, %v1950
    %v2066 = vmul.f32 %v1951, %v1951
    %v2067 = vmul.f32 %v1952, %v1952
    %v2068 = vmul.f32 %v1953, %v1953
    %v2069 = vmul.f32 %v1954, %v1954
    %v2070 = vmul.f32 %v1955, %v1955
    %v2071 = vmul.f32 %v1956, %v1956
    %v2072 = vmul.f32 %v1957, %v1957
    %v2073 = vmul.f32 %v1958, %v1958
    %v2074 = vmul.f32 %v1959, %v1959
    %v2075 = vmul.f32 %v1960, %v1960
    %v2076 = vmul.f32 %v1961, %v1961
    %v2077 = vmul.f32 %v1962, %v1962
    %v2078 = vmul.f32 %v1963, %v1963
    %v2079 = vmul.f32 %v1964, %v1964
    %v2080 = vsel %vm1965, %v2044, 0.0
    %v2081 = vsel %vm1965, %v2045, 0.0
    %v2082 = vadd.f32 %v2080, %v2081
    %v2083 = vsel %vm1965, %v2046, 0.0
    %v2084 = vadd.f32 %v2082, %v2083
    %v2085 = vsel %vm1965, %v2047, 0.0
    %v2086 = vadd.f32 %v2084, %v2085
    %v2087 = vsel %vm1965, %v2048, 0.0
    %v2088 = vadd.f32 %v2086, %v2087
    %v2089 = vsel %vm1965, %v2049, 0.0
    %v2090 = vadd.f32 %v2088, %v2089
    %v2091 = vsel %vm1965, %v2050, 0.0
    %v2092 = vadd.f32 %v2090, %v2091
    %v2093 = vsel %vm1965, %v2051, 0.0
    %v2094 = vadd.f32 %v2092, %v2093
    %v2095 = vsel %vm1965, %v2052, 0.0
    %v2096 = vadd.f32 %v2094, %v2095
    %v2097 = vsel %vm1965, %v2053, 0.0
    %v2098 = vadd.f32 %v2096, %v2097
    %v2099 = vsel %vm1965, %v2054, 0.0
    %v2100 = vadd.f32 %v2098, %v2099
    %v2101 = vsel %vm1965, %v2055, 0.0
    %v2102 = vadd.f32 %v2100, %v2101
    %v2103 = vsel %vm1965, %v2056, 0.0
    %v2104 = vadd.f32 %v2102, %v2103
    %v2105 = vsel %vm1965, %v2057, 0.0
    %v2106 = vadd.f32 %v2104, %v2105
    %v2107 = vsel %vm1965, %v2058, 0.0
    %v2108 = vadd.f32 %v2106, %v2107
    %v2109 = vsel %vm1965, %v2059, 0.0
    %v2110 = vadd.f32 %v2108, %v2109
    %v2111 = vsel %vm1965, %v2060, 0.0
    %v2112 = vadd.f32 %v2110, %v2111
    %v2113 = vsel %vm1965, %v2061, 0.0
    %v2114 = vadd.f32 %v2112, %v2113
    %v2115 = vsel %vm1965, %v2062, 0.0
    %v2116 = vadd.f32 %v2114, %v2115
    %v2117 = vsel %vm1965, %v2063, 0.0
    %v2118 = vadd.f32 %v2116, %v2117
    %v2119 = vsel %vm1965, %v2064, 0.0
    %v2120 = vadd.f32 %v2118, %v2119
    %v2121 = vsel %vm1965, %v2065, 0.0
    %v2122 = vadd.f32 %v2120, %v2121
    %v2123 = vsel %vm1965, %v2066, 0.0
    %v2124 = vadd.f32 %v2122, %v2123
    %v2125 = vsel %vm1965, %v2067, 0.0
    %v2126 = vadd.f32 %v2124, %v2125
    %v2127 = vsel %vm1965, %v2068, 0.0
    %v2128 = vadd.f32 %v2126, %v2127
    %v2129 = vsel %vm1965, %v2069, 0.0
    %v2130 = vadd.f32 %v2128, %v2129
    %v2131 = vsel %vm1965, %v2070, 0.0
    %v2132 = vadd.f32 %v2130, %v2131
    %v2133 = vsel %vm1965, %v2071, 0.0
    %v2134 = vadd.f32 %v2132, %v2133
    %v2135 = vsel %vm1965, %v2072, 0.0
    %v2136 = vadd.f32 %v2134, %v2135
    %v2137 = vsel %vm1965, %v2073, 0.0
    %v2138 = vadd.f32 %v2136, %v2137
    %v2139 = vsel %vm1965, %v2074, 0.0
    %v2140 = vadd.f32 %v2138, %v2139
    %v2141 = vsel %vm1965, %v2075, 0.0
    %v2142 = vadd.f32 %v2140, %v2141
    %v2143 = vsel %vm1965, %v2076, 0.0
    %v2144 = vadd.f32 %v2142, %v2143
    %v2145 = vsel %vm1965, %v2077, 0.0
    %v2146 = vadd.f32 %v2144, %v2145
    %v2147 = vsel %vm1965, %v2078, 0.0
    %v2148 = vadd.f32 %v2146, %v2147
    %v2149 = vsel %vm1965, %v2079, 0.0
    %v2150 = vadd.f32 %v2148, %v2149
    %v2151 = vrot.slane %v2150, 4
    %v2152 = vadd.f32 %v2150, %v2151
    %v2153 = vrot.slane %v2152, 2
    %v2154 = vadd.f32 %v2152, %v2153
    %v2155 = vrot.slane %v2154, 1
    %v2156 = vadd.f32 %v2154, %v2155
    %v2157 = vadd.f32 %v2156, 0.0
    %v2158 = vmul.f32 %v127, %v473
    %v2159 = vmul.f32 %v128, %v473
    %v2160 = vmul.f32 %v130, %v473
    %v2161 = vmul.f32 %v131, %v473
    %v2162 = vmul.f32 %v133, %v473
    %v2163 = vmul.f32 %v134, %v473
    %v2164 = vmul.f32 %v136, %v473
    %v2165 = vmul.f32 %v137, %v473
    %v2166 = vmul.f32 %v139, %v473
    %v2167 = vmul.f32 %v140, %v473
    %v2168 = vmul.f32 %v142, %v473
    %v2169 = vmul.f32 %v143, %v473
    %v2170 = vmul.f32 %v145, %v473
    %v2171 = vmul.f32 %v146, %v473
    %v2172 = vmul.f32 %v148, %v473
    %v2173 = vmul.f32 %v149, %v473
    %v2174 = vmul.f32 %v151, %v473
    %v2175 = vmul.f32 %v152, %v473
    %v2176 = vmul.f32 %v157, %v473
    %v2177 = vmul.f32 %v158, %v473
    %v2178 = vmul.f32 %v160, %v473
    %v2179 = vmul.f32 %v161, %v473
    %v2180 = vmul.f32 %v163, %v473
    %v2181 = vmul.f32 %v164, %v473
    %v2182 = vmul.f32 %v166, %v473
    %v2183 = vmul.f32 %v167, %v473
    %v2184 = vmul.f32 %v169, %v473
    %v2185 = vmul.f32 %v170, %v473
    %v2186 = vmul.f32 %v172, %v473
    %v2187 = vmul.f32 %v173, %v473
    %v2188 = vmul.f32 %v175, %v473
    %v2189 = vmul.f32 %v176, %v473
    %v2190 = vmul.f32 %v178, %v473
    %v2191 = vmul.f32 %v179, %v473
    %v2192 = vmul.f32 %v181, %v473
    %v2193 = vmul.f32 %v182, %v473
    %v2194 = vadd.f32 %v2158, 0.0
    %v2195 = vadd.f32 %v2159, 0.0
    %v2196 = vadd.f32 %v2160, 0.0
    %v2197 = vadd.f32 %v2161, 0.0
    %v2198 = vadd.f32 %v2162, 0.0
    %v2199 = vadd.f32 %v2163, 0.0
    %v2200 = vadd.f32 %v2164, 0.0
    %v2201 = vadd.f32 %v2165, 0.0
    %v2202 = vadd.f32 %v2166, 0.0
    %v2203 = vadd.f32 %v2167, 0.0
    %v2204 = vadd.f32 %v2168, 0.0
    %v2205 = vadd.f32 %v2169, 0.0
    %v2206 = vadd.f32 %v2170, 0.0
    %v2207 = vadd.f32 %v2171, 0.0
    %v2208 = vadd.f32 %v2172, 0.0
    %v2209 = vadd.f32 %v2173, 0.0
    %v2210 = vadd.f32 %v2174, 0.0
    %v2211 = vadd.f32 %v2175, 0.0
    %v2212 = vadd.f32 %v2176, 0.0
    %v2213 = vadd.f32 %v2177, 0.0
    %v2214 = vadd.f32 %v2178, 0.0
    %v2215 = vadd.f32 %v2179, 0.0
    %v2216 = vadd.f32 %v2180, 0.0
    %v2217 = vadd.f32 %v2181, 0.0
    %v2218 = vadd.f32 %v2182, 0.0
    %v2219 = vadd.f32 %v2183, 0.0
    %v2220 = vadd.f32 %v2184, 0.0
    %v2221 = vadd.f32 %v2185, 0.0
    %v2222 = vadd.f32 %v2186, 0.0
    %v2223 = vadd.f32 %v2187, 0.0
    %v2224 = vadd.f32 %v2188, 0.0
    %v2225 = vadd.f32 %v2189, 0.0
    %v2226 = vadd.f32 %v2190, 0.0
    %v2227 = vadd.f32 %v2191, 0.0
    %v2228 = vadd.f32 %v2192, 0.0
    %v2229 = vadd.f32 %v2193, 0.0
    %v2230 = vmul.f32 %v247, %v549
    %v2231 = vmul.f32 %v248, %v549
    %v2232 = vmul.f32 %v250, %v549
    %v2233 = vmul.f32 %v251, %v549
    %v2234 = vmul.f32 %v253, %v549
    %v2235 = vmul.f32 %v254, %v549
    %v2236 = vmul.f32 %v256, %v549
    %v2237 = vmul.f32 %v257, %v549
    %v2238 = vmul.f32 %v259, %v549
    %v2239 = vmul.f32 %v260, %v549
    %v2240 = vmul.f32 %v262, %v549
    %v2241 = vmul.f32 %v263, %v549
    %v2242 = vmul.f32 %v265, %v549
    %v2243 = vmul.f32 %v266, %v549
    %v2244 = vmul.f32 %v268, %v549
    %v2245 = vmul.f32 %v269, %v549
    %v2246 = vmul.f32 %v271, %v549
    %v2247 = vmul.f32 %v272, %v549
    %v2248 = vmul.f32 %v277, %v549
    %v2249 = vmul.f32 %v278, %v549
    %v2250 = vmul.f32 %v280, %v549
    %v2251 = vmul.f32 %v281, %v549
    %v2252 = vmul.f32 %v283, %v549
    %v2253 = vmul.f32 %v284, %v549
    %v2254 = vmul.f32 %v286, %v549
    %v2255 = vmul.f32 %v287, %v549
    %v2256 = vmul.f32 %v289, %v549
    %v2257 = vmul.f32 %v290, %v549
    %v2258 = vmul.f32 %v292, %v549
    %v2259 = vmul.f32 %v293, %v549
    %v2260 = vmul.f32 %v295, %v549
    %v2261 = vmul.f32 %v296, %v549
    %v2262 = vmul.f32 %v298, %v549
    %v2263 = vmul.f32 %v299, %v549
    %v2264 = vmul.f32 %v301, %v549
    %v2265 = vmul.f32 %v302, %v549
    %v2266 = vadd.f32 %v2194, %v2230
    %v2267 = vadd.f32 %v2195, %v2231
    %v2268 = vadd.f32 %v2196, %v2232
    %v2269 = vadd.f32 %v2197, %v2233
    %v2270 = vadd.f32 %v2198, %v2234
    %v2271 = vadd.f32 %v2199, %v2235
    %v2272 = vadd.f32 %v2200, %v2236
    %v2273 = vadd.f32 %v2201, %v2237
    %v2274 = vadd.f32 %v2202, %v2238
    %v2275 = vadd.f32 %v2203, %v2239
    %v2276 = vadd.f32 %v2204, %v2240
    %v2277 = vadd.f32 %v2205, %v2241
    %v2278 = vadd.f32 %v2206, %v2242
    %v2279 = vadd.f32 %v2207, %v2243
    %v2280 = vadd.f32 %v2208, %v2244
    %v2281 = vadd.f32 %v2209, %v2245
    %v2282 = vadd.f32 %v2210, %v2246
    %v2283 = vadd.f32 %v2211, %v2247
    %v2284 = vadd.f32 %v2212, %v2248
    %v2285 = vadd.f32 %v2213, %v2249
    %v2286 = vadd.f32 %v2214, %v2250
    %v2287 = vadd.f32 %v2215, %v2251
    %v2288 = vadd.f32 %v2216, %v2252
    %v2289 = vadd.f32 %v2217, %v2253
    %v2290 = vadd.f32 %v2218, %v2254
    %v2291 = vadd.f32 %v2219, %v2255
    %v2292 = vadd.f32 %v2220, %v2256
    %v2293 = vadd.f32 %v2221, %v2257
    %v2294 = vadd.f32 %v2222, %v2258
    %v2295 = vadd.f32 %v2223, %v2259
    %v2296 = vadd.f32 %v2224, %v2260
    %v2297 = vadd.f32 %v2225, %v2261
    %v2298 = vadd.f32 %v2226, %v2262
    %v2299 = vadd.f32 %v2227, %v2263
    %v2300 = vadd.f32 %v2228, %v2264
    %v2301 = vadd.f32 %v2229, %v2265
    %v2302 = vmul.f32 %v130, %v625
    %v2303 = vmul.f32 %v131, %v625
    %v2304 = vmul.f32 %v133, %v625
    %v2305 = vmul.f32 %v134, %v625
    %v2306 = vmul.f32 %v136, %v625
    %v2307 = vmul.f32 %v137, %v625
    %v2308 = vmul.f32 %v139, %v625
    %v2309 = vmul.f32 %v140, %v625
    %v2310 = vmul.f32 %v142, %v625
    %v2311 = vmul.f32 %v143, %v625
    %v2312 = vmul.f32 %v145, %v625
    %v2313 = vmul.f32 %v146, %v625
    %v2314 = vmul.f32 %v148, %v625
    %v2315 = vmul.f32 %v149, %v625
    %v2316 = vmul.f32 %v151, %v625
    %v2317 = vmul.f32 %v152, %v625
    %v2318 = vmul.f32 %v154, %v625
    %v2319 = vmul.f32 %v155, %v625
    %v2320 = vmul.f32 %v160, %v625
    %v2321 = vmul.f32 %v161, %v625
    %v2322 = vmul.f32 %v163, %v625
    %v2323 = vmul.f32 %v164, %v625
    %v2324 = vmul.f32 %v166, %v625
    %v2325 = vmul.f32 %v167, %v625
    %v2326 = vmul.f32 %v169, %v625
    %v2327 = vmul.f32 %v170, %v625
    %v2328 = vmul.f32 %v172, %v625
    %v2329 = vmul.f32 %v173, %v625
    %v2330 = vmul.f32 %v175, %v625
    %v2331 = vmul.f32 %v176, %v625
    %v2332 = vmul.f32 %v178, %v625
    %v2333 = vmul.f32 %v179, %v625
    %v2334 = vmul.f32 %v181, %v625
    %v2335 = vmul.f32 %v182, %v625
    %v2336 = vmul.f32 %v184, %v625
    %v2337 = vmul.f32 %v185, %v625
    %v2338 = vadd.f32 %v2266, %v2302
    %v2339 = vadd.f32 %v2267, %v2303
    %v2340 = vadd.f32 %v2268, %v2304
    %v2341 = vadd.f32 %v2269, %v2305
    %v2342 = vadd.f32 %v2270, %v2306
    %v2343 = vadd.f32 %v2271, %v2307
    %v2344 = vadd.f32 %v2272, %v2308
    %v2345 = vadd.f32 %v2273, %v2309
    %v2346 = vadd.f32 %v2274, %v2310
    %v2347 = vadd.f32 %v2275, %v2311
    %v2348 = vadd.f32 %v2276, %v2312
    %v2349 = vadd.f32 %v2277, %v2313
    %v2350 = vadd.f32 %v2278, %v2314
    %v2351 = vadd.f32 %v2279, %v2315
    %v2352 = vadd.f32 %v2280, %v2316
    %v2353 = vadd.f32 %v2281, %v2317
    %v2354 = vadd.f32 %v2282, %v2318
    %v2355 = vadd.f32 %v2283, %v2319
    %v2356 = vadd.f32 %v2284, %v2320
    %v2357 = vadd.f32 %v2285, %v2321
    %v2358 = vadd.f32 %v2286, %v2322
    %v2359 = vadd.f32 %v2287, %v2323
    %v2360 = vadd.f32 %v2288, %v2324
    %v2361 = vadd.f32 %v2289, %v2325
    %v2362 = vadd.f32 %v2290, %v2326
    %v2363 = vadd.f32 %v2291, %v2327
    %v2364 = vadd.f32 %v2292, %v2328
    %v2365 = vadd.f32 %v2293, %v2329
    %v2366 = vadd.f32 %v2294, %v2330
    %v2367 = vadd.f32 %v2295, %v2331
    %v2368 = vadd.f32 %v2296, %v2332
    %v2369 = vadd.f32 %v2297, %v2333
    %v2370 = vadd.f32 %v2298, %v2334
    %v2371 = vadd.f32 %v2299, %v2335
    %v2372 = vadd.f32 %v2300, %v2336
    %v2373 = vadd.f32 %v2301, %v2337
    %v2374 = vmul.f32 %v67, %v701
    %v2375 = vmul.f32 %v68, %v701
    %v2376 = vmul.f32 %v69, %v701
    %v2377 = vmul.f32 %v70, %v701
    %v2378 = vmul.f32 %v71, %v701
    %v2379 = vmul.f32 %v72, %v701
    %v2380 = vmul.f32 %v73, %v701
    %v2381 = vmul.f32 %v74, %v701
    %v2382 = vmul.f32 %v75, %v701
    %v2383 = vmul.f32 %v76, %v701
    %v2384 = vmul.f32 %v77, %v701
    %v2385 = vmul.f32 %v78, %v701
    %v2386 = vmul.f32 %v79, %v701
    %v2387 = vmul.f32 %v80, %v701
    %v2388 = vmul.f32 %v81, %v701
    %v2389 = vmul.f32 %v82, %v701
    %v2390 = vmul.f32 %v83, %v701
    %v2391 = vmul.f32 %v84, %v701
    %v2392 = vmul.f32 %v85, %v701
    %v2393 = vmul.f32 %v86, %v701
    %v2394 = vmul.f32 %v87, %v701
    %v2395 = vmul.f32 %v88, %v701
    %v2396 = vmul.f32 %v89, %v701
    %v2397 = vmul.f32 %v90, %v701
    %v2398 = vmul.f32 %v91, %v701
    %v2399 = vmul.f32 %v92, %v701
    %v2400 = vmul.f32 %v93, %v701
    %v2401 = vmul.f32 %v97, %v701
    %v2402 = vmul.f32 %v98, %v701
    %v2403 = vmul.f32 %v99, %v701
    %v2404 = vmul.f32 %v100, %v701
    %v2405 = vmul.f32 %v101, %v701
    %v2406 = vmul.f32 %v102, %v701
    %v2407 = vmul.f32 %v103, %v701
    %v2408 = vmul.f32 %v104, %v701
    %v2409 = vmul.f32 %v105, %v701
    %v2410 = vmul.f32 %v106, %v701
    %v2411 = vmul.f32 %v107, %v701
    %v2412 = vmul.f32 %v108, %v701
    %v2413 = vmul.f32 %v109, %v701
    %v2414 = vmul.f32 %v110, %v701
    %v2415 = vmul.f32 %v111, %v701
    %v2416 = vmul.f32 %v112, %v701
    %v2417 = vmul.f32 %v113, %v701
    %v2418 = vmul.f32 %v114, %v701
    %v2419 = vmul.f32 %v115, %v701
    %v2420 = vmul.f32 %v116, %v701
    %v2421 = vmul.f32 %v117, %v701
    %v2422 = vmul.f32 %v118, %v701
    %v2423 = vmul.f32 %v119, %v701
    %v2424 = vmul.f32 %v120, %v701
    %v2425 = vmul.f32 %v121, %v701
    %v2426 = vmul.f32 %v122, %v701
    %v2427 = vmul.f32 %v123, %v701
    %v2482 = vrot.slane %v2374, 1
    %v2483 = vrot.slane %v2375, 1
    %v2484 = vsel %vm1038, %v2482, %v2483
    %v2485 = vrot.slane %v2376, 1
    %v2486 = vsel %vm1038, %v2483, %v2485
    %v2487 = vrot.slane %v2377, 1
    %v2488 = vrot.slane %v2378, 1
    %v2489 = vsel %vm1038, %v2487, %v2488
    %v2490 = vrot.slane %v2379, 1
    %v2491 = vsel %vm1038, %v2488, %v2490
    %v2492 = vrot.slane %v2380, 1
    %v2493 = vrot.slane %v2381, 1
    %v2494 = vsel %vm1038, %v2492, %v2493
    %v2495 = vrot.slane %v2382, 1
    %v2496 = vsel %vm1038, %v2493, %v2495
    %v2497 = vrot.slane %v2383, 1
    %v2498 = vrot.slane %v2384, 1
    %v2499 = vsel %vm1038, %v2497, %v2498
    %v2500 = vrot.slane %v2385, 1
    %v2501 = vsel %vm1038, %v2498, %v2500
    %v2502 = vrot.slane %v2386, 1
    %v2503 = vrot.slane %v2387, 1
    %v2504 = vsel %vm1038, %v2502, %v2503
    %v2505 = vrot.slane %v2388, 1
    %v2506 = vsel %vm1038, %v2503, %v2505
    %v2507 = vrot.slane %v2389, 1
    %v2508 = vrot.slane %v2390, 1
    %v2509 = vsel %vm1038, %v2507, %v2508
    %v2510 = vrot.slane %v2391, 1
    %v2511 = vsel %vm1038, %v2508, %v2510
    %v2512 = vrot.slane %v2392, 1
    %v2513 = vrot.slane %v2393, 1
    %v2514 = vsel %vm1038, %v2512, %v2513
    %v2515 = vrot.slane %v2394, 1
    %v2516 = vsel %vm1038, %v2513, %v2515
    %v2517 = vrot.slane %v2395, 1
    %v2518 = vrot.slane %v2396, 1
    %v2519 = vsel %vm1038, %v2517, %v2518
    %v2520 = vrot.slane %v2397, 1
    %v2521 = vsel %vm1038, %v2518, %v2520
    %v2522 = vrot.slane %v2398, 1
    %v2523 = vrot.slane %v2399, 1
    %v2524 = vsel %vm1038, %v2522, %v2523
    %v2525 = vrot.slane %v2400, 1
    %v2526 = vsel %vm1038, %v2523, %v2525
    %v2527 = vrot.slane %v2401, 1
    %v2528 = vrot.slane %v2402, 1
    %v2529 = vsel %vm1038, %v2527, %v2528
    %v2530 = vrot.slane %v2403, 1
    %v2531 = vsel %vm1038, %v2528, %v2530
    %v2532 = vrot.slane %v2404, 1
    %v2533 = vrot.slane %v2405, 1
    %v2534 = vsel %vm1038, %v2532, %v2533
    %v2535 = vrot.slane %v2406, 1
    %v2536 = vsel %vm1038, %v2533, %v2535
    %v2537 = vrot.slane %v2407, 1
    %v2538 = vrot.slane %v2408, 1
    %v2539 = vsel %vm1038, %v2537, %v2538
    %v2540 = vrot.slane %v2409, 1
    %v2541 = vsel %vm1038, %v2538, %v2540
    %v2542 = vrot.slane %v2410, 1
    %v2543 = vrot.slane %v2411, 1
    %v2544 = vsel %vm1038, %v2542, %v2543
    %v2545 = vrot.slane %v2412, 1
    %v2546 = vsel %vm1038, %v2543, %v2545
    %v2547 = vrot.slane %v2413, 1
    %v2548 = vrot.slane %v2414, 1
    %v2549 = vsel %vm1038, %v2547, %v2548
    %v2550 = vrot.slane %v2415, 1
    %v2551 = vsel %vm1038, %v2548, %v2550
    %v2552 = vrot.slane %v2416, 1
    %v2553 = vrot.slane %v2417, 1
    %v2554 = vsel %vm1038, %v2552, %v2553
    %v2555 = vrot.slane %v2418, 1
    %v2556 = vsel %vm1038, %v2553, %v2555
    %v2557 = vrot.slane %v2419, 1
    %v2558 = vrot.slane %v2420, 1
    %v2559 = vsel %vm1038, %v2557, %v2558
    %v2560 = vrot.slane %v2421, 1
    %v2561 = vsel %vm1038, %v2558, %v2560
    %v2562 = vrot.slane %v2422, 1
    %v2563 = vrot.slane %v2423, 1
    %v2564 = vsel %vm1038, %v2562, %v2563
    %v2565 = vrot.slane %v2424, 1
    %v2566 = vsel %vm1038, %v2563, %v2565
    %v2567 = vrot.slane %v2425, 1
    %v2568 = vrot.slane %v2426, 1
    %v2569 = vsel %vm1038, %v2567, %v2568
    %v2570 = vrot.slane %v2427, 1
    %v2571 = vsel %vm1038, %v2568, %v2570
    %v2608 = vadd.f32 %v2338, %v2484
    %v2609 = vadd.f32 %v2339, %v2486
    %v2610 = vadd.f32 %v2340, %v2489
    %v2611 = vadd.f32 %v2341, %v2491
    %v2612 = vadd.f32 %v2342, %v2494
    %v2613 = vadd.f32 %v2343, %v2496
    %v2614 = vadd.f32 %v2344, %v2499
    %v2615 = vadd.f32 %v2345, %v2501
    %v2616 = vadd.f32 %v2346, %v2504
    %v2617 = vadd.f32 %v2347, %v2506
    %v2618 = vadd.f32 %v2348, %v2509
    %v2619 = vadd.f32 %v2349, %v2511
    %v2620 = vadd.f32 %v2350, %v2514
    %v2621 = vadd.f32 %v2351, %v2516
    %v2622 = vadd.f32 %v2352, %v2519
    %v2623 = vadd.f32 %v2353, %v2521
    %v2624 = vadd.f32 %v2354, %v2524
    %v2625 = vadd.f32 %v2355, %v2526
    %v2626 = vadd.f32 %v2356, %v2529
    %v2627 = vadd.f32 %v2357, %v2531
    %v2628 = vadd.f32 %v2358, %v2534
    %v2629 = vadd.f32 %v2359, %v2536
    %v2630 = vadd.f32 %v2360, %v2539
    %v2631 = vadd.f32 %v2361, %v2541
    %v2632 = vadd.f32 %v2362, %v2544
    %v2633 = vadd.f32 %v2363, %v2546
    %v2634 = vadd.f32 %v2364, %v2549
    %v2635 = vadd.f32 %v2365, %v2551
    %v2636 = vadd.f32 %v2366, %v2554
    %v2637 = vadd.f32 %v2367, %v2556
    %v2638 = vadd.f32 %v2368, %v2559
    %v2639 = vadd.f32 %v2369, %v2561
    %v2640 = vadd.f32 %v2370, %v2564
    %v2641 = vadd.f32 %v2371, %v2566
    %v2642 = vadd.f32 %v2372, %v2569
    %v2643 = vadd.f32 %v2373, %v2571
    %v2644 = vmul.f32 %v187, %v777
    %v2645 = vmul.f32 %v188, %v777
    %v2646 = vmul.f32 %v189, %v777
    %v2647 = vmul.f32 %v190, %v777
    %v2648 = vmul.f32 %v191, %v777
    %v2649 = vmul.f32 %v192, %v777
    %v2650 = vmul.f32 %v193, %v777
    %v2651 = vmul.f32 %v194, %v777
    %v2652 = vmul.f32 %v195, %v777
    %v2653 = vmul.f32 %v196, %v777
    %v2654 = vmul.f32 %v197, %v777
    %v2655 = vmul.f32 %v198, %v777
    %v2656 = vmul.f32 %v199, %v777
    %v2657 = vmul.f32 %v200, %v777
    %v2658 = vmul.f32 %v201, %v777
    %v2659 = vmul.f32 %v202, %v777
    %v2660 = vmul.f32 %v203, %v777
    %v2661 = vmul.f32 %v204, %v777
    %v2662 = vmul.f32 %v205, %v777
    %v2663 = vmul.f32 %v206, %v777
    %v2664 = vmul.f32 %v207, %v777
    %v2665 = vmul.f32 %v208, %v777
    %v2666 = vmul.f32 %v209, %v777
    %v2667 = vmul.f32 %v210, %v777
    %v2668 = vmul.f32 %v211, %v777
    %v2669 = vmul.f32 %v212, %v777
    %v2670 = vmul.f32 %v213, %v777
    %v2671 = vmul.f32 %v217, %v777
    %v2672 = vmul.f32 %v218, %v777
    %v2673 = vmul.f32 %v219, %v777
    %v2674 = vmul.f32 %v220, %v777
    %v2675 = vmul.f32 %v221, %v777
    %v2676 = vmul.f32 %v222, %v777
    %v2677 = vmul.f32 %v223, %v777
    %v2678 = vmul.f32 %v224, %v777
    %v2679 = vmul.f32 %v225, %v777
    %v2680 = vmul.f32 %v226, %v777
    %v2681 = vmul.f32 %v227, %v777
    %v2682 = vmul.f32 %v228, %v777
    %v2683 = vmul.f32 %v229, %v777
    %v2684 = vmul.f32 %v230, %v777
    %v2685 = vmul.f32 %v231, %v777
    %v2686 = vmul.f32 %v232, %v777
    %v2687 = vmul.f32 %v233, %v777
    %v2688 = vmul.f32 %v234, %v777
    %v2689 = vmul.f32 %v235, %v777
    %v2690 = vmul.f32 %v236, %v777
    %v2691 = vmul.f32 %v237, %v777
    %v2692 = vmul.f32 %v238, %v777
    %v2693 = vmul.f32 %v239, %v777
    %v2694 = vmul.f32 %v240, %v777
    %v2695 = vmul.f32 %v241, %v777
    %v2696 = vmul.f32 %v242, %v777
    %v2697 = vmul.f32 %v243, %v777
    %v2752 = vrot.slane %v2644, 1
    %v2753 = vrot.slane %v2645, 1
    %v2754 = vsel %vm1038, %v2752, %v2753
    %v2755 = vrot.slane %v2646, 1
    %v2756 = vsel %vm1038, %v2753, %v2755
    %v2757 = vrot.slane %v2647, 1
    %v2758 = vrot.slane %v2648, 1
    %v2759 = vsel %vm1038, %v2757, %v2758
    %v2760 = vrot.slane %v2649, 1
    %v2761 = vsel %vm1038, %v2758, %v2760
    %v2762 = vrot.slane %v2650, 1
    %v2763 = vrot.slane %v2651, 1
    %v2764 = vsel %vm1038, %v2762, %v2763
    %v2765 = vrot.slane %v2652, 1
    %v2766 = vsel %vm1038, %v2763, %v2765
    %v2767 = vrot.slane %v2653, 1
    %v2768 = vrot.slane %v2654, 1
    %v2769 = vsel %vm1038, %v2767, %v2768
    %v2770 = vrot.slane %v2655, 1
    %v2771 = vsel %vm1038, %v2768, %v2770
    %v2772 = vrot.slane %v2656, 1
    %v2773 = vrot.slane %v2657, 1
    %v2774 = vsel %vm1038, %v2772, %v2773
    %v2775 = vrot.slane %v2658, 1
    %v2776 = vsel %vm1038, %v2773, %v2775
    %v2777 = vrot.slane %v2659, 1
    %v2778 = vrot.slane %v2660, 1
    %v2779 = vsel %vm1038, %v2777, %v2778
    %v2780 = vrot.slane %v2661, 1
    %v2781 = vsel %vm1038, %v2778, %v2780
    %v2782 = vrot.slane %v2662, 1
    %v2783 = vrot.slane %v2663, 1
    %v2784 = vsel %vm1038, %v2782, %v2783
    %v2785 = vrot.slane %v2664, 1
    %v2786 = vsel %vm1038, %v2783, %v2785
    %v2787 = vrot.slane %v2665, 1
    %v2788 = vrot.slane %v2666, 1
    %v2789 = vsel %vm1038, %v2787, %v2788
    %v2790 = vrot.slane %v2667, 1
    %v2791 = vsel %vm1038, %v2788, %v2790
    %v2792 = vrot.slane %v2668, 1
    %v2793 = vrot.slane %v2669, 1
    %v2794 = vsel %vm1038, %v2792, %v2793
    %v2795 = vrot.slane %v2670, 1
    %v2796 = vsel %vm1038, %v2793, %v2795
    %v2797 = vrot.slane %v2671, 1
    %v2798 = vrot.slane %v2672, 1
    %v2799 = vsel %vm1038, %v2797, %v2798
    %v2800 = vrot.slane %v2673, 1
    %v2801 = vsel %vm1038, %v2798, %v2800
    %v2802 = vrot.slane %v2674, 1
    %v2803 = vrot.slane %v2675, 1
    %v2804 = vsel %vm1038, %v2802, %v2803
    %v2805 = vrot.slane %v2676, 1
    %v2806 = vsel %vm1038, %v2803, %v2805
    %v2807 = vrot.slane %v2677, 1
    %v2808 = vrot.slane %v2678, 1
    %v2809 = vsel %vm1038, %v2807, %v2808
    %v2810 = vrot.slane %v2679, 1
    %v2811 = vsel %vm1038, %v2808, %v2810
    %v2812 = vrot.slane %v2680, 1
    %v2813 = vrot.slane %v2681, 1
    %v2814 = vsel %vm1038, %v2812, %v2813
    %v2815 = vrot.slane %v2682, 1
    %v2816 = vsel %vm1038, %v2813, %v2815
    %v2817 = vrot.slane %v2683, 1
    %v2818 = vrot.slane %v2684, 1
    %v2819 = vsel %vm1038, %v2817, %v2818
    %v2820 = vrot.slane %v2685, 1
    %v2821 = vsel %vm1038, %v2818, %v2820
    %v2822 = vrot.slane %v2686, 1
    %v2823 = vrot.slane %v2687, 1
    %v2824 = vsel %vm1038, %v2822, %v2823
    %v2825 = vrot.slane %v2688, 1
    %v2826 = vsel %vm1038, %v2823, %v2825
    %v2827 = vrot.slane %v2689, 1
    %v2828 = vrot.slane %v2690, 1
    %v2829 = vsel %vm1038, %v2827, %v2828
    %v2830 = vrot.slane %v2691, 1
    %v2831 = vsel %vm1038, %v2828, %v2830
    %v2832 = vrot.slane %v2692, 1
    %v2833 = vrot.slane %v2693, 1
    %v2834 = vsel %vm1038, %v2832, %v2833
    %v2835 = vrot.slane %v2694, 1
    %v2836 = vsel %vm1038, %v2833, %v2835
    %v2837 = vrot.slane %v2695, 1
    %v2838 = vrot.slane %v2696, 1
    %v2839 = vsel %vm1038, %v2837, %v2838
    %v2840 = vrot.slane %v2697, 1
    %v2841 = vsel %vm1038, %v2838, %v2840
    %v2878 = vadd.f32 %v2608, %v2754
    %v2879 = vadd.f32 %v2609, %v2756
    %v2880 = vadd.f32 %v2610, %v2759
    %v2881 = vadd.f32 %v2611, %v2761
    %v2882 = vadd.f32 %v2612, %v2764
    %v2883 = vadd.f32 %v2613, %v2766
    %v2884 = vadd.f32 %v2614, %v2769
    %v2885 = vadd.f32 %v2615, %v2771
    %v2886 = vadd.f32 %v2616, %v2774
    %v2887 = vadd.f32 %v2617, %v2776
    %v2888 = vadd.f32 %v2618, %v2779
    %v2889 = vadd.f32 %v2619, %v2781
    %v2890 = vadd.f32 %v2620, %v2784
    %v2891 = vadd.f32 %v2621, %v2786
    %v2892 = vadd.f32 %v2622, %v2789
    %v2893 = vadd.f32 %v2623, %v2791
    %v2894 = vadd.f32 %v2624, %v2794
    %v2895 = vadd.f32 %v2625, %v2796
    %v2896 = vadd.f32 %v2626, %v2799
    %v2897 = vadd.f32 %v2627, %v2801
    %v2898 = vadd.f32 %v2628, %v2804
    %v2899 = vadd.f32 %v2629, %v2806
    %v2900 = vadd.f32 %v2630, %v2809
    %v2901 = vadd.f32 %v2631, %v2811
    %v2902 = vadd.f32 %v2632, %v2814
    %v2903 = vadd.f32 %v2633, %v2816
    %v2904 = vadd.f32 %v2634, %v2819
    %v2905 = vadd.f32 %v2635, %v2821
    %v2906 = vadd.f32 %v2636, %v2824
    %v2907 = vadd.f32 %v2637, %v2826
    %v2908 = vadd.f32 %v2638, %v2829
    %v2909 = vadd.f32 %v2639, %v2831
    %v2910 = vadd.f32 %v2640, %v2834
    %v2911 = vadd.f32 %v2641, %v2836
    %v2912 = vadd.f32 %v2642, %v2839
    %v2913 = vadd.f32 %v2643, %v2841
    %v2914 = vmul.f32 %v70, %v853
    %v2915 = vmul.f32 %v71, %v853
    %v2916 = vmul.f32 %v72, %v853
    %v2917 = vmul.f32 %v73, %v853
    %v2918 = vmul.f32 %v74, %v853
    %v2919 = vmul.f32 %v75, %v853
    %v2920 = vmul.f32 %v76, %v853
    %v2921 = vmul.f32 %v77, %v853
    %v2922 = vmul.f32 %v78, %v853
    %v2923 = vmul.f32 %v79, %v853
    %v2924 = vmul.f32 %v80, %v853
    %v2925 = vmul.f32 %v81, %v853
    %v2926 = vmul.f32 %v82, %v853
    %v2927 = vmul.f32 %v83, %v853
    %v2928 = vmul.f32 %v84, %v853
    %v2929 = vmul.f32 %v85, %v853
    %v2930 = vmul.f32 %v86, %v853
    %v2931 = vmul.f32 %v87, %v853
    %v2932 = vmul.f32 %v88, %v853
    %v2933 = vmul.f32 %v89, %v853
    %v2934 = vmul.f32 %v90, %v853
    %v2935 = vmul.f32 %v91, %v853
    %v2936 = vmul.f32 %v92, %v853
    %v2937 = vmul.f32 %v93, %v853
    %v2938 = vmul.f32 %v94, %v853
    %v2939 = vmul.f32 %v95, %v853
    %v2940 = vmul.f32 %v96, %v853
    %v2941 = vmul.f32 %v100, %v853
    %v2942 = vmul.f32 %v101, %v853
    %v2943 = vmul.f32 %v102, %v853
    %v2944 = vmul.f32 %v103, %v853
    %v2945 = vmul.f32 %v104, %v853
    %v2946 = vmul.f32 %v105, %v853
    %v2947 = vmul.f32 %v106, %v853
    %v2948 = vmul.f32 %v107, %v853
    %v2949 = vmul.f32 %v108, %v853
    %v2950 = vmul.f32 %v109, %v853
    %v2951 = vmul.f32 %v110, %v853
    %v2952 = vmul.f32 %v111, %v853
    %v2953 = vmul.f32 %v112, %v853
    %v2954 = vmul.f32 %v113, %v853
    %v2955 = vmul.f32 %v114, %v853
    %v2956 = vmul.f32 %v115, %v853
    %v2957 = vmul.f32 %v116, %v853
    %v2958 = vmul.f32 %v117, %v853
    %v2959 = vmul.f32 %v118, %v853
    %v2960 = vmul.f32 %v119, %v853
    %v2961 = vmul.f32 %v120, %v853
    %v2962 = vmul.f32 %v121, %v853
    %v2963 = vmul.f32 %v122, %v853
    %v2964 = vmul.f32 %v123, %v853
    %v2965 = vmul.f32 %v124, %v853
    %v2966 = vmul.f32 %v125, %v853
    %v2967 = vmul.f32 %v126, %v853
    %v3022 = vrot.slane %v2914, 1
    %v3023 = vrot.slane %v2915, 1
    %v3024 = vsel %vm1038, %v3022, %v3023
    %v3025 = vrot.slane %v2916, 1
    %v3026 = vsel %vm1038, %v3023, %v3025
    %v3027 = vrot.slane %v2917, 1
    %v3028 = vrot.slane %v2918, 1
    %v3029 = vsel %vm1038, %v3027, %v3028
    %v3030 = vrot.slane %v2919, 1
    %v3031 = vsel %vm1038, %v3028, %v3030
    %v3032 = vrot.slane %v2920, 1
    %v3033 = vrot.slane %v2921, 1
    %v3034 = vsel %vm1038, %v3032, %v3033
    %v3035 = vrot.slane %v2922, 1
    %v3036 = vsel %vm1038, %v3033, %v3035
    %v3037 = vrot.slane %v2923, 1
    %v3038 = vrot.slane %v2924, 1
    %v3039 = vsel %vm1038, %v3037, %v3038
    %v3040 = vrot.slane %v2925, 1
    %v3041 = vsel %vm1038, %v3038, %v3040
    %v3042 = vrot.slane %v2926, 1
    %v3043 = vrot.slane %v2927, 1
    %v3044 = vsel %vm1038, %v3042, %v3043
    %v3045 = vrot.slane %v2928, 1
    %v3046 = vsel %vm1038, %v3043, %v3045
    %v3047 = vrot.slane %v2929, 1
    %v3048 = vrot.slane %v2930, 1
    %v3049 = vsel %vm1038, %v3047, %v3048
    %v3050 = vrot.slane %v2931, 1
    %v3051 = vsel %vm1038, %v3048, %v3050
    %v3052 = vrot.slane %v2932, 1
    %v3053 = vrot.slane %v2933, 1
    %v3054 = vsel %vm1038, %v3052, %v3053
    %v3055 = vrot.slane %v2934, 1
    %v3056 = vsel %vm1038, %v3053, %v3055
    %v3057 = vrot.slane %v2935, 1
    %v3058 = vrot.slane %v2936, 1
    %v3059 = vsel %vm1038, %v3057, %v3058
    %v3060 = vrot.slane %v2937, 1
    %v3061 = vsel %vm1038, %v3058, %v3060
    %v3062 = vrot.slane %v2938, 1
    %v3063 = vrot.slane %v2939, 1
    %v3064 = vsel %vm1038, %v3062, %v3063
    %v3065 = vrot.slane %v2940, 1
    %v3066 = vsel %vm1038, %v3063, %v3065
    %v3067 = vrot.slane %v2941, 1
    %v3068 = vrot.slane %v2942, 1
    %v3069 = vsel %vm1038, %v3067, %v3068
    %v3070 = vrot.slane %v2943, 1
    %v3071 = vsel %vm1038, %v3068, %v3070
    %v3072 = vrot.slane %v2944, 1
    %v3073 = vrot.slane %v2945, 1
    %v3074 = vsel %vm1038, %v3072, %v3073
    %v3075 = vrot.slane %v2946, 1
    %v3076 = vsel %vm1038, %v3073, %v3075
    %v3077 = vrot.slane %v2947, 1
    %v3078 = vrot.slane %v2948, 1
    %v3079 = vsel %vm1038, %v3077, %v3078
    %v3080 = vrot.slane %v2949, 1
    %v3081 = vsel %vm1038, %v3078, %v3080
    %v3082 = vrot.slane %v2950, 1
    %v3083 = vrot.slane %v2951, 1
    %v3084 = vsel %vm1038, %v3082, %v3083
    %v3085 = vrot.slane %v2952, 1
    %v3086 = vsel %vm1038, %v3083, %v3085
    %v3087 = vrot.slane %v2953, 1
    %v3088 = vrot.slane %v2954, 1
    %v3089 = vsel %vm1038, %v3087, %v3088
    %v3090 = vrot.slane %v2955, 1
    %v3091 = vsel %vm1038, %v3088, %v3090
    %v3092 = vrot.slane %v2956, 1
    %v3093 = vrot.slane %v2957, 1
    %v3094 = vsel %vm1038, %v3092, %v3093
    %v3095 = vrot.slane %v2958, 1
    %v3096 = vsel %vm1038, %v3093, %v3095
    %v3097 = vrot.slane %v2959, 1
    %v3098 = vrot.slane %v2960, 1
    %v3099 = vsel %vm1038, %v3097, %v3098
    %v3100 = vrot.slane %v2961, 1
    %v3101 = vsel %vm1038, %v3098, %v3100
    %v3102 = vrot.slane %v2962, 1
    %v3103 = vrot.slane %v2963, 1
    %v3104 = vsel %vm1038, %v3102, %v3103
    %v3105 = vrot.slane %v2964, 1
    %v3106 = vsel %vm1038, %v3103, %v3105
    %v3107 = vrot.slane %v2965, 1
    %v3108 = vrot.slane %v2966, 1
    %v3109 = vsel %vm1038, %v3107, %v3108
    %v3110 = vrot.slane %v2967, 1
    %v3111 = vsel %vm1038, %v3108, %v3110
    %v3148 = vadd.f32 %v2878, %v3024
    %v3149 = vadd.f32 %v2879, %v3026
    %v3150 = vadd.f32 %v2880, %v3029
    %v3151 = vadd.f32 %v2881, %v3031
    %v3152 = vadd.f32 %v2882, %v3034
    %v3153 = vadd.f32 %v2883, %v3036
    %v3154 = vadd.f32 %v2884, %v3039
    %v3155 = vadd.f32 %v2885, %v3041
    %v3156 = vadd.f32 %v2886, %v3044
    %v3157 = vadd.f32 %v2887, %v3046
    %v3158 = vadd.f32 %v2888, %v3049
    %v3159 = vadd.f32 %v2889, %v3051
    %v3160 = vadd.f32 %v2890, %v3054
    %v3161 = vadd.f32 %v2891, %v3056
    %v3162 = vadd.f32 %v2892, %v3059
    %v3163 = vadd.f32 %v2893, %v3061
    %v3164 = vadd.f32 %v2894, %v3064
    %v3165 = vadd.f32 %v2895, %v3066
    %v3166 = vadd.f32 %v2896, %v3069
    %v3167 = vadd.f32 %v2897, %v3071
    %v3168 = vadd.f32 %v2898, %v3074
    %v3169 = vadd.f32 %v2899, %v3076
    %v3170 = vadd.f32 %v2900, %v3079
    %v3171 = vadd.f32 %v2901, %v3081
    %v3172 = vadd.f32 %v2902, %v3084
    %v3173 = vadd.f32 %v2903, %v3086
    %v3174 = vadd.f32 %v2904, %v3089
    %v3175 = vadd.f32 %v2905, %v3091
    %v3176 = vadd.f32 %v2906, %v3094
    %v3177 = vadd.f32 %v2907, %v3096
    %v3178 = vadd.f32 %v2908, %v3099
    %v3179 = vadd.f32 %v2909, %v3101
    %v3180 = vadd.f32 %v2910, %v3104
    %v3181 = vadd.f32 %v2911, %v3106
    %v3182 = vadd.f32 %v2912, %v3109
    %v3183 = vadd.f32 %v2913, %v3111
    %v3184 = vmul.f32 %v127, %v929
    %v3185 = vmul.f32 %v128, %v929
    %v3186 = vmul.f32 %v129, %v929
    %v3187 = vmul.f32 %v130, %v929
    %v3188 = vmul.f32 %v131, %v929
    %v3189 = vmul.f32 %v132, %v929
    %v3190 = vmul.f32 %v133, %v929
    %v3191 = vmul.f32 %v134, %v929
    %v3192 = vmul.f32 %v135, %v929
    %v3193 = vmul.f32 %v136, %v929
    %v3194 = vmul.f32 %v137, %v929
    %v3195 = vmul.f32 %v138, %v929
    %v3196 = vmul.f32 %v139, %v929
    %v3197 = vmul.f32 %v140, %v929
    %v3198 = vmul.f32 %v141, %v929
    %v3199 = vmul.f32 %v142, %v929
    %v3200 = vmul.f32 %v143, %v929
    %v3201 = vmul.f32 %v144, %v929
    %v3202 = vmul.f32 %v145, %v929
    %v3203 = vmul.f32 %v146, %v929
    %v3204 = vmul.f32 %v147, %v929
    %v3205 = vmul.f32 %v148, %v929
    %v3206 = vmul.f32 %v149, %v929
    %v3207 = vmul.f32 %v150, %v929
    %v3208 = vmul.f32 %v151, %v929
    %v3209 = vmul.f32 %v152, %v929
    %v3210 = vmul.f32 %v153, %v929
    %v3211 = vmul.f32 %v157, %v929
    %v3212 = vmul.f32 %v158, %v929
    %v3213 = vmul.f32 %v159, %v929
    %v3214 = vmul.f32 %v160, %v929
    %v3215 = vmul.f32 %v161, %v929
    %v3216 = vmul.f32 %v162, %v929
    %v3217 = vmul.f32 %v163, %v929
    %v3218 = vmul.f32 %v164, %v929
    %v3219 = vmul.f32 %v165, %v929
    %v3220 = vmul.f32 %v166, %v929
    %v3221 = vmul.f32 %v167, %v929
    %v3222 = vmul.f32 %v168, %v929
    %v3223 = vmul.f32 %v169, %v929
    %v3224 = vmul.f32 %v170, %v929
    %v3225 = vmul.f32 %v171, %v929
    %v3226 = vmul.f32 %v172, %v929
    %v3227 = vmul.f32 %v173, %v929
    %v3228 = vmul.f32 %v174, %v929
    %v3229 = vmul.f32 %v175, %v929
    %v3230 = vmul.f32 %v176, %v929
    %v3231 = vmul.f32 %v177, %v929
    %v3232 = vmul.f32 %v178, %v929
    %v3233 = vmul.f32 %v179, %v929
    %v3234 = vmul.f32 %v180, %v929
    %v3235 = vmul.f32 %v181, %v929
    %v3236 = vmul.f32 %v182, %v929
    %v3237 = vmul.f32 %v183, %v929
    %v3292 = vrot.slane %v3184, 1
    %v3293 = vrot.slane %v3185, 1
    %v3294 = vsel %vm1038, %v3292, %v3293
    %v3295 = vrot.slane %v3186, 1
    %v3296 = vsel %vm1038, %v3293, %v3295
    %v3297 = vrot.slane %v3187, 1
    %v3298 = vrot.slane %v3188, 1
    %v3299 = vsel %vm1038, %v3297, %v3298
    %v3300 = vrot.slane %v3189, 1
    %v3301 = vsel %vm1038, %v3298, %v3300
    %v3302 = vrot.slane %v3190, 1
    %v3303 = vrot.slane %v3191, 1
    %v3304 = vsel %vm1038, %v3302, %v3303
    %v3305 = vrot.slane %v3192, 1
    %v3306 = vsel %vm1038, %v3303, %v3305
    %v3307 = vrot.slane %v3193, 1
    %v3308 = vrot.slane %v3194, 1
    %v3309 = vsel %vm1038, %v3307, %v3308
    %v3310 = vrot.slane %v3195, 1
    %v3311 = vsel %vm1038, %v3308, %v3310
    %v3312 = vrot.slane %v3196, 1
    %v3313 = vrot.slane %v3197, 1
    %v3314 = vsel %vm1038, %v3312, %v3313
    %v3315 = vrot.slane %v3198, 1
    %v3316 = vsel %vm1038, %v3313, %v3315
    %v3317 = vrot.slane %v3199, 1
    %v3318 = vrot.slane %v3200, 1
    %v3319 = vsel %vm1038, %v3317, %v3318
    %v3320 = vrot.slane %v3201, 1
    %v3321 = vsel %vm1038, %v3318, %v3320
    %v3322 = vrot.slane %v3202, 1
    %v3323 = vrot.slane %v3203, 1
    %v3324 = vsel %vm1038, %v3322, %v3323
    %v3325 = vrot.slane %v3204, 1
    %v3326 = vsel %vm1038, %v3323, %v3325
    %v3327 = vrot.slane %v3205, 1
    %v3328 = vrot.slane %v3206, 1
    %v3329 = vsel %vm1038, %v3327, %v3328
    %v3330 = vrot.slane %v3207, 1
    %v3331 = vsel %vm1038, %v3328, %v3330
    %v3332 = vrot.slane %v3208, 1
    %v3333 = vrot.slane %v3209, 1
    %v3334 = vsel %vm1038, %v3332, %v3333
    %v3335 = vrot.slane %v3210, 1
    %v3336 = vsel %vm1038, %v3333, %v3335
    %v3337 = vrot.slane %v3211, 1
    %v3338 = vrot.slane %v3212, 1
    %v3339 = vsel %vm1038, %v3337, %v3338
    %v3340 = vrot.slane %v3213, 1
    %v3341 = vsel %vm1038, %v3338, %v3340
    %v3342 = vrot.slane %v3214, 1
    %v3343 = vrot.slane %v3215, 1
    %v3344 = vsel %vm1038, %v3342, %v3343
    %v3345 = vrot.slane %v3216, 1
    %v3346 = vsel %vm1038, %v3343, %v3345
    %v3347 = vrot.slane %v3217, 1
    %v3348 = vrot.slane %v3218, 1
    %v3349 = vsel %vm1038, %v3347, %v3348
    %v3350 = vrot.slane %v3219, 1
    %v3351 = vsel %vm1038, %v3348, %v3350
    %v3352 = vrot.slane %v3220, 1
    %v3353 = vrot.slane %v3221, 1
    %v3354 = vsel %vm1038, %v3352, %v3353
    %v3355 = vrot.slane %v3222, 1
    %v3356 = vsel %vm1038, %v3353, %v3355
    %v3357 = vrot.slane %v3223, 1
    %v3358 = vrot.slane %v3224, 1
    %v3359 = vsel %vm1038, %v3357, %v3358
    %v3360 = vrot.slane %v3225, 1
    %v3361 = vsel %vm1038, %v3358, %v3360
    %v3362 = vrot.slane %v3226, 1
    %v3363 = vrot.slane %v3227, 1
    %v3364 = vsel %vm1038, %v3362, %v3363
    %v3365 = vrot.slane %v3228, 1
    %v3366 = vsel %vm1038, %v3363, %v3365
    %v3367 = vrot.slane %v3229, 1
    %v3368 = vrot.slane %v3230, 1
    %v3369 = vsel %vm1038, %v3367, %v3368
    %v3370 = vrot.slane %v3231, 1
    %v3371 = vsel %vm1038, %v3368, %v3370
    %v3372 = vrot.slane %v3232, 1
    %v3373 = vrot.slane %v3233, 1
    %v3374 = vsel %vm1038, %v3372, %v3373
    %v3375 = vrot.slane %v3234, 1
    %v3376 = vsel %vm1038, %v3373, %v3375
    %v3377 = vrot.slane %v3235, 1
    %v3378 = vrot.slane %v3236, 1
    %v3379 = vsel %vm1038, %v3377, %v3378
    %v3380 = vrot.slane %v3237, 1
    %v3381 = vsel %vm1038, %v3378, %v3380
    %v3418 = vadd.f32 %v3148, %v3294
    %v3419 = vadd.f32 %v3149, %v3296
    %v3420 = vadd.f32 %v3150, %v3299
    %v3421 = vadd.f32 %v3151, %v3301
    %v3422 = vadd.f32 %v3152, %v3304
    %v3423 = vadd.f32 %v3153, %v3306
    %v3424 = vadd.f32 %v3154, %v3309
    %v3425 = vadd.f32 %v3155, %v3311
    %v3426 = vadd.f32 %v3156, %v3314
    %v3427 = vadd.f32 %v3157, %v3316
    %v3428 = vadd.f32 %v3158, %v3319
    %v3429 = vadd.f32 %v3159, %v3321
    %v3430 = vadd.f32 %v3160, %v3324
    %v3431 = vadd.f32 %v3161, %v3326
    %v3432 = vadd.f32 %v3162, %v3329
    %v3433 = vadd.f32 %v3163, %v3331
    %v3434 = vadd.f32 %v3164, %v3334
    %v3435 = vadd.f32 %v3165, %v3336
    %v3436 = vadd.f32 %v3166, %v3339
    %v3437 = vadd.f32 %v3167, %v3341
    %v3438 = vadd.f32 %v3168, %v3344
    %v3439 = vadd.f32 %v3169, %v3346
    %v3440 = vadd.f32 %v3170, %v3349
    %v3441 = vadd.f32 %v3171, %v3351
    %v3442 = vadd.f32 %v3172, %v3354
    %v3443 = vadd.f32 %v3173, %v3356
    %v3444 = vadd.f32 %v3174, %v3359
    %v3445 = vadd.f32 %v3175, %v3361
    %v3446 = vadd.f32 %v3176, %v3364
    %v3447 = vadd.f32 %v3177, %v3366
    %v3448 = vadd.f32 %v3178, %v3369
    %v3449 = vadd.f32 %v3179, %v3371
    %v3450 = vadd.f32 %v3180, %v3374
    %v3451 = vadd.f32 %v3181, %v3376
    %v3452 = vadd.f32 %v3182, %v3379
    %v3453 = vadd.f32 %v3183, %v3381
    %v3454 = vmul.f32 %v247, %v1204
    %v3455 = vmul.f32 %v248, %v1204
    %v3456 = vmul.f32 %v249, %v1204
    %v3457 = vmul.f32 %v250, %v1204
    %v3458 = vmul.f32 %v251, %v1204
    %v3459 = vmul.f32 %v252, %v1204
    %v3460 = vmul.f32 %v253, %v1204
    %v3461 = vmul.f32 %v254, %v1204
    %v3462 = vmul.f32 %v255, %v1204
    %v3463 = vmul.f32 %v256, %v1204
    %v3464 = vmul.f32 %v257, %v1204
    %v3465 = vmul.f32 %v258, %v1204
    %v3466 = vmul.f32 %v259, %v1204
    %v3467 = vmul.f32 %v260, %v1204
    %v3468 = vmul.f32 %v261, %v1204
    %v3469 = vmul.f32 %v262, %v1204
    %v3470 = vmul.f32 %v263, %v1204
    %v3471 = vmul.f32 %v264, %v1204
    %v3472 = vmul.f32 %v265, %v1204
    %v3473 = vmul.f32 %v266, %v1204
    %v3474 = vmul.f32 %v267, %v1204
    %v3475 = vmul.f32 %v268, %v1204
    %v3476 = vmul.f32 %v269, %v1204
    %v3477 = vmul.f32 %v270, %v1204
    %v3478 = vmul.f32 %v271, %v1204
    %v3479 = vmul.f32 %v272, %v1204
    %v3480 = vmul.f32 %v273, %v1204
    %v3481 = vmul.f32 %v277, %v1204
    %v3482 = vmul.f32 %v278, %v1204
    %v3483 = vmul.f32 %v279, %v1204
    %v3484 = vmul.f32 %v280, %v1204
    %v3485 = vmul.f32 %v281, %v1204
    %v3486 = vmul.f32 %v282, %v1204
    %v3487 = vmul.f32 %v283, %v1204
    %v3488 = vmul.f32 %v284, %v1204
    %v3489 = vmul.f32 %v285, %v1204
    %v3490 = vmul.f32 %v286, %v1204
    %v3491 = vmul.f32 %v287, %v1204
    %v3492 = vmul.f32 %v288, %v1204
    %v3493 = vmul.f32 %v289, %v1204
    %v3494 = vmul.f32 %v290, %v1204
    %v3495 = vmul.f32 %v291, %v1204
    %v3496 = vmul.f32 %v292, %v1204
    %v3497 = vmul.f32 %v293, %v1204
    %v3498 = vmul.f32 %v294, %v1204
    %v3499 = vmul.f32 %v295, %v1204
    %v3500 = vmul.f32 %v296, %v1204
    %v3501 = vmul.f32 %v297, %v1204
    %v3502 = vmul.f32 %v298, %v1204
    %v3503 = vmul.f32 %v299, %v1204
    %v3504 = vmul.f32 %v300, %v1204
    %v3505 = vmul.f32 %v301, %v1204
    %v3506 = vmul.f32 %v302, %v1204
    %v3507 = vmul.f32 %v303, %v1204
    %v3562 = vrot.slane %v3454, 1
    %v3563 = vrot.slane %v3455, 1
    %v3564 = vsel %vm1038, %v3562, %v3563
    %v3565 = vrot.slane %v3456, 1
    %v3566 = vsel %vm1038, %v3563, %v3565
    %v3567 = vrot.slane %v3457, 1
    %v3568 = vrot.slane %v3458, 1
    %v3569 = vsel %vm1038, %v3567, %v3568
    %v3570 = vrot.slane %v3459, 1
    %v3571 = vsel %vm1038, %v3568, %v3570
    %v3572 = vrot.slane %v3460, 1
    %v3573 = vrot.slane %v3461, 1
    %v3574 = vsel %vm1038, %v3572, %v3573
    %v3575 = vrot.slane %v3462, 1
    %v3576 = vsel %vm1038, %v3573, %v3575
    %v3577 = vrot.slane %v3463, 1
    %v3578 = vrot.slane %v3464, 1
    %v3579 = vsel %vm1038, %v3577, %v3578
    %v3580 = vrot.slane %v3465, 1
    %v3581 = vsel %vm1038, %v3578, %v3580
    %v3582 = vrot.slane %v3466, 1
    %v3583 = vrot.slane %v3467, 1
    %v3584 = vsel %vm1038, %v3582, %v3583
    %v3585 = vrot.slane %v3468, 1
    %v3586 = vsel %vm1038, %v3583, %v3585
    %v3587 = vrot.slane %v3469, 1
    %v3588 = vrot.slane %v3470, 1
    %v3589 = vsel %vm1038, %v3587, %v3588
    %v3590 = vrot.slane %v3471, 1
    %v3591 = vsel %vm1038, %v3588, %v3590
    %v3592 = vrot.slane %v3472, 1
    %v3593 = vrot.slane %v3473, 1
    %v3594 = vsel %vm1038, %v3592, %v3593
    %v3595 = vrot.slane %v3474, 1
    %v3596 = vsel %vm1038, %v3593, %v3595
    %v3597 = vrot.slane %v3475, 1
    %v3598 = vrot.slane %v3476, 1
    %v3599 = vsel %vm1038, %v3597, %v3598
    %v3600 = vrot.slane %v3477, 1
    %v3601 = vsel %vm1038, %v3598, %v3600
    %v3602 = vrot.slane %v3478, 1
    %v3603 = vrot.slane %v3479, 1
    %v3604 = vsel %vm1038, %v3602, %v3603
    %v3605 = vrot.slane %v3480, 1
    %v3606 = vsel %vm1038, %v3603, %v3605
    %v3607 = vrot.slane %v3481, 1
    %v3608 = vrot.slane %v3482, 1
    %v3609 = vsel %vm1038, %v3607, %v3608
    %v3610 = vrot.slane %v3483, 1
    %v3611 = vsel %vm1038, %v3608, %v3610
    %v3612 = vrot.slane %v3484, 1
    %v3613 = vrot.slane %v3485, 1
    %v3614 = vsel %vm1038, %v3612, %v3613
    %v3615 = vrot.slane %v3486, 1
    %v3616 = vsel %vm1038, %v3613, %v3615
    %v3617 = vrot.slane %v3487, 1
    %v3618 = vrot.slane %v3488, 1
    %v3619 = vsel %vm1038, %v3617, %v3618
    %v3620 = vrot.slane %v3489, 1
    %v3621 = vsel %vm1038, %v3618, %v3620
    %v3622 = vrot.slane %v3490, 1
    %v3623 = vrot.slane %v3491, 1
    %v3624 = vsel %vm1038, %v3622, %v3623
    %v3625 = vrot.slane %v3492, 1
    %v3626 = vsel %vm1038, %v3623, %v3625
    %v3627 = vrot.slane %v3493, 1
    %v3628 = vrot.slane %v3494, 1
    %v3629 = vsel %vm1038, %v3627, %v3628
    %v3630 = vrot.slane %v3495, 1
    %v3631 = vsel %vm1038, %v3628, %v3630
    %v3632 = vrot.slane %v3496, 1
    %v3633 = vrot.slane %v3497, 1
    %v3634 = vsel %vm1038, %v3632, %v3633
    %v3635 = vrot.slane %v3498, 1
    %v3636 = vsel %vm1038, %v3633, %v3635
    %v3637 = vrot.slane %v3499, 1
    %v3638 = vrot.slane %v3500, 1
    %v3639 = vsel %vm1038, %v3637, %v3638
    %v3640 = vrot.slane %v3501, 1
    %v3641 = vsel %vm1038, %v3638, %v3640
    %v3642 = vrot.slane %v3502, 1
    %v3643 = vrot.slane %v3503, 1
    %v3644 = vsel %vm1038, %v3642, %v3643
    %v3645 = vrot.slane %v3504, 1
    %v3646 = vsel %vm1038, %v3643, %v3645
    %v3647 = vrot.slane %v3505, 1
    %v3648 = vrot.slane %v3506, 1
    %v3649 = vsel %vm1038, %v3647, %v3648
    %v3650 = vrot.slane %v3507, 1
    %v3651 = vsel %vm1038, %v3648, %v3650
    %v3688 = vadd.f32 %v3418, %v3564
    %v3689 = vadd.f32 %v3419, %v3566
    %v3690 = vadd.f32 %v3420, %v3569
    %v3691 = vadd.f32 %v3421, %v3571
    %v3692 = vadd.f32 %v3422, %v3574
    %v3693 = vadd.f32 %v3423, %v3576
    %v3694 = vadd.f32 %v3424, %v3579
    %v3695 = vadd.f32 %v3425, %v3581
    %v3696 = vadd.f32 %v3426, %v3584
    %v3697 = vadd.f32 %v3427, %v3586
    %v3698 = vadd.f32 %v3428, %v3589
    %v3699 = vadd.f32 %v3429, %v3591
    %v3700 = vadd.f32 %v3430, %v3594
    %v3701 = vadd.f32 %v3431, %v3596
    %v3702 = vadd.f32 %v3432, %v3599
    %v3703 = vadd.f32 %v3433, %v3601
    %v3704 = vadd.f32 %v3434, %v3604
    %v3705 = vadd.f32 %v3435, %v3606
    %v3706 = vadd.f32 %v3436, %v3609
    %v3707 = vadd.f32 %v3437, %v3611
    %v3708 = vadd.f32 %v3438, %v3614
    %v3709 = vadd.f32 %v3439, %v3616
    %v3710 = vadd.f32 %v3440, %v3619
    %v3711 = vadd.f32 %v3441, %v3621
    %v3712 = vadd.f32 %v3442, %v3624
    %v3713 = vadd.f32 %v3443, %v3626
    %v3714 = vadd.f32 %v3444, %v3629
    %v3715 = vadd.f32 %v3445, %v3631
    %v3716 = vadd.f32 %v3446, %v3634
    %v3717 = vadd.f32 %v3447, %v3636
    %v3718 = vadd.f32 %v3448, %v3639
    %v3719 = vadd.f32 %v3449, %v3641
    %v3720 = vadd.f32 %v3450, %v3644
    %v3721 = vadd.f32 %v3451, %v3646
    %v3722 = vadd.f32 %v3452, %v3649
    %v3723 = vadd.f32 %v3453, %v3651
    %v3724 = vmul.f32 %v130, %v1478
    %v3725 = vmul.f32 %v131, %v1478
    %v3726 = vmul.f32 %v132, %v1478
    %v3727 = vmul.f32 %v133, %v1478
    %v3728 = vmul.f32 %v134, %v1478
    %v3729 = vmul.f32 %v135, %v1478
    %v3730 = vmul.f32 %v136, %v1478
    %v3731 = vmul.f32 %v137, %v1478
    %v3732 = vmul.f32 %v138, %v1478
    %v3733 = vmul.f32 %v139, %v1478
    %v3734 = vmul.f32 %v140, %v1478
    %v3735 = vmul.f32 %v141, %v1478
    %v3736 = vmul.f32 %v142, %v1478
    %v3737 = vmul.f32 %v143, %v1478
    %v3738 = vmul.f32 %v144, %v1478
    %v3739 = vmul.f32 %v145, %v1478
    %v3740 = vmul.f32 %v146, %v1478
    %v3741 = vmul.f32 %v147, %v1478
    %v3742 = vmul.f32 %v148, %v1478
    %v3743 = vmul.f32 %v149, %v1478
    %v3744 = vmul.f32 %v150, %v1478
    %v3745 = vmul.f32 %v151, %v1478
    %v3746 = vmul.f32 %v152, %v1478
    %v3747 = vmul.f32 %v153, %v1478
    %v3748 = vmul.f32 %v154, %v1478
    %v3749 = vmul.f32 %v155, %v1478
    %v3750 = vmul.f32 %v156, %v1478
    %v3751 = vmul.f32 %v160, %v1478
    %v3752 = vmul.f32 %v161, %v1478
    %v3753 = vmul.f32 %v162, %v1478
    %v3754 = vmul.f32 %v163, %v1478
    %v3755 = vmul.f32 %v164, %v1478
    %v3756 = vmul.f32 %v165, %v1478
    %v3757 = vmul.f32 %v166, %v1478
    %v3758 = vmul.f32 %v167, %v1478
    %v3759 = vmul.f32 %v168, %v1478
    %v3760 = vmul.f32 %v169, %v1478
    %v3761 = vmul.f32 %v170, %v1478
    %v3762 = vmul.f32 %v171, %v1478
    %v3763 = vmul.f32 %v172, %v1478
    %v3764 = vmul.f32 %v173, %v1478
    %v3765 = vmul.f32 %v174, %v1478
    %v3766 = vmul.f32 %v175, %v1478
    %v3767 = vmul.f32 %v176, %v1478
    %v3768 = vmul.f32 %v177, %v1478
    %v3769 = vmul.f32 %v178, %v1478
    %v3770 = vmul.f32 %v179, %v1478
    %v3771 = vmul.f32 %v180, %v1478
    %v3772 = vmul.f32 %v181, %v1478
    %v3773 = vmul.f32 %v182, %v1478
    %v3774 = vmul.f32 %v183, %v1478
    %v3775 = vmul.f32 %v184, %v1478
    %v3776 = vmul.f32 %v185, %v1478
    %v3777 = vmul.f32 %v186, %v1478
    %v3832 = vrot.slane %v3724, 1
    %v3833 = vrot.slane %v3725, 1
    %v3834 = vsel %vm1038, %v3832, %v3833
    %v3835 = vrot.slane %v3726, 1
    %v3836 = vsel %vm1038, %v3833, %v3835
    %v3837 = vrot.slane %v3727, 1
    %v3838 = vrot.slane %v3728, 1
    %v3839 = vsel %vm1038, %v3837, %v3838
    %v3840 = vrot.slane %v3729, 1
    %v3841 = vsel %vm1038, %v3838, %v3840
    %v3842 = vrot.slane %v3730, 1
    %v3843 = vrot.slane %v3731, 1
    %v3844 = vsel %vm1038, %v3842, %v3843
    %v3845 = vrot.slane %v3732, 1
    %v3846 = vsel %vm1038, %v3843, %v3845
    %v3847 = vrot.slane %v3733, 1
    %v3848 = vrot.slane %v3734, 1
    %v3849 = vsel %vm1038, %v3847, %v3848
    %v3850 = vrot.slane %v3735, 1
    %v3851 = vsel %vm1038, %v3848, %v3850
    %v3852 = vrot.slane %v3736, 1
    %v3853 = vrot.slane %v3737, 1
    %v3854 = vsel %vm1038, %v3852, %v3853
    %v3855 = vrot.slane %v3738, 1
    %v3856 = vsel %vm1038, %v3853, %v3855
    %v3857 = vrot.slane %v3739, 1
    %v3858 = vrot.slane %v3740, 1
    %v3859 = vsel %vm1038, %v3857, %v3858
    %v3860 = vrot.slane %v3741, 1
    %v3861 = vsel %vm1038, %v3858, %v3860
    %v3862 = vrot.slane %v3742, 1
    %v3863 = vrot.slane %v3743, 1
    %v3864 = vsel %vm1038, %v3862, %v3863
    %v3865 = vrot.slane %v3744, 1
    %v3866 = vsel %vm1038, %v3863, %v3865
    %v3867 = vrot.slane %v3745, 1
    %v3868 = vrot.slane %v3746, 1
    %v3869 = vsel %vm1038, %v3867, %v3868
    %v3870 = vrot.slane %v3747, 1
    %v3871 = vsel %vm1038, %v3868, %v3870
    %v3872 = vrot.slane %v3748, 1
    %v3873 = vrot.slane %v3749, 1
    %v3874 = vsel %vm1038, %v3872, %v3873
    %v3875 = vrot.slane %v3750, 1
    %v3876 = vsel %vm1038, %v3873, %v3875
    %v3877 = vrot.slane %v3751, 1
    %v3878 = vrot.slane %v3752, 1
    %v3879 = vsel %vm1038, %v3877, %v3878
    %v3880 = vrot.slane %v3753, 1
    %v3881 = vsel %vm1038, %v3878, %v3880
    %v3882 = vrot.slane %v3754, 1
    %v3883 = vrot.slane %v3755, 1
    %v3884 = vsel %vm1038, %v3882, %v3883
    %v3885 = vrot.slane %v3756, 1
    %v3886 = vsel %vm1038, %v3883, %v3885
    %v3887 = vrot.slane %v3757, 1
    %v3888 = vrot.slane %v3758, 1
    %v3889 = vsel %vm1038, %v3887, %v3888
    %v3890 = vrot.slane %v3759, 1
    %v3891 = vsel %vm1038, %v3888, %v3890
    %v3892 = vrot.slane %v3760, 1
    %v3893 = vrot.slane %v3761, 1
    %v3894 = vsel %vm1038, %v3892, %v3893
    %v3895 = vrot.slane %v3762, 1
    %v3896 = vsel %vm1038, %v3893, %v3895
    %v3897 = vrot.slane %v3763, 1
    %v3898 = vrot.slane %v3764, 1
    %v3899 = vsel %vm1038, %v3897, %v3898
    %v3900 = vrot.slane %v3765, 1
    %v3901 = vsel %vm1038, %v3898, %v3900
    %v3902 = vrot.slane %v3766, 1
    %v3903 = vrot.slane %v3767, 1
    %v3904 = vsel %vm1038, %v3902, %v3903
    %v3905 = vrot.slane %v3768, 1
    %v3906 = vsel %vm1038, %v3903, %v3905
    %v3907 = vrot.slane %v3769, 1
    %v3908 = vrot.slane %v3770, 1
    %v3909 = vsel %vm1038, %v3907, %v3908
    %v3910 = vrot.slane %v3771, 1
    %v3911 = vsel %vm1038, %v3908, %v3910
    %v3912 = vrot.slane %v3772, 1
    %v3913 = vrot.slane %v3773, 1
    %v3914 = vsel %vm1038, %v3912, %v3913
    %v3915 = vrot.slane %v3774, 1
    %v3916 = vsel %vm1038, %v3913, %v3915
    %v3917 = vrot.slane %v3775, 1
    %v3918 = vrot.slane %v3776, 1
    %v3919 = vsel %vm1038, %v3917, %v3918
    %v3920 = vrot.slane %v3777, 1
    %v3921 = vsel %vm1038, %v3918, %v3920
    %v3958 = vadd.f32 %v3688, %v3834
    %v3959 = vadd.f32 %v3689, %v3836
    %v3960 = vadd.f32 %v3690, %v3839
    %v3961 = vadd.f32 %v3691, %v3841
    %v3962 = vadd.f32 %v3692, %v3844
    %v3963 = vadd.f32 %v3693, %v3846
    %v3964 = vadd.f32 %v3694, %v3849
    %v3965 = vadd.f32 %v3695, %v3851
    %v3966 = vadd.f32 %v3696, %v3854
    %v3967 = vadd.f32 %v3697, %v3856
    %v3968 = vadd.f32 %v3698, %v3859
    %v3969 = vadd.f32 %v3699, %v3861
    %v3970 = vadd.f32 %v3700, %v3864
    %v3971 = vadd.f32 %v3701, %v3866
    %v3972 = vadd.f32 %v3702, %v3869
    %v3973 = vadd.f32 %v3703, %v3871
    %v3974 = vadd.f32 %v3704, %v3874
    %v3975 = vadd.f32 %v3705, %v3876
    %v3976 = vadd.f32 %v3706, %v3879
    %v3977 = vadd.f32 %v3707, %v3881
    %v3978 = vadd.f32 %v3708, %v3884
    %v3979 = vadd.f32 %v3709, %v3886
    %v3980 = vadd.f32 %v3710, %v3889
    %v3981 = vadd.f32 %v3711, %v3891
    %v3982 = vadd.f32 %v3712, %v3894
    %v3983 = vadd.f32 %v3713, %v3896
    %v3984 = vadd.f32 %v3714, %v3899
    %v3985 = vadd.f32 %v3715, %v3901
    %v3986 = vadd.f32 %v3716, %v3904
    %v3987 = vadd.f32 %v3717, %v3906
    %v3988 = vadd.f32 %v3718, %v3909
    %v3989 = vadd.f32 %v3719, %v3911
    %v3990 = vadd.f32 %v3720, %v3914
    %v3991 = vadd.f32 %v3721, %v3916
    %v3992 = vadd.f32 %v3722, %v3919
    %v3993 = vadd.f32 %v3723, %v3921
    %3995 = vset.pattern.permute.xlu0 0
    %3996 = vperm.xlu0 %3995, %v343
    %v3997 = vpop.permute.xlu0 %3996
    %4000 = vset.pattern.permute.xlu0 0
    %4001 = vperm.xlu0 %4000, %v344
    %v4002 = vpop.permute.xlu0 %4001
    %4005 = vset.pattern.permute.xlu0 0
    %4006 = vperm.xlu0 %4005, %v345
    %v4007 = vpop.permute.xlu0 %4006
    %4010 = vset.pattern.permute.xlu0 0
    %4011 = vperm.xlu0 %4010, %v346
    %v4012 = vpop.permute.xlu0 %4011
    %4015 = vset.pattern.permute.xlu0 0
    %4016 = vperm.xlu0 %4015, %v347
    %v4017 = vpop.permute.xlu0 %4016
    %4020 = vset.pattern.permute.xlu0 0
    %4021 = vperm.xlu0 %4020, %v348
    %v4022 = vpop.permute.xlu0 %4021
    %4025 = vset.pattern.permute.xlu0 0
    %4026 = vperm.xlu0 %4025, %v349
    %v4027 = vpop.permute.xlu0 %4026
    %4030 = vset.pattern.permute.xlu0 0
    %4031 = vperm.xlu0 %4030, %v350
    %v4032 = vpop.permute.xlu0 %4031
    %4035 = vset.pattern.permute.xlu0 0
    %4036 = vperm.xlu0 %4035, %v351
    %v4037 = vpop.permute.xlu0 %4036
    %4040 = vset.pattern.permute.xlu0 0
    %4041 = vperm.xlu0 %4040, %v352
    %v4042 = vpop.permute.xlu0 %4041
    %4045 = vset.pattern.permute.xlu0 0
    %4046 = vperm.xlu0 %4045, %v353
    %v4047 = vpop.permute.xlu0 %4046
    %4050 = vset.pattern.permute.xlu0 0
    %4051 = vperm.xlu0 %4050, %v354
    %v4052 = vpop.permute.xlu0 %4051
    %4055 = vset.pattern.permute.xlu0 0
    %4056 = vperm.xlu0 %4055, %v355
    %v4057 = vpop.permute.xlu0 %4056
    %4060 = vset.pattern.permute.xlu0 0
    %4061 = vperm.xlu0 %4060, %v356
    %v4062 = vpop.permute.xlu0 %4061
    %4065 = vset.pattern.permute.xlu0 0
    %4066 = vperm.xlu0 %4065, %v357
    %v4067 = vpop.permute.xlu0 %4066
    %4070 = vset.pattern.permute.xlu0 0
    %4071 = vperm.xlu0 %4070, %v358
    %v4072 = vpop.permute.xlu0 %4071
    %4075 = vset.pattern.permute.xlu0 0
    %4076 = vperm.xlu0 %4075, %v359
    %v4077 = vpop.permute.xlu0 %4076
    %4080 = vset.pattern.permute.xlu0 0
    %4081 = vperm.xlu0 %4080, %v360
    %v4082 = vpop.permute.xlu0 %4081
    %4085 = vset.pattern.permute.xlu0 0
    %4086 = vperm.xlu0 %4085, %v361
    %v4087 = vpop.permute.xlu0 %4086
    %4090 = vset.pattern.permute.xlu0 0
    %4091 = vperm.xlu0 %4090, %v362
    %v4092 = vpop.permute.xlu0 %4091
    %4095 = vset.pattern.permute.xlu0 0
    %4096 = vperm.xlu0 %4095, %v363
    %v4097 = vpop.permute.xlu0 %4096
    %4100 = vset.pattern.permute.xlu0 0
    %4101 = vperm.xlu0 %4100, %v364
    %v4102 = vpop.permute.xlu0 %4101
    %4105 = vset.pattern.permute.xlu0 0
    %4106 = vperm.xlu0 %4105, %v365
    %v4107 = vpop.permute.xlu0 %4106
    %4110 = vset.pattern.permute.xlu0 0
    %4111 = vperm.xlu0 %4110, %v366
    %v4112 = vpop.permute.xlu0 %4111
    %4115 = vset.pattern.permute.xlu0 0
    %4116 = vperm.xlu0 %4115, %v367
    %v4117 = vpop.permute.xlu0 %4116
    %4120 = vset.pattern.permute.xlu0 0
    %4121 = vperm.xlu0 %4120, %v368
    %v4122 = vpop.permute.xlu0 %4121
    %4125 = vset.pattern.permute.xlu0 0
    %4126 = vperm.xlu0 %4125, %v369
    %v4127 = vpop.permute.xlu0 %4126
    %4130 = vset.pattern.permute.xlu0 0
    %4131 = vperm.xlu0 %4130, %v370
    %v4132 = vpop.permute.xlu0 %4131
    %4135 = vset.pattern.permute.xlu0 0
    %4136 = vperm.xlu0 %4135, %v371
    %v4137 = vpop.permute.xlu0 %4136
    %4140 = vset.pattern.permute.xlu0 0
    %4141 = vperm.xlu0 %4140, %v372
    %v4142 = vpop.permute.xlu0 %4141
    %4145 = vset.pattern.permute.xlu0 0
    %4146 = vperm.xlu0 %4145, %v373
    %v4147 = vpop.permute.xlu0 %4146
    %4150 = vset.pattern.permute.xlu0 0
    %4151 = vperm.xlu0 %4150, %v374
    %v4152 = vpop.permute.xlu0 %4151
    %4155 = vset.pattern.permute.xlu0 0
    %4156 = vperm.xlu0 %4155, %v375
    %v4157 = vpop.permute.xlu0 %4156
    %4160 = vset.pattern.permute.xlu0 0
    %4161 = vperm.xlu0 %4160, %v376
    %v4162 = vpop.permute.xlu0 %4161
    %4165 = vset.pattern.permute.xlu0 0
    %4166 = vperm.xlu0 %4165, %v377
    %v4167 = vpop.permute.xlu0 %4166
    %4170 = vset.pattern.permute.xlu0 0
    %4171 = vperm.xlu0 %4170, %v378
    %v4172 = vpop.permute.xlu0 %4171
    %v4174 = vmul.f32 %v3958, %v3997
    %v4175 = vmul.f32 %v3959, %v4002
    %v4176 = vmul.f32 %v3960, %v4007
    %v4177 = vmul.f32 %v3961, %v4012
    %v4178 = vmul.f32 %v3962, %v4017
    %v4179 = vmul.f32 %v3963, %v4022
    %v4180 = vmul.f32 %v3964, %v4027
    %v4181 = vmul.f32 %v3965, %v4032
    %v4182 = vmul.f32 %v3966, %v4037
    %v4183 = vmul.f32 %v3967, %v4042
    %v4184 = vmul.f32 %v3968, %v4047
    %v4185 = vmul.f32 %v3969, %v4052
    %v4186 = vmul.f32 %v3970, %v4057
    %v4187 = vmul.f32 %v3971, %v4062
    %v4188 = vmul.f32 %v3972, %v4067
    %v4189 = vmul.f32 %v3973, %v4072
    %v4190 = vmul.f32 %v3974, %v4077
    %v4191 = vmul.f32 %v3975, %v4082
    %v4192 = vmul.f32 %v3976, %v4087
    %v4193 = vmul.f32 %v3977, %v4092
    %v4194 = vmul.f32 %v3978, %v4097
    %v4195 = vmul.f32 %v3979, %v4102
    %v4196 = vmul.f32 %v3980, %v4107
    %v4197 = vmul.f32 %v3981, %v4112
    %v4198 = vmul.f32 %v3982, %v4117
    %v4199 = vmul.f32 %v3983, %v4122
    %v4200 = vmul.f32 %v3984, %v4127
    %v4201 = vmul.f32 %v3985, %v4132
    %v4202 = vmul.f32 %v3986, %v4137
    %v4203 = vmul.f32 %v3987, %v4142
    %v4204 = vmul.f32 %v3988, %v4147
    %v4205 = vmul.f32 %v3989, %v4152
    %v4206 = vmul.f32 %v3990, %v4157
    %v4207 = vmul.f32 %v3991, %v4162
    %v4208 = vmul.f32 %v3992, %v4167
    %v4209 = vmul.f32 %v3993, %v4172
    %v4210 = vsel %vm1965, %v4174, 0.0
    %v4211 = vsel %vm1965, %v4175, 0.0
    %v4212 = vadd.f32 %v4210, %v4211
    %v4213 = vsel %vm1965, %v4176, 0.0
    %v4214 = vadd.f32 %v4212, %v4213
    %v4215 = vsel %vm1965, %v4177, 0.0
    %v4216 = vadd.f32 %v4214, %v4215
    %v4217 = vsel %vm1965, %v4178, 0.0
    %v4218 = vadd.f32 %v4216, %v4217
    %v4219 = vsel %vm1965, %v4179, 0.0
    %v4220 = vadd.f32 %v4218, %v4219
    %v4221 = vsel %vm1965, %v4180, 0.0
    %v4222 = vadd.f32 %v4220, %v4221
    %v4223 = vsel %vm1965, %v4181, 0.0
    %v4224 = vadd.f32 %v4222, %v4223
    %v4225 = vsel %vm1965, %v4182, 0.0
    %v4226 = vadd.f32 %v4224, %v4225
    %v4227 = vsel %vm1965, %v4183, 0.0
    %v4228 = vadd.f32 %v4226, %v4227
    %v4229 = vsel %vm1965, %v4184, 0.0
    %v4230 = vadd.f32 %v4228, %v4229
    %v4231 = vsel %vm1965, %v4185, 0.0
    %v4232 = vadd.f32 %v4230, %v4231
    %v4233 = vsel %vm1965, %v4186, 0.0
    %v4234 = vadd.f32 %v4232, %v4233
    %v4235 = vsel %vm1965, %v4187, 0.0
    %v4236 = vadd.f32 %v4234, %v4235
    %v4237 = vsel %vm1965, %v4188, 0.0
    %v4238 = vadd.f32 %v4236, %v4237
    %v4239 = vsel %vm1965, %v4189, 0.0
    %v4240 = vadd.f32 %v4238, %v4239
    %v4241 = vsel %vm1965, %v4190, 0.0
    %v4242 = vadd.f32 %v4240, %v4241
    %v4243 = vsel %vm1965, %v4191, 0.0
    %v4244 = vadd.f32 %v4242, %v4243
    %v4245 = vsel %vm1965, %v4192, 0.0
    %v4246 = vadd.f32 %v4244, %v4245
    %v4247 = vsel %vm1965, %v4193, 0.0
    %v4248 = vadd.f32 %v4246, %v4247
    %v4249 = vsel %vm1965, %v4194, 0.0
    %v4250 = vadd.f32 %v4248, %v4249
    %v4251 = vsel %vm1965, %v4195, 0.0
    %v4252 = vadd.f32 %v4250, %v4251
    %v4253 = vsel %vm1965, %v4196, 0.0
    %v4254 = vadd.f32 %v4252, %v4253
    %v4255 = vsel %vm1965, %v4197, 0.0
    %v4256 = vadd.f32 %v4254, %v4255
    %v4257 = vsel %vm1965, %v4198, 0.0
    %v4258 = vadd.f32 %v4256, %v4257
    %v4259 = vsel %vm1965, %v4199, 0.0
    %v4260 = vadd.f32 %v4258, %v4259
    %v4261 = vsel %vm1965, %v4200, 0.0
    %v4262 = vadd.f32 %v4260, %v4261
    %v4263 = vsel %vm1965, %v4201, 0.0
    %v4264 = vadd.f32 %v4262, %v4263
    %v4265 = vsel %vm1965, %v4202, 0.0
    %v4266 = vadd.f32 %v4264, %v4265
    %v4267 = vsel %vm1965, %v4203, 0.0
    %v4268 = vadd.f32 %v4266, %v4267
    %v4269 = vsel %vm1965, %v4204, 0.0
    %v4270 = vadd.f32 %v4268, %v4269
    %v4271 = vsel %vm1965, %v4205, 0.0
    %v4272 = vadd.f32 %v4270, %v4271
    %v4273 = vsel %vm1965, %v4206, 0.0
    %v4274 = vadd.f32 %v4272, %v4273
    %v4275 = vsel %vm1965, %v4207, 0.0
    %v4276 = vadd.f32 %v4274, %v4275
    %v4277 = vsel %vm1965, %v4208, 0.0
    %v4278 = vadd.f32 %v4276, %v4277
    %v4279 = vsel %vm1965, %v4209, 0.0
    %v4280 = vadd.f32 %v4278, %v4279
    %v4281 = vrot.slane %v4280, 4
    %v4282 = vadd.f32 %v4280, %v4281
    %v4283 = vrot.slane %v4282, 2
    %v4284 = vadd.f32 %v4282, %v4283
    %v4285 = vrot.slane %v4284, 1
    %v4286 = vadd.f32 %v4284, %v4285
    %v4287 = vadd.f32 %v2043, %v4286
    %v4288 = vmul.f32 %v4174, %v4174
    %v4289 = vmul.f32 %v4175, %v4175
    %v4290 = vmul.f32 %v4176, %v4176
    %v4291 = vmul.f32 %v4177, %v4177
    %v4292 = vmul.f32 %v4178, %v4178
    %v4293 = vmul.f32 %v4179, %v4179
    %v4294 = vmul.f32 %v4180, %v4180
    %v4295 = vmul.f32 %v4181, %v4181
    %v4296 = vmul.f32 %v4182, %v4182
    %v4297 = vmul.f32 %v4183, %v4183
    %v4298 = vmul.f32 %v4184, %v4184
    %v4299 = vmul.f32 %v4185, %v4185
    %v4300 = vmul.f32 %v4186, %v4186
    %v4301 = vmul.f32 %v4187, %v4187
    %v4302 = vmul.f32 %v4188, %v4188
    %v4303 = vmul.f32 %v4189, %v4189
    %v4304 = vmul.f32 %v4190, %v4190
    %v4305 = vmul.f32 %v4191, %v4191
    %v4306 = vmul.f32 %v4192, %v4192
    %v4307 = vmul.f32 %v4193, %v4193
    %v4308 = vmul.f32 %v4194, %v4194
    %v4309 = vmul.f32 %v4195, %v4195
    %v4310 = vmul.f32 %v4196, %v4196
    %v4311 = vmul.f32 %v4197, %v4197
    %v4312 = vmul.f32 %v4198, %v4198
    %v4313 = vmul.f32 %v4199, %v4199
    %v4314 = vmul.f32 %v4200, %v4200
    %v4315 = vmul.f32 %v4201, %v4201
    %v4316 = vmul.f32 %v4202, %v4202
    %v4317 = vmul.f32 %v4203, %v4203
    %v4318 = vmul.f32 %v4204, %v4204
    %v4319 = vmul.f32 %v4205, %v4205
    %v4320 = vmul.f32 %v4206, %v4206
    %v4321 = vmul.f32 %v4207, %v4207
    %v4322 = vmul.f32 %v4208, %v4208
    %v4323 = vmul.f32 %v4209, %v4209
    %v4324 = vsel %vm1965, %v4288, 0.0
    %v4325 = vsel %vm1965, %v4289, 0.0
    %v4326 = vadd.f32 %v4324, %v4325
    %v4327 = vsel %vm1965, %v4290, 0.0
    %v4328 = vadd.f32 %v4326, %v4327
    %v4329 = vsel %vm1965, %v4291, 0.0
    %v4330 = vadd.f32 %v4328, %v4329
    %v4331 = vsel %vm1965, %v4292, 0.0
    %v4332 = vadd.f32 %v4330, %v4331
    %v4333 = vsel %vm1965, %v4293, 0.0
    %v4334 = vadd.f32 %v4332, %v4333
    %v4335 = vsel %vm1965, %v4294, 0.0
    %v4336 = vadd.f32 %v4334, %v4335
    %v4337 = vsel %vm1965, %v4295, 0.0
    %v4338 = vadd.f32 %v4336, %v4337
    %v4339 = vsel %vm1965, %v4296, 0.0
    %v4340 = vadd.f32 %v4338, %v4339
    %v4341 = vsel %vm1965, %v4297, 0.0
    %v4342 = vadd.f32 %v4340, %v4341
    %v4343 = vsel %vm1965, %v4298, 0.0
    %v4344 = vadd.f32 %v4342, %v4343
    %v4345 = vsel %vm1965, %v4299, 0.0
    %v4346 = vadd.f32 %v4344, %v4345
    %v4347 = vsel %vm1965, %v4300, 0.0
    %v4348 = vadd.f32 %v4346, %v4347
    %v4349 = vsel %vm1965, %v4301, 0.0
    %v4350 = vadd.f32 %v4348, %v4349
    %v4351 = vsel %vm1965, %v4302, 0.0
    %v4352 = vadd.f32 %v4350, %v4351
    %v4353 = vsel %vm1965, %v4303, 0.0
    %v4354 = vadd.f32 %v4352, %v4353
    %v4355 = vsel %vm1965, %v4304, 0.0
    %v4356 = vadd.f32 %v4354, %v4355
    %v4357 = vsel %vm1965, %v4305, 0.0
    %v4358 = vadd.f32 %v4356, %v4357
    %v4359 = vsel %vm1965, %v4306, 0.0
    %v4360 = vadd.f32 %v4358, %v4359
    %v4361 = vsel %vm1965, %v4307, 0.0
    %v4362 = vadd.f32 %v4360, %v4361
    %v4363 = vsel %vm1965, %v4308, 0.0
    %v4364 = vadd.f32 %v4362, %v4363
    %v4365 = vsel %vm1965, %v4309, 0.0
    %v4366 = vadd.f32 %v4364, %v4365
    %v4367 = vsel %vm1965, %v4310, 0.0
    %v4368 = vadd.f32 %v4366, %v4367
    %v4369 = vsel %vm1965, %v4311, 0.0
    %v4370 = vadd.f32 %v4368, %v4369
    %v4371 = vsel %vm1965, %v4312, 0.0
    %v4372 = vadd.f32 %v4370, %v4371
    %v4373 = vsel %vm1965, %v4313, 0.0
    %v4374 = vadd.f32 %v4372, %v4373
    %v4375 = vsel %vm1965, %v4314, 0.0
    %v4376 = vadd.f32 %v4374, %v4375
    %v4377 = vsel %vm1965, %v4315, 0.0
    %v4378 = vadd.f32 %v4376, %v4377
    %v4379 = vsel %vm1965, %v4316, 0.0
    %v4380 = vadd.f32 %v4378, %v4379
    %v4381 = vsel %vm1965, %v4317, 0.0
    %v4382 = vadd.f32 %v4380, %v4381
    %v4383 = vsel %vm1965, %v4318, 0.0
    %v4384 = vadd.f32 %v4382, %v4383
    %v4385 = vsel %vm1965, %v4319, 0.0
    %v4386 = vadd.f32 %v4384, %v4385
    %v4387 = vsel %vm1965, %v4320, 0.0
    %v4388 = vadd.f32 %v4386, %v4387
    %v4389 = vsel %vm1965, %v4321, 0.0
    %v4390 = vadd.f32 %v4388, %v4389
    %v4391 = vsel %vm1965, %v4322, 0.0
    %v4392 = vadd.f32 %v4390, %v4391
    %v4393 = vsel %vm1965, %v4323, 0.0
    %v4394 = vadd.f32 %v4392, %v4393
    %v4395 = vrot.slane %v4394, 4
    %v4396 = vadd.f32 %v4394, %v4395
    %v4397 = vrot.slane %v4396, 2
    %v4398 = vadd.f32 %v4396, %v4397
    %v4399 = vrot.slane %v4398, 1
    %v4400 = vadd.f32 %v4398, %v4399
    %v4401 = vadd.f32 %v2157, %v4400
    %v4402 = vmul.f32 %v187, %v473
    %v4403 = vmul.f32 %v188, %v473
    %v4404 = vmul.f32 %v190, %v473
    %v4405 = vmul.f32 %v191, %v473
    %v4406 = vmul.f32 %v193, %v473
    %v4407 = vmul.f32 %v194, %v473
    %v4408 = vmul.f32 %v196, %v473
    %v4409 = vmul.f32 %v197, %v473
    %v4410 = vmul.f32 %v199, %v473
    %v4411 = vmul.f32 %v200, %v473
    %v4412 = vmul.f32 %v202, %v473
    %v4413 = vmul.f32 %v203, %v473
    %v4414 = vmul.f32 %v205, %v473
    %v4415 = vmul.f32 %v206, %v473
    %v4416 = vmul.f32 %v208, %v473
    %v4417 = vmul.f32 %v209, %v473
    %v4418 = vmul.f32 %v211, %v473
    %v4419 = vmul.f32 %v212, %v473
    %v4420 = vmul.f32 %v217, %v473
    %v4421 = vmul.f32 %v218, %v473
    %v4422 = vmul.f32 %v220, %v473
    %v4423 = vmul.f32 %v221, %v473
    %v4424 = vmul.f32 %v223, %v473
    %v4425 = vmul.f32 %v224, %v473
    %v4426 = vmul.f32 %v226, %v473
    %v4427 = vmul.f32 %v227, %v473
    %v4428 = vmul.f32 %v229, %v473
    %v4429 = vmul.f32 %v230, %v473
    %v4430 = vmul.f32 %v232, %v473
    %v4431 = vmul.f32 %v233, %v473
    %v4432 = vmul.f32 %v235, %v473
    %v4433 = vmul.f32 %v236, %v473
    %v4434 = vmul.f32 %v238, %v473
    %v4435 = vmul.f32 %v239, %v473
    %v4436 = vmul.f32 %v241, %v473
    %v4437 = vmul.f32 %v242, %v473
    %v4438 = vadd.f32 %v4402, 0.0
    %v4439 = vadd.f32 %v4403, 0.0
    %v4440 = vadd.f32 %v4404, 0.0
    %v4441 = vadd.f32 %v4405, 0.0
    %v4442 = vadd.f32 %v4406, 0.0
    %v4443 = vadd.f32 %v4407, 0.0
    %v4444 = vadd.f32 %v4408, 0.0
    %v4445 = vadd.f32 %v4409, 0.0
    %v4446 = vadd.f32 %v4410, 0.0
    %v4447 = vadd.f32 %v4411, 0.0
    %v4448 = vadd.f32 %v4412, 0.0
    %v4449 = vadd.f32 %v4413, 0.0
    %v4450 = vadd.f32 %v4414, 0.0
    %v4451 = vadd.f32 %v4415, 0.0
    %v4452 = vadd.f32 %v4416, 0.0
    %v4453 = vadd.f32 %v4417, 0.0
    %v4454 = vadd.f32 %v4418, 0.0
    %v4455 = vadd.f32 %v4419, 0.0
    %v4456 = vadd.f32 %v4420, 0.0
    %v4457 = vadd.f32 %v4421, 0.0
    %v4458 = vadd.f32 %v4422, 0.0
    %v4459 = vadd.f32 %v4423, 0.0
    %v4460 = vadd.f32 %v4424, 0.0
    %v4461 = vadd.f32 %v4425, 0.0
    %v4462 = vadd.f32 %v4426, 0.0
    %v4463 = vadd.f32 %v4427, 0.0
    %v4464 = vadd.f32 %v4428, 0.0
    %v4465 = vadd.f32 %v4429, 0.0
    %v4466 = vadd.f32 %v4430, 0.0
    %v4467 = vadd.f32 %v4431, 0.0
    %v4468 = vadd.f32 %v4432, 0.0
    %v4469 = vadd.f32 %v4433, 0.0
    %v4470 = vadd.f32 %v4434, 0.0
    %v4471 = vadd.f32 %v4435, 0.0
    %v4472 = vadd.f32 %v4436, 0.0
    %v4473 = vadd.f32 %v4437, 0.0
    %v4474 = vmul.f32 %v70, %v549
    %v4475 = vmul.f32 %v71, %v549
    %v4476 = vmul.f32 %v73, %v549
    %v4477 = vmul.f32 %v74, %v549
    %v4478 = vmul.f32 %v76, %v549
    %v4479 = vmul.f32 %v77, %v549
    %v4480 = vmul.f32 %v79, %v549
    %v4481 = vmul.f32 %v80, %v549
    %v4482 = vmul.f32 %v82, %v549
    %v4483 = vmul.f32 %v83, %v549
    %v4484 = vmul.f32 %v85, %v549
    %v4485 = vmul.f32 %v86, %v549
    %v4486 = vmul.f32 %v88, %v549
    %v4487 = vmul.f32 %v89, %v549
    %v4488 = vmul.f32 %v91, %v549
    %v4489 = vmul.f32 %v92, %v549
    %v4490 = vmul.f32 %v94, %v549
    %v4491 = vmul.f32 %v95, %v549
    %v4492 = vmul.f32 %v100, %v549
    %v4493 = vmul.f32 %v101, %v549
    %v4494 = vmul.f32 %v103, %v549
    %v4495 = vmul.f32 %v104, %v549
    %v4496 = vmul.f32 %v106, %v549
    %v4497 = vmul.f32 %v107, %v549
    %v4498 = vmul.f32 %v109, %v549
    %v4499 = vmul.f32 %v110, %v549
    %v4500 = vmul.f32 %v112, %v549
    %v4501 = vmul.f32 %v113, %v549
    %v4502 = vmul.f32 %v115, %v549
    %v4503 = vmul.f32 %v116, %v549
    %v4504 = vmul.f32 %v118, %v549
    %v4505 = vmul.f32 %v119, %v549
    %v4506 = vmul.f32 %v121, %v549
    %v4507 = vmul.f32 %v122, %v549
    %v4508 = vmul.f32 %v124, %v549
    %v4509 = vmul.f32 %v125, %v549
    %v4510 = vadd.f32 %v4438, %v4474
    %v4511 = vadd.f32 %v4439, %v4475
    %v4512 = vadd.f32 %v4440, %v4476
    %v4513 = vadd.f32 %v4441, %v4477
    %v4514 = vadd.f32 %v4442, %v4478
    %v4515 = vadd.f32 %v4443, %v4479
    %v4516 = vadd.f32 %v4444, %v4480
    %v4517 = vadd.f32 %v4445, %v4481
    %v4518 = vadd.f32 %v4446, %v4482
    %v4519 = vadd.f32 %v4447, %v4483
    %v4520 = vadd.f32 %v4448, %v4484
    %v4521 = vadd.f32 %v4449, %v4485
    %v4522 = vadd.f32 %v4450, %v4486
    %v4523 = vadd.f32 %v4451, %v4487
    %v4524 = vadd.f32 %v4452, %v4488
    %v4525 = vadd.f32 %v4453, %v4489
    %v4526 = vadd.f32 %v4454, %v4490
    %v4527 = vadd.f32 %v4455, %v4491
    %v4528 = vadd.f32 %v4456, %v4492
    %v4529 = vadd.f32 %v4457, %v4493
    %v4530 = vadd.f32 %v4458, %v4494
    %v4531 = vadd.f32 %v4459, %v4495
    %v4532 = vadd.f32 %v4460, %v4496
    %v4533 = vadd.f32 %v4461, %v4497
    %v4534 = vadd.f32 %v4462, %v4498
    %v4535 = vadd.f32 %v4463, %v4499
    %v4536 = vadd.f32 %v4464, %v4500
    %v4537 = vadd.f32 %v4465, %v4501
    %v4538 = vadd.f32 %v4466, %v4502
    %v4539 = vadd.f32 %v4467, %v4503
    %v4540 = vadd.f32 %v4468, %v4504
    %v4541 = vadd.f32 %v4469, %v4505
    %v4542 = vadd.f32 %v4470, %v4506
    %v4543 = vadd.f32 %v4471, %v4507
    %v4544 = vadd.f32 %v4472, %v4508
    %v4545 = vadd.f32 %v4473, %v4509
    %v4546 = vmul.f32 %v190, %v625
    %v4547 = vmul.f32 %v191, %v625
    %v4548 = vmul.f32 %v193, %v625
    %v4549 = vmul.f32 %v194, %v625
    %v4550 = vmul.f32 %v196, %v625
    %v4551 = vmul.f32 %v197, %v625
    %v4552 = vmul.f32 %v199, %v625
    %v4553 = vmul.f32 %v200, %v625
    %v4554 = vmul.f32 %v202, %v625
    %v4555 = vmul.f32 %v203, %v625
    %v4556 = vmul.f32 %v205, %v625
    %v4557 = vmul.f32 %v206, %v625
    %v4558 = vmul.f32 %v208, %v625
    %v4559 = vmul.f32 %v209, %v625
    %v4560 = vmul.f32 %v211, %v625
    %v4561 = vmul.f32 %v212, %v625
    %v4562 = vmul.f32 %v214, %v625
    %v4563 = vmul.f32 %v215, %v625
    %v4564 = vmul.f32 %v220, %v625
    %v4565 = vmul.f32 %v221, %v625
    %v4566 = vmul.f32 %v223, %v625
    %v4567 = vmul.f32 %v224, %v625
    %v4568 = vmul.f32 %v226, %v625
    %v4569 = vmul.f32 %v227, %v625
    %v4570 = vmul.f32 %v229, %v625
    %v4571 = vmul.f32 %v230, %v625
    %v4572 = vmul.f32 %v232, %v625
    %v4573 = vmul.f32 %v233, %v625
    %v4574 = vmul.f32 %v235, %v625
    %v4575 = vmul.f32 %v236, %v625
    %v4576 = vmul.f32 %v238, %v625
    %v4577 = vmul.f32 %v239, %v625
    %v4578 = vmul.f32 %v241, %v625
    %v4579 = vmul.f32 %v242, %v625
    %v4580 = vmul.f32 %v244, %v625
    %v4581 = vmul.f32 %v245, %v625
    %v4582 = vadd.f32 %v4510, %v4546
    %v4583 = vadd.f32 %v4511, %v4547
    %v4584 = vadd.f32 %v4512, %v4548
    %v4585 = vadd.f32 %v4513, %v4549
    %v4586 = vadd.f32 %v4514, %v4550
    %v4587 = vadd.f32 %v4515, %v4551
    %v4588 = vadd.f32 %v4516, %v4552
    %v4589 = vadd.f32 %v4517, %v4553
    %v4590 = vadd.f32 %v4518, %v4554
    %v4591 = vadd.f32 %v4519, %v4555
    %v4592 = vadd.f32 %v4520, %v4556
    %v4593 = vadd.f32 %v4521, %v4557
    %v4594 = vadd.f32 %v4522, %v4558
    %v4595 = vadd.f32 %v4523, %v4559
    %v4596 = vadd.f32 %v4524, %v4560
    %v4597 = vadd.f32 %v4525, %v4561
    %v4598 = vadd.f32 %v4526, %v4562
    %v4599 = vadd.f32 %v4527, %v4563
    %v4600 = vadd.f32 %v4528, %v4564
    %v4601 = vadd.f32 %v4529, %v4565
    %v4602 = vadd.f32 %v4530, %v4566
    %v4603 = vadd.f32 %v4531, %v4567
    %v4604 = vadd.f32 %v4532, %v4568
    %v4605 = vadd.f32 %v4533, %v4569
    %v4606 = vadd.f32 %v4534, %v4570
    %v4607 = vadd.f32 %v4535, %v4571
    %v4608 = vadd.f32 %v4536, %v4572
    %v4609 = vadd.f32 %v4537, %v4573
    %v4610 = vadd.f32 %v4538, %v4574
    %v4611 = vadd.f32 %v4539, %v4575
    %v4612 = vadd.f32 %v4540, %v4576
    %v4613 = vadd.f32 %v4541, %v4577
    %v4614 = vadd.f32 %v4542, %v4578
    %v4615 = vadd.f32 %v4543, %v4579
    %v4616 = vadd.f32 %v4544, %v4580
    %v4617 = vadd.f32 %v4545, %v4581
    %v4618 = vmul.f32 %v247, %v701
    %v4619 = vmul.f32 %v248, %v701
    %v4620 = vmul.f32 %v250, %v701
    %v4621 = vmul.f32 %v251, %v701
    %v4622 = vmul.f32 %v253, %v701
    %v4623 = vmul.f32 %v254, %v701
    %v4624 = vmul.f32 %v256, %v701
    %v4625 = vmul.f32 %v257, %v701
    %v4626 = vmul.f32 %v259, %v701
    %v4627 = vmul.f32 %v260, %v701
    %v4628 = vmul.f32 %v262, %v701
    %v4629 = vmul.f32 %v263, %v701
    %v4630 = vmul.f32 %v265, %v701
    %v4631 = vmul.f32 %v266, %v701
    %v4632 = vmul.f32 %v268, %v701
    %v4633 = vmul.f32 %v269, %v701
    %v4634 = vmul.f32 %v271, %v701
    %v4635 = vmul.f32 %v272, %v701
    %v4636 = vmul.f32 %v277, %v701
    %v4637 = vmul.f32 %v278, %v701
    %v4638 = vmul.f32 %v280, %v701
    %v4639 = vmul.f32 %v281, %v701
    %v4640 = vmul.f32 %v283, %v701
    %v4641 = vmul.f32 %v284, %v701
    %v4642 = vmul.f32 %v286, %v701
    %v4643 = vmul.f32 %v287, %v701
    %v4644 = vmul.f32 %v289, %v701
    %v4645 = vmul.f32 %v290, %v701
    %v4646 = vmul.f32 %v292, %v701
    %v4647 = vmul.f32 %v293, %v701
    %v4648 = vmul.f32 %v295, %v701
    %v4649 = vmul.f32 %v296, %v701
    %v4650 = vmul.f32 %v298, %v701
    %v4651 = vmul.f32 %v299, %v701
    %v4652 = vmul.f32 %v301, %v701
    %v4653 = vmul.f32 %v302, %v701
    %v4654 = vadd.f32 %v4582, %v4618
    %v4655 = vadd.f32 %v4583, %v4619
    %v4656 = vadd.f32 %v4584, %v4620
    %v4657 = vadd.f32 %v4585, %v4621
    %v4658 = vadd.f32 %v4586, %v4622
    %v4659 = vadd.f32 %v4587, %v4623
    %v4660 = vadd.f32 %v4588, %v4624
    %v4661 = vadd.f32 %v4589, %v4625
    %v4662 = vadd.f32 %v4590, %v4626
    %v4663 = vadd.f32 %v4591, %v4627
    %v4664 = vadd.f32 %v4592, %v4628
    %v4665 = vadd.f32 %v4593, %v4629
    %v4666 = vadd.f32 %v4594, %v4630
    %v4667 = vadd.f32 %v4595, %v4631
    %v4668 = vadd.f32 %v4596, %v4632
    %v4669 = vadd.f32 %v4597, %v4633
    %v4670 = vadd.f32 %v4598, %v4634
    %v4671 = vadd.f32 %v4599, %v4635
    %v4672 = vadd.f32 %v4600, %v4636
    %v4673 = vadd.f32 %v4601, %v4637
    %v4674 = vadd.f32 %v4602, %v4638
    %v4675 = vadd.f32 %v4603, %v4639
    %v4676 = vadd.f32 %v4604, %v4640
    %v4677 = vadd.f32 %v4605, %v4641
    %v4678 = vadd.f32 %v4606, %v4642
    %v4679 = vadd.f32 %v4607, %v4643
    %v4680 = vadd.f32 %v4608, %v4644
    %v4681 = vadd.f32 %v4609, %v4645
    %v4682 = vadd.f32 %v4610, %v4646
    %v4683 = vadd.f32 %v4611, %v4647
    %v4684 = vadd.f32 %v4612, %v4648
    %v4685 = vadd.f32 %v4613, %v4649
    %v4686 = vadd.f32 %v4614, %v4650
    %v4687 = vadd.f32 %v4615, %v4651
    %v4688 = vadd.f32 %v4616, %v4652
    %v4689 = vadd.f32 %v4617, %v4653
    %v4690 = vmul.f32 %v130, %v777
    %v4691 = vmul.f32 %v131, %v777
    %v4692 = vmul.f32 %v133, %v777
    %v4693 = vmul.f32 %v134, %v777
    %v4694 = vmul.f32 %v136, %v777
    %v4695 = vmul.f32 %v137, %v777
    %v4696 = vmul.f32 %v139, %v777
    %v4697 = vmul.f32 %v140, %v777
    %v4698 = vmul.f32 %v142, %v777
    %v4699 = vmul.f32 %v143, %v777
    %v4700 = vmul.f32 %v145, %v777
    %v4701 = vmul.f32 %v146, %v777
    %v4702 = vmul.f32 %v148, %v777
    %v4703 = vmul.f32 %v149, %v777
    %v4704 = vmul.f32 %v151, %v777
    %v4705 = vmul.f32 %v152, %v777
    %v4706 = vmul.f32 %v154, %v777
    %v4707 = vmul.f32 %v155, %v777
    %v4708 = vmul.f32 %v160, %v777
    %v4709 = vmul.f32 %v161, %v777
    %v4710 = vmul.f32 %v163, %v777
    %v4711 = vmul.f32 %v164, %v777
    %v4712 = vmul.f32 %v166, %v777
    %v4713 = vmul.f32 %v167, %v777
    %v4714 = vmul.f32 %v169, %v777
    %v4715 = vmul.f32 %v170, %v777
    %v4716 = vmul.f32 %v172, %v777
    %v4717 = vmul.f32 %v173, %v777
    %v4718 = vmul.f32 %v175, %v777
    %v4719 = vmul.f32 %v176, %v777
    %v4720 = vmul.f32 %v178, %v777
    %v4721 = vmul.f32 %v179, %v777
    %v4722 = vmul.f32 %v181, %v777
    %v4723 = vmul.f32 %v182, %v777
    %v4724 = vmul.f32 %v184, %v777
    %v4725 = vmul.f32 %v185, %v777
    %v4726 = vadd.f32 %v4654, %v4690
    %v4727 = vadd.f32 %v4655, %v4691
    %v4728 = vadd.f32 %v4656, %v4692
    %v4729 = vadd.f32 %v4657, %v4693
    %v4730 = vadd.f32 %v4658, %v4694
    %v4731 = vadd.f32 %v4659, %v4695
    %v4732 = vadd.f32 %v4660, %v4696
    %v4733 = vadd.f32 %v4661, %v4697
    %v4734 = vadd.f32 %v4662, %v4698
    %v4735 = vadd.f32 %v4663, %v4699
    %v4736 = vadd.f32 %v4664, %v4700
    %v4737 = vadd.f32 %v4665, %v4701
    %v4738 = vadd.f32 %v4666, %v4702
    %v4739 = vadd.f32 %v4667, %v4703
    %v4740 = vadd.f32 %v4668, %v4704
    %v4741 = vadd.f32 %v4669, %v4705
    %v4742 = vadd.f32 %v4670, %v4706
    %v4743 = vadd.f32 %v4671, %v4707
    %v4744 = vadd.f32 %v4672, %v4708
    %v4745 = vadd.f32 %v4673, %v4709
    %v4746 = vadd.f32 %v4674, %v4710
    %v4747 = vadd.f32 %v4675, %v4711
    %v4748 = vadd.f32 %v4676, %v4712
    %v4749 = vadd.f32 %v4677, %v4713
    %v4750 = vadd.f32 %v4678, %v4714
    %v4751 = vadd.f32 %v4679, %v4715
    %v4752 = vadd.f32 %v4680, %v4716
    %v4753 = vadd.f32 %v4681, %v4717
    %v4754 = vadd.f32 %v4682, %v4718
    %v4755 = vadd.f32 %v4683, %v4719
    %v4756 = vadd.f32 %v4684, %v4720
    %v4757 = vadd.f32 %v4685, %v4721
    %v4758 = vadd.f32 %v4686, %v4722
    %v4759 = vadd.f32 %v4687, %v4723
    %v4760 = vadd.f32 %v4688, %v4724
    %v4761 = vadd.f32 %v4689, %v4725
    %v4762 = vmul.f32 %v250, %v853
    %v4763 = vmul.f32 %v251, %v853
    %v4764 = vmul.f32 %v253, %v853
    %v4765 = vmul.f32 %v254, %v853
    %v4766 = vmul.f32 %v256, %v853
    %v4767 = vmul.f32 %v257, %v853
    %v4768 = vmul.f32 %v259, %v853
    %v4769 = vmul.f32 %v260, %v853
    %v4770 = vmul.f32 %v262, %v853
    %v4771 = vmul.f32 %v263, %v853
    %v4772 = vmul.f32 %v265, %v853
    %v4773 = vmul.f32 %v266, %v853
    %v4774 = vmul.f32 %v268, %v853
    %v4775 = vmul.f32 %v269, %v853
    %v4776 = vmul.f32 %v271, %v853
    %v4777 = vmul.f32 %v272, %v853
    %v4778 = vmul.f32 %v274, %v853
    %v4779 = vmul.f32 %v275, %v853
    %v4780 = vmul.f32 %v280, %v853
    %v4781 = vmul.f32 %v281, %v853
    %v4782 = vmul.f32 %v283, %v853
    %v4783 = vmul.f32 %v284, %v853
    %v4784 = vmul.f32 %v286, %v853
    %v4785 = vmul.f32 %v287, %v853
    %v4786 = vmul.f32 %v289, %v853
    %v4787 = vmul.f32 %v290, %v853
    %v4788 = vmul.f32 %v292, %v853
    %v4789 = vmul.f32 %v293, %v853
    %v4790 = vmul.f32 %v295, %v853
    %v4791 = vmul.f32 %v296, %v853
    %v4792 = vmul.f32 %v298, %v853
    %v4793 = vmul.f32 %v299, %v853
    %v4794 = vmul.f32 %v301, %v853
    %v4795 = vmul.f32 %v302, %v853
    %v4796 = vmul.f32 %v304, %v853
    %v4797 = vmul.f32 %v305, %v853
    %v4798 = vadd.f32 %v4726, %v4762
    %v4799 = vadd.f32 %v4727, %v4763
    %v4800 = vadd.f32 %v4728, %v4764
    %v4801 = vadd.f32 %v4729, %v4765
    %v4802 = vadd.f32 %v4730, %v4766
    %v4803 = vadd.f32 %v4731, %v4767
    %v4804 = vadd.f32 %v4732, %v4768
    %v4805 = vadd.f32 %v4733, %v4769
    %v4806 = vadd.f32 %v4734, %v4770
    %v4807 = vadd.f32 %v4735, %v4771
    %v4808 = vadd.f32 %v4736, %v4772
    %v4809 = vadd.f32 %v4737, %v4773
    %v4810 = vadd.f32 %v4738, %v4774
    %v4811 = vadd.f32 %v4739, %v4775
    %v4812 = vadd.f32 %v4740, %v4776
    %v4813 = vadd.f32 %v4741, %v4777
    %v4814 = vadd.f32 %v4742, %v4778
    %v4815 = vadd.f32 %v4743, %v4779
    %v4816 = vadd.f32 %v4744, %v4780
    %v4817 = vadd.f32 %v4745, %v4781
    %v4818 = vadd.f32 %v4746, %v4782
    %v4819 = vadd.f32 %v4747, %v4783
    %v4820 = vadd.f32 %v4748, %v4784
    %v4821 = vadd.f32 %v4749, %v4785
    %v4822 = vadd.f32 %v4750, %v4786
    %v4823 = vadd.f32 %v4751, %v4787
    %v4824 = vadd.f32 %v4752, %v4788
    %v4825 = vadd.f32 %v4753, %v4789
    %v4826 = vadd.f32 %v4754, %v4790
    %v4827 = vadd.f32 %v4755, %v4791
    %v4828 = vadd.f32 %v4756, %v4792
    %v4829 = vadd.f32 %v4757, %v4793
    %v4830 = vadd.f32 %v4758, %v4794
    %v4831 = vadd.f32 %v4759, %v4795
    %v4832 = vadd.f32 %v4760, %v4796
    %v4833 = vadd.f32 %v4761, %v4797
    %v4834 = vmul.f32 %v187, %v929
    %v4835 = vmul.f32 %v188, %v929
    %v4836 = vmul.f32 %v189, %v929
    %v4837 = vmul.f32 %v190, %v929
    %v4838 = vmul.f32 %v191, %v929
    %v4839 = vmul.f32 %v192, %v929
    %v4840 = vmul.f32 %v193, %v929
    %v4841 = vmul.f32 %v194, %v929
    %v4842 = vmul.f32 %v195, %v929
    %v4843 = vmul.f32 %v196, %v929
    %v4844 = vmul.f32 %v197, %v929
    %v4845 = vmul.f32 %v198, %v929
    %v4846 = vmul.f32 %v199, %v929
    %v4847 = vmul.f32 %v200, %v929
    %v4848 = vmul.f32 %v201, %v929
    %v4849 = vmul.f32 %v202, %v929
    %v4850 = vmul.f32 %v203, %v929
    %v4851 = vmul.f32 %v204, %v929
    %v4852 = vmul.f32 %v205, %v929
    %v4853 = vmul.f32 %v206, %v929
    %v4854 = vmul.f32 %v207, %v929
    %v4855 = vmul.f32 %v208, %v929
    %v4856 = vmul.f32 %v209, %v929
    %v4857 = vmul.f32 %v210, %v929
    %v4858 = vmul.f32 %v211, %v929
    %v4859 = vmul.f32 %v212, %v929
    %v4860 = vmul.f32 %v213, %v929
    %v4861 = vmul.f32 %v217, %v929
    %v4862 = vmul.f32 %v218, %v929
    %v4863 = vmul.f32 %v219, %v929
    %v4864 = vmul.f32 %v220, %v929
    %v4865 = vmul.f32 %v221, %v929
    %v4866 = vmul.f32 %v222, %v929
    %v4867 = vmul.f32 %v223, %v929
    %v4868 = vmul.f32 %v224, %v929
    %v4869 = vmul.f32 %v225, %v929
    %v4870 = vmul.f32 %v226, %v929
    %v4871 = vmul.f32 %v227, %v929
    %v4872 = vmul.f32 %v228, %v929
    %v4873 = vmul.f32 %v229, %v929
    %v4874 = vmul.f32 %v230, %v929
    %v4875 = vmul.f32 %v231, %v929
    %v4876 = vmul.f32 %v232, %v929
    %v4877 = vmul.f32 %v233, %v929
    %v4878 = vmul.f32 %v234, %v929
    %v4879 = vmul.f32 %v235, %v929
    %v4880 = vmul.f32 %v236, %v929
    %v4881 = vmul.f32 %v237, %v929
    %v4882 = vmul.f32 %v238, %v929
    %v4883 = vmul.f32 %v239, %v929
    %v4884 = vmul.f32 %v240, %v929
    %v4885 = vmul.f32 %v241, %v929
    %v4886 = vmul.f32 %v242, %v929
    %v4887 = vmul.f32 %v243, %v929
    %v4942 = vrot.slane %v4834, 1
    %v4943 = vrot.slane %v4835, 1
    %v4944 = vsel %vm1038, %v4942, %v4943
    %v4945 = vrot.slane %v4836, 1
    %v4946 = vsel %vm1038, %v4943, %v4945
    %v4947 = vrot.slane %v4837, 1
    %v4948 = vrot.slane %v4838, 1
    %v4949 = vsel %vm1038, %v4947, %v4948
    %v4950 = vrot.slane %v4839, 1
    %v4951 = vsel %vm1038, %v4948, %v4950
    %v4952 = vrot.slane %v4840, 1
    %v4953 = vrot.slane %v4841, 1
    %v4954 = vsel %vm1038, %v4952, %v4953
    %v4955 = vrot.slane %v4842, 1
    %v4956 = vsel %vm1038, %v4953, %v4955
    %v4957 = vrot.slane %v4843, 1
    %v4958 = vrot.slane %v4844, 1
    %v4959 = vsel %vm1038, %v4957, %v4958
    %v4960 = vrot.slane %v4845, 1
    %v4961 = vsel %vm1038, %v4958, %v4960
    %v4962 = vrot.slane %v4846, 1
    %v4963 = vrot.slane %v4847, 1
    %v4964 = vsel %vm1038, %v4962, %v4963
    %v4965 = vrot.slane %v4848, 1
    %v4966 = vsel %vm1038, %v4963, %v4965
    %v4967 = vrot.slane %v4849, 1
    %v4968 = vrot.slane %v4850, 1
    %v4969 = vsel %vm1038, %v4967, %v4968
    %v4970 = vrot.slane %v4851, 1
    %v4971 = vsel %vm1038, %v4968, %v4970
    %v4972 = vrot.slane %v4852, 1
    %v4973 = vrot.slane %v4853, 1
    %v4974 = vsel %vm1038, %v4972, %v4973
    %v4975 = vrot.slane %v4854, 1
    %v4976 = vsel %vm1038, %v4973, %v4975
    %v4977 = vrot.slane %v4855, 1
    %v4978 = vrot.slane %v4856, 1
    %v4979 = vsel %vm1038, %v4977, %v4978
    %v4980 = vrot.slane %v4857, 1
    %v4981 = vsel %vm1038, %v4978, %v4980
    %v4982 = vrot.slane %v4858, 1
    %v4983 = vrot.slane %v4859, 1
    %v4984 = vsel %vm1038, %v4982, %v4983
    %v4985 = vrot.slane %v4860, 1
    %v4986 = vsel %vm1038, %v4983, %v4985
    %v4987 = vrot.slane %v4861, 1
    %v4988 = vrot.slane %v4862, 1
    %v4989 = vsel %vm1038, %v4987, %v4988
    %v4990 = vrot.slane %v4863, 1
    %v4991 = vsel %vm1038, %v4988, %v4990
    %v4992 = vrot.slane %v4864, 1
    %v4993 = vrot.slane %v4865, 1
    %v4994 = vsel %vm1038, %v4992, %v4993
    %v4995 = vrot.slane %v4866, 1
    %v4996 = vsel %vm1038, %v4993, %v4995
    %v4997 = vrot.slane %v4867, 1
    %v4998 = vrot.slane %v4868, 1
    %v4999 = vsel %vm1038, %v4997, %v4998
    %v5000 = vrot.slane %v4869, 1
    %v5001 = vsel %vm1038, %v4998, %v5000
    %v5002 = vrot.slane %v4870, 1
    %v5003 = vrot.slane %v4871, 1
    %v5004 = vsel %vm1038, %v5002, %v5003
    %v5005 = vrot.slane %v4872, 1
    %v5006 = vsel %vm1038, %v5003, %v5005
    %v5007 = vrot.slane %v4873, 1
    %v5008 = vrot.slane %v4874, 1
    %v5009 = vsel %vm1038, %v5007, %v5008
    %v5010 = vrot.slane %v4875, 1
    %v5011 = vsel %vm1038, %v5008, %v5010
    %v5012 = vrot.slane %v4876, 1
    %v5013 = vrot.slane %v4877, 1
    %v5014 = vsel %vm1038, %v5012, %v5013
    %v5015 = vrot.slane %v4878, 1
    %v5016 = vsel %vm1038, %v5013, %v5015
    %v5017 = vrot.slane %v4879, 1
    %v5018 = vrot.slane %v4880, 1
    %v5019 = vsel %vm1038, %v5017, %v5018
    %v5020 = vrot.slane %v4881, 1
    %v5021 = vsel %vm1038, %v5018, %v5020
    %v5022 = vrot.slane %v4882, 1
    %v5023 = vrot.slane %v4883, 1
    %v5024 = vsel %vm1038, %v5022, %v5023
    %v5025 = vrot.slane %v4884, 1
    %v5026 = vsel %vm1038, %v5023, %v5025
    %v5027 = vrot.slane %v4885, 1
    %v5028 = vrot.slane %v4886, 1
    %v5029 = vsel %vm1038, %v5027, %v5028
    %v5030 = vrot.slane %v4887, 1
    %v5031 = vsel %vm1038, %v5028, %v5030
    %v5068 = vadd.f32 %v4798, %v4944
    %v5069 = vadd.f32 %v4799, %v4946
    %v5070 = vadd.f32 %v4800, %v4949
    %v5071 = vadd.f32 %v4801, %v4951
    %v5072 = vadd.f32 %v4802, %v4954
    %v5073 = vadd.f32 %v4803, %v4956
    %v5074 = vadd.f32 %v4804, %v4959
    %v5075 = vadd.f32 %v4805, %v4961
    %v5076 = vadd.f32 %v4806, %v4964
    %v5077 = vadd.f32 %v4807, %v4966
    %v5078 = vadd.f32 %v4808, %v4969
    %v5079 = vadd.f32 %v4809, %v4971
    %v5080 = vadd.f32 %v4810, %v4974
    %v5081 = vadd.f32 %v4811, %v4976
    %v5082 = vadd.f32 %v4812, %v4979
    %v5083 = vadd.f32 %v4813, %v4981
    %v5084 = vadd.f32 %v4814, %v4984
    %v5085 = vadd.f32 %v4815, %v4986
    %v5086 = vadd.f32 %v4816, %v4989
    %v5087 = vadd.f32 %v4817, %v4991
    %v5088 = vadd.f32 %v4818, %v4994
    %v5089 = vadd.f32 %v4819, %v4996
    %v5090 = vadd.f32 %v4820, %v4999
    %v5091 = vadd.f32 %v4821, %v5001
    %v5092 = vadd.f32 %v4822, %v5004
    %v5093 = vadd.f32 %v4823, %v5006
    %v5094 = vadd.f32 %v4824, %v5009
    %v5095 = vadd.f32 %v4825, %v5011
    %v5096 = vadd.f32 %v4826, %v5014
    %v5097 = vadd.f32 %v4827, %v5016
    %v5098 = vadd.f32 %v4828, %v5019
    %v5099 = vadd.f32 %v4829, %v5021
    %v5100 = vadd.f32 %v4830, %v5024
    %v5101 = vadd.f32 %v4831, %v5026
    %v5102 = vadd.f32 %v4832, %v5029
    %v5103 = vadd.f32 %v4833, %v5031
    %v5104 = vmul.f32 %v70, %v1204
    %v5105 = vmul.f32 %v71, %v1204
    %v5106 = vmul.f32 %v72, %v1204
    %v5107 = vmul.f32 %v73, %v1204
    %v5108 = vmul.f32 %v74, %v1204
    %v5109 = vmul.f32 %v75, %v1204
    %v5110 = vmul.f32 %v76, %v1204
    %v5111 = vmul.f32 %v77, %v1204
    %v5112 = vmul.f32 %v78, %v1204
    %v5113 = vmul.f32 %v79, %v1204
    %v5114 = vmul.f32 %v80, %v1204
    %v5115 = vmul.f32 %v81, %v1204
    %v5116 = vmul.f32 %v82, %v1204
    %v5117 = vmul.f32 %v83, %v1204
    %v5118 = vmul.f32 %v84, %v1204
    %v5119 = vmul.f32 %v85, %v1204
    %v5120 = vmul.f32 %v86, %v1204
    %v5121 = vmul.f32 %v87, %v1204
    %v5122 = vmul.f32 %v88, %v1204
    %v5123 = vmul.f32 %v89, %v1204
    %v5124 = vmul.f32 %v90, %v1204
    %v5125 = vmul.f32 %v91, %v1204
    %v5126 = vmul.f32 %v92, %v1204
    %v5127 = vmul.f32 %v93, %v1204
    %v5128 = vmul.f32 %v94, %v1204
    %v5129 = vmul.f32 %v95, %v1204
    %v5130 = vmul.f32 %v96, %v1204
    %v5131 = vmul.f32 %v100, %v1204
    %v5132 = vmul.f32 %v101, %v1204
    %v5133 = vmul.f32 %v102, %v1204
    %v5134 = vmul.f32 %v103, %v1204
    %v5135 = vmul.f32 %v104, %v1204
    %v5136 = vmul.f32 %v105, %v1204
    %v5137 = vmul.f32 %v106, %v1204
    %v5138 = vmul.f32 %v107, %v1204
    %v5139 = vmul.f32 %v108, %v1204
    %v5140 = vmul.f32 %v109, %v1204
    %v5141 = vmul.f32 %v110, %v1204
    %v5142 = vmul.f32 %v111, %v1204
    %v5143 = vmul.f32 %v112, %v1204
    %v5144 = vmul.f32 %v113, %v1204
    %v5145 = vmul.f32 %v114, %v1204
    %v5146 = vmul.f32 %v115, %v1204
    %v5147 = vmul.f32 %v116, %v1204
    %v5148 = vmul.f32 %v117, %v1204
    %v5149 = vmul.f32 %v118, %v1204
    %v5150 = vmul.f32 %v119, %v1204
    %v5151 = vmul.f32 %v120, %v1204
    %v5152 = vmul.f32 %v121, %v1204
    %v5153 = vmul.f32 %v122, %v1204
    %v5154 = vmul.f32 %v123, %v1204
    %v5155 = vmul.f32 %v124, %v1204
    %v5156 = vmul.f32 %v125, %v1204
    %v5157 = vmul.f32 %v126, %v1204
    %v5212 = vrot.slane %v5104, 1
    %v5213 = vrot.slane %v5105, 1
    %v5214 = vsel %vm1038, %v5212, %v5213
    %v5215 = vrot.slane %v5106, 1
    %v5216 = vsel %vm1038, %v5213, %v5215
    %v5217 = vrot.slane %v5107, 1
    %v5218 = vrot.slane %v5108, 1
    %v5219 = vsel %vm1038, %v5217, %v5218
    %v5220 = vrot.slane %v5109, 1
    %v5221 = vsel %vm1038, %v5218, %v5220
    %v5222 = vrot.slane %v5110, 1
    %v5223 = vrot.slane %v5111, 1
    %v5224 = vsel %vm1038, %v5222, %v5223
    %v5225 = vrot.slane %v5112, 1
    %v5226 = vsel %vm1038, %v5223, %v5225
    %v5227 = vrot.slane %v5113, 1
    %v5228 = vrot.slane %v5114, 1
    %v5229 = vsel %vm1038, %v5227, %v5228
    %v5230 = vrot.slane %v5115, 1
    %v5231 = vsel %vm1038, %v5228, %v5230
    %v5232 = vrot.slane %v5116, 1
    %v5233 = vrot.slane %v5117, 1
    %v5234 = vsel %vm1038, %v5232, %v5233
    %v5235 = vrot.slane %v5118, 1
    %v5236 = vsel %vm1038, %v5233, %v5235
    %v5237 = vrot.slane %v5119, 1
    %v5238 = vrot.slane %v5120, 1
    %v5239 = vsel %vm1038, %v5237, %v5238
    %v5240 = vrot.slane %v5121, 1
    %v5241 = vsel %vm1038, %v5238, %v5240
    %v5242 = vrot.slane %v5122, 1
    %v5243 = vrot.slane %v5123, 1
    %v5244 = vsel %vm1038, %v5242, %v5243
    %v5245 = vrot.slane %v5124, 1
    %v5246 = vsel %vm1038, %v5243, %v5245
    %v5247 = vrot.slane %v5125, 1
    %v5248 = vrot.slane %v5126, 1
    %v5249 = vsel %vm1038, %v5247, %v5248
    %v5250 = vrot.slane %v5127, 1
    %v5251 = vsel %vm1038, %v5248, %v5250
    %v5252 = vrot.slane %v5128, 1
    %v5253 = vrot.slane %v5129, 1
    %v5254 = vsel %vm1038, %v5252, %v5253
    %v5255 = vrot.slane %v5130, 1
    %v5256 = vsel %vm1038, %v5253, %v5255
    %v5257 = vrot.slane %v5131, 1
    %v5258 = vrot.slane %v5132, 1
    %v5259 = vsel %vm1038, %v5257, %v5258
    %v5260 = vrot.slane %v5133, 1
    %v5261 = vsel %vm1038, %v5258, %v5260
    %v5262 = vrot.slane %v5134, 1
    %v5263 = vrot.slane %v5135, 1
    %v5264 = vsel %vm1038, %v5262, %v5263
    %v5265 = vrot.slane %v5136, 1
    %v5266 = vsel %vm1038, %v5263, %v5265
    %v5267 = vrot.slane %v5137, 1
    %v5268 = vrot.slane %v5138, 1
    %v5269 = vsel %vm1038, %v5267, %v5268
    %v5270 = vrot.slane %v5139, 1
    %v5271 = vsel %vm1038, %v5268, %v5270
    %v5272 = vrot.slane %v5140, 1
    %v5273 = vrot.slane %v5141, 1
    %v5274 = vsel %vm1038, %v5272, %v5273
    %v5275 = vrot.slane %v5142, 1
    %v5276 = vsel %vm1038, %v5273, %v5275
    %v5277 = vrot.slane %v5143, 1
    %v5278 = vrot.slane %v5144, 1
    %v5279 = vsel %vm1038, %v5277, %v5278
    %v5280 = vrot.slane %v5145, 1
    %v5281 = vsel %vm1038, %v5278, %v5280
    %v5282 = vrot.slane %v5146, 1
    %v5283 = vrot.slane %v5147, 1
    %v5284 = vsel %vm1038, %v5282, %v5283
    %v5285 = vrot.slane %v5148, 1
    %v5286 = vsel %vm1038, %v5283, %v5285
    %v5287 = vrot.slane %v5149, 1
    %v5288 = vrot.slane %v5150, 1
    %v5289 = vsel %vm1038, %v5287, %v5288
    %v5290 = vrot.slane %v5151, 1
    %v5291 = vsel %vm1038, %v5288, %v5290
    %v5292 = vrot.slane %v5152, 1
    %v5293 = vrot.slane %v5153, 1
    %v5294 = vsel %vm1038, %v5292, %v5293
    %v5295 = vrot.slane %v5154, 1
    %v5296 = vsel %vm1038, %v5293, %v5295
    %v5297 = vrot.slane %v5155, 1
    %v5298 = vrot.slane %v5156, 1
    %v5299 = vsel %vm1038, %v5297, %v5298
    %v5300 = vrot.slane %v5157, 1
    %v5301 = vsel %vm1038, %v5298, %v5300
    %v5338 = vadd.f32 %v5068, %v5214
    %v5339 = vadd.f32 %v5069, %v5216
    %v5340 = vadd.f32 %v5070, %v5219
    %v5341 = vadd.f32 %v5071, %v5221
    %v5342 = vadd.f32 %v5072, %v5224
    %v5343 = vadd.f32 %v5073, %v5226
    %v5344 = vadd.f32 %v5074, %v5229
    %v5345 = vadd.f32 %v5075, %v5231
    %v5346 = vadd.f32 %v5076, %v5234
    %v5347 = vadd.f32 %v5077, %v5236
    %v5348 = vadd.f32 %v5078, %v5239
    %v5349 = vadd.f32 %v5079, %v5241
    %v5350 = vadd.f32 %v5080, %v5244
    %v5351 = vadd.f32 %v5081, %v5246
    %v5352 = vadd.f32 %v5082, %v5249
    %v5353 = vadd.f32 %v5083, %v5251
    %v5354 = vadd.f32 %v5084, %v5254
    %v5355 = vadd.f32 %v5085, %v5256
    %v5356 = vadd.f32 %v5086, %v5259
    %v5357 = vadd.f32 %v5087, %v5261
    %v5358 = vadd.f32 %v5088, %v5264
    %v5359 = vadd.f32 %v5089, %v5266
    %v5360 = vadd.f32 %v5090, %v5269
    %v5361 = vadd.f32 %v5091, %v5271
    %v5362 = vadd.f32 %v5092, %v5274
    %v5363 = vadd.f32 %v5093, %v5276
    %v5364 = vadd.f32 %v5094, %v5279
    %v5365 = vadd.f32 %v5095, %v5281
    %v5366 = vadd.f32 %v5096, %v5284
    %v5367 = vadd.f32 %v5097, %v5286
    %v5368 = vadd.f32 %v5098, %v5289
    %v5369 = vadd.f32 %v5099, %v5291
    %v5370 = vadd.f32 %v5100, %v5294
    %v5371 = vadd.f32 %v5101, %v5296
    %v5372 = vadd.f32 %v5102, %v5299
    %v5373 = vadd.f32 %v5103, %v5301
    %v5374 = vmul.f32 %v190, %v1478
    %v5375 = vmul.f32 %v191, %v1478
    %v5376 = vmul.f32 %v192, %v1478
    %v5377 = vmul.f32 %v193, %v1478
    %v5378 = vmul.f32 %v194, %v1478
    %v5379 = vmul.f32 %v195, %v1478
    %v5380 = vmul.f32 %v196, %v1478
    %v5381 = vmul.f32 %v197, %v1478
    %v5382 = vmul.f32 %v198, %v1478
    %v5383 = vmul.f32 %v199, %v1478
    %v5384 = vmul.f32 %v200, %v1478
    %v5385 = vmul.f32 %v201, %v1478
    %v5386 = vmul.f32 %v202, %v1478
    %v5387 = vmul.f32 %v203, %v1478
    %v5388 = vmul.f32 %v204, %v1478
    %v5389 = vmul.f32 %v205, %v1478
    %v5390 = vmul.f32 %v206, %v1478
    %v5391 = vmul.f32 %v207, %v1478
    %v5392 = vmul.f32 %v208, %v1478
    %v5393 = vmul.f32 %v209, %v1478
    %v5394 = vmul.f32 %v210, %v1478
    %v5395 = vmul.f32 %v211, %v1478
    %v5396 = vmul.f32 %v212, %v1478
    %v5397 = vmul.f32 %v213, %v1478
    %v5398 = vmul.f32 %v214, %v1478
    %v5399 = vmul.f32 %v215, %v1478
    %v5400 = vmul.f32 %v216, %v1478
    %v5401 = vmul.f32 %v220, %v1478
    %v5402 = vmul.f32 %v221, %v1478
    %v5403 = vmul.f32 %v222, %v1478
    %v5404 = vmul.f32 %v223, %v1478
    %v5405 = vmul.f32 %v224, %v1478
    %v5406 = vmul.f32 %v225, %v1478
    %v5407 = vmul.f32 %v226, %v1478
    %v5408 = vmul.f32 %v227, %v1478
    %v5409 = vmul.f32 %v228, %v1478
    %v5410 = vmul.f32 %v229, %v1478
    %v5411 = vmul.f32 %v230, %v1478
    %v5412 = vmul.f32 %v231, %v1478
    %v5413 = vmul.f32 %v232, %v1478
    %v5414 = vmul.f32 %v233, %v1478
    %v5415 = vmul.f32 %v234, %v1478
    %v5416 = vmul.f32 %v235, %v1478
    %v5417 = vmul.f32 %v236, %v1478
    %v5418 = vmul.f32 %v237, %v1478
    %v5419 = vmul.f32 %v238, %v1478
    %v5420 = vmul.f32 %v239, %v1478
    %v5421 = vmul.f32 %v240, %v1478
    %v5422 = vmul.f32 %v241, %v1478
    %v5423 = vmul.f32 %v242, %v1478
    %v5424 = vmul.f32 %v243, %v1478
    %v5425 = vmul.f32 %v244, %v1478
    %v5426 = vmul.f32 %v245, %v1478
    %v5427 = vmul.f32 %v246, %v1478
    %v5482 = vrot.slane %v5374, 1
    %v5483 = vrot.slane %v5375, 1
    %v5484 = vsel %vm1038, %v5482, %v5483
    %v5485 = vrot.slane %v5376, 1
    %v5486 = vsel %vm1038, %v5483, %v5485
    %v5487 = vrot.slane %v5377, 1
    %v5488 = vrot.slane %v5378, 1
    %v5489 = vsel %vm1038, %v5487, %v5488
    %v5490 = vrot.slane %v5379, 1
    %v5491 = vsel %vm1038, %v5488, %v5490
    %v5492 = vrot.slane %v5380, 1
    %v5493 = vrot.slane %v5381, 1
    %v5494 = vsel %vm1038, %v5492, %v5493
    %v5495 = vrot.slane %v5382, 1
    %v5496 = vsel %vm1038, %v5493, %v5495
    %v5497 = vrot.slane %v5383, 1
    %v5498 = vrot.slane %v5384, 1
    %v5499 = vsel %vm1038, %v5497, %v5498
    %v5500 = vrot.slane %v5385, 1
    %v5501 = vsel %vm1038, %v5498, %v5500
    %v5502 = vrot.slane %v5386, 1
    %v5503 = vrot.slane %v5387, 1
    %v5504 = vsel %vm1038, %v5502, %v5503
    %v5505 = vrot.slane %v5388, 1
    %v5506 = vsel %vm1038, %v5503, %v5505
    %v5507 = vrot.slane %v5389, 1
    %v5508 = vrot.slane %v5390, 1
    %v5509 = vsel %vm1038, %v5507, %v5508
    %v5510 = vrot.slane %v5391, 1
    %v5511 = vsel %vm1038, %v5508, %v5510
    %v5512 = vrot.slane %v5392, 1
    %v5513 = vrot.slane %v5393, 1
    %v5514 = vsel %vm1038, %v5512, %v5513
    %v5515 = vrot.slane %v5394, 1
    %v5516 = vsel %vm1038, %v5513, %v5515
    %v5517 = vrot.slane %v5395, 1
    %v5518 = vrot.slane %v5396, 1
    %v5519 = vsel %vm1038, %v5517, %v5518
    %v5520 = vrot.slane %v5397, 1
    %v5521 = vsel %vm1038, %v5518, %v5520
    %v5522 = vrot.slane %v5398, 1
    %v5523 = vrot.slane %v5399, 1
    %v5524 = vsel %vm1038, %v5522, %v5523
    %v5525 = vrot.slane %v5400, 1
    %v5526 = vsel %vm1038, %v5523, %v5525
    %v5527 = vrot.slane %v5401, 1
    %v5528 = vrot.slane %v5402, 1
    %v5529 = vsel %vm1038, %v5527, %v5528
    %v5530 = vrot.slane %v5403, 1
    %v5531 = vsel %vm1038, %v5528, %v5530
    %v5532 = vrot.slane %v5404, 1
    %v5533 = vrot.slane %v5405, 1
    %v5534 = vsel %vm1038, %v5532, %v5533
    %v5535 = vrot.slane %v5406, 1
    %v5536 = vsel %vm1038, %v5533, %v5535
    %v5537 = vrot.slane %v5407, 1
    %v5538 = vrot.slane %v5408, 1
    %v5539 = vsel %vm1038, %v5537, %v5538
    %v5540 = vrot.slane %v5409, 1
    %v5541 = vsel %vm1038, %v5538, %v5540
    %v5542 = vrot.slane %v5410, 1
    %v5543 = vrot.slane %v5411, 1
    %v5544 = vsel %vm1038, %v5542, %v5543
    %v5545 = vrot.slane %v5412, 1
    %v5546 = vsel %vm1038, %v5543, %v5545
    %v5547 = vrot.slane %v5413, 1
    %v5548 = vrot.slane %v5414, 1
    %v5549 = vsel %vm1038, %v5547, %v5548
    %v5550 = vrot.slane %v5415, 1
    %v5551 = vsel %vm1038, %v5548, %v5550
    %v5552 = vrot.slane %v5416, 1
    %v5553 = vrot.slane %v5417, 1
    %v5554 = vsel %vm1038, %v5552, %v5553
    %v5555 = vrot.slane %v5418, 1
    %v5556 = vsel %vm1038, %v5553, %v5555
    %v5557 = vrot.slane %v5419, 1
    %v5558 = vrot.slane %v5420, 1
    %v5559 = vsel %vm1038, %v5557, %v5558
    %v5560 = vrot.slane %v5421, 1
    %v5561 = vsel %vm1038, %v5558, %v5560
    %v5562 = vrot.slane %v5422, 1
    %v5563 = vrot.slane %v5423, 1
    %v5564 = vsel %vm1038, %v5562, %v5563
    %v5565 = vrot.slane %v5424, 1
    %v5566 = vsel %vm1038, %v5563, %v5565
    %v5567 = vrot.slane %v5425, 1
    %v5568 = vrot.slane %v5426, 1
    %v5569 = vsel %vm1038, %v5567, %v5568
    %v5570 = vrot.slane %v5427, 1
    %v5571 = vsel %vm1038, %v5568, %v5570
    %v5608 = vadd.f32 %v5338, %v5484
    %v5609 = vadd.f32 %v5339, %v5486
    %v5610 = vadd.f32 %v5340, %v5489
    %v5611 = vadd.f32 %v5341, %v5491
    %v5612 = vadd.f32 %v5342, %v5494
    %v5613 = vadd.f32 %v5343, %v5496
    %v5614 = vadd.f32 %v5344, %v5499
    %v5615 = vadd.f32 %v5345, %v5501
    %v5616 = vadd.f32 %v5346, %v5504
    %v5617 = vadd.f32 %v5347, %v5506
    %v5618 = vadd.f32 %v5348, %v5509
    %v5619 = vadd.f32 %v5349, %v5511
    %v5620 = vadd.f32 %v5350, %v5514
    %v5621 = vadd.f32 %v5351, %v5516
    %v5622 = vadd.f32 %v5352, %v5519
    %v5623 = vadd.f32 %v5353, %v5521
    %v5624 = vadd.f32 %v5354, %v5524
    %v5625 = vadd.f32 %v5355, %v5526
    %v5626 = vadd.f32 %v5356, %v5529
    %v5627 = vadd.f32 %v5357, %v5531
    %v5628 = vadd.f32 %v5358, %v5534
    %v5629 = vadd.f32 %v5359, %v5536
    %v5630 = vadd.f32 %v5360, %v5539
    %v5631 = vadd.f32 %v5361, %v5541
    %v5632 = vadd.f32 %v5362, %v5544
    %v5633 = vadd.f32 %v5363, %v5546
    %v5634 = vadd.f32 %v5364, %v5549
    %v5635 = vadd.f32 %v5365, %v5551
    %v5636 = vadd.f32 %v5366, %v5554
    %v5637 = vadd.f32 %v5367, %v5556
    %v5638 = vadd.f32 %v5368, %v5559
    %v5639 = vadd.f32 %v5369, %v5561
    %v5640 = vadd.f32 %v5370, %v5564
    %v5641 = vadd.f32 %v5371, %v5566
    %v5642 = vadd.f32 %v5372, %v5569
    %v5643 = vadd.f32 %v5373, %v5571
    %5645 = vset.pattern.permute.xlu0 0
    %5646 = vperm.xlu0 %5645, %v379
    %v5647 = vpop.permute.xlu0 %5646
    %5650 = vset.pattern.permute.xlu0 0
    %5651 = vperm.xlu0 %5650, %v380
    %v5652 = vpop.permute.xlu0 %5651
    %5655 = vset.pattern.permute.xlu0 0
    %5656 = vperm.xlu0 %5655, %v381
    %v5657 = vpop.permute.xlu0 %5656
    %5660 = vset.pattern.permute.xlu0 0
    %5661 = vperm.xlu0 %5660, %v382
    %v5662 = vpop.permute.xlu0 %5661
    %5665 = vset.pattern.permute.xlu0 0
    %5666 = vperm.xlu0 %5665, %v383
    %v5667 = vpop.permute.xlu0 %5666
    %5670 = vset.pattern.permute.xlu0 0
    %5671 = vperm.xlu0 %5670, %v384
    %v5672 = vpop.permute.xlu0 %5671
    %5675 = vset.pattern.permute.xlu0 0
    %5676 = vperm.xlu0 %5675, %v385
    %v5677 = vpop.permute.xlu0 %5676
    %5680 = vset.pattern.permute.xlu0 0
    %5681 = vperm.xlu0 %5680, %v386
    %v5682 = vpop.permute.xlu0 %5681
    %5685 = vset.pattern.permute.xlu0 0
    %5686 = vperm.xlu0 %5685, %v387
    %v5687 = vpop.permute.xlu0 %5686
    %5690 = vset.pattern.permute.xlu0 0
    %5691 = vperm.xlu0 %5690, %v388
    %v5692 = vpop.permute.xlu0 %5691
    %5695 = vset.pattern.permute.xlu0 0
    %5696 = vperm.xlu0 %5695, %v389
    %v5697 = vpop.permute.xlu0 %5696
    %5700 = vset.pattern.permute.xlu0 0
    %5701 = vperm.xlu0 %5700, %v390
    %v5702 = vpop.permute.xlu0 %5701
    %5705 = vset.pattern.permute.xlu0 0
    %5706 = vperm.xlu0 %5705, %v391
    %v5707 = vpop.permute.xlu0 %5706
    %5710 = vset.pattern.permute.xlu0 0
    %5711 = vperm.xlu0 %5710, %v392
    %v5712 = vpop.permute.xlu0 %5711
    %5715 = vset.pattern.permute.xlu0 0
    %5716 = vperm.xlu0 %5715, %v393
    %v5717 = vpop.permute.xlu0 %5716
    %5720 = vset.pattern.permute.xlu0 0
    %5721 = vperm.xlu0 %5720, %v394
    %v5722 = vpop.permute.xlu0 %5721
    %5725 = vset.pattern.permute.xlu0 0
    %5726 = vperm.xlu0 %5725, %v395
    %v5727 = vpop.permute.xlu0 %5726
    %5730 = vset.pattern.permute.xlu0 0
    %5731 = vperm.xlu0 %5730, %v396
    %v5732 = vpop.permute.xlu0 %5731
    %5735 = vset.pattern.permute.xlu0 0
    %5736 = vperm.xlu0 %5735, %v397
    %v5737 = vpop.permute.xlu0 %5736
    %5740 = vset.pattern.permute.xlu0 0
    %5741 = vperm.xlu0 %5740, %v398
    %v5742 = vpop.permute.xlu0 %5741
    %5745 = vset.pattern.permute.xlu0 0
    %5746 = vperm.xlu0 %5745, %v399
    %v5747 = vpop.permute.xlu0 %5746
    %5750 = vset.pattern.permute.xlu0 0
    %5751 = vperm.xlu0 %5750, %v400
    %v5752 = vpop.permute.xlu0 %5751
    %5755 = vset.pattern.permute.xlu0 0
    %5756 = vperm.xlu0 %5755, %v401
    %v5757 = vpop.permute.xlu0 %5756
    %5760 = vset.pattern.permute.xlu0 0
    %5761 = vperm.xlu0 %5760, %v402
    %v5762 = vpop.permute.xlu0 %5761
    %5765 = vset.pattern.permute.xlu0 0
    %5766 = vperm.xlu0 %5765, %v403
    %v5767 = vpop.permute.xlu0 %5766
    %5770 = vset.pattern.permute.xlu0 0
    %5771 = vperm.xlu0 %5770, %v404
    %v5772 = vpop.permute.xlu0 %5771
    %5775 = vset.pattern.permute.xlu0 0
    %5776 = vperm.xlu0 %5775, %v405
    %v5777 = vpop.permute.xlu0 %5776
    %5780 = vset.pattern.permute.xlu0 0
    %5781 = vperm.xlu0 %5780, %v406
    %v5782 = vpop.permute.xlu0 %5781
    %5785 = vset.pattern.permute.xlu0 0
    %5786 = vperm.xlu0 %5785, %v407
    %v5787 = vpop.permute.xlu0 %5786
    %5790 = vset.pattern.permute.xlu0 0
    %5791 = vperm.xlu0 %5790, %v408
    %v5792 = vpop.permute.xlu0 %5791
    %5795 = vset.pattern.permute.xlu0 0
    %5796 = vperm.xlu0 %5795, %v409
    %v5797 = vpop.permute.xlu0 %5796
    %5800 = vset.pattern.permute.xlu0 0
    %5801 = vperm.xlu0 %5800, %v410
    %v5802 = vpop.permute.xlu0 %5801
    %5805 = vset.pattern.permute.xlu0 0
    %5806 = vperm.xlu0 %5805, %v411
    %v5807 = vpop.permute.xlu0 %5806
    %5810 = vset.pattern.permute.xlu0 0
    %5811 = vperm.xlu0 %5810, %v412
    %v5812 = vpop.permute.xlu0 %5811
    %5815 = vset.pattern.permute.xlu0 0
    %5816 = vperm.xlu0 %5815, %v413
    %v5817 = vpop.permute.xlu0 %5816
    %5820 = vset.pattern.permute.xlu0 0
    %5821 = vperm.xlu0 %5820, %v414
    %v5822 = vpop.permute.xlu0 %5821
    %v5824 = vmul.f32 %v5608, %v5647
    %v5825 = vmul.f32 %v5609, %v5652
    %v5826 = vmul.f32 %v5610, %v5657
    %v5827 = vmul.f32 %v5611, %v5662
    %v5828 = vmul.f32 %v5612, %v5667
    %v5829 = vmul.f32 %v5613, %v5672
    %v5830 = vmul.f32 %v5614, %v5677
    %v5831 = vmul.f32 %v5615, %v5682
    %v5832 = vmul.f32 %v5616, %v5687
    %v5833 = vmul.f32 %v5617, %v5692
    %v5834 = vmul.f32 %v5618, %v5697
    %v5835 = vmul.f32 %v5619, %v5702
    %v5836 = vmul.f32 %v5620, %v5707
    %v5837 = vmul.f32 %v5621, %v5712
    %v5838 = vmul.f32 %v5622, %v5717
    %v5839 = vmul.f32 %v5623, %v5722
    %v5840 = vmul.f32 %v5624, %v5727
    %v5841 = vmul.f32 %v5625, %v5732
    %v5842 = vmul.f32 %v5626, %v5737
    %v5843 = vmul.f32 %v5627, %v5742
    %v5844 = vmul.f32 %v5628, %v5747
    %v5845 = vmul.f32 %v5629, %v5752
    %v5846 = vmul.f32 %v5630, %v5757
    %v5847 = vmul.f32 %v5631, %v5762
    %v5848 = vmul.f32 %v5632, %v5767
    %v5849 = vmul.f32 %v5633, %v5772
    %v5850 = vmul.f32 %v5634, %v5777
    %v5851 = vmul.f32 %v5635, %v5782
    %v5852 = vmul.f32 %v5636, %v5787
    %v5853 = vmul.f32 %v5637, %v5792
    %v5854 = vmul.f32 %v5638, %v5797
    %v5855 = vmul.f32 %v5639, %v5802
    %v5856 = vmul.f32 %v5640, %v5807
    %v5857 = vmul.f32 %v5641, %v5812
    %v5858 = vmul.f32 %v5642, %v5817
    %v5859 = vmul.f32 %v5643, %v5822
    %v5860 = vsel %vm1965, %v5824, 0.0
    %v5861 = vsel %vm1965, %v5825, 0.0
    %v5862 = vadd.f32 %v5860, %v5861
    %v5863 = vsel %vm1965, %v5826, 0.0
    %v5864 = vadd.f32 %v5862, %v5863
    %v5865 = vsel %vm1965, %v5827, 0.0
    %v5866 = vadd.f32 %v5864, %v5865
    %v5867 = vsel %vm1965, %v5828, 0.0
    %v5868 = vadd.f32 %v5866, %v5867
    %v5869 = vsel %vm1965, %v5829, 0.0
    %v5870 = vadd.f32 %v5868, %v5869
    %v5871 = vsel %vm1965, %v5830, 0.0
    %v5872 = vadd.f32 %v5870, %v5871
    %v5873 = vsel %vm1965, %v5831, 0.0
    %v5874 = vadd.f32 %v5872, %v5873
    %v5875 = vsel %vm1965, %v5832, 0.0
    %v5876 = vadd.f32 %v5874, %v5875
    %v5877 = vsel %vm1965, %v5833, 0.0
    %v5878 = vadd.f32 %v5876, %v5877
    %v5879 = vsel %vm1965, %v5834, 0.0
    %v5880 = vadd.f32 %v5878, %v5879
    %v5881 = vsel %vm1965, %v5835, 0.0
    %v5882 = vadd.f32 %v5880, %v5881
    %v5883 = vsel %vm1965, %v5836, 0.0
    %v5884 = vadd.f32 %v5882, %v5883
    %v5885 = vsel %vm1965, %v5837, 0.0
    %v5886 = vadd.f32 %v5884, %v5885
    %v5887 = vsel %vm1965, %v5838, 0.0
    %v5888 = vadd.f32 %v5886, %v5887
    %v5889 = vsel %vm1965, %v5839, 0.0
    %v5890 = vadd.f32 %v5888, %v5889
    %v5891 = vsel %vm1965, %v5840, 0.0
    %v5892 = vadd.f32 %v5890, %v5891
    %v5893 = vsel %vm1965, %v5841, 0.0
    %v5894 = vadd.f32 %v5892, %v5893
    %v5895 = vsel %vm1965, %v5842, 0.0
    %v5896 = vadd.f32 %v5894, %v5895
    %v5897 = vsel %vm1965, %v5843, 0.0
    %v5898 = vadd.f32 %v5896, %v5897
    %v5899 = vsel %vm1965, %v5844, 0.0
    %v5900 = vadd.f32 %v5898, %v5899
    %v5901 = vsel %vm1965, %v5845, 0.0
    %v5902 = vadd.f32 %v5900, %v5901
    %v5903 = vsel %vm1965, %v5846, 0.0
    %v5904 = vadd.f32 %v5902, %v5903
    %v5905 = vsel %vm1965, %v5847, 0.0
    %v5906 = vadd.f32 %v5904, %v5905
    %v5907 = vsel %vm1965, %v5848, 0.0
    %v5908 = vadd.f32 %v5906, %v5907
    %v5909 = vsel %vm1965, %v5849, 0.0
    %v5910 = vadd.f32 %v5908, %v5909
    %v5911 = vsel %vm1965, %v5850, 0.0
    %v5912 = vadd.f32 %v5910, %v5911
    %v5913 = vsel %vm1965, %v5851, 0.0
    %v5914 = vadd.f32 %v5912, %v5913
    %v5915 = vsel %vm1965, %v5852, 0.0
    %v5916 = vadd.f32 %v5914, %v5915
    %v5917 = vsel %vm1965, %v5853, 0.0
    %v5918 = vadd.f32 %v5916, %v5917
    %v5919 = vsel %vm1965, %v5854, 0.0
    %v5920 = vadd.f32 %v5918, %v5919
    %v5921 = vsel %vm1965, %v5855, 0.0
    %v5922 = vadd.f32 %v5920, %v5921
    %v5923 = vsel %vm1965, %v5856, 0.0
    %v5924 = vadd.f32 %v5922, %v5923
    %v5925 = vsel %vm1965, %v5857, 0.0
    %v5926 = vadd.f32 %v5924, %v5925
    %v5927 = vsel %vm1965, %v5858, 0.0
    %v5928 = vadd.f32 %v5926, %v5927
    %v5929 = vsel %vm1965, %v5859, 0.0
    %v5930 = vadd.f32 %v5928, %v5929
    %v5931 = vrot.slane %v5930, 4
    %v5932 = vadd.f32 %v5930, %v5931
    %v5933 = vrot.slane %v5932, 2
    %v5934 = vadd.f32 %v5932, %v5933
    %v5935 = vrot.slane %v5934, 1
    %v5936 = vadd.f32 %v5934, %v5935
    %v5937 = vadd.f32 %v4287, %v5936
    %v5938 = vmul.f32 %v5824, %v5824
    %v5939 = vmul.f32 %v5825, %v5825
    %v5940 = vmul.f32 %v5826, %v5826
    %v5941 = vmul.f32 %v5827, %v5827
    %v5942 = vmul.f32 %v5828, %v5828
    %v5943 = vmul.f32 %v5829, %v5829
    %v5944 = vmul.f32 %v5830, %v5830
    %v5945 = vmul.f32 %v5831, %v5831
    %v5946 = vmul.f32 %v5832, %v5832
    %v5947 = vmul.f32 %v5833, %v5833
    %v5948 = vmul.f32 %v5834, %v5834
    %v5949 = vmul.f32 %v5835, %v5835
    %v5950 = vmul.f32 %v5836, %v5836
    %v5951 = vmul.f32 %v5837, %v5837
    %v5952 = vmul.f32 %v5838, %v5838
    %v5953 = vmul.f32 %v5839, %v5839
    %v5954 = vmul.f32 %v5840, %v5840
    %v5955 = vmul.f32 %v5841, %v5841
    %v5956 = vmul.f32 %v5842, %v5842
    %v5957 = vmul.f32 %v5843, %v5843
    %v5958 = vmul.f32 %v5844, %v5844
    %v5959 = vmul.f32 %v5845, %v5845
    %v5960 = vmul.f32 %v5846, %v5846
    %v5961 = vmul.f32 %v5847, %v5847
    %v5962 = vmul.f32 %v5848, %v5848
    %v5963 = vmul.f32 %v5849, %v5849
    %v5964 = vmul.f32 %v5850, %v5850
    %v5965 = vmul.f32 %v5851, %v5851
    %v5966 = vmul.f32 %v5852, %v5852
    %v5967 = vmul.f32 %v5853, %v5853
    %v5968 = vmul.f32 %v5854, %v5854
    %v5969 = vmul.f32 %v5855, %v5855
    %v5970 = vmul.f32 %v5856, %v5856
    %v5971 = vmul.f32 %v5857, %v5857
    %v5972 = vmul.f32 %v5858, %v5858
    %v5973 = vmul.f32 %v5859, %v5859
    %v5974 = vsel %vm1965, %v5938, 0.0
    %v5975 = vsel %vm1965, %v5939, 0.0
    %v5976 = vadd.f32 %v5974, %v5975
    %v5977 = vsel %vm1965, %v5940, 0.0
    %v5978 = vadd.f32 %v5976, %v5977
    %v5979 = vsel %vm1965, %v5941, 0.0
    %v5980 = vadd.f32 %v5978, %v5979
    %v5981 = vsel %vm1965, %v5942, 0.0
    %v5982 = vadd.f32 %v5980, %v5981
    %v5983 = vsel %vm1965, %v5943, 0.0
    %v5984 = vadd.f32 %v5982, %v5983
    %v5985 = vsel %vm1965, %v5944, 0.0
    %v5986 = vadd.f32 %v5984, %v5985
    %v5987 = vsel %vm1965, %v5945, 0.0
    %v5988 = vadd.f32 %v5986, %v5987
    %v5989 = vsel %vm1965, %v5946, 0.0
    %v5990 = vadd.f32 %v5988, %v5989
    %v5991 = vsel %vm1965, %v5947, 0.0
    %v5992 = vadd.f32 %v5990, %v5991
    %v5993 = vsel %vm1965, %v5948, 0.0
    %v5994 = vadd.f32 %v5992, %v5993
    %v5995 = vsel %vm1965, %v5949, 0.0
    %v5996 = vadd.f32 %v5994, %v5995
    %v5997 = vsel %vm1965, %v5950, 0.0
    %v5998 = vadd.f32 %v5996, %v5997
    %v5999 = vsel %vm1965, %v5951, 0.0
    %v6000 = vadd.f32 %v5998, %v5999
    %v6001 = vsel %vm1965, %v5952, 0.0
    %v6002 = vadd.f32 %v6000, %v6001
    %v6003 = vsel %vm1965, %v5953, 0.0
    %v6004 = vadd.f32 %v6002, %v6003
    %v6005 = vsel %vm1965, %v5954, 0.0
    %v6006 = vadd.f32 %v6004, %v6005
    %v6007 = vsel %vm1965, %v5955, 0.0
    %v6008 = vadd.f32 %v6006, %v6007
    %v6009 = vsel %vm1965, %v5956, 0.0
    %v6010 = vadd.f32 %v6008, %v6009
    %v6011 = vsel %vm1965, %v5957, 0.0
    %v6012 = vadd.f32 %v6010, %v6011
    %v6013 = vsel %vm1965, %v5958, 0.0
    %v6014 = vadd.f32 %v6012, %v6013
    %v6015 = vsel %vm1965, %v5959, 0.0
    %v6016 = vadd.f32 %v6014, %v6015
    %v6017 = vsel %vm1965, %v5960, 0.0
    %v6018 = vadd.f32 %v6016, %v6017
    %v6019 = vsel %vm1965, %v5961, 0.0
    %v6020 = vadd.f32 %v6018, %v6019
    %v6021 = vsel %vm1965, %v5962, 0.0
    %v6022 = vadd.f32 %v6020, %v6021
    %v6023 = vsel %vm1965, %v5963, 0.0
    %v6024 = vadd.f32 %v6022, %v6023
    %v6025 = vsel %vm1965, %v5964, 0.0
    %v6026 = vadd.f32 %v6024, %v6025
    %v6027 = vsel %vm1965, %v5965, 0.0
    %v6028 = vadd.f32 %v6026, %v6027
    %v6029 = vsel %vm1965, %v5966, 0.0
    %v6030 = vadd.f32 %v6028, %v6029
    %v6031 = vsel %vm1965, %v5967, 0.0
    %v6032 = vadd.f32 %v6030, %v6031
    %v6033 = vsel %vm1965, %v5968, 0.0
    %v6034 = vadd.f32 %v6032, %v6033
    %v6035 = vsel %vm1965, %v5969, 0.0
    %v6036 = vadd.f32 %v6034, %v6035
    %v6037 = vsel %vm1965, %v5970, 0.0
    %v6038 = vadd.f32 %v6036, %v6037
    %v6039 = vsel %vm1965, %v5971, 0.0
    %v6040 = vadd.f32 %v6038, %v6039
    %v6041 = vsel %vm1965, %v5972, 0.0
    %v6042 = vadd.f32 %v6040, %v6041
    %v6043 = vsel %vm1965, %v5973, 0.0
    %v6044 = vadd.f32 %v6042, %v6043
    %v6045 = vrot.slane %v6044, 4
    %v6046 = vadd.f32 %v6044, %v6045
    %v6047 = vrot.slane %v6046, 2
    %v6048 = vadd.f32 %v6046, %v6047
    %v6049 = vrot.slane %v6048, 1
    %v6050 = vadd.f32 %v6048, %v6049
    %v6051 = vadd.f32 %v4401, %v6050
    %v6052 = vmul.f32 %v247, %v473
    %v6053 = vmul.f32 %v248, %v473
    %v6054 = vmul.f32 %v250, %v473
    %v6055 = vmul.f32 %v251, %v473
    %v6056 = vmul.f32 %v253, %v473
    %v6057 = vmul.f32 %v254, %v473
    %v6058 = vmul.f32 %v256, %v473
    %v6059 = vmul.f32 %v257, %v473
    %v6060 = vmul.f32 %v259, %v473
    %v6061 = vmul.f32 %v260, %v473
    %v6062 = vmul.f32 %v262, %v473
    %v6063 = vmul.f32 %v263, %v473
    %v6064 = vmul.f32 %v265, %v473
    %v6065 = vmul.f32 %v266, %v473
    %v6066 = vmul.f32 %v268, %v473
    %v6067 = vmul.f32 %v269, %v473
    %v6068 = vmul.f32 %v271, %v473
    %v6069 = vmul.f32 %v272, %v473
    %v6070 = vmul.f32 %v277, %v473
    %v6071 = vmul.f32 %v278, %v473
    %v6072 = vmul.f32 %v280, %v473
    %v6073 = vmul.f32 %v281, %v473
    %v6074 = vmul.f32 %v283, %v473
    %v6075 = vmul.f32 %v284, %v473
    %v6076 = vmul.f32 %v286, %v473
    %v6077 = vmul.f32 %v287, %v473
    %v6078 = vmul.f32 %v289, %v473
    %v6079 = vmul.f32 %v290, %v473
    %v6080 = vmul.f32 %v292, %v473
    %v6081 = vmul.f32 %v293, %v473
    %v6082 = vmul.f32 %v295, %v473
    %v6083 = vmul.f32 %v296, %v473
    %v6084 = vmul.f32 %v298, %v473
    %v6085 = vmul.f32 %v299, %v473
    %v6086 = vmul.f32 %v301, %v473
    %v6087 = vmul.f32 %v302, %v473
    %v6088 = vadd.f32 %v6052, 0.0
    %v6089 = vadd.f32 %v6053, 0.0
    %v6090 = vadd.f32 %v6054, 0.0
    %v6091 = vadd.f32 %v6055, 0.0
    %v6092 = vadd.f32 %v6056, 0.0
    %v6093 = vadd.f32 %v6057, 0.0
    %v6094 = vadd.f32 %v6058, 0.0
    %v6095 = vadd.f32 %v6059, 0.0
    %v6096 = vadd.f32 %v6060, 0.0
    %v6097 = vadd.f32 %v6061, 0.0
    %v6098 = vadd.f32 %v6062, 0.0
    %v6099 = vadd.f32 %v6063, 0.0
    %v6100 = vadd.f32 %v6064, 0.0
    %v6101 = vadd.f32 %v6065, 0.0
    %v6102 = vadd.f32 %v6066, 0.0
    %v6103 = vadd.f32 %v6067, 0.0
    %v6104 = vadd.f32 %v6068, 0.0
    %v6105 = vadd.f32 %v6069, 0.0
    %v6106 = vadd.f32 %v6070, 0.0
    %v6107 = vadd.f32 %v6071, 0.0
    %v6108 = vadd.f32 %v6072, 0.0
    %v6109 = vadd.f32 %v6073, 0.0
    %v6110 = vadd.f32 %v6074, 0.0
    %v6111 = vadd.f32 %v6075, 0.0
    %v6112 = vadd.f32 %v6076, 0.0
    %v6113 = vadd.f32 %v6077, 0.0
    %v6114 = vadd.f32 %v6078, 0.0
    %v6115 = vadd.f32 %v6079, 0.0
    %v6116 = vadd.f32 %v6080, 0.0
    %v6117 = vadd.f32 %v6081, 0.0
    %v6118 = vadd.f32 %v6082, 0.0
    %v6119 = vadd.f32 %v6083, 0.0
    %v6120 = vadd.f32 %v6084, 0.0
    %v6121 = vadd.f32 %v6085, 0.0
    %v6122 = vadd.f32 %v6086, 0.0
    %v6123 = vadd.f32 %v6087, 0.0
    %v6124 = vmul.f32 %v130, %v549
    %v6125 = vmul.f32 %v131, %v549
    %v6126 = vmul.f32 %v133, %v549
    %v6127 = vmul.f32 %v134, %v549
    %v6128 = vmul.f32 %v136, %v549
    %v6129 = vmul.f32 %v137, %v549
    %v6130 = vmul.f32 %v139, %v549
    %v6131 = vmul.f32 %v140, %v549
    %v6132 = vmul.f32 %v142, %v549
    %v6133 = vmul.f32 %v143, %v549
    %v6134 = vmul.f32 %v145, %v549
    %v6135 = vmul.f32 %v146, %v549
    %v6136 = vmul.f32 %v148, %v549
    %v6137 = vmul.f32 %v149, %v549
    %v6138 = vmul.f32 %v151, %v549
    %v6139 = vmul.f32 %v152, %v549
    %v6140 = vmul.f32 %v154, %v549
    %v6141 = vmul.f32 %v155, %v549
    %v6142 = vmul.f32 %v160, %v549
    %v6143 = vmul.f32 %v161, %v549
    %v6144 = vmul.f32 %v163, %v549
    %v6145 = vmul.f32 %v164, %v549
    %v6146 = vmul.f32 %v166, %v549
    %v6147 = vmul.f32 %v167, %v549
    %v6148 = vmul.f32 %v169, %v549
    %v6149 = vmul.f32 %v170, %v549
    %v6150 = vmul.f32 %v172, %v549
    %v6151 = vmul.f32 %v173, %v549
    %v6152 = vmul.f32 %v175, %v549
    %v6153 = vmul.f32 %v176, %v549
    %v6154 = vmul.f32 %v178, %v549
    %v6155 = vmul.f32 %v179, %v549
    %v6156 = vmul.f32 %v181, %v549
    %v6157 = vmul.f32 %v182, %v549
    %v6158 = vmul.f32 %v184, %v549
    %v6159 = vmul.f32 %v185, %v549
    %v6160 = vadd.f32 %v6088, %v6124
    %v6161 = vadd.f32 %v6089, %v6125
    %v6162 = vadd.f32 %v6090, %v6126
    %v6163 = vadd.f32 %v6091, %v6127
    %v6164 = vadd.f32 %v6092, %v6128
    %v6165 = vadd.f32 %v6093, %v6129
    %v6166 = vadd.f32 %v6094, %v6130
    %v6167 = vadd.f32 %v6095, %v6131
    %v6168 = vadd.f32 %v6096, %v6132
    %v6169 = vadd.f32 %v6097, %v6133
    %v6170 = vadd.f32 %v6098, %v6134
    %v6171 = vadd.f32 %v6099, %v6135
    %v6172 = vadd.f32 %v6100, %v6136
    %v6173 = vadd.f32 %v6101, %v6137
    %v6174 = vadd.f32 %v6102, %v6138
    %v6175 = vadd.f32 %v6103, %v6139
    %v6176 = vadd.f32 %v6104, %v6140
    %v6177 = vadd.f32 %v6105, %v6141
    %v6178 = vadd.f32 %v6106, %v6142
    %v6179 = vadd.f32 %v6107, %v6143
    %v6180 = vadd.f32 %v6108, %v6144
    %v6181 = vadd.f32 %v6109, %v6145
    %v6182 = vadd.f32 %v6110, %v6146
    %v6183 = vadd.f32 %v6111, %v6147
    %v6184 = vadd.f32 %v6112, %v6148
    %v6185 = vadd.f32 %v6113, %v6149
    %v6186 = vadd.f32 %v6114, %v6150
    %v6187 = vadd.f32 %v6115, %v6151
    %v6188 = vadd.f32 %v6116, %v6152
    %v6189 = vadd.f32 %v6117, %v6153
    %v6190 = vadd.f32 %v6118, %v6154
    %v6191 = vadd.f32 %v6119, %v6155
    %v6192 = vadd.f32 %v6120, %v6156
    %v6193 = vadd.f32 %v6121, %v6157
    %v6194 = vadd.f32 %v6122, %v6158
    %v6195 = vadd.f32 %v6123, %v6159
    %v6196 = vmul.f32 %v250, %v625
    %v6197 = vmul.f32 %v251, %v625
    %v6198 = vmul.f32 %v253, %v625
    %v6199 = vmul.f32 %v254, %v625
    %v6200 = vmul.f32 %v256, %v625
    %v6201 = vmul.f32 %v257, %v625
    %v6202 = vmul.f32 %v259, %v625
    %v6203 = vmul.f32 %v260, %v625
    %v6204 = vmul.f32 %v262, %v625
    %v6205 = vmul.f32 %v263, %v625
    %v6206 = vmul.f32 %v265, %v625
    %v6207 = vmul.f32 %v266, %v625
    %v6208 = vmul.f32 %v268, %v625
    %v6209 = vmul.f32 %v269, %v625
    %v6210 = vmul.f32 %v271, %v625
    %v6211 = vmul.f32 %v272, %v625
    %v6212 = vmul.f32 %v274, %v625
    %v6213 = vmul.f32 %v275, %v625
    %v6214 = vmul.f32 %v280, %v625
    %v6215 = vmul.f32 %v281, %v625
    %v6216 = vmul.f32 %v283, %v625
    %v6217 = vmul.f32 %v284, %v625
    %v6218 = vmul.f32 %v286, %v625
    %v6219 = vmul.f32 %v287, %v625
    %v6220 = vmul.f32 %v289, %v625
    %v6221 = vmul.f32 %v290, %v625
    %v6222 = vmul.f32 %v292, %v625
    %v6223 = vmul.f32 %v293, %v625
    %v6224 = vmul.f32 %v295, %v625
    %v6225 = vmul.f32 %v296, %v625
    %v6226 = vmul.f32 %v298, %v625
    %v6227 = vmul.f32 %v299, %v625
    %v6228 = vmul.f32 %v301, %v625
    %v6229 = vmul.f32 %v302, %v625
    %v6230 = vmul.f32 %v304, %v625
    %v6231 = vmul.f32 %v305, %v625
    %v6232 = vadd.f32 %v6160, %v6196
    %v6233 = vadd.f32 %v6161, %v6197
    %v6234 = vadd.f32 %v6162, %v6198
    %v6235 = vadd.f32 %v6163, %v6199
    %v6236 = vadd.f32 %v6164, %v6200
    %v6237 = vadd.f32 %v6165, %v6201
    %v6238 = vadd.f32 %v6166, %v6202
    %v6239 = vadd.f32 %v6167, %v6203
    %v6240 = vadd.f32 %v6168, %v6204
    %v6241 = vadd.f32 %v6169, %v6205
    %v6242 = vadd.f32 %v6170, %v6206
    %v6243 = vadd.f32 %v6171, %v6207
    %v6244 = vadd.f32 %v6172, %v6208
    %v6245 = vadd.f32 %v6173, %v6209
    %v6246 = vadd.f32 %v6174, %v6210
    %v6247 = vadd.f32 %v6175, %v6211
    %v6248 = vadd.f32 %v6176, %v6212
    %v6249 = vadd.f32 %v6177, %v6213
    %v6250 = vadd.f32 %v6178, %v6214
    %v6251 = vadd.f32 %v6179, %v6215
    %v6252 = vadd.f32 %v6180, %v6216
    %v6253 = vadd.f32 %v6181, %v6217
    %v6254 = vadd.f32 %v6182, %v6218
    %v6255 = vadd.f32 %v6183, %v6219
    %v6256 = vadd.f32 %v6184, %v6220
    %v6257 = vadd.f32 %v6185, %v6221
    %v6258 = vadd.f32 %v6186, %v6222
    %v6259 = vadd.f32 %v6187, %v6223
    %v6260 = vadd.f32 %v6188, %v6224
    %v6261 = vadd.f32 %v6189, %v6225
    %v6262 = vadd.f32 %v6190, %v6226
    %v6263 = vadd.f32 %v6191, %v6227
    %v6264 = vadd.f32 %v6192, %v6228
    %v6265 = vadd.f32 %v6193, %v6229
    %v6266 = vadd.f32 %v6194, %v6230
    %v6267 = vadd.f32 %v6195, %v6231
    %v6268 = vmul.f32 %v187, %v701
    %v6269 = vmul.f32 %v188, %v701
    %v6270 = vmul.f32 %v189, %v701
    %v6271 = vmul.f32 %v190, %v701
    %v6272 = vmul.f32 %v191, %v701
    %v6273 = vmul.f32 %v192, %v701
    %v6274 = vmul.f32 %v193, %v701
    %v6275 = vmul.f32 %v194, %v701
    %v6276 = vmul.f32 %v195, %v701
    %v6277 = vmul.f32 %v196, %v701
    %v6278 = vmul.f32 %v197, %v701
    %v6279 = vmul.f32 %v198, %v701
    %v6280 = vmul.f32 %v199, %v701
    %v6281 = vmul.f32 %v200, %v701
    %v6282 = vmul.f32 %v201, %v701
    %v6283 = vmul.f32 %v202, %v701
    %v6284 = vmul.f32 %v203, %v701
    %v6285 = vmul.f32 %v204, %v701
    %v6286 = vmul.f32 %v205, %v701
    %v6287 = vmul.f32 %v206, %v701
    %v6288 = vmul.f32 %v207, %v701
    %v6289 = vmul.f32 %v208, %v701
    %v6290 = vmul.f32 %v209, %v701
    %v6291 = vmul.f32 %v210, %v701
    %v6292 = vmul.f32 %v211, %v701
    %v6293 = vmul.f32 %v212, %v701
    %v6294 = vmul.f32 %v213, %v701
    %v6295 = vmul.f32 %v217, %v701
    %v6296 = vmul.f32 %v218, %v701
    %v6297 = vmul.f32 %v219, %v701
    %v6298 = vmul.f32 %v220, %v701
    %v6299 = vmul.f32 %v221, %v701
    %v6300 = vmul.f32 %v222, %v701
    %v6301 = vmul.f32 %v223, %v701
    %v6302 = vmul.f32 %v224, %v701
    %v6303 = vmul.f32 %v225, %v701
    %v6304 = vmul.f32 %v226, %v701
    %v6305 = vmul.f32 %v227, %v701
    %v6306 = vmul.f32 %v228, %v701
    %v6307 = vmul.f32 %v229, %v701
    %v6308 = vmul.f32 %v230, %v701
    %v6309 = vmul.f32 %v231, %v701
    %v6310 = vmul.f32 %v232, %v701
    %v6311 = vmul.f32 %v233, %v701
    %v6312 = vmul.f32 %v234, %v701
    %v6313 = vmul.f32 %v235, %v701
    %v6314 = vmul.f32 %v236, %v701
    %v6315 = vmul.f32 %v237, %v701
    %v6316 = vmul.f32 %v238, %v701
    %v6317 = vmul.f32 %v239, %v701
    %v6318 = vmul.f32 %v240, %v701
    %v6319 = vmul.f32 %v241, %v701
    %v6320 = vmul.f32 %v242, %v701
    %v6321 = vmul.f32 %v243, %v701
    %v6376 = vrot.slane %v6268, 1
    %v6377 = vrot.slane %v6269, 1
    %v6378 = vsel %vm1038, %v6376, %v6377
    %v6379 = vrot.slane %v6270, 1
    %v6380 = vsel %vm1038, %v6377, %v6379
    %v6381 = vrot.slane %v6271, 1
    %v6382 = vrot.slane %v6272, 1
    %v6383 = vsel %vm1038, %v6381, %v6382
    %v6384 = vrot.slane %v6273, 1
    %v6385 = vsel %vm1038, %v6382, %v6384
    %v6386 = vrot.slane %v6274, 1
    %v6387 = vrot.slane %v6275, 1
    %v6388 = vsel %vm1038, %v6386, %v6387
    %v6389 = vrot.slane %v6276, 1
    %v6390 = vsel %vm1038, %v6387, %v6389
    %v6391 = vrot.slane %v6277, 1
    %v6392 = vrot.slane %v6278, 1
    %v6393 = vsel %vm1038, %v6391, %v6392
    %v6394 = vrot.slane %v6279, 1
    %v6395 = vsel %vm1038, %v6392, %v6394
    %v6396 = vrot.slane %v6280, 1
    %v6397 = vrot.slane %v6281, 1
    %v6398 = vsel %vm1038, %v6396, %v6397
    %v6399 = vrot.slane %v6282, 1
    %v6400 = vsel %vm1038, %v6397, %v6399
    %v6401 = vrot.slane %v6283, 1
    %v6402 = vrot.slane %v6284, 1
    %v6403 = vsel %vm1038, %v6401, %v6402
    %v6404 = vrot.slane %v6285, 1
    %v6405 = vsel %vm1038, %v6402, %v6404
    %v6406 = vrot.slane %v6286, 1
    %v6407 = vrot.slane %v6287, 1
    %v6408 = vsel %vm1038, %v6406, %v6407
    %v6409 = vrot.slane %v6288, 1
    %v6410 = vsel %vm1038, %v6407, %v6409
    %v6411 = vrot.slane %v6289, 1
    %v6412 = vrot.slane %v6290, 1
    %v6413 = vsel %vm1038, %v6411, %v6412
    %v6414 = vrot.slane %v6291, 1
    %v6415 = vsel %vm1038, %v6412, %v6414
    %v6416 = vrot.slane %v6292, 1
    %v6417 = vrot.slane %v6293, 1
    %v6418 = vsel %vm1038, %v6416, %v6417
    %v6419 = vrot.slane %v6294, 1
    %v6420 = vsel %vm1038, %v6417, %v6419
    %v6421 = vrot.slane %v6295, 1
    %v6422 = vrot.slane %v6296, 1
    %v6423 = vsel %vm1038, %v6421, %v6422
    %v6424 = vrot.slane %v6297, 1
    %v6425 = vsel %vm1038, %v6422, %v6424
    %v6426 = vrot.slane %v6298, 1
    %v6427 = vrot.slane %v6299, 1
    %v6428 = vsel %vm1038, %v6426, %v6427
    %v6429 = vrot.slane %v6300, 1
    %v6430 = vsel %vm1038, %v6427, %v6429
    %v6431 = vrot.slane %v6301, 1
    %v6432 = vrot.slane %v6302, 1
    %v6433 = vsel %vm1038, %v6431, %v6432
    %v6434 = vrot.slane %v6303, 1
    %v6435 = vsel %vm1038, %v6432, %v6434
    %v6436 = vrot.slane %v6304, 1
    %v6437 = vrot.slane %v6305, 1
    %v6438 = vsel %vm1038, %v6436, %v6437
    %v6439 = vrot.slane %v6306, 1
    %v6440 = vsel %vm1038, %v6437, %v6439
    %v6441 = vrot.slane %v6307, 1
    %v6442 = vrot.slane %v6308, 1
    %v6443 = vsel %vm1038, %v6441, %v6442
    %v6444 = vrot.slane %v6309, 1
    %v6445 = vsel %vm1038, %v6442, %v6444
    %v6446 = vrot.slane %v6310, 1
    %v6447 = vrot.slane %v6311, 1
    %v6448 = vsel %vm1038, %v6446, %v6447
    %v6449 = vrot.slane %v6312, 1
    %v6450 = vsel %vm1038, %v6447, %v6449
    %v6451 = vrot.slane %v6313, 1
    %v6452 = vrot.slane %v6314, 1
    %v6453 = vsel %vm1038, %v6451, %v6452
    %v6454 = vrot.slane %v6315, 1
    %v6455 = vsel %vm1038, %v6452, %v6454
    %v6456 = vrot.slane %v6316, 1
    %v6457 = vrot.slane %v6317, 1
    %v6458 = vsel %vm1038, %v6456, %v6457
    %v6459 = vrot.slane %v6318, 1
    %v6460 = vsel %vm1038, %v6457, %v6459
    %v6461 = vrot.slane %v6319, 1
    %v6462 = vrot.slane %v6320, 1
    %v6463 = vsel %vm1038, %v6461, %v6462
    %v6464 = vrot.slane %v6321, 1
    %v6465 = vsel %vm1038, %v6462, %v6464
    %v6502 = vadd.f32 %v6232, %v6378
    %v6503 = vadd.f32 %v6233, %v6380
    %v6504 = vadd.f32 %v6234, %v6383
    %v6505 = vadd.f32 %v6235, %v6385
    %v6506 = vadd.f32 %v6236, %v6388
    %v6507 = vadd.f32 %v6237, %v6390
    %v6508 = vadd.f32 %v6238, %v6393
    %v6509 = vadd.f32 %v6239, %v6395
    %v6510 = vadd.f32 %v6240, %v6398
    %v6511 = vadd.f32 %v6241, %v6400
    %v6512 = vadd.f32 %v6242, %v6403
    %v6513 = vadd.f32 %v6243, %v6405
    %v6514 = vadd.f32 %v6244, %v6408
    %v6515 = vadd.f32 %v6245, %v6410
    %v6516 = vadd.f32 %v6246, %v6413
    %v6517 = vadd.f32 %v6247, %v6415
    %v6518 = vadd.f32 %v6248, %v6418
    %v6519 = vadd.f32 %v6249, %v6420
    %v6520 = vadd.f32 %v6250, %v6423
    %v6521 = vadd.f32 %v6251, %v6425
    %v6522 = vadd.f32 %v6252, %v6428
    %v6523 = vadd.f32 %v6253, %v6430
    %v6524 = vadd.f32 %v6254, %v6433
    %v6525 = vadd.f32 %v6255, %v6435
    %v6526 = vadd.f32 %v6256, %v6438
    %v6527 = vadd.f32 %v6257, %v6440
    %v6528 = vadd.f32 %v6258, %v6443
    %v6529 = vadd.f32 %v6259, %v6445
    %v6530 = vadd.f32 %v6260, %v6448
    %v6531 = vadd.f32 %v6261, %v6450
    %v6532 = vadd.f32 %v6262, %v6453
    %v6533 = vadd.f32 %v6263, %v6455
    %v6534 = vadd.f32 %v6264, %v6458
    %v6535 = vadd.f32 %v6265, %v6460
    %v6536 = vadd.f32 %v6266, %v6463
    %v6537 = vadd.f32 %v6267, %v6465
    %v6538 = vmul.f32 %v70, %v777
    %v6539 = vmul.f32 %v71, %v777
    %v6540 = vmul.f32 %v72, %v777
    %v6541 = vmul.f32 %v73, %v777
    %v6542 = vmul.f32 %v74, %v777
    %v6543 = vmul.f32 %v75, %v777
    %v6544 = vmul.f32 %v76, %v777
    %v6545 = vmul.f32 %v77, %v777
    %v6546 = vmul.f32 %v78, %v777
    %v6547 = vmul.f32 %v79, %v777
    %v6548 = vmul.f32 %v80, %v777
    %v6549 = vmul.f32 %v81, %v777
    %v6550 = vmul.f32 %v82, %v777
    %v6551 = vmul.f32 %v83, %v777
    %v6552 = vmul.f32 %v84, %v777
    %v6553 = vmul.f32 %v85, %v777
    %v6554 = vmul.f32 %v86, %v777
    %v6555 = vmul.f32 %v87, %v777
    %v6556 = vmul.f32 %v88, %v777
    %v6557 = vmul.f32 %v89, %v777
    %v6558 = vmul.f32 %v90, %v777
    %v6559 = vmul.f32 %v91, %v777
    %v6560 = vmul.f32 %v92, %v777
    %v6561 = vmul.f32 %v93, %v777
    %v6562 = vmul.f32 %v94, %v777
    %v6563 = vmul.f32 %v95, %v777
    %v6564 = vmul.f32 %v96, %v777
    %v6565 = vmul.f32 %v100, %v777
    %v6566 = vmul.f32 %v101, %v777
    %v6567 = vmul.f32 %v102, %v777
    %v6568 = vmul.f32 %v103, %v777
    %v6569 = vmul.f32 %v104, %v777
    %v6570 = vmul.f32 %v105, %v777
    %v6571 = vmul.f32 %v106, %v777
    %v6572 = vmul.f32 %v107, %v777
    %v6573 = vmul.f32 %v108, %v777
    %v6574 = vmul.f32 %v109, %v777
    %v6575 = vmul.f32 %v110, %v777
    %v6576 = vmul.f32 %v111, %v777
    %v6577 = vmul.f32 %v112, %v777
    %v6578 = vmul.f32 %v113, %v777
    %v6579 = vmul.f32 %v114, %v777
    %v6580 = vmul.f32 %v115, %v777
    %v6581 = vmul.f32 %v116, %v777
    %v6582 = vmul.f32 %v117, %v777
    %v6583 = vmul.f32 %v118, %v777
    %v6584 = vmul.f32 %v119, %v777
    %v6585 = vmul.f32 %v120, %v777
    %v6586 = vmul.f32 %v121, %v777
    %v6587 = vmul.f32 %v122, %v777
    %v6588 = vmul.f32 %v123, %v777
    %v6589 = vmul.f32 %v124, %v777
    %v6590 = vmul.f32 %v125, %v777
    %v6591 = vmul.f32 %v126, %v777
    %v6646 = vrot.slane %v6538, 1
    %v6647 = vrot.slane %v6539, 1
    %v6648 = vsel %vm1038, %v6646, %v6647
    %v6649 = vrot.slane %v6540, 1
    %v6650 = vsel %vm1038, %v6647, %v6649
    %v6651 = vrot.slane %v6541, 1
    %v6652 = vrot.slane %v6542, 1
    %v6653 = vsel %vm1038, %v6651, %v6652
    %v6654 = vrot.slane %v6543, 1
    %v6655 = vsel %vm1038, %v6652, %v6654
    %v6656 = vrot.slane %v6544, 1
    %v6657 = vrot.slane %v6545, 1
    %v6658 = vsel %vm1038, %v6656, %v6657
    %v6659 = vrot.slane %v6546, 1
    %v6660 = vsel %vm1038, %v6657, %v6659
    %v6661 = vrot.slane %v6547, 1
    %v6662 = vrot.slane %v6548, 1
    %v6663 = vsel %vm1038, %v6661, %v6662
    %v6664 = vrot.slane %v6549, 1
    %v6665 = vsel %vm1038, %v6662, %v6664
    %v6666 = vrot.slane %v6550, 1
    %v6667 = vrot.slane %v6551, 1
    %v6668 = vsel %vm1038, %v6666, %v6667
    %v6669 = vrot.slane %v6552, 1
    %v6670 = vsel %vm1038, %v6667, %v6669
    %v6671 = vrot.slane %v6553, 1
    %v6672 = vrot.slane %v6554, 1
    %v6673 = vsel %vm1038, %v6671, %v6672
    %v6674 = vrot.slane %v6555, 1
    %v6675 = vsel %vm1038, %v6672, %v6674
    %v6676 = vrot.slane %v6556, 1
    %v6677 = vrot.slane %v6557, 1
    %v6678 = vsel %vm1038, %v6676, %v6677
    %v6679 = vrot.slane %v6558, 1
    %v6680 = vsel %vm1038, %v6677, %v6679
    %v6681 = vrot.slane %v6559, 1
    %v6682 = vrot.slane %v6560, 1
    %v6683 = vsel %vm1038, %v6681, %v6682
    %v6684 = vrot.slane %v6561, 1
    %v6685 = vsel %vm1038, %v6682, %v6684
    %v6686 = vrot.slane %v6562, 1
    %v6687 = vrot.slane %v6563, 1
    %v6688 = vsel %vm1038, %v6686, %v6687
    %v6689 = vrot.slane %v6564, 1
    %v6690 = vsel %vm1038, %v6687, %v6689
    %v6691 = vrot.slane %v6565, 1
    %v6692 = vrot.slane %v6566, 1
    %v6693 = vsel %vm1038, %v6691, %v6692
    %v6694 = vrot.slane %v6567, 1
    %v6695 = vsel %vm1038, %v6692, %v6694
    %v6696 = vrot.slane %v6568, 1
    %v6697 = vrot.slane %v6569, 1
    %v6698 = vsel %vm1038, %v6696, %v6697
    %v6699 = vrot.slane %v6570, 1
    %v6700 = vsel %vm1038, %v6697, %v6699
    %v6701 = vrot.slane %v6571, 1
    %v6702 = vrot.slane %v6572, 1
    %v6703 = vsel %vm1038, %v6701, %v6702
    %v6704 = vrot.slane %v6573, 1
    %v6705 = vsel %vm1038, %v6702, %v6704
    %v6706 = vrot.slane %v6574, 1
    %v6707 = vrot.slane %v6575, 1
    %v6708 = vsel %vm1038, %v6706, %v6707
    %v6709 = vrot.slane %v6576, 1
    %v6710 = vsel %vm1038, %v6707, %v6709
    %v6711 = vrot.slane %v6577, 1
    %v6712 = vrot.slane %v6578, 1
    %v6713 = vsel %vm1038, %v6711, %v6712
    %v6714 = vrot.slane %v6579, 1
    %v6715 = vsel %vm1038, %v6712, %v6714
    %v6716 = vrot.slane %v6580, 1
    %v6717 = vrot.slane %v6581, 1
    %v6718 = vsel %vm1038, %v6716, %v6717
    %v6719 = vrot.slane %v6582, 1
    %v6720 = vsel %vm1038, %v6717, %v6719
    %v6721 = vrot.slane %v6583, 1
    %v6722 = vrot.slane %v6584, 1
    %v6723 = vsel %vm1038, %v6721, %v6722
    %v6724 = vrot.slane %v6585, 1
    %v6725 = vsel %vm1038, %v6722, %v6724
    %v6726 = vrot.slane %v6586, 1
    %v6727 = vrot.slane %v6587, 1
    %v6728 = vsel %vm1038, %v6726, %v6727
    %v6729 = vrot.slane %v6588, 1
    %v6730 = vsel %vm1038, %v6727, %v6729
    %v6731 = vrot.slane %v6589, 1
    %v6732 = vrot.slane %v6590, 1
    %v6733 = vsel %vm1038, %v6731, %v6732
    %v6734 = vrot.slane %v6591, 1
    %v6735 = vsel %vm1038, %v6732, %v6734
    %v6772 = vadd.f32 %v6502, %v6648
    %v6773 = vadd.f32 %v6503, %v6650
    %v6774 = vadd.f32 %v6504, %v6653
    %v6775 = vadd.f32 %v6505, %v6655
    %v6776 = vadd.f32 %v6506, %v6658
    %v6777 = vadd.f32 %v6507, %v6660
    %v6778 = vadd.f32 %v6508, %v6663
    %v6779 = vadd.f32 %v6509, %v6665
    %v6780 = vadd.f32 %v6510, %v6668
    %v6781 = vadd.f32 %v6511, %v6670
    %v6782 = vadd.f32 %v6512, %v6673
    %v6783 = vadd.f32 %v6513, %v6675
    %v6784 = vadd.f32 %v6514, %v6678
    %v6785 = vadd.f32 %v6515, %v6680
    %v6786 = vadd.f32 %v6516, %v6683
    %v6787 = vadd.f32 %v6517, %v6685
    %v6788 = vadd.f32 %v6518, %v6688
    %v6789 = vadd.f32 %v6519, %v6690
    %v6790 = vadd.f32 %v6520, %v6693
    %v6791 = vadd.f32 %v6521, %v6695
    %v6792 = vadd.f32 %v6522, %v6698
    %v6793 = vadd.f32 %v6523, %v6700
    %v6794 = vadd.f32 %v6524, %v6703
    %v6795 = vadd.f32 %v6525, %v6705
    %v6796 = vadd.f32 %v6526, %v6708
    %v6797 = vadd.f32 %v6527, %v6710
    %v6798 = vadd.f32 %v6528, %v6713
    %v6799 = vadd.f32 %v6529, %v6715
    %v6800 = vadd.f32 %v6530, %v6718
    %v6801 = vadd.f32 %v6531, %v6720
    %v6802 = vadd.f32 %v6532, %v6723
    %v6803 = vadd.f32 %v6533, %v6725
    %v6804 = vadd.f32 %v6534, %v6728
    %v6805 = vadd.f32 %v6535, %v6730
    %v6806 = vadd.f32 %v6536, %v6733
    %v6807 = vadd.f32 %v6537, %v6735
    %v6808 = vmul.f32 %v190, %v853
    %v6809 = vmul.f32 %v191, %v853
    %v6810 = vmul.f32 %v192, %v853
    %v6811 = vmul.f32 %v193, %v853
    %v6812 = vmul.f32 %v194, %v853
    %v6813 = vmul.f32 %v195, %v853
    %v6814 = vmul.f32 %v196, %v853
    %v6815 = vmul.f32 %v197, %v853
    %v6816 = vmul.f32 %v198, %v853
    %v6817 = vmul.f32 %v199, %v853
    %v6818 = vmul.f32 %v200, %v853
    %v6819 = vmul.f32 %v201, %v853
    %v6820 = vmul.f32 %v202, %v853
    %v6821 = vmul.f32 %v203, %v853
    %v6822 = vmul.f32 %v204, %v853
    %v6823 = vmul.f32 %v205, %v853
    %v6824 = vmul.f32 %v206, %v853
    %v6825 = vmul.f32 %v207, %v853
    %v6826 = vmul.f32 %v208, %v853
    %v6827 = vmul.f32 %v209, %v853
    %v6828 = vmul.f32 %v210, %v853
    %v6829 = vmul.f32 %v211, %v853
    %v6830 = vmul.f32 %v212, %v853
    %v6831 = vmul.f32 %v213, %v853
    %v6832 = vmul.f32 %v214, %v853
    %v6833 = vmul.f32 %v215, %v853
    %v6834 = vmul.f32 %v216, %v853
    %v6835 = vmul.f32 %v220, %v853
    %v6836 = vmul.f32 %v221, %v853
    %v6837 = vmul.f32 %v222, %v853
    %v6838 = vmul.f32 %v223, %v853
    %v6839 = vmul.f32 %v224, %v853
    %v6840 = vmul.f32 %v225, %v853
    %v6841 = vmul.f32 %v226, %v853
    %v6842 = vmul.f32 %v227, %v853
    %v6843 = vmul.f32 %v228, %v853
    %v6844 = vmul.f32 %v229, %v853
    %v6845 = vmul.f32 %v230, %v853
    %v6846 = vmul.f32 %v231, %v853
    %v6847 = vmul.f32 %v232, %v853
    %v6848 = vmul.f32 %v233, %v853
    %v6849 = vmul.f32 %v234, %v853
    %v6850 = vmul.f32 %v235, %v853
    %v6851 = vmul.f32 %v236, %v853
    %v6852 = vmul.f32 %v237, %v853
    %v6853 = vmul.f32 %v238, %v853
    %v6854 = vmul.f32 %v239, %v853
    %v6855 = vmul.f32 %v240, %v853
    %v6856 = vmul.f32 %v241, %v853
    %v6857 = vmul.f32 %v242, %v853
    %v6858 = vmul.f32 %v243, %v853
    %v6859 = vmul.f32 %v244, %v853
    %v6860 = vmul.f32 %v245, %v853
    %v6861 = vmul.f32 %v246, %v853
    %v6916 = vrot.slane %v6808, 1
    %v6917 = vrot.slane %v6809, 1
    %v6918 = vsel %vm1038, %v6916, %v6917
    %v6919 = vrot.slane %v6810, 1
    %v6920 = vsel %vm1038, %v6917, %v6919
    %v6921 = vrot.slane %v6811, 1
    %v6922 = vrot.slane %v6812, 1
    %v6923 = vsel %vm1038, %v6921, %v6922
    %v6924 = vrot.slane %v6813, 1
    %v6925 = vsel %vm1038, %v6922, %v6924
    %v6926 = vrot.slane %v6814, 1
    %v6927 = vrot.slane %v6815, 1
    %v6928 = vsel %vm1038, %v6926, %v6927
    %v6929 = vrot.slane %v6816, 1
    %v6930 = vsel %vm1038, %v6927, %v6929
    %v6931 = vrot.slane %v6817, 1
    %v6932 = vrot.slane %v6818, 1
    %v6933 = vsel %vm1038, %v6931, %v6932
    %v6934 = vrot.slane %v6819, 1
    %v6935 = vsel %vm1038, %v6932, %v6934
    %v6936 = vrot.slane %v6820, 1
    %v6937 = vrot.slane %v6821, 1
    %v6938 = vsel %vm1038, %v6936, %v6937
    %v6939 = vrot.slane %v6822, 1
    %v6940 = vsel %vm1038, %v6937, %v6939
    %v6941 = vrot.slane %v6823, 1
    %v6942 = vrot.slane %v6824, 1
    %v6943 = vsel %vm1038, %v6941, %v6942
    %v6944 = vrot.slane %v6825, 1
    %v6945 = vsel %vm1038, %v6942, %v6944
    %v6946 = vrot.slane %v6826, 1
    %v6947 = vrot.slane %v6827, 1
    %v6948 = vsel %vm1038, %v6946, %v6947
    %v6949 = vrot.slane %v6828, 1
    %v6950 = vsel %vm1038, %v6947, %v6949
    %v6951 = vrot.slane %v6829, 1
    %v6952 = vrot.slane %v6830, 1
    %v6953 = vsel %vm1038, %v6951, %v6952
    %v6954 = vrot.slane %v6831, 1
    %v6955 = vsel %vm1038, %v6952, %v6954
    %v6956 = vrot.slane %v6832, 1
    %v6957 = vrot.slane %v6833, 1
    %v6958 = vsel %vm1038, %v6956, %v6957
    %v6959 = vrot.slane %v6834, 1
    %v6960 = vsel %vm1038, %v6957, %v6959
    %v6961 = vrot.slane %v6835, 1
    %v6962 = vrot.slane %v6836, 1
    %v6963 = vsel %vm1038, %v6961, %v6962
    %v6964 = vrot.slane %v6837, 1
    %v6965 = vsel %vm1038, %v6962, %v6964
    %v6966 = vrot.slane %v6838, 1
    %v6967 = vrot.slane %v6839, 1
    %v6968 = vsel %vm1038, %v6966, %v6967
    %v6969 = vrot.slane %v6840, 1
    %v6970 = vsel %vm1038, %v6967, %v6969
    %v6971 = vrot.slane %v6841, 1
    %v6972 = vrot.slane %v6842, 1
    %v6973 = vsel %vm1038, %v6971, %v6972
    %v6974 = vrot.slane %v6843, 1
    %v6975 = vsel %vm1038, %v6972, %v6974
    %v6976 = vrot.slane %v6844, 1
    %v6977 = vrot.slane %v6845, 1
    %v6978 = vsel %vm1038, %v6976, %v6977
    %v6979 = vrot.slane %v6846, 1
    %v6980 = vsel %vm1038, %v6977, %v6979
    %v6981 = vrot.slane %v6847, 1
    %v6982 = vrot.slane %v6848, 1
    %v6983 = vsel %vm1038, %v6981, %v6982
    %v6984 = vrot.slane %v6849, 1
    %v6985 = vsel %vm1038, %v6982, %v6984
    %v6986 = vrot.slane %v6850, 1
    %v6987 = vrot.slane %v6851, 1
    %v6988 = vsel %vm1038, %v6986, %v6987
    %v6989 = vrot.slane %v6852, 1
    %v6990 = vsel %vm1038, %v6987, %v6989
    %v6991 = vrot.slane %v6853, 1
    %v6992 = vrot.slane %v6854, 1
    %v6993 = vsel %vm1038, %v6991, %v6992
    %v6994 = vrot.slane %v6855, 1
    %v6995 = vsel %vm1038, %v6992, %v6994
    %v6996 = vrot.slane %v6856, 1
    %v6997 = vrot.slane %v6857, 1
    %v6998 = vsel %vm1038, %v6996, %v6997
    %v6999 = vrot.slane %v6858, 1
    %v7000 = vsel %vm1038, %v6997, %v6999
    %v7001 = vrot.slane %v6859, 1
    %v7002 = vrot.slane %v6860, 1
    %v7003 = vsel %vm1038, %v7001, %v7002
    %v7004 = vrot.slane %v6861, 1
    %v7005 = vsel %vm1038, %v7002, %v7004
    %v7042 = vadd.f32 %v6772, %v6918
    %v7043 = vadd.f32 %v6773, %v6920
    %v7044 = vadd.f32 %v6774, %v6923
    %v7045 = vadd.f32 %v6775, %v6925
    %v7046 = vadd.f32 %v6776, %v6928
    %v7047 = vadd.f32 %v6777, %v6930
    %v7048 = vadd.f32 %v6778, %v6933
    %v7049 = vadd.f32 %v6779, %v6935
    %v7050 = vadd.f32 %v6780, %v6938
    %v7051 = vadd.f32 %v6781, %v6940
    %v7052 = vadd.f32 %v6782, %v6943
    %v7053 = vadd.f32 %v6783, %v6945
    %v7054 = vadd.f32 %v6784, %v6948
    %v7055 = vadd.f32 %v6785, %v6950
    %v7056 = vadd.f32 %v6786, %v6953
    %v7057 = vadd.f32 %v6787, %v6955
    %v7058 = vadd.f32 %v6788, %v6958
    %v7059 = vadd.f32 %v6789, %v6960
    %v7060 = vadd.f32 %v6790, %v6963
    %v7061 = vadd.f32 %v6791, %v6965
    %v7062 = vadd.f32 %v6792, %v6968
    %v7063 = vadd.f32 %v6793, %v6970
    %v7064 = vadd.f32 %v6794, %v6973
    %v7065 = vadd.f32 %v6795, %v6975
    %v7066 = vadd.f32 %v6796, %v6978
    %v7067 = vadd.f32 %v6797, %v6980
    %v7068 = vadd.f32 %v6798, %v6983
    %v7069 = vadd.f32 %v6799, %v6985
    %v7070 = vadd.f32 %v6800, %v6988
    %v7071 = vadd.f32 %v6801, %v6990
    %v7072 = vadd.f32 %v6802, %v6993
    %v7073 = vadd.f32 %v6803, %v6995
    %v7074 = vadd.f32 %v6804, %v6998
    %v7075 = vadd.f32 %v6805, %v7000
    %v7076 = vadd.f32 %v6806, %v7003
    %v7077 = vadd.f32 %v6807, %v7005
    %v7078 = vmul.f32 %v247, %v929
    %v7079 = vmul.f32 %v248, %v929
    %v7080 = vmul.f32 %v249, %v929
    %v7081 = vmul.f32 %v250, %v929
    %v7082 = vmul.f32 %v251, %v929
    %v7083 = vmul.f32 %v252, %v929
    %v7084 = vmul.f32 %v253, %v929
    %v7085 = vmul.f32 %v254, %v929
    %v7086 = vmul.f32 %v255, %v929
    %v7087 = vmul.f32 %v256, %v929
    %v7088 = vmul.f32 %v257, %v929
    %v7089 = vmul.f32 %v258, %v929
    %v7090 = vmul.f32 %v259, %v929
    %v7091 = vmul.f32 %v260, %v929
    %v7092 = vmul.f32 %v261, %v929
    %v7093 = vmul.f32 %v262, %v929
    %v7094 = vmul.f32 %v263, %v929
    %v7095 = vmul.f32 %v264, %v929
    %v7096 = vmul.f32 %v265, %v929
    %v7097 = vmul.f32 %v266, %v929
    %v7098 = vmul.f32 %v267, %v929
    %v7099 = vmul.f32 %v268, %v929
    %v7100 = vmul.f32 %v269, %v929
    %v7101 = vmul.f32 %v270, %v929
    %v7102 = vmul.f32 %v271, %v929
    %v7103 = vmul.f32 %v272, %v929
    %v7104 = vmul.f32 %v273, %v929
    %v7105 = vmul.f32 %v277, %v929
    %v7106 = vmul.f32 %v278, %v929
    %v7107 = vmul.f32 %v279, %v929
    %v7108 = vmul.f32 %v280, %v929
    %v7109 = vmul.f32 %v281, %v929
    %v7110 = vmul.f32 %v282, %v929
    %v7111 = vmul.f32 %v283, %v929
    %v7112 = vmul.f32 %v284, %v929
    %v7113 = vmul.f32 %v285, %v929
    %v7114 = vmul.f32 %v286, %v929
    %v7115 = vmul.f32 %v287, %v929
    %v7116 = vmul.f32 %v288, %v929
    %v7117 = vmul.f32 %v289, %v929
    %v7118 = vmul.f32 %v290, %v929
    %v7119 = vmul.f32 %v291, %v929
    %v7120 = vmul.f32 %v292, %v929
    %v7121 = vmul.f32 %v293, %v929
    %v7122 = vmul.f32 %v294, %v929
    %v7123 = vmul.f32 %v295, %v929
    %v7124 = vmul.f32 %v296, %v929
    %v7125 = vmul.f32 %v297, %v929
    %v7126 = vmul.f32 %v298, %v929
    %v7127 = vmul.f32 %v299, %v929
    %v7128 = vmul.f32 %v300, %v929
    %v7129 = vmul.f32 %v301, %v929
    %v7130 = vmul.f32 %v302, %v929
    %v7131 = vmul.f32 %v303, %v929
    %v7186 = vrot.slane %v7078, 1
    %v7187 = vrot.slane %v7079, 1
    %v7188 = vsel %vm1038, %v7186, %v7187
    %v7189 = vrot.slane %v7080, 1
    %v7190 = vsel %vm1038, %v7187, %v7189
    %v7191 = vrot.slane %v7081, 1
    %v7192 = vrot.slane %v7082, 1
    %v7193 = vsel %vm1038, %v7191, %v7192
    %v7194 = vrot.slane %v7083, 1
    %v7195 = vsel %vm1038, %v7192, %v7194
    %v7196 = vrot.slane %v7084, 1
    %v7197 = vrot.slane %v7085, 1
    %v7198 = vsel %vm1038, %v7196, %v7197
    %v7199 = vrot.slane %v7086, 1
    %v7200 = vsel %vm1038, %v7197, %v7199
    %v7201 = vrot.slane %v7087, 1
    %v7202 = vrot.slane %v7088, 1
    %v7203 = vsel %vm1038, %v7201, %v7202
    %v7204 = vrot.slane %v7089, 1
    %v7205 = vsel %vm1038, %v7202, %v7204
    %v7206 = vrot.slane %v7090, 1
    %v7207 = vrot.slane %v7091, 1
    %v7208 = vsel %vm1038, %v7206, %v7207
    %v7209 = vrot.slane %v7092, 1
    %v7210 = vsel %vm1038, %v7207, %v7209
    %v7211 = vrot.slane %v7093, 1
    %v7212 = vrot.slane %v7094, 1
    %v7213 = vsel %vm1038, %v7211, %v7212
    %v7214 = vrot.slane %v7095, 1
    %v7215 = vsel %vm1038, %v7212, %v7214
    %v7216 = vrot.slane %v7096, 1
    %v7217 = vrot.slane %v7097, 1
    %v7218 = vsel %vm1038, %v7216, %v7217
    %v7219 = vrot.slane %v7098, 1
    %v7220 = vsel %vm1038, %v7217, %v7219
    %v7221 = vrot.slane %v7099, 1
    %v7222 = vrot.slane %v7100, 1
    %v7223 = vsel %vm1038, %v7221, %v7222
    %v7224 = vrot.slane %v7101, 1
    %v7225 = vsel %vm1038, %v7222, %v7224
    %v7226 = vrot.slane %v7102, 1
    %v7227 = vrot.slane %v7103, 1
    %v7228 = vsel %vm1038, %v7226, %v7227
    %v7229 = vrot.slane %v7104, 1
    %v7230 = vsel %vm1038, %v7227, %v7229
    %v7231 = vrot.slane %v7105, 1
    %v7232 = vrot.slane %v7106, 1
    %v7233 = vsel %vm1038, %v7231, %v7232
    %v7234 = vrot.slane %v7107, 1
    %v7235 = vsel %vm1038, %v7232, %v7234
    %v7236 = vrot.slane %v7108, 1
    %v7237 = vrot.slane %v7109, 1
    %v7238 = vsel %vm1038, %v7236, %v7237
    %v7239 = vrot.slane %v7110, 1
    %v7240 = vsel %vm1038, %v7237, %v7239
    %v7241 = vrot.slane %v7111, 1
    %v7242 = vrot.slane %v7112, 1
    %v7243 = vsel %vm1038, %v7241, %v7242
    %v7244 = vrot.slane %v7113, 1
    %v7245 = vsel %vm1038, %v7242, %v7244
    %v7246 = vrot.slane %v7114, 1
    %v7247 = vrot.slane %v7115, 1
    %v7248 = vsel %vm1038, %v7246, %v7247
    %v7249 = vrot.slane %v7116, 1
    %v7250 = vsel %vm1038, %v7247, %v7249
    %v7251 = vrot.slane %v7117, 1
    %v7252 = vrot.slane %v7118, 1
    %v7253 = vsel %vm1038, %v7251, %v7252
    %v7254 = vrot.slane %v7119, 1
    %v7255 = vsel %vm1038, %v7252, %v7254
    %v7256 = vrot.slane %v7120, 1
    %v7257 = vrot.slane %v7121, 1
    %v7258 = vsel %vm1038, %v7256, %v7257
    %v7259 = vrot.slane %v7122, 1
    %v7260 = vsel %vm1038, %v7257, %v7259
    %v7261 = vrot.slane %v7123, 1
    %v7262 = vrot.slane %v7124, 1
    %v7263 = vsel %vm1038, %v7261, %v7262
    %v7264 = vrot.slane %v7125, 1
    %v7265 = vsel %vm1038, %v7262, %v7264
    %v7266 = vrot.slane %v7126, 1
    %v7267 = vrot.slane %v7127, 1
    %v7268 = vsel %vm1038, %v7266, %v7267
    %v7269 = vrot.slane %v7128, 1
    %v7270 = vsel %vm1038, %v7267, %v7269
    %v7271 = vrot.slane %v7129, 1
    %v7272 = vrot.slane %v7130, 1
    %v7273 = vsel %vm1038, %v7271, %v7272
    %v7274 = vrot.slane %v7131, 1
    %v7275 = vsel %vm1038, %v7272, %v7274
    %v7312 = vadd.f32 %v7042, %v7188
    %v7313 = vadd.f32 %v7043, %v7190
    %v7314 = vadd.f32 %v7044, %v7193
    %v7315 = vadd.f32 %v7045, %v7195
    %v7316 = vadd.f32 %v7046, %v7198
    %v7317 = vadd.f32 %v7047, %v7200
    %v7318 = vadd.f32 %v7048, %v7203
    %v7319 = vadd.f32 %v7049, %v7205
    %v7320 = vadd.f32 %v7050, %v7208
    %v7321 = vadd.f32 %v7051, %v7210
    %v7322 = vadd.f32 %v7052, %v7213
    %v7323 = vadd.f32 %v7053, %v7215
    %v7324 = vadd.f32 %v7054, %v7218
    %v7325 = vadd.f32 %v7055, %v7220
    %v7326 = vadd.f32 %v7056, %v7223
    %v7327 = vadd.f32 %v7057, %v7225
    %v7328 = vadd.f32 %v7058, %v7228
    %v7329 = vadd.f32 %v7059, %v7230
    %v7330 = vadd.f32 %v7060, %v7233
    %v7331 = vadd.f32 %v7061, %v7235
    %v7332 = vadd.f32 %v7062, %v7238
    %v7333 = vadd.f32 %v7063, %v7240
    %v7334 = vadd.f32 %v7064, %v7243
    %v7335 = vadd.f32 %v7065, %v7245
    %v7336 = vadd.f32 %v7066, %v7248
    %v7337 = vadd.f32 %v7067, %v7250
    %v7338 = vadd.f32 %v7068, %v7253
    %v7339 = vadd.f32 %v7069, %v7255
    %v7340 = vadd.f32 %v7070, %v7258
    %v7341 = vadd.f32 %v7071, %v7260
    %v7342 = vadd.f32 %v7072, %v7263
    %v7343 = vadd.f32 %v7073, %v7265
    %v7344 = vadd.f32 %v7074, %v7268
    %v7345 = vadd.f32 %v7075, %v7270
    %v7346 = vadd.f32 %v7076, %v7273
    %v7347 = vadd.f32 %v7077, %v7275
    %v7348 = vmul.f32 %v130, %v1204
    %v7349 = vmul.f32 %v131, %v1204
    %v7350 = vmul.f32 %v132, %v1204
    %v7351 = vmul.f32 %v133, %v1204
    %v7352 = vmul.f32 %v134, %v1204
    %v7353 = vmul.f32 %v135, %v1204
    %v7354 = vmul.f32 %v136, %v1204
    %v7355 = vmul.f32 %v137, %v1204
    %v7356 = vmul.f32 %v138, %v1204
    %v7357 = vmul.f32 %v139, %v1204
    %v7358 = vmul.f32 %v140, %v1204
    %v7359 = vmul.f32 %v141, %v1204
    %v7360 = vmul.f32 %v142, %v1204
    %v7361 = vmul.f32 %v143, %v1204
    %v7362 = vmul.f32 %v144, %v1204
    %v7363 = vmul.f32 %v145, %v1204
    %v7364 = vmul.f32 %v146, %v1204
    %v7365 = vmul.f32 %v147, %v1204
    %v7366 = vmul.f32 %v148, %v1204
    %v7367 = vmul.f32 %v149, %v1204
    %v7368 = vmul.f32 %v150, %v1204
    %v7369 = vmul.f32 %v151, %v1204
    %v7370 = vmul.f32 %v152, %v1204
    %v7371 = vmul.f32 %v153, %v1204
    %v7372 = vmul.f32 %v154, %v1204
    %v7373 = vmul.f32 %v155, %v1204
    %v7374 = vmul.f32 %v156, %v1204
    %v7375 = vmul.f32 %v160, %v1204
    %v7376 = vmul.f32 %v161, %v1204
    %v7377 = vmul.f32 %v162, %v1204
    %v7378 = vmul.f32 %v163, %v1204
    %v7379 = vmul.f32 %v164, %v1204
    %v7380 = vmul.f32 %v165, %v1204
    %v7381 = vmul.f32 %v166, %v1204
    %v7382 = vmul.f32 %v167, %v1204
    %v7383 = vmul.f32 %v168, %v1204
    %v7384 = vmul.f32 %v169, %v1204
    %v7385 = vmul.f32 %v170, %v1204
    %v7386 = vmul.f32 %v171, %v1204
    %v7387 = vmul.f32 %v172, %v1204
    %v7388 = vmul.f32 %v173, %v1204
    %v7389 = vmul.f32 %v174, %v1204
    %v7390 = vmul.f32 %v175, %v1204
    %v7391 = vmul.f32 %v176, %v1204
    %v7392 = vmul.f32 %v177, %v1204
    %v7393 = vmul.f32 %v178, %v1204
    %v7394 = vmul.f32 %v179, %v1204
    %v7395 = vmul.f32 %v180, %v1204
    %v7396 = vmul.f32 %v181, %v1204
    %v7397 = vmul.f32 %v182, %v1204
    %v7398 = vmul.f32 %v183, %v1204
    %v7399 = vmul.f32 %v184, %v1204
    %v7400 = vmul.f32 %v185, %v1204
    %v7401 = vmul.f32 %v186, %v1204
    %v7456 = vrot.slane %v7348, 1
    %v7457 = vrot.slane %v7349, 1
    %v7458 = vsel %vm1038, %v7456, %v7457
    %v7459 = vrot.slane %v7350, 1
    %v7460 = vsel %vm1038, %v7457, %v7459
    %v7461 = vrot.slane %v7351, 1
    %v7462 = vrot.slane %v7352, 1
    %v7463 = vsel %vm1038, %v7461, %v7462
    %v7464 = vrot.slane %v7353, 1
    %v7465 = vsel %vm1038, %v7462, %v7464
    %v7466 = vrot.slane %v7354, 1
    %v7467 = vrot.slane %v7355, 1
    %v7468 = vsel %vm1038, %v7466, %v7467
    %v7469 = vrot.slane %v7356, 1
    %v7470 = vsel %vm1038, %v7467, %v7469
    %v7471 = vrot.slane %v7357, 1
    %v7472 = vrot.slane %v7358, 1
    %v7473 = vsel %vm1038, %v7471, %v7472
    %v7474 = vrot.slane %v7359, 1
    %v7475 = vsel %vm1038, %v7472, %v7474
    %v7476 = vrot.slane %v7360, 1
    %v7477 = vrot.slane %v7361, 1
    %v7478 = vsel %vm1038, %v7476, %v7477
    %v7479 = vrot.slane %v7362, 1
    %v7480 = vsel %vm1038, %v7477, %v7479
    %v7481 = vrot.slane %v7363, 1
    %v7482 = vrot.slane %v7364, 1
    %v7483 = vsel %vm1038, %v7481, %v7482
    %v7484 = vrot.slane %v7365, 1
    %v7485 = vsel %vm1038, %v7482, %v7484
    %v7486 = vrot.slane %v7366, 1
    %v7487 = vrot.slane %v7367, 1
    %v7488 = vsel %vm1038, %v7486, %v7487
    %v7489 = vrot.slane %v7368, 1
    %v7490 = vsel %vm1038, %v7487, %v7489
    %v7491 = vrot.slane %v7369, 1
    %v7492 = vrot.slane %v7370, 1
    %v7493 = vsel %vm1038, %v7491, %v7492
    %v7494 = vrot.slane %v7371, 1
    %v7495 = vsel %vm1038, %v7492, %v7494
    %v7496 = vrot.slane %v7372, 1
    %v7497 = vrot.slane %v7373, 1
    %v7498 = vsel %vm1038, %v7496, %v7497
    %v7499 = vrot.slane %v7374, 1
    %v7500 = vsel %vm1038, %v7497, %v7499
    %v7501 = vrot.slane %v7375, 1
    %v7502 = vrot.slane %v7376, 1
    %v7503 = vsel %vm1038, %v7501, %v7502
    %v7504 = vrot.slane %v7377, 1
    %v7505 = vsel %vm1038, %v7502, %v7504
    %v7506 = vrot.slane %v7378, 1
    %v7507 = vrot.slane %v7379, 1
    %v7508 = vsel %vm1038, %v7506, %v7507
    %v7509 = vrot.slane %v7380, 1
    %v7510 = vsel %vm1038, %v7507, %v7509
    %v7511 = vrot.slane %v7381, 1
    %v7512 = vrot.slane %v7382, 1
    %v7513 = vsel %vm1038, %v7511, %v7512
    %v7514 = vrot.slane %v7383, 1
    %v7515 = vsel %vm1038, %v7512, %v7514
    %v7516 = vrot.slane %v7384, 1
    %v7517 = vrot.slane %v7385, 1
    %v7518 = vsel %vm1038, %v7516, %v7517
    %v7519 = vrot.slane %v7386, 1
    %v7520 = vsel %vm1038, %v7517, %v7519
    %v7521 = vrot.slane %v7387, 1
    %v7522 = vrot.slane %v7388, 1
    %v7523 = vsel %vm1038, %v7521, %v7522
    %v7524 = vrot.slane %v7389, 1
    %v7525 = vsel %vm1038, %v7522, %v7524
    %v7526 = vrot.slane %v7390, 1
    %v7527 = vrot.slane %v7391, 1
    %v7528 = vsel %vm1038, %v7526, %v7527
    %v7529 = vrot.slane %v7392, 1
    %v7530 = vsel %vm1038, %v7527, %v7529
    %v7531 = vrot.slane %v7393, 1
    %v7532 = vrot.slane %v7394, 1
    %v7533 = vsel %vm1038, %v7531, %v7532
    %v7534 = vrot.slane %v7395, 1
    %v7535 = vsel %vm1038, %v7532, %v7534
    %v7536 = vrot.slane %v7396, 1
    %v7537 = vrot.slane %v7397, 1
    %v7538 = vsel %vm1038, %v7536, %v7537
    %v7539 = vrot.slane %v7398, 1
    %v7540 = vsel %vm1038, %v7537, %v7539
    %v7541 = vrot.slane %v7399, 1
    %v7542 = vrot.slane %v7400, 1
    %v7543 = vsel %vm1038, %v7541, %v7542
    %v7544 = vrot.slane %v7401, 1
    %v7545 = vsel %vm1038, %v7542, %v7544
    %v7582 = vadd.f32 %v7312, %v7458
    %v7583 = vadd.f32 %v7313, %v7460
    %v7584 = vadd.f32 %v7314, %v7463
    %v7585 = vadd.f32 %v7315, %v7465
    %v7586 = vadd.f32 %v7316, %v7468
    %v7587 = vadd.f32 %v7317, %v7470
    %v7588 = vadd.f32 %v7318, %v7473
    %v7589 = vadd.f32 %v7319, %v7475
    %v7590 = vadd.f32 %v7320, %v7478
    %v7591 = vadd.f32 %v7321, %v7480
    %v7592 = vadd.f32 %v7322, %v7483
    %v7593 = vadd.f32 %v7323, %v7485
    %v7594 = vadd.f32 %v7324, %v7488
    %v7595 = vadd.f32 %v7325, %v7490
    %v7596 = vadd.f32 %v7326, %v7493
    %v7597 = vadd.f32 %v7327, %v7495
    %v7598 = vadd.f32 %v7328, %v7498
    %v7599 = vadd.f32 %v7329, %v7500
    %v7600 = vadd.f32 %v7330, %v7503
    %v7601 = vadd.f32 %v7331, %v7505
    %v7602 = vadd.f32 %v7332, %v7508
    %v7603 = vadd.f32 %v7333, %v7510
    %v7604 = vadd.f32 %v7334, %v7513
    %v7605 = vadd.f32 %v7335, %v7515
    %v7606 = vadd.f32 %v7336, %v7518
    %v7607 = vadd.f32 %v7337, %v7520
    %v7608 = vadd.f32 %v7338, %v7523
    %v7609 = vadd.f32 %v7339, %v7525
    %v7610 = vadd.f32 %v7340, %v7528
    %v7611 = vadd.f32 %v7341, %v7530
    %v7612 = vadd.f32 %v7342, %v7533
    %v7613 = vadd.f32 %v7343, %v7535
    %v7614 = vadd.f32 %v7344, %v7538
    %v7615 = vadd.f32 %v7345, %v7540
    %v7616 = vadd.f32 %v7346, %v7543
    %v7617 = vadd.f32 %v7347, %v7545
    %v7618 = vmul.f32 %v250, %v1478
    %v7619 = vmul.f32 %v251, %v1478
    %v7620 = vmul.f32 %v252, %v1478
    %v7621 = vmul.f32 %v253, %v1478
    %v7622 = vmul.f32 %v254, %v1478
    %v7623 = vmul.f32 %v255, %v1478
    %v7624 = vmul.f32 %v256, %v1478
    %v7625 = vmul.f32 %v257, %v1478
    %v7626 = vmul.f32 %v258, %v1478
    %v7627 = vmul.f32 %v259, %v1478
    %v7628 = vmul.f32 %v260, %v1478
    %v7629 = vmul.f32 %v261, %v1478
    %v7630 = vmul.f32 %v262, %v1478
    %v7631 = vmul.f32 %v263, %v1478
    %v7632 = vmul.f32 %v264, %v1478
    %v7633 = vmul.f32 %v265, %v1478
    %v7634 = vmul.f32 %v266, %v1478
    %v7635 = vmul.f32 %v267, %v1478
    %v7636 = vmul.f32 %v268, %v1478
    %v7637 = vmul.f32 %v269, %v1478
    %v7638 = vmul.f32 %v270, %v1478
    %v7639 = vmul.f32 %v271, %v1478
    %v7640 = vmul.f32 %v272, %v1478
    %v7641 = vmul.f32 %v273, %v1478
    %v7642 = vmul.f32 %v274, %v1478
    %v7643 = vmul.f32 %v275, %v1478
    %v7644 = vmul.f32 %v276, %v1478
    %v7645 = vmul.f32 %v280, %v1478
    %v7646 = vmul.f32 %v281, %v1478
    %v7647 = vmul.f32 %v282, %v1478
    %v7648 = vmul.f32 %v283, %v1478
    %v7649 = vmul.f32 %v284, %v1478
    %v7650 = vmul.f32 %v285, %v1478
    %v7651 = vmul.f32 %v286, %v1478
    %v7652 = vmul.f32 %v287, %v1478
    %v7653 = vmul.f32 %v288, %v1478
    %v7654 = vmul.f32 %v289, %v1478
    %v7655 = vmul.f32 %v290, %v1478
    %v7656 = vmul.f32 %v291, %v1478
    %v7657 = vmul.f32 %v292, %v1478
    %v7658 = vmul.f32 %v293, %v1478
    %v7659 = vmul.f32 %v294, %v1478
    %v7660 = vmul.f32 %v295, %v1478
    %v7661 = vmul.f32 %v296, %v1478
    %v7662 = vmul.f32 %v297, %v1478
    %v7663 = vmul.f32 %v298, %v1478
    %v7664 = vmul.f32 %v299, %v1478
    %v7665 = vmul.f32 %v300, %v1478
    %v7666 = vmul.f32 %v301, %v1478
    %v7667 = vmul.f32 %v302, %v1478
    %v7668 = vmul.f32 %v303, %v1478
    %v7669 = vmul.f32 %v304, %v1478
    %v7670 = vmul.f32 %v305, %v1478
    %v7671 = vmul.f32 %v306, %v1478
    %v7726 = vrot.slane %v7618, 1
    %v7727 = vrot.slane %v7619, 1
    %v7728 = vsel %vm1038, %v7726, %v7727
    %v7729 = vrot.slane %v7620, 1
    %v7730 = vsel %vm1038, %v7727, %v7729
    %v7731 = vrot.slane %v7621, 1
    %v7732 = vrot.slane %v7622, 1
    %v7733 = vsel %vm1038, %v7731, %v7732
    %v7734 = vrot.slane %v7623, 1
    %v7735 = vsel %vm1038, %v7732, %v7734
    %v7736 = vrot.slane %v7624, 1
    %v7737 = vrot.slane %v7625, 1
    %v7738 = vsel %vm1038, %v7736, %v7737
    %v7739 = vrot.slane %v7626, 1
    %v7740 = vsel %vm1038, %v7737, %v7739
    %v7741 = vrot.slane %v7627, 1
    %v7742 = vrot.slane %v7628, 1
    %v7743 = vsel %vm1038, %v7741, %v7742
    %v7744 = vrot.slane %v7629, 1
    %v7745 = vsel %vm1038, %v7742, %v7744
    %v7746 = vrot.slane %v7630, 1
    %v7747 = vrot.slane %v7631, 1
    %v7748 = vsel %vm1038, %v7746, %v7747
    %v7749 = vrot.slane %v7632, 1
    %v7750 = vsel %vm1038, %v7747, %v7749
    %v7751 = vrot.slane %v7633, 1
    %v7752 = vrot.slane %v7634, 1
    %v7753 = vsel %vm1038, %v7751, %v7752
    %v7754 = vrot.slane %v7635, 1
    %v7755 = vsel %vm1038, %v7752, %v7754
    %v7756 = vrot.slane %v7636, 1
    %v7757 = vrot.slane %v7637, 1
    %v7758 = vsel %vm1038, %v7756, %v7757
    %v7759 = vrot.slane %v7638, 1
    %v7760 = vsel %vm1038, %v7757, %v7759
    %v7761 = vrot.slane %v7639, 1
    %v7762 = vrot.slane %v7640, 1
    %v7763 = vsel %vm1038, %v7761, %v7762
    %v7764 = vrot.slane %v7641, 1
    %v7765 = vsel %vm1038, %v7762, %v7764
    %v7766 = vrot.slane %v7642, 1
    %v7767 = vrot.slane %v7643, 1
    %v7768 = vsel %vm1038, %v7766, %v7767
    %v7769 = vrot.slane %v7644, 1
    %v7770 = vsel %vm1038, %v7767, %v7769
    %v7771 = vrot.slane %v7645, 1
    %v7772 = vrot.slane %v7646, 1
    %v7773 = vsel %vm1038, %v7771, %v7772
    %v7774 = vrot.slane %v7647, 1
    %v7775 = vsel %vm1038, %v7772, %v7774
    %v7776 = vrot.slane %v7648, 1
    %v7777 = vrot.slane %v7649, 1
    %v7778 = vsel %vm1038, %v7776, %v7777
    %v7779 = vrot.slane %v7650, 1
    %v7780 = vsel %vm1038, %v7777, %v7779
    %v7781 = vrot.slane %v7651, 1
    %v7782 = vrot.slane %v7652, 1
    %v7783 = vsel %vm1038, %v7781, %v7782
    %v7784 = vrot.slane %v7653, 1
    %v7785 = vsel %vm1038, %v7782, %v7784
    %v7786 = vrot.slane %v7654, 1
    %v7787 = vrot.slane %v7655, 1
    %v7788 = vsel %vm1038, %v7786, %v7787
    %v7789 = vrot.slane %v7656, 1
    %v7790 = vsel %vm1038, %v7787, %v7789
    %v7791 = vrot.slane %v7657, 1
    %v7792 = vrot.slane %v7658, 1
    %v7793 = vsel %vm1038, %v7791, %v7792
    %v7794 = vrot.slane %v7659, 1
    %v7795 = vsel %vm1038, %v7792, %v7794
    %v7796 = vrot.slane %v7660, 1
    %v7797 = vrot.slane %v7661, 1
    %v7798 = vsel %vm1038, %v7796, %v7797
    %v7799 = vrot.slane %v7662, 1
    %v7800 = vsel %vm1038, %v7797, %v7799
    %v7801 = vrot.slane %v7663, 1
    %v7802 = vrot.slane %v7664, 1
    %v7803 = vsel %vm1038, %v7801, %v7802
    %v7804 = vrot.slane %v7665, 1
    %v7805 = vsel %vm1038, %v7802, %v7804
    %v7806 = vrot.slane %v7666, 1
    %v7807 = vrot.slane %v7667, 1
    %v7808 = vsel %vm1038, %v7806, %v7807
    %v7809 = vrot.slane %v7668, 1
    %v7810 = vsel %vm1038, %v7807, %v7809
    %v7811 = vrot.slane %v7669, 1
    %v7812 = vrot.slane %v7670, 1
    %v7813 = vsel %vm1038, %v7811, %v7812
    %v7814 = vrot.slane %v7671, 1
    %v7815 = vsel %vm1038, %v7812, %v7814
    %v7852 = vadd.f32 %v7582, %v7728
    %v7853 = vadd.f32 %v7583, %v7730
    %v7854 = vadd.f32 %v7584, %v7733
    %v7855 = vadd.f32 %v7585, %v7735
    %v7856 = vadd.f32 %v7586, %v7738
    %v7857 = vadd.f32 %v7587, %v7740
    %v7858 = vadd.f32 %v7588, %v7743
    %v7859 = vadd.f32 %v7589, %v7745
    %v7860 = vadd.f32 %v7590, %v7748
    %v7861 = vadd.f32 %v7591, %v7750
    %v7862 = vadd.f32 %v7592, %v7753
    %v7863 = vadd.f32 %v7593, %v7755
    %v7864 = vadd.f32 %v7594, %v7758
    %v7865 = vadd.f32 %v7595, %v7760
    %v7866 = vadd.f32 %v7596, %v7763
    %v7867 = vadd.f32 %v7597, %v7765
    %v7868 = vadd.f32 %v7598, %v7768
    %v7869 = vadd.f32 %v7599, %v7770
    %v7870 = vadd.f32 %v7600, %v7773
    %v7871 = vadd.f32 %v7601, %v7775
    %v7872 = vadd.f32 %v7602, %v7778
    %v7873 = vadd.f32 %v7603, %v7780
    %v7874 = vadd.f32 %v7604, %v7783
    %v7875 = vadd.f32 %v7605, %v7785
    %v7876 = vadd.f32 %v7606, %v7788
    %v7877 = vadd.f32 %v7607, %v7790
    %v7878 = vadd.f32 %v7608, %v7793
    %v7879 = vadd.f32 %v7609, %v7795
    %v7880 = vadd.f32 %v7610, %v7798
    %v7881 = vadd.f32 %v7611, %v7800
    %v7882 = vadd.f32 %v7612, %v7803
    %v7883 = vadd.f32 %v7613, %v7805
    %v7884 = vadd.f32 %v7614, %v7808
    %v7885 = vadd.f32 %v7615, %v7810
    %v7886 = vadd.f32 %v7616, %v7813
    %v7887 = vadd.f32 %v7617, %v7815
    %7889 = vset.pattern.permute.xlu0 0
    %7890 = vperm.xlu0 %7889, %v415
    %v7891 = vpop.permute.xlu0 %7890
    %7894 = vset.pattern.permute.xlu0 0
    %7895 = vperm.xlu0 %7894, %v416
    %v7896 = vpop.permute.xlu0 %7895
    %7899 = vset.pattern.permute.xlu0 0
    %7900 = vperm.xlu0 %7899, %v417
    %v7901 = vpop.permute.xlu0 %7900
    %7904 = vset.pattern.permute.xlu0 0
    %7905 = vperm.xlu0 %7904, %v418
    %v7906 = vpop.permute.xlu0 %7905
    %7909 = vset.pattern.permute.xlu0 0
    %7910 = vperm.xlu0 %7909, %v419
    %v7911 = vpop.permute.xlu0 %7910
    %7914 = vset.pattern.permute.xlu0 0
    %7915 = vperm.xlu0 %7914, %v420
    %v7916 = vpop.permute.xlu0 %7915
    %7919 = vset.pattern.permute.xlu0 0
    %7920 = vperm.xlu0 %7919, %v421
    %v7921 = vpop.permute.xlu0 %7920
    %7924 = vset.pattern.permute.xlu0 0
    %7925 = vperm.xlu0 %7924, %v422
    %v7926 = vpop.permute.xlu0 %7925
    %7929 = vset.pattern.permute.xlu0 0
    %7930 = vperm.xlu0 %7929, %v423
    %v7931 = vpop.permute.xlu0 %7930
    %7934 = vset.pattern.permute.xlu0 0
    %7935 = vperm.xlu0 %7934, %v424
    %v7936 = vpop.permute.xlu0 %7935
    %7939 = vset.pattern.permute.xlu0 0
    %7940 = vperm.xlu0 %7939, %v425
    %v7941 = vpop.permute.xlu0 %7940
    %7944 = vset.pattern.permute.xlu0 0
    %7945 = vperm.xlu0 %7944, %v426
    %v7946 = vpop.permute.xlu0 %7945
    %7949 = vset.pattern.permute.xlu0 0
    %7950 = vperm.xlu0 %7949, %v427
    %v7951 = vpop.permute.xlu0 %7950
    %7954 = vset.pattern.permute.xlu0 0
    %7955 = vperm.xlu0 %7954, %v428
    %v7956 = vpop.permute.xlu0 %7955
    %7959 = vset.pattern.permute.xlu0 0
    %7960 = vperm.xlu0 %7959, %v429
    %v7961 = vpop.permute.xlu0 %7960
    %7964 = vset.pattern.permute.xlu0 0
    %7965 = vperm.xlu0 %7964, %v430
    %v7966 = vpop.permute.xlu0 %7965
    %7969 = vset.pattern.permute.xlu0 0
    %7970 = vperm.xlu0 %7969, %v431
    %v7971 = vpop.permute.xlu0 %7970
    %7974 = vset.pattern.permute.xlu0 0
    %7975 = vperm.xlu0 %7974, %v432
    %v7976 = vpop.permute.xlu0 %7975
    %7979 = vset.pattern.permute.xlu0 0
    %7980 = vperm.xlu0 %7979, %v433
    %v7981 = vpop.permute.xlu0 %7980
    %7984 = vset.pattern.permute.xlu0 0
    %7985 = vperm.xlu0 %7984, %v434
    %v7986 = vpop.permute.xlu0 %7985
    %7989 = vset.pattern.permute.xlu0 0
    %7990 = vperm.xlu0 %7989, %v435
    %v7991 = vpop.permute.xlu0 %7990
    %7994 = vset.pattern.permute.xlu0 0
    %7995 = vperm.xlu0 %7994, %v436
    %v7996 = vpop.permute.xlu0 %7995
    %7999 = vset.pattern.permute.xlu0 0
    %8000 = vperm.xlu0 %7999, %v437
    %v8001 = vpop.permute.xlu0 %8000
    %8004 = vset.pattern.permute.xlu0 0
    %8005 = vperm.xlu0 %8004, %v438
    %v8006 = vpop.permute.xlu0 %8005
    %8009 = vset.pattern.permute.xlu0 0
    %8010 = vperm.xlu0 %8009, %v439
    %v8011 = vpop.permute.xlu0 %8010
    %8014 = vset.pattern.permute.xlu0 0
    %8015 = vperm.xlu0 %8014, %v440
    %v8016 = vpop.permute.xlu0 %8015
    %8019 = vset.pattern.permute.xlu0 0
    %8020 = vperm.xlu0 %8019, %v441
    %v8021 = vpop.permute.xlu0 %8020
    %8024 = vset.pattern.permute.xlu0 0
    %8025 = vperm.xlu0 %8024, %v442
    %v8026 = vpop.permute.xlu0 %8025
    %8029 = vset.pattern.permute.xlu0 0
    %8030 = vperm.xlu0 %8029, %v443
    %v8031 = vpop.permute.xlu0 %8030
    %8034 = vset.pattern.permute.xlu0 0
    %8035 = vperm.xlu0 %8034, %v444
    %v8036 = vpop.permute.xlu0 %8035
    %8039 = vset.pattern.permute.xlu0 0
    %8040 = vperm.xlu0 %8039, %v445
    %v8041 = vpop.permute.xlu0 %8040
    %8044 = vset.pattern.permute.xlu0 0
    %8045 = vperm.xlu0 %8044, %v446
    %v8046 = vpop.permute.xlu0 %8045
    %8049 = vset.pattern.permute.xlu0 0
    %8050 = vperm.xlu0 %8049, %v447
    %v8051 = vpop.permute.xlu0 %8050
    %8054 = vset.pattern.permute.xlu0 0
    %8055 = vperm.xlu0 %8054, %v448
    %v8056 = vpop.permute.xlu0 %8055
    %8059 = vset.pattern.permute.xlu0 0
    %8060 = vperm.xlu0 %8059, %v449
    %v8061 = vpop.permute.xlu0 %8060
    %8064 = vset.pattern.permute.xlu0 0
    %8065 = vperm.xlu0 %8064, %v450
    %v8066 = vpop.permute.xlu0 %8065
    %v8068 = vmul.f32 %v7852, %v7891
    %v8069 = vmul.f32 %v7853, %v7896
    %v8070 = vmul.f32 %v7854, %v7901
    %v8071 = vmul.f32 %v7855, %v7906
    %v8072 = vmul.f32 %v7856, %v7911
    %v8073 = vmul.f32 %v7857, %v7916
    %v8074 = vmul.f32 %v7858, %v7921
    %v8075 = vmul.f32 %v7859, %v7926
    %v8076 = vmul.f32 %v7860, %v7931
    %v8077 = vmul.f32 %v7861, %v7936
    %v8078 = vmul.f32 %v7862, %v7941
    %v8079 = vmul.f32 %v7863, %v7946
    %v8080 = vmul.f32 %v7864, %v7951
    %v8081 = vmul.f32 %v7865, %v7956
    %v8082 = vmul.f32 %v7866, %v7961
    %v8083 = vmul.f32 %v7867, %v7966
    %v8084 = vmul.f32 %v7868, %v7971
    %v8085 = vmul.f32 %v7869, %v7976
    %v8086 = vmul.f32 %v7870, %v7981
    %v8087 = vmul.f32 %v7871, %v7986
    %v8088 = vmul.f32 %v7872, %v7991
    %v8089 = vmul.f32 %v7873, %v7996
    %v8090 = vmul.f32 %v7874, %v8001
    %v8091 = vmul.f32 %v7875, %v8006
    %v8092 = vmul.f32 %v7876, %v8011
    %v8093 = vmul.f32 %v7877, %v8016
    %v8094 = vmul.f32 %v7878, %v8021
    %v8095 = vmul.f32 %v7879, %v8026
    %v8096 = vmul.f32 %v7880, %v8031
    %v8097 = vmul.f32 %v7881, %v8036
    %v8098 = vmul.f32 %v7882, %v8041
    %v8099 = vmul.f32 %v7883, %v8046
    %v8100 = vmul.f32 %v7884, %v8051
    %v8101 = vmul.f32 %v7885, %v8056
    %v8102 = vmul.f32 %v7886, %v8061
    %v8103 = vmul.f32 %v7887, %v8066
    %v8104 = vsel %vm1965, %v8068, 0.0
    %v8105 = vsel %vm1965, %v8069, 0.0
    %v8106 = vadd.f32 %v8104, %v8105
    %v8107 = vsel %vm1965, %v8070, 0.0
    %v8108 = vadd.f32 %v8106, %v8107
    %v8109 = vsel %vm1965, %v8071, 0.0
    %v8110 = vadd.f32 %v8108, %v8109
    %v8111 = vsel %vm1965, %v8072, 0.0
    %v8112 = vadd.f32 %v8110, %v8111
    %v8113 = vsel %vm1965, %v8073, 0.0
    %v8114 = vadd.f32 %v8112, %v8113
    %v8115 = vsel %vm1965, %v8074, 0.0
    %v8116 = vadd.f32 %v8114, %v8115
    %v8117 = vsel %vm1965, %v8075, 0.0
    %v8118 = vadd.f32 %v8116, %v8117
    %v8119 = vsel %vm1965, %v8076, 0.0
    %v8120 = vadd.f32 %v8118, %v8119
    %v8121 = vsel %vm1965, %v8077, 0.0
    %v8122 = vadd.f32 %v8120, %v8121
    %v8123 = vsel %vm1965, %v8078, 0.0
    %v8124 = vadd.f32 %v8122, %v8123
    %v8125 = vsel %vm1965, %v8079, 0.0
    %v8126 = vadd.f32 %v8124, %v8125
    %v8127 = vsel %vm1965, %v8080, 0.0
    %v8128 = vadd.f32 %v8126, %v8127
    %v8129 = vsel %vm1965, %v8081, 0.0
    %v8130 = vadd.f32 %v8128, %v8129
    %v8131 = vsel %vm1965, %v8082, 0.0
    %v8132 = vadd.f32 %v8130, %v8131
    %v8133 = vsel %vm1965, %v8083, 0.0
    %v8134 = vadd.f32 %v8132, %v8133
    %v8135 = vsel %vm1965, %v8084, 0.0
    %v8136 = vadd.f32 %v8134, %v8135
    %v8137 = vsel %vm1965, %v8085, 0.0
    %v8138 = vadd.f32 %v8136, %v8137
    %v8139 = vsel %vm1965, %v8086, 0.0
    %v8140 = vadd.f32 %v8138, %v8139
    %v8141 = vsel %vm1965, %v8087, 0.0
    %v8142 = vadd.f32 %v8140, %v8141
    %v8143 = vsel %vm1965, %v8088, 0.0
    %v8144 = vadd.f32 %v8142, %v8143
    %v8145 = vsel %vm1965, %v8089, 0.0
    %v8146 = vadd.f32 %v8144, %v8145
    %v8147 = vsel %vm1965, %v8090, 0.0
    %v8148 = vadd.f32 %v8146, %v8147
    %v8149 = vsel %vm1965, %v8091, 0.0
    %v8150 = vadd.f32 %v8148, %v8149
    %v8151 = vsel %vm1965, %v8092, 0.0
    %v8152 = vadd.f32 %v8150, %v8151
    %v8153 = vsel %vm1965, %v8093, 0.0
    %v8154 = vadd.f32 %v8152, %v8153
    %v8155 = vsel %vm1965, %v8094, 0.0
    %v8156 = vadd.f32 %v8154, %v8155
    %v8157 = vsel %vm1965, %v8095, 0.0
    %v8158 = vadd.f32 %v8156, %v8157
    %v8159 = vsel %vm1965, %v8096, 0.0
    %v8160 = vadd.f32 %v8158, %v8159
    %v8161 = vsel %vm1965, %v8097, 0.0
    %v8162 = vadd.f32 %v8160, %v8161
    %v8163 = vsel %vm1965, %v8098, 0.0
    %v8164 = vadd.f32 %v8162, %v8163
    %v8165 = vsel %vm1965, %v8099, 0.0
    %v8166 = vadd.f32 %v8164, %v8165
    %v8167 = vsel %vm1965, %v8100, 0.0
    %v8168 = vadd.f32 %v8166, %v8167
    %v8169 = vsel %vm1965, %v8101, 0.0
    %v8170 = vadd.f32 %v8168, %v8169
    %v8171 = vsel %vm1965, %v8102, 0.0
    %v8172 = vadd.f32 %v8170, %v8171
    %v8173 = vsel %vm1965, %v8103, 0.0
    %v8174 = vadd.f32 %v8172, %v8173
    %v8175 = vrot.slane %v8174, 4
    %v8176 = vadd.f32 %v8174, %v8175
    %v8177 = vrot.slane %v8176, 2
    %v8178 = vadd.f32 %v8176, %v8177
    %v8179 = vrot.slane %v8178, 1
    %v8180 = vadd.f32 %v8178, %v8179
    %v8181 = vadd.f32 %v5937, %v8180
    %v8182 = vmul.f32 %v8068, %v8068
    %v8183 = vmul.f32 %v8069, %v8069
    %v8184 = vmul.f32 %v8070, %v8070
    %v8185 = vmul.f32 %v8071, %v8071
    %v8186 = vmul.f32 %v8072, %v8072
    %v8187 = vmul.f32 %v8073, %v8073
    %v8188 = vmul.f32 %v8074, %v8074
    %v8189 = vmul.f32 %v8075, %v8075
    %v8190 = vmul.f32 %v8076, %v8076
    %v8191 = vmul.f32 %v8077, %v8077
    %v8192 = vmul.f32 %v8078, %v8078
    %v8193 = vmul.f32 %v8079, %v8079
    %v8194 = vmul.f32 %v8080, %v8080
    %v8195 = vmul.f32 %v8081, %v8081
    %v8196 = vmul.f32 %v8082, %v8082
    %v8197 = vmul.f32 %v8083, %v8083
    %v8198 = vmul.f32 %v8084, %v8084
    %v8199 = vmul.f32 %v8085, %v8085
    %v8200 = vmul.f32 %v8086, %v8086
    %v8201 = vmul.f32 %v8087, %v8087
    %v8202 = vmul.f32 %v8088, %v8088
    %v8203 = vmul.f32 %v8089, %v8089
    %v8204 = vmul.f32 %v8090, %v8090
    %v8205 = vmul.f32 %v8091, %v8091
    %v8206 = vmul.f32 %v8092, %v8092
    %v8207 = vmul.f32 %v8093, %v8093
    %v8208 = vmul.f32 %v8094, %v8094
    %v8209 = vmul.f32 %v8095, %v8095
    %v8210 = vmul.f32 %v8096, %v8096
    %v8211 = vmul.f32 %v8097, %v8097
    %v8212 = vmul.f32 %v8098, %v8098
    %v8213 = vmul.f32 %v8099, %v8099
    %v8214 = vmul.f32 %v8100, %v8100
    %v8215 = vmul.f32 %v8101, %v8101
    %v8216 = vmul.f32 %v8102, %v8102
    %v8217 = vmul.f32 %v8103, %v8103
    %v8218 = vsel %vm1965, %v8182, 0.0
    %v8219 = vsel %vm1965, %v8183, 0.0
    %v8220 = vadd.f32 %v8218, %v8219
    %v8221 = vsel %vm1965, %v8184, 0.0
    %v8222 = vadd.f32 %v8220, %v8221
    %v8223 = vsel %vm1965, %v8185, 0.0
    %v8224 = vadd.f32 %v8222, %v8223
    %v8225 = vsel %vm1965, %v8186, 0.0
    %v8226 = vadd.f32 %v8224, %v8225
    %v8227 = vsel %vm1965, %v8187, 0.0
    %v8228 = vadd.f32 %v8226, %v8227
    %v8229 = vsel %vm1965, %v8188, 0.0
    %v8230 = vadd.f32 %v8228, %v8229
    %v8231 = vsel %vm1965, %v8189, 0.0
    %v8232 = vadd.f32 %v8230, %v8231
    %v8233 = vsel %vm1965, %v8190, 0.0
    %v8234 = vadd.f32 %v8232, %v8233
    %v8235 = vsel %vm1965, %v8191, 0.0
    %v8236 = vadd.f32 %v8234, %v8235
    %v8237 = vsel %vm1965, %v8192, 0.0
    %v8238 = vadd.f32 %v8236, %v8237
    %v8239 = vsel %vm1965, %v8193, 0.0
    %v8240 = vadd.f32 %v8238, %v8239
    %v8241 = vsel %vm1965, %v8194, 0.0
    %v8242 = vadd.f32 %v8240, %v8241
    %v8243 = vsel %vm1965, %v8195, 0.0
    %v8244 = vadd.f32 %v8242, %v8243
    %v8245 = vsel %vm1965, %v8196, 0.0
    %v8246 = vadd.f32 %v8244, %v8245
    %v8247 = vsel %vm1965, %v8197, 0.0
    %v8248 = vadd.f32 %v8246, %v8247
    %v8249 = vsel %vm1965, %v8198, 0.0
    %v8250 = vadd.f32 %v8248, %v8249
    %v8251 = vsel %vm1965, %v8199, 0.0
    %v8252 = vadd.f32 %v8250, %v8251
    %v8253 = vsel %vm1965, %v8200, 0.0
    %v8254 = vadd.f32 %v8252, %v8253
    %v8255 = vsel %vm1965, %v8201, 0.0
    %v8256 = vadd.f32 %v8254, %v8255
    %v8257 = vsel %vm1965, %v8202, 0.0
    %v8258 = vadd.f32 %v8256, %v8257
    %v8259 = vsel %vm1965, %v8203, 0.0
    %v8260 = vadd.f32 %v8258, %v8259
    %v8261 = vsel %vm1965, %v8204, 0.0
    %v8262 = vadd.f32 %v8260, %v8261
    %v8263 = vsel %vm1965, %v8205, 0.0
    %v8264 = vadd.f32 %v8262, %v8263
    %v8265 = vsel %vm1965, %v8206, 0.0
    %v8266 = vadd.f32 %v8264, %v8265
    %v8267 = vsel %vm1965, %v8207, 0.0
    %v8268 = vadd.f32 %v8266, %v8267
    %v8269 = vsel %vm1965, %v8208, 0.0
    %v8270 = vadd.f32 %v8268, %v8269
    %v8271 = vsel %vm1965, %v8209, 0.0
    %v8272 = vadd.f32 %v8270, %v8271
    %v8273 = vsel %vm1965, %v8210, 0.0
    %v8274 = vadd.f32 %v8272, %v8273
    %v8275 = vsel %vm1965, %v8211, 0.0
    %v8276 = vadd.f32 %v8274, %v8275
    %v8277 = vsel %vm1965, %v8212, 0.0
    %v8278 = vadd.f32 %v8276, %v8277
    %v8279 = vsel %vm1965, %v8213, 0.0
    %v8280 = vadd.f32 %v8278, %v8279
    %v8281 = vsel %vm1965, %v8214, 0.0
    %v8282 = vadd.f32 %v8280, %v8281
    %v8283 = vsel %vm1965, %v8215, 0.0
    %v8284 = vadd.f32 %v8282, %v8283
    %v8285 = vsel %vm1965, %v8216, 0.0
    %v8286 = vadd.f32 %v8284, %v8285
    %v8287 = vsel %vm1965, %v8217, 0.0
    %v8288 = vadd.f32 %v8286, %v8287
    %v8289 = vrot.slane %v8288, 4
    %v8290 = vadd.f32 %v8288, %v8289
    %v8291 = vrot.slane %v8290, 2
    %v8292 = vadd.f32 %v8290, %v8291
    %v8293 = vrot.slane %v8292, 1
    %v8294 = vadd.f32 %v8292, %v8293
    %v8295 = vadd.f32 %v6051, %v8294
    %v8296 = vrcp.pop 512.0
    %v8297 = vmul.f32 %v8181, %v8296
    %v8298 = vmul.f32 %v8295, %v8296
    %v8299 = vmul.f32 %v8297, %v8297
    %v8300 = vsub.f32 %v8298, %v8299
    %v8301 = vadd.f32 %v8300, 1e-05
    %v8302 = vrsqrt.pop %v8301
    %v8303 = vmul.f32 %v454, %v8302
    %v8304 = vmul.f32 %v8297, %v8303
    %v8305 = vsub.f32 %v455, %v8304
    %v8307 = vlaneseq
    %v8308 = vshrl.u32 %v8307, 7
    %v8309 = vsub.s32 0, %v8308
    %v8310 = vrot.slane %v8303, %v8309
    %v8312 = vmul.f32 %v1713, %v8310
    %v8313 = vmul.f32 %v1714, %v8310
    %v8314 = vmul.f32 %v1715, %v8310
    %v8315 = vmul.f32 %v1716, %v8310
    %v8316 = vmul.f32 %v1717, %v8310
    %v8317 = vmul.f32 %v1718, %v8310
    %v8318 = vmul.f32 %v1719, %v8310
    %v8319 = vmul.f32 %v1720, %v8310
    %v8320 = vmul.f32 %v1721, %v8310
    %v8321 = vmul.f32 %v1722, %v8310
    %v8322 = vmul.f32 %v1723, %v8310
    %v8323 = vmul.f32 %v1724, %v8310
    %v8324 = vmul.f32 %v1725, %v8310
    %v8325 = vmul.f32 %v1726, %v8310
    %v8326 = vmul.f32 %v1727, %v8310
    %v8327 = vmul.f32 %v1728, %v8310
    %v8328 = vmul.f32 %v1729, %v8310
    %v8329 = vmul.f32 %v1730, %v8310
    %v8330 = vmul.f32 %v1731, %v8310
    %v8331 = vmul.f32 %v1732, %v8310
    %v8332 = vmul.f32 %v1733, %v8310
    %v8333 = vmul.f32 %v1734, %v8310
    %v8334 = vmul.f32 %v1735, %v8310
    %v8335 = vmul.f32 %v1736, %v8310
    %v8336 = vmul.f32 %v1737, %v8310
    %v8337 = vmul.f32 %v1738, %v8310
    %v8338 = vmul.f32 %v1739, %v8310
    %v8339 = vmul.f32 %v1740, %v8310
    %v8340 = vmul.f32 %v1741, %v8310
    %v8341 = vmul.f32 %v1742, %v8310
    %v8342 = vmul.f32 %v1743, %v8310
    %v8343 = vmul.f32 %v1744, %v8310
    %v8344 = vmul.f32 %v1745, %v8310
    %v8345 = vmul.f32 %v1746, %v8310
    %v8346 = vmul.f32 %v1747, %v8310
    %v8347 = vmul.f32 %v1748, %v8310
    %v8349 = vlaneseq
    %v8350 = vshrl.u32 %v8349, 7
    %v8351 = vsub.s32 0, %v8350
    %v8352 = vrot.slane %v8305, %v8351
    %v8354 = vadd.f32 %v8312, %v8352
    %v8355 = vadd.f32 %v8313, %v8352
    %v8356 = vadd.f32 %v8314, %v8352
    %v8357 = vadd.f32 %v8315, %v8352
    %v8358 = vadd.f32 %v8316, %v8352
    %v8359 = vadd.f32 %v8317, %v8352
    %v8360 = vadd.f32 %v8318, %v8352
    %v8361 = vadd.f32 %v8319, %v8352
    %v8362 = vadd.f32 %v8320, %v8352
    %v8363 = vadd.f32 %v8321, %v8352
    %v8364 = vadd.f32 %v8322, %v8352
    %v8365 = vadd.f32 %v8323, %v8352
    %v8366 = vadd.f32 %v8324, %v8352
    %v8367 = vadd.f32 %v8325, %v8352
    %v8368 = vadd.f32 %v8326, %v8352
    %v8369 = vadd.f32 %v8327, %v8352
    %v8370 = vadd.f32 %v8328, %v8352
    %v8371 = vadd.f32 %v8329, %v8352
    %v8372 = vadd.f32 %v8330, %v8352
    %v8373 = vadd.f32 %v8331, %v8352
    %v8374 = vadd.f32 %v8332, %v8352
    %v8375 = vadd.f32 %v8333, %v8352
    %v8376 = vadd.f32 %v8334, %v8352
    %v8377 = vadd.f32 %v8335, %v8352
    %v8378 = vadd.f32 %v8336, %v8352
    %v8379 = vadd.f32 %v8337, %v8352
    %v8380 = vadd.f32 %v8338, %v8352
    %v8381 = vadd.f32 %v8339, %v8352
    %v8382 = vadd.f32 %v8340, %v8352
    %v8383 = vadd.f32 %v8341, %v8352
    %v8384 = vadd.f32 %v8342, %v8352
    %v8385 = vadd.f32 %v8343, %v8352
    %v8386 = vadd.f32 %v8344, %v8352
    %v8387 = vadd.f32 %v8345, %v8352
    %v8388 = vadd.f32 %v8346, %v8352
    %v8389 = vadd.f32 %v8347, %v8352
    %v8390 = vpack.c.bf16 %v8355, %v8354
    %v8391 = vpack.c.bf16 %v8357, %v8356
    %v8392 = vpack.c.bf16 %v8359, %v8358
    %v8393 = vpack.c.bf16 %v8361, %v8360
    %v8394 = vpack.c.bf16 %v8363, %v8362
    %v8395 = vpack.c.bf16 %v8365, %v8364
    %v8396 = vpack.c.bf16 %v8367, %v8366
    %v8397 = vpack.c.bf16 %v8369, %v8368
    %v8398 = vpack.c.bf16 %v8371, %v8370
    %v8399 = vpack.c.bf16 %v8373, %v8372
    %v8400 = vpack.c.bf16 %v8375, %v8374
    %v8401 = vpack.c.bf16 %v8377, %v8376
    %v8402 = vpack.c.bf16 %v8379, %v8378
    %v8403 = vpack.c.bf16 %v8381, %v8380
    %v8404 = vpack.c.bf16 %v8383, %v8382
    %v8405 = vpack.c.bf16 %v8385, %v8384
    %v8406 = vpack.c.bf16 %v8387, %v8386
    %v8407 = vpack.c.bf16 %v8389, %v8388
    %v8409 = vsel %vm1965, %v8390, 0
    %v8412 = vsel %vm1965, %v8391, 0
    %v8415 = vsel %vm1965, %v8392, 0
    %v8418 = vsel %vm1965, %v8393, 0
    %v8421 = vsel %vm1965, %v8394, 0
    %v8424 = vsel %vm1965, %v8395, 0
    %v8427 = vsel %vm1965, %v8396, 0
    %v8430 = vsel %vm1965, %v8397, 0
    %v8433 = vsel %vm1965, %v8398, 0
    %v8436 = vsel %vm1965, %v8399, 0
    %v8439 = vsel %vm1965, %v8400, 0
    %v8442 = vsel %vm1965, %v8401, 0
    %v8445 = vsel %vm1965, %v8402, 0
    %v8448 = vsel %vm1965, %v8403, 0
    %v8451 = vsel %vm1965, %v8404, 0
    %v8454 = vsel %vm1965, %v8405, 0
    %v8457 = vsel %vm1965, %v8406, 0
    %v8460 = vsel %vm1965, %v8407, 0
    %vm8462 = vcmask 1043456
    %v8464 = vsel %vm8462, %v456, 0
    %8466 = vmatprep.subr.bf16.mxu0 0
    %8467 = vmatpush1.bf16.msra.mxu0 %v8464
    %8468 = vmatprep.subr.bf16.mxu0 0
    %8469 = vmatpush1.bf16.msra.mxu0 0
    %8470 = vmatprep.subr.bf16.mxu0 0
    %8471 = vmatpush1.bf16.msra.mxu0 0
    %8472 = vmatprep.subr.bf16.mxu0 0
    %8473 = vmatpush1.bf16.msra.mxu0 0
    %8474 = vmatprep.subr.bf16.mxu0 0
    %8475 = vmatpush1.bf16.msra.mxu0 0
    %8476 = vmatprep.subr.bf16.mxu0 0
    %8477 = vmatpush1.bf16.msra.mxu0 0
    %8478 = vmatprep.subr.bf16.mxu0 0
    %8479 = vmatpush1.bf16.msra.mxu0 0
    %8480 = vmatprep.subr.bf16.mxu0 0
    %8481 = vmatpush1.bf16.msra.mxu0 0
    %8482 = vmatprep.subr.bf16.mxu0 0
    %8483 = vmatpush1.bf16.msra.mxu0 0
    %8484 = vmatprep.subr.bf16.mxu0 0
    %8485 = vmatpush1.bf16.msra.mxu0 0
    %8486 = vmatprep.subr.bf16.mxu0 0
    %8487 = vmatpush1.bf16.msra.mxu0 0
    %8488 = vmatprep.subr.bf16.mxu0 0
    %8489 = vmatpush1.bf16.msra.mxu0 0
    %8490 = vmatprep.subr.bf16.mxu0 0
    %8491 = vmatpush1.bf16.msra.mxu0 0
    %8492 = vmatprep.subr.bf16.mxu0 0
    %8493 = vmatpush1.bf16.msra.mxu0 0
    %8494 = vmatprep.subr.bf16.mxu0 0
    %8495 = vmatpush1.bf16.msra.mxu0 0
    %8496 = vmatprep.subr.bf16.mxu0 0
    %8497 = vmatpush1.bf16.msra.mxu0 0
    %8498 = vmatprep.mubr.bf16.mxu0 0
    %8499 = vmatmul.mubr.bf16.gmra.mrb[0].mxu0 %v8409
    %v8500 = vpop.f32.mrb[0].mxu0
    %v8501 = vadd.f32 0.0, %v8500
    %v8502 = vpop.f32.mrb[0].mxu0
    %v8503 = vpop.f32.mrb[0].mxu0
    %v8504 = vadd.f32 0.0, %v8503
    %v8505 = vpop.f32.mrb[0].mxu0
    %8506 = vmatprep.mubr.bf16.mxu0 0
    %8507 = vmatmul.mubr.bf16.gmra.mrb[0].mxu0 %v8412
    %v8508 = vpop.f32.mrb[0].mxu0
    %v8509 = vadd.f32 0.0, %v8508
    %v8510 = vpop.f32.mrb[0].mxu0
    %v8511 = vpop.f32.mrb[0].mxu0
    %v8512 = vadd.f32 0.0, %v8511
    %v8513 = vpop.f32.mrb[0].mxu0
    %8514 = vmatprep.mubr.bf16.mxu0 0
    %8515 = vmatmul.mubr.bf16.gmra.mrb[0].mxu0 %v8415
    %v8516 = vpop.f32.mrb[0].mxu0
    %v8517 = vadd.f32 0.0, %v8516
    %v8518 = vpop.f32.mrb[0].mxu0
    %v8519 = vpop.f32.mrb[0].mxu0
    %v8520 = vadd.f32 0.0, %v8519
    %v8521 = vpop.f32.mrb[0].mxu0
    %8522 = vmatprep.mubr.bf16.mxu0 0
    %8523 = vmatmul.mubr.bf16.gmra.mrb[0].mxu0 %v8418
    %v8524 = vpop.f32.mrb[0].mxu0
    %v8525 = vadd.f32 0.0, %v8524
    %v8526 = vpop.f32.mrb[0].mxu0
    %v8527 = vpop.f32.mrb[0].mxu0
    %v8528 = vadd.f32 0.0, %v8527
    %v8529 = vpop.f32.mrb[0].mxu0
    %8530 = vmatprep.mubr.bf16.mxu0 0
    %8531 = vmatmul.mubr.bf16.gmra.mrb[0].mxu0 %v8421
    %v8532 = vpop.f32.mrb[0].mxu0
    %v8533 = vadd.f32 0.0, %v8532
    %v8534 = vpop.f32.mrb[0].mxu0
    %v8535 = vpop.f32.mrb[0].mxu0
    %v8536 = vadd.f32 0.0, %v8535
    %v8537 = vpop.f32.mrb[0].mxu0
    %8538 = vmatprep.mubr.bf16.mxu0 0
    %8539 = vmatmul.mubr.bf16.gmra.mrb[0].mxu0 %v8424
    %v8540 = vpop.f32.mrb[0].mxu0
    %v8541 = vadd.f32 0.0, %v8540
    %v8542 = vpop.f32.mrb[0].mxu0
    %v8543 = vpop.f32.mrb[0].mxu0
    %v8544 = vadd.f32 0.0, %v8543
    %v8545 = vpop.f32.mrb[0].mxu0
    %8546 = vmatprep.mubr.bf16.mxu0 0
    %8547 = vmatmul.mubr.bf16.gmra.mrb[0].mxu0 %v8427
    %v8548 = vpop.f32.mrb[0].mxu0
    %v8549 = vadd.f32 0.0, %v8548
    %v8550 = vpop.f32.mrb[0].mxu0
    %v8551 = vpop.f32.mrb[0].mxu0
    %v8552 = vadd.f32 0.0, %v8551
    %v8553 = vpop.f32.mrb[0].mxu0
    %8554 = vmatprep.mubr.bf16.mxu0 0
    %8555 = vmatmul.mubr.bf16.gmra.mrb[0].mxu0 %v8430
    %v8556 = vpop.f32.mrb[0].mxu0
    %v8557 = vadd.f32 0.0, %v8556
    %v8558 = vpop.f32.mrb[0].mxu0
    %v8559 = vpop.f32.mrb[0].mxu0
    %v8560 = vadd.f32 0.0, %v8559
    %v8561 = vpop.f32.mrb[0].mxu0
    %8562 = vmatprep.mubr.bf16.mxu0 0
    %8563 = vmatmul.mubr.bf16.gmra.mrb[0].mxu0 %v8433
    %v8564 = vpop.f32.mrb[0].mxu0
    %v8565 = vadd.f32 0.0, %v8564
    %v8566 = vpop.f32.mrb[0].mxu0
    %v8567 = vpop.f32.mrb[0].mxu0
    %v8568 = vadd.f32 0.0, %v8567
    %v8569 = vpop.f32.mrb[0].mxu0
    %8570 = vmatprep.mubr.bf16.mxu0 0
    %8571 = vmatmul.mubr.bf16.gmra.mrb[0].mxu0 %v8436
    %v8572 = vpop.f32.mrb[0].mxu0
    %v8573 = vadd.f32 0.0, %v8572
    %v8574 = vpop.f32.mrb[0].mxu0
    %v8575 = vpop.f32.mrb[0].mxu0
    %v8576 = vadd.f32 0.0, %v8575
    %v8577 = vpop.f32.mrb[0].mxu0
    %8578 = vmatprep.mubr.bf16.mxu0 0
    %8579 = vmatmul.mubr.bf16.gmra.mrb[0].mxu0 %v8439
    %v8580 = vpop.f32.mrb[0].mxu0
    %v8581 = vadd.f32 0.0, %v8580
    %v8582 = vpop.f32.mrb[0].mxu0
    %v8583 = vpop.f32.mrb[0].mxu0
    %v8584 = vadd.f32 0.0, %v8583
    %v8585 = vpop.f32.mrb[0].mxu0
    %8586 = vmatprep.mubr.bf16.mxu0 0
    %8587 = vmatmul.mubr.bf16.gmra.mrb[0].mxu0 %v8442
    %v8588 = vpop.f32.mrb[0].mxu0
    %v8589 = vadd.f32 0.0, %v8588
    %v8590 = vpop.f32.mrb[0].mxu0
    %v8591 = vpop.f32.mrb[0].mxu0
    %v8592 = vadd.f32 0.0, %v8591
    %v8593 = vpop.f32.mrb[0].mxu0
    %8594 = vmatprep.mubr.bf16.mxu0 0
    %8595 = vmatmul.mubr.bf16.gmra.mrb[0].mxu0 %v8445
    %v8596 = vpop.f32.mrb[0].mxu0
    %v8597 = vadd.f32 0.0, %v8596
    %v8598 = vpop.f32.mrb[0].mxu0
    %v8599 = vpop.f32.mrb[0].mxu0
    %v8600 = vadd.f32 0.0, %v8599
    %v8601 = vpop.f32.mrb[0].mxu0
    %8602 = vmatprep.mubr.bf16.mxu0 0
    %8603 = vmatmul.mubr.bf16.gmra.mrb[0].mxu0 %v8448
    %v8604 = vpop.f32.mrb[0].mxu0
    %v8605 = vadd.f32 0.0, %v8604
    %v8606 = vpop.f32.mrb[0].mxu0
    %v8607 = vpop.f32.mrb[0].mxu0
    %v8608 = vadd.f32 0.0, %v8607
    %v8609 = vpop.f32.mrb[0].mxu0
    %8610 = vmatprep.mubr.bf16.mxu0 0
    %8611 = vmatmul.mubr.bf16.gmra.mrb[0].mxu0 %v8451
    %v8612 = vpop.f32.mrb[0].mxu0
    %v8613 = vadd.f32 0.0, %v8612
    %v8614 = vpop.f32.mrb[0].mxu0
    %v8615 = vpop.f32.mrb[0].mxu0
    %v8616 = vadd.f32 0.0, %v8615
    %v8617 = vpop.f32.mrb[0].mxu0
    %8618 = vmatprep.mubr.bf16.mxu0 0
    %8619 = vmatmul.mubr.bf16.gmra.mrb[0].mxu0 %v8454
    %v8620 = vpop.f32.mrb[0].mxu0
    %v8621 = vadd.f32 0.0, %v8620
    %v8622 = vpop.f32.mrb[0].mxu0
    %v8623 = vpop.f32.mrb[0].mxu0
    %v8624 = vadd.f32 0.0, %v8623
    %v8625 = vpop.f32.mrb[0].mxu0
    %8626 = vmatprep.mubr.bf16.mxu0 0
    %8627 = vmatmul.mubr.bf16.gmra.mrb[0].mxu0 %v8457
    %v8628 = vpop.f32.mrb[0].mxu0
    %v8629 = vadd.f32 0.0, %v8628
    %v8630 = vpop.f32.mrb[0].mxu0
    %v8631 = vpop.f32.mrb[0].mxu0
    %v8632 = vadd.f32 0.0, %v8631
    %v8633 = vpop.f32.mrb[0].mxu0
    %8634 = vmatprep.mubr.bf16.mxu0 0
    %8635 = vmatmul.mubr.bf16.gmra.mrb[0].mxu0 %v8460
    %v8636 = vpop.f32.mrb[0].mxu0
    %v8637 = vadd.f32 0.0, %v8636
    %v8638 = vpop.f32.mrb[0].mxu0
    %v8639 = vpop.f32.mrb[0].mxu0
    %v8640 = vadd.f32 0.0, %v8639
    %v8641 = vpop.f32.mrb[0].mxu0
    %8642 = vdwg.mxu0
    %v8643 = vmul.f32 %v8501, %v1752
    %v8644 = vmul.f32 %v8504, %v1757
    %v8645 = vmul.f32 %v8509, %v1762
    %v8646 = vmul.f32 %v8512, %v1767
    %v8647 = vmul.f32 %v8517, %v1772
    %v8648 = vmul.f32 %v8520, %v1777
    %v8649 = vmul.f32 %v8525, %v1782
    %v8650 = vmul.f32 %v8528, %v1787
    %v8651 = vmul.f32 %v8533, %v1792
    %v8652 = vmul.f32 %v8536, %v1797
    %v8653 = vmul.f32 %v8541, %v1802
    %v8654 = vmul.f32 %v8544, %v1807
    %v8655 = vmul.f32 %v8549, %v1812
    %v8656 = vmul.f32 %v8552, %v1817
    %v8657 = vmul.f32 %v8557, %v1822
    %v8658 = vmul.f32 %v8560, %v1827
    %v8659 = vmul.f32 %v8565, %v1832
    %v8660 = vmul.f32 %v8568, %v1837
    %v8661 = vmul.f32 %v8573, %v1842
    %v8662 = vmul.f32 %v8576, %v1847
    %v8663 = vmul.f32 %v8581, %v1852
    %v8664 = vmul.f32 %v8584, %v1857
    %v8665 = vmul.f32 %v8589, %v1862
    %v8666 = vmul.f32 %v8592, %v1867
    %v8667 = vmul.f32 %v8597, %v1872
    %v8668 = vmul.f32 %v8600, %v1877
    %v8669 = vmul.f32 %v8605, %v1882
    %v8670 = vmul.f32 %v8608, %v1887
    %v8671 = vmul.f32 %v8613, %v1892
    %v8672 = vmul.f32 %v8616, %v1897
    %v8673 = vmul.f32 %v8621, %v1902
    %v8674 = vmul.f32 %v8624, %v1907
    %v8675 = vmul.f32 %v8629, %v1912
    %v8676 = vmul.f32 %v8632, %v1917
    %v8677 = vmul.f32 %v8637, %v1922
    %v8678 = vmul.f32 %v8640, %v1927
    %vm8679 = vcmask 261120
    %v8680 = vsel %vm8679, %v8643, 0.0
    %v8681 = vsel %vm8679, %v8644, 0.0
    %v8682 = vadd.f32 %v8680, %v8681
    %v8683 = vsel %vm8679, %v8645, 0.0
    %v8684 = vadd.f32 %v8682, %v8683
    %v8685 = vsel %vm8679, %v8646, 0.0
    %v8686 = vadd.f32 %v8684, %v8685
    %v8687 = vsel %vm8679, %v8647, 0.0
    %v8688 = vadd.f32 %v8686, %v8687
    %v8689 = vsel %vm8679, %v8648, 0.0
    %v8690 = vadd.f32 %v8688, %v8689
    %v8691 = vsel %vm8679, %v8649, 0.0
    %v8692 = vadd.f32 %v8690, %v8691
    %v8693 = vsel %vm8679, %v8650, 0.0
    %v8694 = vadd.f32 %v8692, %v8693
    %v8695 = vsel %vm8679, %v8651, 0.0
    %v8696 = vadd.f32 %v8694, %v8695
    %v8697 = vsel %vm8679, %v8652, 0.0
    %v8698 = vadd.f32 %v8696, %v8697
    %v8699 = vsel %vm8679, %v8653, 0.0
    %v8700 = vadd.f32 %v8698, %v8699
    %v8701 = vsel %vm8679, %v8654, 0.0
    %v8702 = vadd.f32 %v8700, %v8701
    %v8703 = vsel %vm8679, %v8655, 0.0
    %v8704 = vadd.f32 %v8702, %v8703
    %v8705 = vsel %vm8679, %v8656, 0.0
    %v8706 = vadd.f32 %v8704, %v8705
    %v8707 = vsel %vm8679, %v8657, 0.0
    %v8708 = vadd.f32 %v8706, %v8707
    %v8709 = vsel %vm8679, %v8658, 0.0
    %v8710 = vadd.f32 %v8708, %v8709
    %v8711 = vsel %vm8679, %v8659, 0.0
    %v8712 = vadd.f32 %v8710, %v8711
    %v8713 = vsel %vm8679, %v8660, 0.0
    %v8714 = vadd.f32 %v8712, %v8713
    %v8715 = vsel %vm8679, %v8661, 0.0
    %v8716 = vadd.f32 %v8714, %v8715
    %v8717 = vsel %vm8679, %v8662, 0.0
    %v8718 = vadd.f32 %v8716, %v8717
    %v8719 = vsel %vm8679, %v8663, 0.0
    %v8720 = vadd.f32 %v8718, %v8719
    %v8721 = vsel %vm8679, %v8664, 0.0
    %v8722 = vadd.f32 %v8720, %v8721
    %v8723 = vsel %vm8679, %v8665, 0.0
    %v8724 = vadd.f32 %v8722, %v8723
    %v8725 = vsel %vm8679, %v8666, 0.0
    %v8726 = vadd.f32 %v8724, %v8725
    %v8727 = vsel %vm8679, %v8667, 0.0
    %v8728 = vadd.f32 %v8726, %v8727
    %v8729 = vsel %vm8679, %v8668, 0.0
    %v8730 = vadd.f32 %v8728, %v8729
    %v8731 = vsel %vm8679, %v8669, 0.0
    %v8732 = vadd.f32 %v8730, %v8731
    %v8733 = vsel %vm8679, %v8670, 0.0
    %v8734 = vadd.f32 %v8732, %v8733
    %v8735 = vsel %vm8679, %v8671, 0.0
    %v8736 = vadd.f32 %v8734, %v8735
    %v8737 = vsel %vm8679, %v8672, 0.0
    %v8738 = vadd.f32 %v8736, %v8737
    %v8739 = vsel %vm8679, %v8673, 0.0
    %v8740 = vadd.f32 %v8738, %v8739
    %v8741 = vsel %vm8679, %v8674, 0.0
    %v8742 = vadd.f32 %v8740, %v8741
    %v8743 = vsel %vm8679, %v8675, 0.0
    %v8744 = vadd.f32 %v8742, %v8743
    %v8745 = vsel %vm8679, %v8676, 0.0
    %v8746 = vadd.f32 %v8744, %v8745
    %v8747 = vsel %vm8679, %v8677, 0.0
    %v8748 = vadd.f32 %v8746, %v8747
    %v8749 = vsel %vm8679, %v8678, 0.0
    %v8750 = vadd.f32 %v8748, %v8749
    %v8751 = vrot.slane %v8750, 4
    %v8752 = vadd.f32 %v8750, %v8751
    %v8753 = vrot.slane %v8752, 2
    %v8754 = vadd.f32 %v8752, %v8753
    %v8755 = vrot.slane %v8754, 1
    %v8756 = vadd.f32 %v8754, %v8755
    %v8757 = vadd.f32 %v8756, 0.0
    %v8758 = vmul.f32 %v8643, %v8643
    %v8759 = vmul.f32 %v8644, %v8644
    %v8760 = vmul.f32 %v8645, %v8645
    %v8761 = vmul.f32 %v8646, %v8646
    %v8762 = vmul.f32 %v8647, %v8647
    %v8763 = vmul.f32 %v8648, %v8648
    %v8764 = vmul.f32 %v8649, %v8649
    %v8765 = vmul.f32 %v8650, %v8650
    %v8766 = vmul.f32 %v8651, %v8651
    %v8767 = vmul.f32 %v8652, %v8652
    %v8768 = vmul.f32 %v8653, %v8653
    %v8769 = vmul.f32 %v8654, %v8654
    %v8770 = vmul.f32 %v8655, %v8655
    %v8771 = vmul.f32 %v8656, %v8656
    %v8772 = vmul.f32 %v8657, %v8657
    %v8773 = vmul.f32 %v8658, %v8658
    %v8774 = vmul.f32 %v8659, %v8659
    %v8775 = vmul.f32 %v8660, %v8660
    %v8776 = vmul.f32 %v8661, %v8661
    %v8777 = vmul.f32 %v8662, %v8662
    %v8778 = vmul.f32 %v8663, %v8663
    %v8779 = vmul.f32 %v8664, %v8664
    %v8780 = vmul.f32 %v8665, %v8665
    %v8781 = vmul.f32 %v8666, %v8666
    %v8782 = vmul.f32 %v8667, %v8667
    %v8783 = vmul.f32 %v8668, %v8668
    %v8784 = vmul.f32 %v8669, %v8669
    %v8785 = vmul.f32 %v8670, %v8670
    %v8786 = vmul.f32 %v8671, %v8671
    %v8787 = vmul.f32 %v8672, %v8672
    %v8788 = vmul.f32 %v8673, %v8673
    %v8789 = vmul.f32 %v8674, %v8674
    %v8790 = vmul.f32 %v8675, %v8675
    %v8791 = vmul.f32 %v8676, %v8676
    %v8792 = vmul.f32 %v8677, %v8677
    %v8793 = vmul.f32 %v8678, %v8678
    %v8794 = vsel %vm8679, %v8758, 0.0
    %v8795 = vsel %vm8679, %v8759, 0.0
    %v8796 = vadd.f32 %v8794, %v8795
    %v8797 = vsel %vm8679, %v8760, 0.0
    %v8798 = vadd.f32 %v8796, %v8797
    %v8799 = vsel %vm8679, %v8761, 0.0
    %v8800 = vadd.f32 %v8798, %v8799
    %v8801 = vsel %vm8679, %v8762, 0.0
    %v8802 = vadd.f32 %v8800, %v8801
    %v8803 = vsel %vm8679, %v8763, 0.0
    %v8804 = vadd.f32 %v8802, %v8803
    %v8805 = vsel %vm8679, %v8764, 0.0
    %v8806 = vadd.f32 %v8804, %v8805
    %v8807 = vsel %vm8679, %v8765, 0.0
    %v8808 = vadd.f32 %v8806, %v8807
    %v8809 = vsel %vm8679, %v8766, 0.0
    %v8810 = vadd.f32 %v8808, %v8809
    %v8811 = vsel %vm8679, %v8767, 0.0
    %v8812 = vadd.f32 %v8810, %v8811
    %v8813 = vsel %vm8679, %v8768, 0.0
    %v8814 = vadd.f32 %v8812, %v8813
    %v8815 = vsel %vm8679, %v8769, 0.0
    %v8816 = vadd.f32 %v8814, %v8815
    %v8817 = vsel %vm8679, %v8770, 0.0
    %v8818 = vadd.f32 %v8816, %v8817
    %v8819 = vsel %vm8679, %v8771, 0.0
    %v8820 = vadd.f32 %v8818, %v8819
    %v8821 = vsel %vm8679, %v8772, 0.0
    %v8822 = vadd.f32 %v8820, %v8821
    %v8823 = vsel %vm8679, %v8773, 0.0
    %v8824 = vadd.f32 %v8822, %v8823
    %v8825 = vsel %vm8679, %v8774, 0.0
    %v8826 = vadd.f32 %v8824, %v8825
    %v8827 = vsel %vm8679, %v8775, 0.0
    %v8828 = vadd.f32 %v8826, %v8827
    %v8829 = vsel %vm8679, %v8776, 0.0
    %v8830 = vadd.f32 %v8828, %v8829
    %v8831 = vsel %vm8679, %v8777, 0.0
    %v8832 = vadd.f32 %v8830, %v8831
    %v8833 = vsel %vm8679, %v8778, 0.0
    %v8834 = vadd.f32 %v8832, %v8833
    %v8835 = vsel %vm8679, %v8779, 0.0
    %v8836 = vadd.f32 %v8834, %v8835
    %v8837 = vsel %vm8679, %v8780, 0.0
    %v8838 = vadd.f32 %v8836, %v8837
    %v8839 = vsel %vm8679, %v8781, 0.0
    %v8840 = vadd.f32 %v8838, %v8839
    %v8841 = vsel %vm8679, %v8782, 0.0
    %v8842 = vadd.f32 %v8840, %v8841
    %v8843 = vsel %vm8679, %v8783, 0.0
    %v8844 = vadd.f32 %v8842, %v8843
    %v8845 = vsel %vm8679, %v8784, 0.0
    %v8846 = vadd.f32 %v8844, %v8845
    %v8847 = vsel %vm8679, %v8785, 0.0
    %v8848 = vadd.f32 %v8846, %v8847
    %v8849 = vsel %vm8679, %v8786, 0.0
    %v8850 = vadd.f32 %v8848, %v8849
    %v8851 = vsel %vm8679, %v8787, 0.0
    %v8852 = vadd.f32 %v8850, %v8851
    %v8853 = vsel %vm8679, %v8788, 0.0
    %v8854 = vadd.f32 %v8852, %v8853
    %v8855 = vsel %vm8679, %v8789, 0.0
    %v8856 = vadd.f32 %v8854, %v8855
    %v8857 = vsel %vm8679, %v8790, 0.0
    %v8858 = vadd.f32 %v8856, %v8857
    %v8859 = vsel %vm8679, %v8791, 0.0
    %v8860 = vadd.f32 %v8858, %v8859
    %v8861 = vsel %vm8679, %v8792, 0.0
    %v8862 = vadd.f32 %v8860, %v8861
    %v8863 = vsel %vm8679, %v8793, 0.0
    %v8864 = vadd.f32 %v8862, %v8863
    %v8865 = vrot.slane %v8864, 4
    %v8866 = vadd.f32 %v8864, %v8865
    %v8867 = vrot.slane %v8866, 2
    %v8868 = vadd.f32 %v8866, %v8867
    %v8869 = vrot.slane %v8868, 1
    %v8870 = vadd.f32 %v8868, %v8869
    %v8871 = vadd.f32 %v8870, 0.0
    %v8872 = vmul.f32 %v3958, %v8310
    %v8873 = vmul.f32 %v3959, %v8310
    %v8874 = vmul.f32 %v3960, %v8310
    %v8875 = vmul.f32 %v3961, %v8310
    %v8876 = vmul.f32 %v3962, %v8310
    %v8877 = vmul.f32 %v3963, %v8310
    %v8878 = vmul.f32 %v3964, %v8310
    %v8879 = vmul.f32 %v3965, %v8310
    %v8880 = vmul.f32 %v3966, %v8310
    %v8881 = vmul.f32 %v3967, %v8310
    %v8882 = vmul.f32 %v3968, %v8310
    %v8883 = vmul.f32 %v3969, %v8310
    %v8884 = vmul.f32 %v3970, %v8310
    %v8885 = vmul.f32 %v3971, %v8310
    %v8886 = vmul.f32 %v3972, %v8310
    %v8887 = vmul.f32 %v3973, %v8310
    %v8888 = vmul.f32 %v3974, %v8310
    %v8889 = vmul.f32 %v3975, %v8310
    %v8890 = vmul.f32 %v3976, %v8310
    %v8891 = vmul.f32 %v3977, %v8310
    %v8892 = vmul.f32 %v3978, %v8310
    %v8893 = vmul.f32 %v3979, %v8310
    %v8894 = vmul.f32 %v3980, %v8310
    %v8895 = vmul.f32 %v3981, %v8310
    %v8896 = vmul.f32 %v3982, %v8310
    %v8897 = vmul.f32 %v3983, %v8310
    %v8898 = vmul.f32 %v3984, %v8310
    %v8899 = vmul.f32 %v3985, %v8310
    %v8900 = vmul.f32 %v3986, %v8310
    %v8901 = vmul.f32 %v3987, %v8310
    %v8902 = vmul.f32 %v3988, %v8310
    %v8903 = vmul.f32 %v3989, %v8310
    %v8904 = vmul.f32 %v3990, %v8310
    %v8905 = vmul.f32 %v3991, %v8310
    %v8906 = vmul.f32 %v3992, %v8310
    %v8907 = vmul.f32 %v3993, %v8310
    %v8908 = vadd.f32 %v8872, %v8352
    %v8909 = vadd.f32 %v8873, %v8352
    %v8910 = vadd.f32 %v8874, %v8352
    %v8911 = vadd.f32 %v8875, %v8352
    %v8912 = vadd.f32 %v8876, %v8352
    %v8913 = vadd.f32 %v8877, %v8352
    %v8914 = vadd.f32 %v8878, %v8352
    %v8915 = vadd.f32 %v8879, %v8352
    %v8916 = vadd.f32 %v8880, %v8352
    %v8917 = vadd.f32 %v8881, %v8352
    %v8918 = vadd.f32 %v8882, %v8352
    %v8919 = vadd.f32 %v8883, %v8352
    %v8920 = vadd.f32 %v8884, %v8352
    %v8921 = vadd.f32 %v8885, %v8352
    %v8922 = vadd.f32 %v8886, %v8352
    %v8923 = vadd.f32 %v8887, %v8352
    %v8924 = vadd.f32 %v8888, %v8352
    %v8925 = vadd.f32 %v8889, %v8352
    %v8926 = vadd.f32 %v8890, %v8352
    %v8927 = vadd.f32 %v8891, %v8352
    %v8928 = vadd.f32 %v8892, %v8352
    %v8929 = vadd.f32 %v8893, %v8352
    %v8930 = vadd.f32 %v8894, %v8352
    %v8931 = vadd.f32 %v8895, %v8352
    %v8932 = vadd.f32 %v8896, %v8352
    %v8933 = vadd.f32 %v8897, %v8352
    %v8934 = vadd.f32 %v8898, %v8352
    %v8935 = vadd.f32 %v8899, %v8352
    %v8936 = vadd.f32 %v8900, %v8352
    %v8937 = vadd.f32 %v8901, %v8352
    %v8938 = vadd.f32 %v8902, %v8352
    %v8939 = vadd.f32 %v8903, %v8352
    %v8940 = vadd.f32 %v8904, %v8352
    %v8941 = vadd.f32 %v8905, %v8352
    %v8942 = vadd.f32 %v8906, %v8352
    %v8943 = vadd.f32 %v8907, %v8352
    %v8944 = vpack.c.bf16 %v8909, %v8908
    %v8945 = vpack.c.bf16 %v8911, %v8910
    %v8946 = vpack.c.bf16 %v8913, %v8912
    %v8947 = vpack.c.bf16 %v8915, %v8914
    %v8948 = vpack.c.bf16 %v8917, %v8916
    %v8949 = vpack.c.bf16 %v8919, %v8918
    %v8950 = vpack.c.bf16 %v8921, %v8920
    %v8951 = vpack.c.bf16 %v8923, %v8922
    %v8952 = vpack.c.bf16 %v8925, %v8924
    %v8953 = vpack.c.bf16 %v8927, %v8926
    %v8954 = vpack.c.bf16 %v8929, %v8928
    %v8955 = vpack.c.bf16 %v8931, %v8930
    %v8956 = vpack.c.bf16 %v8933, %v8932
    %v8957 = vpack.c.bf16 %v8935, %v8934
    %v8958 = vpack.c.bf16 %v8937, %v8936
    %v8959 = vpack.c.bf16 %v8939, %v8938
    %v8960 = vpack.c.bf16 %v8941, %v8940
    %v8961 = vpack.c.bf16 %v8943, %v8942
    %v8963 = vsel %vm1965, %v8944, 0
    %v8966 = vsel %vm1965, %v8945, 0
    %v8969 = vsel %vm1965, %v8946, 0
    %v8972 = vsel %vm1965, %v8947, 0
    %v8975 = vsel %vm1965, %v8948, 0
    %v8978 = vsel %vm1965, %v8949, 0
    %v8981 = vsel %vm1965, %v8950, 0
    %v8984 = vsel %vm1965, %v8951, 0
    %v8987 = vsel %vm1965, %v8952, 0
    %v8990 = vsel %vm1965, %v8953, 0
    %v8993 = vsel %vm1965, %v8954, 0
    %v8996 = vsel %vm1965, %v8955, 0
    %v8999 = vsel %vm1965, %v8956, 0
    %v9002 = vsel %vm1965, %v8957, 0
    %v9005 = vsel %vm1965, %v8958, 0
    %v9008 = vsel %vm1965, %v8959, 0
    %v9011 = vsel %vm1965, %v8960, 0
    %v9014 = vsel %vm1965, %v8961, 0
    %9016 = vmatprep.subr.bf16.mxu0 0
    %9017 = vmatpush1.bf16.msra.mxu0 %v8464
    %9018 = vmatprep.subr.bf16.mxu0 0
    %9019 = vmatpush1.bf16.msra.mxu0 0
    %9020 = vmatprep.subr.bf16.mxu0 0
    %9021 = vmatpush1.bf16.msra.mxu0 0
    %9022 = vmatprep.subr.bf16.mxu0 0
    %9023 = vmatpush1.bf16.msra.mxu0 0
    %9024 = vmatprep.subr.bf16.mxu0 0
    %9025 = vmatpush1.bf16.msra.mxu0 0
    %9026 = vmatprep.subr.bf16.mxu0 0
    %9027 = vmatpush1.bf16.msra.mxu0 0
    %9028 = vmatprep.subr.bf16.mxu0 0
    %9029 = vmatpush1.bf16.msra.mxu0 0
    %9030 = vmatprep.subr.bf16.mxu0 0
    %9031 = vmatpush1.bf16.msra.mxu0 0
    %9032 = vmatprep.subr.bf16.mxu0 0
    %9033 = vmatpush1.bf16.msra.mxu0 0
    %9034 = vmatprep.subr.bf16.mxu0 0
    %9035 = vmatpush1.bf16.msra.mxu0 0
    %9036 = vmatprep.subr.bf16.mxu0 0
    %9037 = vmatpush1.bf16.msra.mxu0 0
    %9038 = vmatprep.subr.bf16.mxu0 0
    %9039 = vmatpush1.bf16.msra.mxu0 0
    %9040 = vmatprep.subr.bf16.mxu0 0
    %9041 = vmatpush1.bf16.msra.mxu0 0
    %9042 = vmatprep.subr.bf16.mxu0 0
    %9043 = vmatpush1.bf16.msra.mxu0 0
    %9044 = vmatprep.subr.bf16.mxu0 0
    %9045 = vmatpush1.bf16.msra.mxu0 0
    %9046 = vmatprep.subr.bf16.mxu0 0
    %9047 = vmatpush1.bf16.msra.mxu0 0
    %9048 = vmatprep.mubr.bf16.mxu0 0
    %9049 = vmatmul.mubr.bf16.gmra.mrb[0].mxu0 %v8963
    %v9050 = vpop.f32.mrb[0].mxu0
    %v9051 = vadd.f32 0.0, %v9050
    %v9052 = vpop.f32.mrb[0].mxu0
    %v9053 = vpop.f32.mrb[0].mxu0
    %v9054 = vadd.f32 0.0, %v9053
    %v9055 = vpop.f32.mrb[0].mxu0
    %9056 = vmatprep.mubr.bf16.mxu0 0
    %9057 = vmatmul.mubr.bf16.gmra.mrb[0].mxu0 %v8966
    %v9058 = vpop.f32.mrb[0].mxu0
    %v9059 = vadd.f32 0.0, %v9058
    %v9060 = vpop.f32.mrb[0].mxu0
    %v9061 = vpop.f32.mrb[0].mxu0
    %v9062 = vadd.f32 0.0, %v9061
    %v9063 = vpop.f32.mrb[0].mxu0
    %9064 = vmatprep.mubr.bf16.mxu0 0
    %9065 = vmatmul.mubr.bf16.gmra.mrb[0].mxu0 %v8969
    %v9066 = vpop.f32.mrb[0].mxu0
    %v9067 = vadd.f32 0.0, %v9066
    %v9068 = vpop.f32.mrb[0].mxu0
    %v9069 = vpop.f32.mrb[0].mxu0
    %v9070 = vadd.f32 0.0, %v9069
    %v9071 = vpop.f32.mrb[0].mxu0
    %9072 = vmatprep.mubr.bf16.mxu0 0
    %9073 = vmatmul.mubr.bf16.gmra.mrb[0].mxu0 %v8972
    %v9074 = vpop.f32.mrb[0].mxu0
    %v9075 = vadd.f32 0.0, %v9074
    %v9076 = vpop.f32.mrb[0].mxu0
    %v9077 = vpop.f32.mrb[0].mxu0
    %v9078 = vadd.f32 0.0, %v9077
    %v9079 = vpop.f32.mrb[0].mxu0
    %9080 = vmatprep.mubr.bf16.mxu0 0
    %9081 = vmatmul.mubr.bf16.gmra.mrb[0].mxu0 %v8975
    %v9082 = vpop.f32.mrb[0].mxu0
    %v9083 = vadd.f32 0.0, %v9082
    %v9084 = vpop.f32.mrb[0].mxu0
    %v9085 = vpop.f32.mrb[0].mxu0
    %v9086 = vadd.f32 0.0, %v9085
    %v9087 = vpop.f32.mrb[0].mxu0
    %9088 = vmatprep.mubr.bf16.mxu0 0
    %9089 = vmatmul.mubr.bf16.gmra.mrb[0].mxu0 %v8978
    %v9090 = vpop.f32.mrb[0].mxu0
    %v9091 = vadd.f32 0.0, %v9090
    %v9092 = vpop.f32.mrb[0].mxu0
    %v9093 = vpop.f32.mrb[0].mxu0
    %v9094 = vadd.f32 0.0, %v9093
    %v9095 = vpop.f32.mrb[0].mxu0
    %9096 = vmatprep.mubr.bf16.mxu0 0
    %9097 = vmatmul.mubr.bf16.gmra.mrb[0].mxu0 %v8981
    %v9098 = vpop.f32.mrb[0].mxu0
    %v9099 = vadd.f32 0.0, %v9098
    %v9100 = vpop.f32.mrb[0].mxu0
    %v9101 = vpop.f32.mrb[0].mxu0
    %v9102 = vadd.f32 0.0, %v9101
    %v9103 = vpop.f32.mrb[0].mxu0
    %9104 = vmatprep.mubr.bf16.mxu0 0
    %9105 = vmatmul.mubr.bf16.gmra.mrb[0].mxu0 %v8984
    %v9106 = vpop.f32.mrb[0].mxu0
    %v9107 = vadd.f32 0.0, %v9106
    %v9108 = vpop.f32.mrb[0].mxu0
    %v9109 = vpop.f32.mrb[0].mxu0
    %v9110 = vadd.f32 0.0, %v9109
    %v9111 = vpop.f32.mrb[0].mxu0
    %9112 = vmatprep.mubr.bf16.mxu0 0
    %9113 = vmatmul.mubr.bf16.gmra.mrb[0].mxu0 %v8987
    %v9114 = vpop.f32.mrb[0].mxu0
    %v9115 = vadd.f32 0.0, %v9114
    %v9116 = vpop.f32.mrb[0].mxu0
    %v9117 = vpop.f32.mrb[0].mxu0
    %v9118 = vadd.f32 0.0, %v9117
    %v9119 = vpop.f32.mrb[0].mxu0
    %9120 = vmatprep.mubr.bf16.mxu0 0
    %9121 = vmatmul.mubr.bf16.gmra.mrb[0].mxu0 %v8990
    %v9122 = vpop.f32.mrb[0].mxu0
    %v9123 = vadd.f32 0.0, %v9122
    %v9124 = vpop.f32.mrb[0].mxu0
    %v9125 = vpop.f32.mrb[0].mxu0
    %v9126 = vadd.f32 0.0, %v9125
    %v9127 = vpop.f32.mrb[0].mxu0
    %9128 = vmatprep.mubr.bf16.mxu0 0
    %9129 = vmatmul.mubr.bf16.gmra.mrb[0].mxu0 %v8993
    %v9130 = vpop.f32.mrb[0].mxu0
    %v9131 = vadd.f32 0.0, %v9130
    %v9132 = vpop.f32.mrb[0].mxu0
    %v9133 = vpop.f32.mrb[0].mxu0
    %v9134 = vadd.f32 0.0, %v9133
    %v9135 = vpop.f32.mrb[0].mxu0
    %9136 = vmatprep.mubr.bf16.mxu0 0
    %9137 = vmatmul.mubr.bf16.gmra.mrb[0].mxu0 %v8996
    %v9138 = vpop.f32.mrb[0].mxu0
    %v9139 = vadd.f32 0.0, %v9138
    %v9140 = vpop.f32.mrb[0].mxu0
    %v9141 = vpop.f32.mrb[0].mxu0
    %v9142 = vadd.f32 0.0, %v9141
    %v9143 = vpop.f32.mrb[0].mxu0
    %9144 = vmatprep.mubr.bf16.mxu0 0
    %9145 = vmatmul.mubr.bf16.gmra.mrb[0].mxu0 %v8999
    %v9146 = vpop.f32.mrb[0].mxu0
    %v9147 = vadd.f32 0.0, %v9146
    %v9148 = vpop.f32.mrb[0].mxu0
    %v9149 = vpop.f32.mrb[0].mxu0
    %v9150 = vadd.f32 0.0, %v9149
    %v9151 = vpop.f32.mrb[0].mxu0
    %9152 = vmatprep.mubr.bf16.mxu0 0
    %9153 = vmatmul.mubr.bf16.gmra.mrb[0].mxu0 %v9002
    %v9154 = vpop.f32.mrb[0].mxu0
    %v9155 = vadd.f32 0.0, %v9154
    %v9156 = vpop.f32.mrb[0].mxu0
    %v9157 = vpop.f32.mrb[0].mxu0
    %v9158 = vadd.f32 0.0, %v9157
    %v9159 = vpop.f32.mrb[0].mxu0
    %9160 = vmatprep.mubr.bf16.mxu0 0
    %9161 = vmatmul.mubr.bf16.gmra.mrb[0].mxu0 %v9005
    %v9162 = vpop.f32.mrb[0].mxu0
    %v9163 = vadd.f32 0.0, %v9162
    %v9164 = vpop.f32.mrb[0].mxu0
    %v9165 = vpop.f32.mrb[0].mxu0
    %v9166 = vadd.f32 0.0, %v9165
    %v9167 = vpop.f32.mrb[0].mxu0
    %9168 = vmatprep.mubr.bf16.mxu0 0
    %9169 = vmatmul.mubr.bf16.gmra.mrb[0].mxu0 %v9008
    %v9170 = vpop.f32.mrb[0].mxu0
    %v9171 = vadd.f32 0.0, %v9170
    %v9172 = vpop.f32.mrb[0].mxu0
    %v9173 = vpop.f32.mrb[0].mxu0
    %v9174 = vadd.f32 0.0, %v9173
    %v9175 = vpop.f32.mrb[0].mxu0
    %9176 = vmatprep.mubr.bf16.mxu0 0
    %9177 = vmatmul.mubr.bf16.gmra.mrb[0].mxu0 %v9011
    %v9178 = vpop.f32.mrb[0].mxu0
    %v9179 = vadd.f32 0.0, %v9178
    %v9180 = vpop.f32.mrb[0].mxu0
    %v9181 = vpop.f32.mrb[0].mxu0
    %v9182 = vadd.f32 0.0, %v9181
    %v9183 = vpop.f32.mrb[0].mxu0
    %9184 = vmatprep.mubr.bf16.mxu0 0
    %9185 = vmatmul.mubr.bf16.gmra.mrb[0].mxu0 %v9014
    %v9186 = vpop.f32.mrb[0].mxu0
    %v9187 = vadd.f32 0.0, %v9186
    %v9188 = vpop.f32.mrb[0].mxu0
    %v9189 = vpop.f32.mrb[0].mxu0
    %v9190 = vadd.f32 0.0, %v9189
    %v9191 = vpop.f32.mrb[0].mxu0
    %9192 = vdwg.mxu0
    %v9193 = vmul.f32 %v9051, %v3997
    %v9194 = vmul.f32 %v9054, %v4002
    %v9195 = vmul.f32 %v9059, %v4007
    %v9196 = vmul.f32 %v9062, %v4012
    %v9197 = vmul.f32 %v9067, %v4017
    %v9198 = vmul.f32 %v9070, %v4022
    %v9199 = vmul.f32 %v9075, %v4027
    %v9200 = vmul.f32 %v9078, %v4032
    %v9201 = vmul.f32 %v9083, %v4037
    %v9202 = vmul.f32 %v9086, %v4042
    %v9203 = vmul.f32 %v9091, %v4047
    %v9204 = vmul.f32 %v9094, %v4052
    %v9205 = vmul.f32 %v9099, %v4057
    %v9206 = vmul.f32 %v9102, %v4062
    %v9207 = vmul.f32 %v9107, %v4067
    %v9208 = vmul.f32 %v9110, %v4072
    %v9209 = vmul.f32 %v9115, %v4077
    %v9210 = vmul.f32 %v9118, %v4082
    %v9211 = vmul.f32 %v9123, %v4087
    %v9212 = vmul.f32 %v9126, %v4092
    %v9213 = vmul.f32 %v9131, %v4097
    %v9214 = vmul.f32 %v9134, %v4102
    %v9215 = vmul.f32 %v9139, %v4107
    %v9216 = vmul.f32 %v9142, %v4112
    %v9217 = vmul.f32 %v9147, %v4117
    %v9218 = vmul.f32 %v9150, %v4122
    %v9219 = vmul.f32 %v9155, %v4127
    %v9220 = vmul.f32 %v9158, %v4132
    %v9221 = vmul.f32 %v9163, %v4137
    %v9222 = vmul.f32 %v9166, %v4142
    %v9223 = vmul.f32 %v9171, %v4147
    %v9224 = vmul.f32 %v9174, %v4152
    %v9225 = vmul.f32 %v9179, %v4157
    %v9226 = vmul.f32 %v9182, %v4162
    %v9227 = vmul.f32 %v9187, %v4167
    %v9228 = vmul.f32 %v9190, %v4172
    %v9229 = vsel %vm8679, %v9193, 0.0
    %v9230 = vsel %vm8679, %v9194, 0.0
    %v9231 = vadd.f32 %v9229, %v9230
    %v9232 = vsel %vm8679, %v9195, 0.0
    %v9233 = vadd.f32 %v9231, %v9232
    %v9234 = vsel %vm8679, %v9196, 0.0
    %v9235 = vadd.f32 %v9233, %v9234
    %v9236 = vsel %vm8679, %v9197, 0.0
    %v9237 = vadd.f32 %v9235, %v9236
    %v9238 = vsel %vm8679, %v9198, 0.0
    %v9239 = vadd.f32 %v9237, %v9238
    %v9240 = vsel %vm8679, %v9199, 0.0
    %v9241 = vadd.f32 %v9239, %v9240
    %v9242 = vsel %vm8679, %v9200, 0.0
    %v9243 = vadd.f32 %v9241, %v9242
    %v9244 = vsel %vm8679, %v9201, 0.0
    %v9245 = vadd.f32 %v9243, %v9244
    %v9246 = vsel %vm8679, %v9202, 0.0
    %v9247 = vadd.f32 %v9245, %v9246
    %v9248 = vsel %vm8679, %v9203, 0.0
    %v9249 = vadd.f32 %v9247, %v9248
    %v9250 = vsel %vm8679, %v9204, 0.0
    %v9251 = vadd.f32 %v9249, %v9250
    %v9252 = vsel %vm8679, %v9205, 0.0
    %v9253 = vadd.f32 %v9251, %v9252
    %v9254 = vsel %vm8679, %v9206, 0.0
    %v9255 = vadd.f32 %v9253, %v9254
    %v9256 = vsel %vm8679, %v9207, 0.0
    %v9257 = vadd.f32 %v9255, %v9256
    %v9258 = vsel %vm8679, %v9208, 0.0
    %v9259 = vadd.f32 %v9257, %v9258
    %v9260 = vsel %vm8679, %v9209, 0.0
    %v9261 = vadd.f32 %v9259, %v9260
    %v9262 = vsel %vm8679, %v9210, 0.0
    %v9263 = vadd.f32 %v9261, %v9262
    %v9264 = vsel %vm8679, %v9211, 0.0
    %v9265 = vadd.f32 %v9263, %v9264
    %v9266 = vsel %vm8679, %v9212, 0.0
    %v9267 = vadd.f32 %v9265, %v9266
    %v9268 = vsel %vm8679, %v9213, 0.0
    %v9269 = vadd.f32 %v9267, %v9268
    %v9270 = vsel %vm8679, %v9214, 0.0
    %v9271 = vadd.f32 %v9269, %v9270
    %v9272 = vsel %vm8679, %v9215, 0.0
    %v9273 = vadd.f32 %v9271, %v9272
    %v9274 = vsel %vm8679, %v9216, 0.0
    %v9275 = vadd.f32 %v9273, %v9274
    %v9276 = vsel %vm8679, %v9217, 0.0
    %v9277 = vadd.f32 %v9275, %v9276
    %v9278 = vsel %vm8679, %v9218, 0.0
    %v9279 = vadd.f32 %v9277, %v9278
    %v9280 = vsel %vm8679, %v9219, 0.0
    %v9281 = vadd.f32 %v9279, %v9280
    %v9282 = vsel %vm8679, %v9220, 0.0
    %v9283 = vadd.f32 %v9281, %v9282
    %v9284 = vsel %vm8679, %v9221, 0.0
    %v9285 = vadd.f32 %v9283, %v9284
    %v9286 = vsel %vm8679, %v9222, 0.0
    %v9287 = vadd.f32 %v9285, %v9286
    %v9288 = vsel %vm8679, %v9223, 0.0
    %v9289 = vadd.f32 %v9287, %v9288
    %v9290 = vsel %vm8679, %v9224, 0.0
    %v9291 = vadd.f32 %v9289, %v9290
    %v9292 = vsel %vm8679, %v9225, 0.0
    %v9293 = vadd.f32 %v9291, %v9292
    %v9294 = vsel %vm8679, %v9226, 0.0
    %v9295 = vadd.f32 %v9293, %v9294
    %v9296 = vsel %vm8679, %v9227, 0.0
    %v9297 = vadd.f32 %v9295, %v9296
    %v9298 = vsel %vm8679, %v9228, 0.0
    %v9299 = vadd.f32 %v9297, %v9298
    %v9300 = vrot.slane %v9299, 4
    %v9301 = vadd.f32 %v9299, %v9300
    %v9302 = vrot.slane %v9301, 2
    %v9303 = vadd.f32 %v9301, %v9302
    %v9304 = vrot.slane %v9303, 1
    %v9305 = vadd.f32 %v9303, %v9304
    %v9306 = vadd.f32 %v8757, %v9305
    %v9307 = vmul.f32 %v9193, %v9193
    %v9308 = vmul.f32 %v9194, %v9194
    %v9309 = vmul.f32 %v9195, %v9195
    %v9310 = vmul.f32 %v9196, %v9196
    %v9311 = vmul.f32 %v9197, %v9197
    %v9312 = vmul.f32 %v9198, %v9198
    %v9313 = vmul.f32 %v9199, %v9199
    %v9314 = vmul.f32 %v9200, %v9200
    %v9315 = vmul.f32 %v9201, %v9201
    %v9316 = vmul.f32 %v9202, %v9202
    %v9317 = vmul.f32 %v9203, %v9203
    %v9318 = vmul.f32 %v9204, %v9204
    %v9319 = vmul.f32 %v9205, %v9205
    %v9320 = vmul.f32 %v9206, %v9206
    %v9321 = vmul.f32 %v9207, %v9207
    %v9322 = vmul.f32 %v9208, %v9208
    %v9323 = vmul.f32 %v9209, %v9209
    %v9324 = vmul.f32 %v9210, %v9210
    %v9325 = vmul.f32 %v9211, %v9211
    %v9326 = vmul.f32 %v9212, %v9212
    %v9327 = vmul.f32 %v9213, %v9213
    %v9328 = vmul.f32 %v9214, %v9214
    %v9329 = vmul.f32 %v9215, %v9215
    %v9330 = vmul.f32 %v9216, %v9216
    %v9331 = vmul.f32 %v9217, %v9217
    %v9332 = vmul.f32 %v9218, %v9218
    %v9333 = vmul.f32 %v9219, %v9219
    %v9334 = vmul.f32 %v9220, %v9220
    %v9335 = vmul.f32 %v9221, %v9221
    %v9336 = vmul.f32 %v9222, %v9222
    %v9337 = vmul.f32 %v9223, %v9223
    %v9338 = vmul.f32 %v9224, %v9224
    %v9339 = vmul.f32 %v9225, %v9225
    %v9340 = vmul.f32 %v9226, %v9226
    %v9341 = vmul.f32 %v9227, %v9227
    %v9342 = vmul.f32 %v9228, %v9228
    %v9343 = vsel %vm8679, %v9307, 0.0
    %v9344 = vsel %vm8679, %v9308, 0.0
    %v9345 = vadd.f32 %v9343, %v9344
    %v9346 = vsel %vm8679, %v9309, 0.0
    %v9347 = vadd.f32 %v9345, %v9346
    %v9348 = vsel %vm8679, %v9310, 0.0
    %v9349 = vadd.f32 %v9347, %v9348
    %v9350 = vsel %vm8679, %v9311, 0.0
    %v9351 = vadd.f32 %v9349, %v9350
    %v9352 = vsel %vm8679, %v9312, 0.0
    %v9353 = vadd.f32 %v9351, %v9352
    %v9354 = vsel %vm8679, %v9313, 0.0
    %v9355 = vadd.f32 %v9353, %v9354
    %v9356 = vsel %vm8679, %v9314, 0.0
    %v9357 = vadd.f32 %v9355, %v9356
    %v9358 = vsel %vm8679, %v9315, 0.0
    %v9359 = vadd.f32 %v9357, %v9358
    %v9360 = vsel %vm8679, %v9316, 0.0
    %v9361 = vadd.f32 %v9359, %v9360
    %v9362 = vsel %vm8679, %v9317, 0.0
    %v9363 = vadd.f32 %v9361, %v9362
    %v9364 = vsel %vm8679, %v9318, 0.0
    %v9365 = vadd.f32 %v9363, %v9364
    %v9366 = vsel %vm8679, %v9319, 0.0
    %v9367 = vadd.f32 %v9365, %v9366
    %v9368 = vsel %vm8679, %v9320, 0.0
    %v9369 = vadd.f32 %v9367, %v9368
    %v9370 = vsel %vm8679, %v9321, 0.0
    %v9371 = vadd.f32 %v9369, %v9370
    %v9372 = vsel %vm8679, %v9322, 0.0
    %v9373 = vadd.f32 %v9371, %v9372
    %v9374 = vsel %vm8679, %v9323, 0.0
    %v9375 = vadd.f32 %v9373, %v9374
    %v9376 = vsel %vm8679, %v9324, 0.0
    %v9377 = vadd.f32 %v9375, %v9376
    %v9378 = vsel %vm8679, %v9325, 0.0
    %v9379 = vadd.f32 %v9377, %v9378
    %v9380 = vsel %vm8679, %v9326, 0.0
    %v9381 = vadd.f32 %v9379, %v9380
    %v9382 = vsel %vm8679, %v9327, 0.0
    %v9383 = vadd.f32 %v9381, %v9382
    %v9384 = vsel %vm8679, %v9328, 0.0
    %v9385 = vadd.f32 %v9383, %v9384
    %v9386 = vsel %vm8679, %v9329, 0.0
    %v9387 = vadd.f32 %v9385, %v9386
    %v9388 = vsel %vm8679, %v9330, 0.0
    %v9389 = vadd.f32 %v9387, %v9388
    %v9390 = vsel %vm8679, %v9331, 0.0
    %v9391 = vadd.f32 %v9389, %v9390
    %v9392 = vsel %vm8679, %v9332, 0.0
    %v9393 = vadd.f32 %v9391, %v9392
    %v9394 = vsel %vm8679, %v9333, 0.0
    %v9395 = vadd.f32 %v9393, %v9394
    %v9396 = vsel %vm8679, %v9334, 0.0
    %v9397 = vadd.f32 %v9395, %v9396
    %v9398 = vsel %vm8679, %v9335, 0.0
    %v9399 = vadd.f32 %v9397, %v9398
    %v9400 = vsel %vm8679, %v9336, 0.0
    %v9401 = vadd.f32 %v9399, %v9400
    %v9402 = vsel %vm8679, %v9337, 0.0
    %v9403 = vadd.f32 %v9401, %v9402
    %v9404 = vsel %vm8679, %v9338, 0.0
    %v9405 = vadd.f32 %v9403, %v9404
    %v9406 = vsel %vm8679, %v9339, 0.0
    %v9407 = vadd.f32 %v9405, %v9406
    %v9408 = vsel %vm8679, %v9340, 0.0
    %v9409 = vadd.f32 %v9407, %v9408
    %v9410 = vsel %vm8679, %v9341, 0.0
    %v9411 = vadd.f32 %v9409, %v9410
    %v9412 = vsel %vm8679, %v9342, 0.0
    %v9413 = vadd.f32 %v9411, %v9412
    %v9414 = vrot.slane %v9413, 4
    %v9415 = vadd.f32 %v9413, %v9414
    %v9416 = vrot.slane %v9415, 2
    %v9417 = vadd.f32 %v9415, %v9416
    %v9418 = vrot.slane %v9417, 1
    %v9419 = vadd.f32 %v9417, %v9418
    %v9420 = vadd.f32 %v8871, %v9419
    %v9421 = vmul.f32 %v5608, %v8310
    %v9422 = vmul.f32 %v5609, %v8310
    %v9423 = vmul.f32 %v5610, %v8310
    %v9424 = vmul.f32 %v5611, %v8310
    %v9425 = vmul.f32 %v5612, %v8310
    %v9426 = vmul.f32 %v5613, %v8310
    %v9427 = vmul.f32 %v5614, %v8310
    %v9428 = vmul.f32 %v5615, %v8310
    %v9429 = vmul.f32 %v5616, %v8310
    %v9430 = vmul.f32 %v5617, %v8310
    %v9431 = vmul.f32 %v5618, %v8310
    %v9432 = vmul.f32 %v5619, %v8310
    %v9433 = vmul.f32 %v5620, %v8310
    %v9434 = vmul.f32 %v5621, %v8310
    %v9435 = vmul.f32 %v5622, %v8310
    %v9436 = vmul.f32 %v5623, %v8310
    %v9437 = vmul.f32 %v5624, %v8310
    %v9438 = vmul.f32 %v5625, %v8310
    %v9439 = vmul.f32 %v5626, %v8310
    %v9440 = vmul.f32 %v5627, %v8310
    %v9441 = vmul.f32 %v5628, %v8310
    %v9442 = vmul.f32 %v5629, %v8310
    %v9443 = vmul.f32 %v5630, %v8310
    %v9444 = vmul.f32 %v5631, %v8310
    %v9445 = vmul.f32 %v5632, %v8310
    %v9446 = vmul.f32 %v5633, %v8310
    %v9447 = vmul.f32 %v5634, %v8310
    %v9448 = vmul.f32 %v5635, %v8310
    %v9449 = vmul.f32 %v5636, %v8310
    %v9450 = vmul.f32 %v5637, %v8310
    %v9451 = vmul.f32 %v5638, %v8310
    %v9452 = vmul.f32 %v5639, %v8310
    %v9453 = vmul.f32 %v5640, %v8310
    %v9454 = vmul.f32 %v5641, %v8310
    %v9455 = vmul.f32 %v5642, %v8310
    %v9456 = vmul.f32 %v5643, %v8310
    %v9457 = vadd.f32 %v9421, %v8352
    %v9458 = vadd.f32 %v9422, %v8352
    %v9459 = vadd.f32 %v9423, %v8352
    %v9460 = vadd.f32 %v9424, %v8352
    %v9461 = vadd.f32 %v9425, %v8352
    %v9462 = vadd.f32 %v9426, %v8352
    %v9463 = vadd.f32 %v9427, %v8352
    %v9464 = vadd.f32 %v9428, %v8352
    %v9465 = vadd.f32 %v9429, %v8352
    %v9466 = vadd.f32 %v9430, %v8352
    %v9467 = vadd.f32 %v9431, %v8352
    %v9468 = vadd.f32 %v9432, %v8352
    %v9469 = vadd.f32 %v9433, %v8352
    %v9470 = vadd.f32 %v9434, %v8352
    %v9471 = vadd.f32 %v9435, %v8352
    %v9472 = vadd.f32 %v9436, %v8352
    %v9473 = vadd.f32 %v9437, %v8352
    %v9474 = vadd.f32 %v9438, %v8352
    %v9475 = vadd.f32 %v9439, %v8352
    %v9476 = vadd.f32 %v9440, %v8352
    %v9477 = vadd.f32 %v9441, %v8352
    %v9478 = vadd.f32 %v9442, %v8352
    %v9479 = vadd.f32 %v9443, %v8352
    %v9480 = vadd.f32 %v9444, %v8352
    %v9481 = vadd.f32 %v9445, %v8352
    %v9482 = vadd.f32 %v9446, %v8352
    %v9483 = vadd.f32 %v9447, %v8352
    %v9484 = vadd.f32 %v9448, %v8352
    %v9485 = vadd.f32 %v9449, %v8352
    %v9486 = vadd.f32 %v9450, %v8352
    %v9487 = vadd.f32 %v9451, %v8352
    %v9488 = vadd.f32 %v9452, %v8352
    %v9489 = vadd.f32 %v9453, %v8352
    %v9490 = vadd.f32 %v9454, %v8352
    %v9491 = vadd.f32 %v9455, %v8352
    %v9492 = vadd.f32 %v9456, %v8352
    %v9493 = vpack.c.bf16 %v9458, %v9457
    %v9494 = vpack.c.bf16 %v9460, %v9459
    %v9495 = vpack.c.bf16 %v9462, %v9461
    %v9496 = vpack.c.bf16 %v9464, %v9463
    %v9497 = vpack.c.bf16 %v9466, %v9465
    %v9498 = vpack.c.bf16 %v9468, %v9467
    %v9499 = vpack.c.bf16 %v9470, %v9469
    %v9500 = vpack.c.bf16 %v9472, %v9471
    %v9501 = vpack.c.bf16 %v9474, %v9473
    %v9502 = vpack.c.bf16 %v9476, %v9475
    %v9503 = vpack.c.bf16 %v9478, %v9477
    %v9504 = vpack.c.bf16 %v9480, %v9479
    %v9505 = vpack.c.bf16 %v9482, %v9481
    %v9506 = vpack.c.bf16 %v9484, %v9483
    %v9507 = vpack.c.bf16 %v9486, %v9485
    %v9508 = vpack.c.bf16 %v9488, %v9487
    %v9509 = vpack.c.bf16 %v9490, %v9489
    %v9510 = vpack.c.bf16 %v9492, %v9491
    %v9512 = vsel %vm1965, %v9493, 0
    %v9515 = vsel %vm1965, %v9494, 0
    %v9518 = vsel %vm1965, %v9495, 0
    %v9521 = vsel %vm1965, %v9496, 0
    %v9524 = vsel %vm1965, %v9497, 0
    %v9527 = vsel %vm1965, %v9498, 0
    %v9530 = vsel %vm1965, %v9499, 0
    %v9533 = vsel %vm1965, %v9500, 0
    %v9536 = vsel %vm1965, %v9501, 0
    %v9539 = vsel %vm1965, %v9502, 0
    %v9542 = vsel %vm1965, %v9503, 0
    %v9545 = vsel %vm1965, %v9504, 0
    %v9548 = vsel %vm1965, %v9505, 0
    %v9551 = vsel %vm1965, %v9506, 0
    %v9554 = vsel %vm1965, %v9507, 0
    %v9557 = vsel %vm1965, %v9508, 0
    %v9560 = vsel %vm1965, %v9509, 0
    %v9563 = vsel %vm1965, %v9510, 0
    %9565 = vmatprep.subr.bf16.mxu0 0
    %9566 = vmatpush1.bf16.msra.mxu0 %v8464
    %9567 = vmatprep.subr.bf16.mxu0 0
    %9568 = vmatpush1.bf16.msra.mxu0 0
    %9569 = vmatprep.subr.bf16.mxu0 0
    %9570 = vmatpush1.bf16.msra.mxu0 0
    %9571 = vmatprep.subr.bf16.mxu0 0
    %9572 = vmatpush1.bf16.msra.mxu0 0
    %9573 = vmatprep.subr.bf16.mxu0 0
    %9574 = vmatpush1.bf16.msra.mxu0 0
    %9575 = vmatprep.subr.bf16.mxu0 0
    %9576 = vmatpush1.bf16.msra.mxu0 0
    %9577 = vmatprep.subr.bf16.mxu0 0
    %9578 = vmatpush1.bf16.msra.mxu0 0
    %9579 = vmatprep.subr.bf16.mxu0 0
    %9580 = vmatpush1.bf16.msra.mxu0 0
    %9581 = vmatprep.subr.bf16.mxu0 0
    %9582 = vmatpush1.bf16.msra.mxu0 0
    %9583 = vmatprep.subr.bf16.mxu0 0
    %9584 = vmatpush1.bf16.msra.mxu0 0
    %9585 = vmatprep.subr.bf16.mxu0 0
    %9586 = vmatpush1.bf16.msra.mxu0 0
    %9587 = vmatprep.subr.bf16.mxu0 0
    %9588 = vmatpush1.bf16.msra.mxu0 0
    %9589 = vmatprep.subr.bf16.mxu0 0
    %9590 = vmatpush1.bf16.msra.mxu0 0
    %9591 = vmatprep.subr.bf16.mxu0 0
    %9592 = vmatpush1.bf16.msra.mxu0 0
    %9593 = vmatprep.subr.bf16.mxu0 0
    %9594 = vmatpush1.bf16.msra.mxu0 0
    %9595 = vmatprep.subr.bf16.mxu0 0
    %9596 = vmatpush1.bf16.msra.mxu0 0
    %9597 = vmatprep.mubr.bf16.mxu0 0
    %9598 = vmatmul.mubr.bf16.gmra.mrb[0].mxu0 %v9512
    %v9599 = vpop.f32.mrb[0].mxu0
    %v9600 = vadd.f32 0.0, %v9599
    %v9601 = vpop.f32.mrb[0].mxu0
    %v9602 = vpop.f32.mrb[0].mxu0
    %v9603 = vadd.f32 0.0, %v9602
    %v9604 = vpop.f32.mrb[0].mxu0
    %9605 = vmatprep.mubr.bf16.mxu0 0
    %9606 = vmatmul.mubr.bf16.gmra.mrb[0].mxu0 %v9515
    %v9607 = vpop.f32.mrb[0].mxu0
    %v9608 = vadd.f32 0.0, %v9607
    %v9609 = vpop.f32.mrb[0].mxu0
    %v9610 = vpop.f32.mrb[0].mxu0
    %v9611 = vadd.f32 0.0, %v9610
    %v9612 = vpop.f32.mrb[0].mxu0
    %9613 = vmatprep.mubr.bf16.mxu0 0
    %9614 = vmatmul.mubr.bf16.gmra.mrb[0].mxu0 %v9518
    %v9615 = vpop.f32.mrb[0].mxu0
    %v9616 = vadd.f32 0.0, %v9615
    %v9617 = vpop.f32.mrb[0].mxu0
    %v9618 = vpop.f32.mrb[0].mxu0
    %v9619 = vadd.f32 0.0, %v9618
    %v9620 = vpop.f32.mrb[0].mxu0
    %9621 = vmatprep.mubr.bf16.mxu0 0
    %9622 = vmatmul.mubr.bf16.gmra.mrb[0].mxu0 %v9521
    %v9623 = vpop.f32.mrb[0].mxu0
    %v9624 = vadd.f32 0.0, %v9623
    %v9625 = vpop.f32.mrb[0].mxu0
    %v9626 = vpop.f32.mrb[0].mxu0
    %v9627 = vadd.f32 0.0, %v9626
    %v9628 = vpop.f32.mrb[0].mxu0
    %9629 = vmatprep.mubr.bf16.mxu0 0
    %9630 = vmatmul.mubr.bf16.gmra.mrb[0].mxu0 %v9524
    %v9631 = vpop.f32.mrb[0].mxu0
    %v9632 = vadd.f32 0.0, %v9631
    %v9633 = vpop.f32.mrb[0].mxu0
    %v9634 = vpop.f32.mrb[0].mxu0
    %v9635 = vadd.f32 0.0, %v9634
    %v9636 = vpop.f32.mrb[0].mxu0
    %9637 = vmatprep.mubr.bf16.mxu0 0
    %9638 = vmatmul.mubr.bf16.gmra.mrb[0].mxu0 %v9527
    %v9639 = vpop.f32.mrb[0].mxu0
    %v9640 = vadd.f32 0.0, %v9639
    %v9641 = vpop.f32.mrb[0].mxu0
    %v9642 = vpop.f32.mrb[0].mxu0
    %v9643 = vadd.f32 0.0, %v9642
    %v9644 = vpop.f32.mrb[0].mxu0
    %9645 = vmatprep.mubr.bf16.mxu0 0
    %9646 = vmatmul.mubr.bf16.gmra.mrb[0].mxu0 %v9530
    %v9647 = vpop.f32.mrb[0].mxu0
    %v9648 = vadd.f32 0.0, %v9647
    %v9649 = vpop.f32.mrb[0].mxu0
    %v9650 = vpop.f32.mrb[0].mxu0
    %v9651 = vadd.f32 0.0, %v9650
    %v9652 = vpop.f32.mrb[0].mxu0
    %9653 = vmatprep.mubr.bf16.mxu0 0
    %9654 = vmatmul.mubr.bf16.gmra.mrb[0].mxu0 %v9533
    %v9655 = vpop.f32.mrb[0].mxu0
    %v9656 = vadd.f32 0.0, %v9655
    %v9657 = vpop.f32.mrb[0].mxu0
    %v9658 = vpop.f32.mrb[0].mxu0
    %v9659 = vadd.f32 0.0, %v9658
    %v9660 = vpop.f32.mrb[0].mxu0
    %9661 = vmatprep.mubr.bf16.mxu0 0
    %9662 = vmatmul.mubr.bf16.gmra.mrb[0].mxu0 %v9536
    %v9663 = vpop.f32.mrb[0].mxu0
    %v9664 = vadd.f32 0.0, %v9663
    %v9665 = vpop.f32.mrb[0].mxu0
    %v9666 = vpop.f32.mrb[0].mxu0
    %v9667 = vadd.f32 0.0, %v9666
    %v9668 = vpop.f32.mrb[0].mxu0
    %9669 = vmatprep.mubr.bf16.mxu0 0
    %9670 = vmatmul.mubr.bf16.gmra.mrb[0].mxu0 %v9539
    %v9671 = vpop.f32.mrb[0].mxu0
    %v9672 = vadd.f32 0.0, %v9671
    %v9673 = vpop.f32.mrb[0].mxu0
    %v9674 = vpop.f32.mrb[0].mxu0
    %v9675 = vadd.f32 0.0, %v9674
    %v9676 = vpop.f32.mrb[0].mxu0
    %9677 = vmatprep.mubr.bf16.mxu0 0
    %9678 = vmatmul.mubr.bf16.gmra.mrb[0].mxu0 %v9542
    %v9679 = vpop.f32.mrb[0].mxu0
    %v9680 = vadd.f32 0.0, %v9679
    %v9681 = vpop.f32.mrb[0].mxu0
    %v9682 = vpop.f32.mrb[0].mxu0
    %v9683 = vadd.f32 0.0, %v9682
    %v9684 = vpop.f32.mrb[0].mxu0
    %9685 = vmatprep.mubr.bf16.mxu0 0
    %9686 = vmatmul.mubr.bf16.gmra.mrb[0].mxu0 %v9545
    %v9687 = vpop.f32.mrb[0].mxu0
    %v9688 = vadd.f32 0.0, %v9687
    %v9689 = vpop.f32.mrb[0].mxu0
    %v9690 = vpop.f32.mrb[0].mxu0
    %v9691 = vadd.f32 0.0, %v9690
    %v9692 = vpop.f32.mrb[0].mxu0
    %9693 = vmatprep.mubr.bf16.mxu0 0
    %9694 = vmatmul.mubr.bf16.gmra.mrb[0].mxu0 %v9548
    %v9695 = vpop.f32.mrb[0].mxu0
    %v9696 = vadd.f32 0.0, %v9695
    %v9697 = vpop.f32.mrb[0].mxu0
    %v9698 = vpop.f32.mrb[0].mxu0
    %v9699 = vadd.f32 0.0, %v9698
    %v9700 = vpop.f32.mrb[0].mxu0
    %9701 = vmatprep.mubr.bf16.mxu0 0
    %9702 = vmatmul.mubr.bf16.gmra.mrb[0].mxu0 %v9551
    %v9703 = vpop.f32.mrb[0].mxu0
    %v9704 = vadd.f32 0.0, %v9703
    %v9705 = vpop.f32.mrb[0].mxu0
    %v9706 = vpop.f32.mrb[0].mxu0
    %v9707 = vadd.f32 0.0, %v9706
    %v9708 = vpop.f32.mrb[0].mxu0
    %9709 = vmatprep.mubr.bf16.mxu0 0
    %9710 = vmatmul.mubr.bf16.gmra.mrb[0].mxu0 %v9554
    %v9711 = vpop.f32.mrb[0].mxu0
    %v9712 = vadd.f32 0.0, %v9711
    %v9713 = vpop.f32.mrb[0].mxu0
    %v9714 = vpop.f32.mrb[0].mxu0
    %v9715 = vadd.f32 0.0, %v9714
    %v9716 = vpop.f32.mrb[0].mxu0
    %9717 = vmatprep.mubr.bf16.mxu0 0
    %9718 = vmatmul.mubr.bf16.gmra.mrb[0].mxu0 %v9557
    %v9719 = vpop.f32.mrb[0].mxu0
    %v9720 = vadd.f32 0.0, %v9719
    %v9721 = vpop.f32.mrb[0].mxu0
    %v9722 = vpop.f32.mrb[0].mxu0
    %v9723 = vadd.f32 0.0, %v9722
    %v9724 = vpop.f32.mrb[0].mxu0
    %9725 = vmatprep.mubr.bf16.mxu0 0
    %9726 = vmatmul.mubr.bf16.gmra.mrb[0].mxu0 %v9560
    %v9727 = vpop.f32.mrb[0].mxu0
    %v9728 = vadd.f32 0.0, %v9727
    %v9729 = vpop.f32.mrb[0].mxu0
    %v9730 = vpop.f32.mrb[0].mxu0
    %v9731 = vadd.f32 0.0, %v9730
    %v9732 = vpop.f32.mrb[0].mxu0
    %9733 = vmatprep.mubr.bf16.mxu0 0
    %9734 = vmatmul.mubr.bf16.gmra.mrb[0].mxu0 %v9563
    %v9735 = vpop.f32.mrb[0].mxu0
    %v9736 = vadd.f32 0.0, %v9735
    %v9737 = vpop.f32.mrb[0].mxu0
    %v9738 = vpop.f32.mrb[0].mxu0
    %v9739 = vadd.f32 0.0, %v9738
    %v9740 = vpop.f32.mrb[0].mxu0
    %9741 = vdwg.mxu0
    %v9742 = vmul.f32 %v9600, %v5647
    %v9743 = vmul.f32 %v9603, %v5652
    %v9744 = vmul.f32 %v9608, %v5657
    %v9745 = vmul.f32 %v9611, %v5662
    %v9746 = vmul.f32 %v9616, %v5667
    %v9747 = vmul.f32 %v9619, %v5672
    %v9748 = vmul.f32 %v9624, %v5677
    %v9749 = vmul.f32 %v9627, %v5682
    %v9750 = vmul.f32 %v9632, %v5687
    %v9751 = vmul.f32 %v9635, %v5692
    %v9752 = vmul.f32 %v9640, %v5697
    %v9753 = vmul.f32 %v9643, %v5702
    %v9754 = vmul.f32 %v9648, %v5707
    %v9755 = vmul.f32 %v9651, %v5712
    %v9756 = vmul.f32 %v9656, %v5717
    %v9757 = vmul.f32 %v9659, %v5722
    %v9758 = vmul.f32 %v9664, %v5727
    %v9759 = vmul.f32 %v9667, %v5732
    %v9760 = vmul.f32 %v9672, %v5737
    %v9761 = vmul.f32 %v9675, %v5742
    %v9762 = vmul.f32 %v9680, %v5747
    %v9763 = vmul.f32 %v9683, %v5752
    %v9764 = vmul.f32 %v9688, %v5757
    %v9765 = vmul.f32 %v9691, %v5762
    %v9766 = vmul.f32 %v9696, %v5767
    %v9767 = vmul.f32 %v9699, %v5772
    %v9768 = vmul.f32 %v9704, %v5777
    %v9769 = vmul.f32 %v9707, %v5782
    %v9770 = vmul.f32 %v9712, %v5787
    %v9771 = vmul.f32 %v9715, %v5792
    %v9772 = vmul.f32 %v9720, %v5797
    %v9773 = vmul.f32 %v9723, %v5802
    %v9774 = vmul.f32 %v9728, %v5807
    %v9775 = vmul.f32 %v9731, %v5812
    %v9776 = vmul.f32 %v9736, %v5817
    %v9777 = vmul.f32 %v9739, %v5822
    %v9778 = vsel %vm8679, %v9742, 0.0
    %v9779 = vsel %vm8679, %v9743, 0.0
    %v9780 = vadd.f32 %v9778, %v9779
    %v9781 = vsel %vm8679, %v9744, 0.0
    %v9782 = vadd.f32 %v9780, %v9781
    %v9783 = vsel %vm8679, %v9745, 0.0
    %v9784 = vadd.f32 %v9782, %v9783
    %v9785 = vsel %vm8679, %v9746, 0.0
    %v9786 = vadd.f32 %v9784, %v9785
    %v9787 = vsel %vm8679, %v9747, 0.0
    %v9788 = vadd.f32 %v9786, %v9787
    %v9789 = vsel %vm8679, %v9748, 0.0
    %v9790 = vadd.f32 %v9788, %v9789
    %v9791 = vsel %vm8679, %v9749, 0.0
    %v9792 = vadd.f32 %v9790, %v9791
    %v9793 = vsel %vm8679, %v9750, 0.0
    %v9794 = vadd.f32 %v9792, %v9793
    %v9795 = vsel %vm8679, %v9751, 0.0
    %v9796 = vadd.f32 %v9794, %v9795
    %v9797 = vsel %vm8679, %v9752, 0.0
    %v9798 = vadd.f32 %v9796, %v9797
    %v9799 = vsel %vm8679, %v9753, 0.0
    %v9800 = vadd.f32 %v9798, %v9799
    %v9801 = vsel %vm8679, %v9754, 0.0
    %v9802 = vadd.f32 %v9800, %v9801
    %v9803 = vsel %vm8679, %v9755, 0.0
    %v9804 = vadd.f32 %v9802, %v9803
    %v9805 = vsel %vm8679, %v9756, 0.0
    %v9806 = vadd.f32 %v9804, %v9805
    %v9807 = vsel %vm8679, %v9757, 0.0
    %v9808 = vadd.f32 %v9806, %v9807
    %v9809 = vsel %vm8679, %v9758, 0.0
    %v9810 = vadd.f32 %v9808, %v9809
    %v9811 = vsel %vm8679, %v9759, 0.0
    %v9812 = vadd.f32 %v9810, %v9811
    %v9813 = vsel %vm8679, %v9760, 0.0
    %v9814 = vadd.f32 %v9812, %v9813
    %v9815 = vsel %vm8679, %v9761, 0.0
    %v9816 = vadd.f32 %v9814, %v9815
    %v9817 = vsel %vm8679, %v9762, 0.0
    %v9818 = vadd.f32 %v9816, %v9817
    %v9819 = vsel %vm8679, %v9763, 0.0
    %v9820 = vadd.f32 %v9818, %v9819
    %v9821 = vsel %vm8679, %v9764, 0.0
    %v9822 = vadd.f32 %v9820, %v9821
    %v9823 = vsel %vm8679, %v9765, 0.0
    %v9824 = vadd.f32 %v9822, %v9823
    %v9825 = vsel %vm8679, %v9766, 0.0
    %v9826 = vadd.f32 %v9824, %v9825
    %v9827 = vsel %vm8679, %v9767, 0.0
    %v9828 = vadd.f32 %v9826, %v9827
    %v9829 = vsel %vm8679, %v9768, 0.0
    %v9830 = vadd.f32 %v9828, %v9829
    %v9831 = vsel %vm8679, %v9769, 0.0
    %v9832 = vadd.f32 %v9830, %v9831
    %v9833 = vsel %vm8679, %v9770, 0.0
    %v9834 = vadd.f32 %v9832, %v9833
    %v9835 = vsel %vm8679, %v9771, 0.0
    %v9836 = vadd.f32 %v9834, %v9835
    %v9837 = vsel %vm8679, %v9772, 0.0
    %v9838 = vadd.f32 %v9836, %v9837
    %v9839 = vsel %vm8679, %v9773, 0.0
    %v9840 = vadd.f32 %v9838, %v9839
    %v9841 = vsel %vm8679, %v9774, 0.0
    %v9842 = vadd.f32 %v9840, %v9841
    %v9843 = vsel %vm8679, %v9775, 0.0
    %v9844 = vadd.f32 %v9842, %v9843
    %v9845 = vsel %vm8679, %v9776, 0.0
    %v9846 = vadd.f32 %v9844, %v9845
    %v9847 = vsel %vm8679, %v9777, 0.0
    %v9848 = vadd.f32 %v9846, %v9847
    %v9849 = vrot.slane %v9848, 4
    %v9850 = vadd.f32 %v9848, %v9849
    %v9851 = vrot.slane %v9850, 2
    %v9852 = vadd.f32 %v9850, %v9851
    %v9853 = vrot.slane %v9852, 1
    %v9854 = vadd.f32 %v9852, %v9853
    %v9855 = vadd.f32 %v9306, %v9854
    %v9856 = vmul.f32 %v9742, %v9742
    %v9857 = vmul.f32 %v9743, %v9743
    %v9858 = vmul.f32 %v9744, %v9744
    %v9859 = vmul.f32 %v9745, %v9745
    %v9860 = vmul.f32 %v9746, %v9746
    %v9861 = vmul.f32 %v9747, %v9747
    %v9862 = vmul.f32 %v9748, %v9748
    %v9863 = vmul.f32 %v9749, %v9749
    %v9864 = vmul.f32 %v9750, %v9750
    %v9865 = vmul.f32 %v9751, %v9751
    %v9866 = vmul.f32 %v9752, %v9752
    %v9867 = vmul.f32 %v9753, %v9753
    %v9868 = vmul.f32 %v9754, %v9754
    %v9869 = vmul.f32 %v9755, %v9755
    %v9870 = vmul.f32 %v9756, %v9756
    %v9871 = vmul.f32 %v9757, %v9757
    %v9872 = vmul.f32 %v9758, %v9758
    %v9873 = vmul.f32 %v9759, %v9759
    %v9874 = vmul.f32 %v9760, %v9760
    %v9875 = vmul.f32 %v9761, %v9761
    %v9876 = vmul.f32 %v9762, %v9762
    %v9877 = vmul.f32 %v9763, %v9763
    %v9878 = vmul.f32 %v9764, %v9764
    %v9879 = vmul.f32 %v9765, %v9765
    %v9880 = vmul.f32 %v9766, %v9766
    %v9881 = vmul.f32 %v9767, %v9767
    %v9882 = vmul.f32 %v9768, %v9768
    %v9883 = vmul.f32 %v9769, %v9769
    %v9884 = vmul.f32 %v9770, %v9770
    %v9885 = vmul.f32 %v9771, %v9771
    %v9886 = vmul.f32 %v9772, %v9772
    %v9887 = vmul.f32 %v9773, %v9773
    %v9888 = vmul.f32 %v9774, %v9774
    %v9889 = vmul.f32 %v9775, %v9775
    %v9890 = vmul.f32 %v9776, %v9776
    %v9891 = vmul.f32 %v9777, %v9777
    %v9892 = vsel %vm8679, %v9856, 0.0
    %v9893 = vsel %vm8679, %v9857, 0.0
    %v9894 = vadd.f32 %v9892, %v9893
    %v9895 = vsel %vm8679, %v9858, 0.0
    %v9896 = vadd.f32 %v9894, %v9895
    %v9897 = vsel %vm8679, %v9859, 0.0
    %v9898 = vadd.f32 %v9896, %v9897
    %v9899 = vsel %vm8679, %v9860, 0.0
    %v9900 = vadd.f32 %v9898, %v9899
    %v9901 = vsel %vm8679, %v9861, 0.0
    %v9902 = vadd.f32 %v9900, %v9901
    %v9903 = vsel %vm8679, %v9862, 0.0
    %v9904 = vadd.f32 %v9902, %v9903
    %v9905 = vsel %vm8679, %v9863, 0.0
    %v9906 = vadd.f32 %v9904, %v9905
    %v9907 = vsel %vm8679, %v9864, 0.0
    %v9908 = vadd.f32 %v9906, %v9907
    %v9909 = vsel %vm8679, %v9865, 0.0
    %v9910 = vadd.f32 %v9908, %v9909
    %v9911 = vsel %vm8679, %v9866, 0.0
    %v9912 = vadd.f32 %v9910, %v9911
    %v9913 = vsel %vm8679, %v9867, 0.0
    %v9914 = vadd.f32 %v9912, %v9913
    %v9915 = vsel %vm8679, %v9868, 0.0
    %v9916 = vadd.f32 %v9914, %v9915
    %v9917 = vsel %vm8679, %v9869, 0.0
    %v9918 = vadd.f32 %v9916, %v9917
    %v9919 = vsel %vm8679, %v9870, 0.0
    %v9920 = vadd.f32 %v9918, %v9919
    %v9921 = vsel %vm8679, %v9871, 0.0
    %v9922 = vadd.f32 %v9920, %v9921
    %v9923 = vsel %vm8679, %v9872, 0.0
    %v9924 = vadd.f32 %v9922, %v9923
    %v9925 = vsel %vm8679, %v9873, 0.0
    %v9926 = vadd.f32 %v9924, %v9925
    %v9927 = vsel %vm8679, %v9874, 0.0
    %v9928 = vadd.f32 %v9926, %v9927
    %v9929 = vsel %vm8679, %v9875, 0.0
    %v9930 = vadd.f32 %v9928, %v9929
    %v9931 = vsel %vm8679, %v9876, 0.0
    %v9932 = vadd.f32 %v9930, %v9931
    %v9933 = vsel %vm8679, %v9877, 0.0
    %v9934 = vadd.f32 %v9932, %v9933
    %v9935 = vsel %vm8679, %v9878, 0.0
    %v9936 = vadd.f32 %v9934, %v9935
    %v9937 = vsel %vm8679, %v9879, 0.0
    %v9938 = vadd.f32 %v9936, %v9937
    %v9939 = vsel %vm8679, %v9880, 0.0
    %v9940 = vadd.f32 %v9938, %v9939
    %v9941 = vsel %vm8679, %v9881, 0.0
    %v9942 = vadd.f32 %v9940, %v9941
    %v9943 = vsel %vm8679, %v9882, 0.0
    %v9944 = vadd.f32 %v9942, %v9943
    %v9945 = vsel %vm8679, %v9883, 0.0
    %v9946 = vadd.f32 %v9944, %v9945
    %v9947 = vsel %vm8679, %v9884, 0.0
    %v9948 = vadd.f32 %v9946, %v9947
    %v9949 = vsel %vm8679, %v9885, 0.0
    %v9950 = vadd.f32 %v9948, %v9949
    %v9951 = vsel %vm8679, %v9886, 0.0
    %v9952 = vadd.f32 %v9950, %v9951
    %v9953 = vsel %vm8679, %v9887, 0.0
    %v9954 = vadd.f32 %v9952, %v9953
    %v9955 = vsel %vm8679, %v9888, 0.0
    %v9956 = vadd.f32 %v9954, %v9955
    %v9957 = vsel %vm8679, %v9889, 0.0
    %v9958 = vadd.f32 %v9956, %v9957
    %v9959 = vsel %vm8679, %v9890, 0.0
    %v9960 = vadd.f32 %v9958, %v9959
    %v9961 = vsel %vm8679, %v9891, 0.0
    %v9962 = vadd.f32 %v9960, %v9961
    %v9963 = vrot.slane %v9962, 4
    %v9964 = vadd.f32 %v9962, %v9963
    %v9965 = vrot.slane %v9964, 2
    %v9966 = vadd.f32 %v9964, %v9965
    %v9967 = vrot.slane %v9966, 1
    %v9968 = vadd.f32 %v9966, %v9967
    %v9969 = vadd.f32 %v9420, %v9968
    %v9970 = vmul.f32 %v7852, %v8310
    %v9971 = vmul.f32 %v7853, %v8310
    %v9972 = vmul.f32 %v7854, %v8310
    %v9973 = vmul.f32 %v7855, %v8310
    %v9974 = vmul.f32 %v7856, %v8310
    %v9975 = vmul.f32 %v7857, %v8310
    %v9976 = vmul.f32 %v7858, %v8310
    %v9977 = vmul.f32 %v7859, %v8310
    %v9978 = vmul.f32 %v7860, %v8310
    %v9979 = vmul.f32 %v7861, %v8310
    %v9980 = vmul.f32 %v7862, %v8310
    %v9981 = vmul.f32 %v7863, %v8310
    %v9982 = vmul.f32 %v7864, %v8310
    %v9983 = vmul.f32 %v7865, %v8310
    %v9984 = vmul.f32 %v7866, %v8310
    %v9985 = vmul.f32 %v7867, %v8310
    %v9986 = vmul.f32 %v7868, %v8310
    %v9987 = vmul.f32 %v7869, %v8310
    %v9988 = vmul.f32 %v7870, %v8310
    %v9989 = vmul.f32 %v7871, %v8310
    %v9990 = vmul.f32 %v7872, %v8310
    %v9991 = vmul.f32 %v7873, %v8310
    %v9992 = vmul.f32 %v7874, %v8310
    %v9993 = vmul.f32 %v7875, %v8310
    %v9994 = vmul.f32 %v7876, %v8310
    %v9995 = vmul.f32 %v7877, %v8310
    %v9996 = vmul.f32 %v7878, %v8310
    %v9997 = vmul.f32 %v7879, %v8310
    %v9998 = vmul.f32 %v7880, %v8310
    %v9999 = vmul.f32 %v7881, %v8310
    %v10000 = vmul.f32 %v7882, %v8310
    %v10001 = vmul.f32 %v7883, %v8310
    %v10002 = vmul.f32 %v7884, %v8310
    %v10003 = vmul.f32 %v7885, %v8310
    %v10004 = vmul.f32 %v7886, %v8310
    %v10005 = vmul.f32 %v7887, %v8310
    %v10006 = vadd.f32 %v9970, %v8352
    %v10007 = vadd.f32 %v9971, %v8352
    %v10008 = vadd.f32 %v9972, %v8352
    %v10009 = vadd.f32 %v9973, %v8352
    %v10010 = vadd.f32 %v9974, %v8352
    %v10011 = vadd.f32 %v9975, %v8352
    %v10012 = vadd.f32 %v9976, %v8352
    %v10013 = vadd.f32 %v9977, %v8352
    %v10014 = vadd.f32 %v9978, %v8352
    %v10015 = vadd.f32 %v9979, %v8352
    %v10016 = vadd.f32 %v9980, %v8352
    %v10017 = vadd.f32 %v9981, %v8352
    %v10018 = vadd.f32 %v9982, %v8352
    %v10019 = vadd.f32 %v9983, %v8352
    %v10020 = vadd.f32 %v9984, %v8352
    %v10021 = vadd.f32 %v9985, %v8352
    %v10022 = vadd.f32 %v9986, %v8352
    %v10023 = vadd.f32 %v9987, %v8352
    %v10024 = vadd.f32 %v9988, %v8352
    %v10025 = vadd.f32 %v9989, %v8352
    %v10026 = vadd.f32 %v9990, %v8352
    %v10027 = vadd.f32 %v9991, %v8352
    %v10028 = vadd.f32 %v9992, %v8352
    %v10029 = vadd.f32 %v9993, %v8352
    %v10030 = vadd.f32 %v9994, %v8352
    %v10031 = vadd.f32 %v9995, %v8352
    %v10032 = vadd.f32 %v9996, %v8352
    %v10033 = vadd.f32 %v9997, %v8352
    %v10034 = vadd.f32 %v9998, %v8352
    %v10035 = vadd.f32 %v9999, %v8352
    %v10036 = vadd.f32 %v10000, %v8352
    %v10037 = vadd.f32 %v10001, %v8352
    %v10038 = vadd.f32 %v10002, %v8352
    %v10039 = vadd.f32 %v10003, %v8352
    %v10040 = vadd.f32 %v10004, %v8352
    %v10041 = vadd.f32 %v10005, %v8352
    %v10042 = vpack.c.bf16 %v10007, %v10006
    %v10043 = vpack.c.bf16 %v10009, %v10008
    %v10044 = vpack.c.bf16 %v10011, %v10010
    %v10045 = vpack.c.bf16 %v10013, %v10012
    %v10046 = vpack.c.bf16 %v10015, %v10014
    %v10047 = vpack.c.bf16 %v10017, %v10016
    %v10048 = vpack.c.bf16 %v10019, %v10018
    %v10049 = vpack.c.bf16 %v10021, %v10020
    %v10050 = vpack.c.bf16 %v10023, %v10022
    %v10051 = vpack.c.bf16 %v10025, %v10024
    %v10052 = vpack.c.bf16 %v10027, %v10026
    %v10053 = vpack.c.bf16 %v10029, %v10028
    %v10054 = vpack.c.bf16 %v10031, %v10030
    %v10055 = vpack.c.bf16 %v10033, %v10032
    %v10056 = vpack.c.bf16 %v10035, %v10034
    %v10057 = vpack.c.bf16 %v10037, %v10036
    %v10058 = vpack.c.bf16 %v10039, %v10038
    %v10059 = vpack.c.bf16 %v10041, %v10040
    %v10061 = vsel %vm1965, %v10042, 0
    %v10064 = vsel %vm1965, %v10043, 0
    %v10067 = vsel %vm1965, %v10044, 0
    %v10070 = vsel %vm1965, %v10045, 0
    %v10073 = vsel %vm1965, %v10046, 0
    %v10076 = vsel %vm1965, %v10047, 0
    %v10079 = vsel %vm1965, %v10048, 0
    %v10082 = vsel %vm1965, %v10049, 0
    %v10085 = vsel %vm1965, %v10050, 0
    %v10088 = vsel %vm1965, %v10051, 0
    %v10091 = vsel %vm1965, %v10052, 0
    %v10094 = vsel %vm1965, %v10053, 0
    %v10097 = vsel %vm1965, %v10054, 0
    %v10100 = vsel %vm1965, %v10055, 0
    %v10103 = vsel %vm1965, %v10056, 0
    %v10106 = vsel %vm1965, %v10057, 0
    %v10109 = vsel %vm1965, %v10058, 0
    %v10112 = vsel %vm1965, %v10059, 0
    %10114 = vmatprep.subr.bf16.mxu0 0
    %10115 = vmatpush1.bf16.msra.mxu0 %v8464
    %10116 = vmatprep.subr.bf16.mxu0 0
    %10117 = vmatpush1.bf16.msra.mxu0 0
    %10118 = vmatprep.subr.bf16.mxu0 0
    %10119 = vmatpush1.bf16.msra.mxu0 0
    %10120 = vmatprep.subr.bf16.mxu0 0
    %10121 = vmatpush1.bf16.msra.mxu0 0
    %10122 = vmatprep.subr.bf16.mxu0 0
    %10123 = vmatpush1.bf16.msra.mxu0 0
    %10124 = vmatprep.subr.bf16.mxu0 0
    %10125 = vmatpush1.bf16.msra.mxu0 0
    %10126 = vmatprep.subr.bf16.mxu0 0
    %10127 = vmatpush1.bf16.msra.mxu0 0
    %10128 = vmatprep.subr.bf16.mxu0 0
    %10129 = vmatpush1.bf16.msra.mxu0 0
    %10130 = vmatprep.subr.bf16.mxu0 0
    %10131 = vmatpush1.bf16.msra.mxu0 0
    %10132 = vmatprep.subr.bf16.mxu0 0
    %10133 = vmatpush1.bf16.msra.mxu0 0
    %10134 = vmatprep.subr.bf16.mxu0 0
    %10135 = vmatpush1.bf16.msra.mxu0 0
    %10136 = vmatprep.subr.bf16.mxu0 0
    %10137 = vmatpush1.bf16.msra.mxu0 0
    %10138 = vmatprep.subr.bf16.mxu0 0
    %10139 = vmatpush1.bf16.msra.mxu0 0
    %10140 = vmatprep.subr.bf16.mxu0 0
    %10141 = vmatpush1.bf16.msra.mxu0 0
    %10142 = vmatprep.subr.bf16.mxu0 0
    %10143 = vmatpush1.bf16.msra.mxu0 0
    %10144 = vmatprep.subr.bf16.mxu0 0
    %10145 = vmatpush1.bf16.msra.mxu0 0
    %10146 = vmatprep.mubr.bf16.mxu0 0
    %10147 = vmatmul.mubr.bf16.gmra.mrb[0].mxu0 %v10061
    %v10148 = vpop.f32.mrb[0].mxu0
    %v10149 = vadd.f32 0.0, %v10148
    %v10150 = vpop.f32.mrb[0].mxu0
    %v10151 = vpop.f32.mrb[0].mxu0
    %v10152 = vadd.f32 0.0, %v10151
    %v10153 = vpop.f32.mrb[0].mxu0
    %10154 = vmatprep.mubr.bf16.mxu0 0
    %10155 = vmatmul.mubr.bf16.gmra.mrb[0].mxu0 %v10064
    %v10156 = vpop.f32.mrb[0].mxu0
    %v10157 = vadd.f32 0.0, %v10156
    %v10158 = vpop.f32.mrb[0].mxu0
    %v10159 = vpop.f32.mrb[0].mxu0
    %v10160 = vadd.f32 0.0, %v10159
    %v10161 = vpop.f32.mrb[0].mxu0
    %10162 = vmatprep.mubr.bf16.mxu0 0
    %10163 = vmatmul.mubr.bf16.gmra.mrb[0].mxu0 %v10067
    %v10164 = vpop.f32.mrb[0].mxu0
    %v10165 = vadd.f32 0.0, %v10164
    %v10166 = vpop.f32.mrb[0].mxu0
    %v10167 = vpop.f32.mrb[0].mxu0
    %v10168 = vadd.f32 0.0, %v10167
    %v10169 = vpop.f32.mrb[0].mxu0
    %10170 = vmatprep.mubr.bf16.mxu0 0
    %10171 = vmatmul.mubr.bf16.gmra.mrb[0].mxu0 %v10070
    %v10172 = vpop.f32.mrb[0].mxu0
    %v10173 = vadd.f32 0.0, %v10172
    %v10174 = vpop.f32.mrb[0].mxu0
    %v10175 = vpop.f32.mrb[0].mxu0
    %v10176 = vadd.f32 0.0, %v10175
    %v10177 = vpop.f32.mrb[0].mxu0
    %10178 = vmatprep.mubr.bf16.mxu0 0
    %10179 = vmatmul.mubr.bf16.gmra.mrb[0].mxu0 %v10073
    %v10180 = vpop.f32.mrb[0].mxu0
    %v10181 = vadd.f32 0.0, %v10180
    %v10182 = vpop.f32.mrb[0].mxu0
    %v10183 = vpop.f32.mrb[0].mxu0
    %v10184 = vadd.f32 0.0, %v10183
    %v10185 = vpop.f32.mrb[0].mxu0
    %10186 = vmatprep.mubr.bf16.mxu0 0
    %10187 = vmatmul.mubr.bf16.gmra.mrb[0].mxu0 %v10076
    %v10188 = vpop.f32.mrb[0].mxu0
    %v10189 = vadd.f32 0.0, %v10188
    %v10190 = vpop.f32.mrb[0].mxu0
    %v10191 = vpop.f32.mrb[0].mxu0
    %v10192 = vadd.f32 0.0, %v10191
    %v10193 = vpop.f32.mrb[0].mxu0
    %10194 = vmatprep.mubr.bf16.mxu0 0
    %10195 = vmatmul.mubr.bf16.gmra.mrb[0].mxu0 %v10079
    %v10196 = vpop.f32.mrb[0].mxu0
    %v10197 = vadd.f32 0.0, %v10196
    %v10198 = vpop.f32.mrb[0].mxu0
    %v10199 = vpop.f32.mrb[0].mxu0
    %v10200 = vadd.f32 0.0, %v10199
    %v10201 = vpop.f32.mrb[0].mxu0
    %10202 = vmatprep.mubr.bf16.mxu0 0
    %10203 = vmatmul.mubr.bf16.gmra.mrb[0].mxu0 %v10082
    %v10204 = vpop.f32.mrb[0].mxu0
    %v10205 = vadd.f32 0.0, %v10204
    %v10206 = vpop.f32.mrb[0].mxu0
    %v10207 = vpop.f32.mrb[0].mxu0
    %v10208 = vadd.f32 0.0, %v10207
    %v10209 = vpop.f32.mrb[0].mxu0
    %10210 = vmatprep.mubr.bf16.mxu0 0
    %10211 = vmatmul.mubr.bf16.gmra.mrb[0].mxu0 %v10085
    %v10212 = vpop.f32.mrb[0].mxu0
    %v10213 = vadd.f32 0.0, %v10212
    %v10214 = vpop.f32.mrb[0].mxu0
    %v10215 = vpop.f32.mrb[0].mxu0
    %v10216 = vadd.f32 0.0, %v10215
    %v10217 = vpop.f32.mrb[0].mxu0
    %10218 = vmatprep.mubr.bf16.mxu0 0
    %10219 = vmatmul.mubr.bf16.gmra.mrb[0].mxu0 %v10088
    %v10220 = vpop.f32.mrb[0].mxu0
    %v10221 = vadd.f32 0.0, %v10220
    %v10222 = vpop.f32.mrb[0].mxu0
    %v10223 = vpop.f32.mrb[0].mxu0
    %v10224 = vadd.f32 0.0, %v10223
    %v10225 = vpop.f32.mrb[0].mxu0
    %10226 = vmatprep.mubr.bf16.mxu0 0
    %10227 = vmatmul.mubr.bf16.gmra.mrb[0].mxu0 %v10091
    %v10228 = vpop.f32.mrb[0].mxu0
    %v10229 = vadd.f32 0.0, %v10228
    %v10230 = vpop.f32.mrb[0].mxu0
    %v10231 = vpop.f32.mrb[0].mxu0
    %v10232 = vadd.f32 0.0, %v10231
    %v10233 = vpop.f32.mrb[0].mxu0
    %10234 = vmatprep.mubr.bf16.mxu0 0
    %10235 = vmatmul.mubr.bf16.gmra.mrb[0].mxu0 %v10094
    %v10236 = vpop.f32.mrb[0].mxu0
    %v10237 = vadd.f32 0.0, %v10236
    %v10238 = vpop.f32.mrb[0].mxu0
    %v10239 = vpop.f32.mrb[0].mxu0
    %v10240 = vadd.f32 0.0, %v10239
    %v10241 = vpop.f32.mrb[0].mxu0
    %10242 = vmatprep.mubr.bf16.mxu0 0
    %10243 = vmatmul.mubr.bf16.gmra.mrb[0].mxu0 %v10097
    %v10244 = vpop.f32.mrb[0].mxu0
    %v10245 = vadd.f32 0.0, %v10244
    %v10246 = vpop.f32.mrb[0].mxu0
    %v10247 = vpop.f32.mrb[0].mxu0
    %v10248 = vadd.f32 0.0, %v10247
    %v10249 = vpop.f32.mrb[0].mxu0
    %10250 = vmatprep.mubr.bf16.mxu0 0
    %10251 = vmatmul.mubr.bf16.gmra.mrb[0].mxu0 %v10100
    %v10252 = vpop.f32.mrb[0].mxu0
    %v10253 = vadd.f32 0.0, %v10252
    %v10254 = vpop.f32.mrb[0].mxu0
    %v10255 = vpop.f32.mrb[0].mxu0
    %v10256 = vadd.f32 0.0, %v10255
    %v10257 = vpop.f32.mrb[0].mxu0
    %10258 = vmatprep.mubr.bf16.mxu0 0
    %10259 = vmatmul.mubr.bf16.gmra.mrb[0].mxu0 %v10103
    %v10260 = vpop.f32.mrb[0].mxu0
    %v10261 = vadd.f32 0.0, %v10260
    %v10262 = vpop.f32.mrb[0].mxu0
    %v10263 = vpop.f32.mrb[0].mxu0
    %v10264 = vadd.f32 0.0, %v10263
    %v10265 = vpop.f32.mrb[0].mxu0
    %10266 = vmatprep.mubr.bf16.mxu0 0
    %10267 = vmatmul.mubr.bf16.gmra.mrb[0].mxu0 %v10106
    %v10268 = vpop.f32.mrb[0].mxu0
    %v10269 = vadd.f32 0.0, %v10268
    %v10270 = vpop.f32.mrb[0].mxu0
    %v10271 = vpop.f32.mrb[0].mxu0
    %v10272 = vadd.f32 0.0, %v10271
    %v10273 = vpop.f32.mrb[0].mxu0
    %10274 = vmatprep.mubr.bf16.mxu0 0
    %10275 = vmatmul.mubr.bf16.gmra.mrb[0].mxu0 %v10109
    %v10276 = vpop.f32.mrb[0].mxu0
    %v10277 = vadd.f32 0.0, %v10276
    %v10278 = vpop.f32.mrb[0].mxu0
    %v10279 = vpop.f32.mrb[0].mxu0
    %v10280 = vadd.f32 0.0, %v10279
    %v10281 = vpop.f32.mrb[0].mxu0
    %10282 = vmatprep.mubr.bf16.mxu0 0
    %10283 = vmatmul.mubr.bf16.gmra.mrb[0].mxu0 %v10112
    %v10284 = vpop.f32.mrb[0].mxu0
    %v10285 = vadd.f32 0.0, %v10284
    %v10286 = vpop.f32.mrb[0].mxu0
    %v10287 = vpop.f32.mrb[0].mxu0
    %v10288 = vadd.f32 0.0, %v10287
    %v10289 = vpop.f32.mrb[0].mxu0
    %10290 = vdwg.mxu0
    %v10291 = vmul.f32 %v10149, %v7891
    %v10292 = vmul.f32 %v10152, %v7896
    %v10293 = vmul.f32 %v10157, %v7901
    %v10294 = vmul.f32 %v10160, %v7906
    %v10295 = vmul.f32 %v10165, %v7911
    %v10296 = vmul.f32 %v10168, %v7916
    %v10297 = vmul.f32 %v10173, %v7921
    %v10298 = vmul.f32 %v10176, %v7926
    %v10299 = vmul.f32 %v10181, %v7931
    %v10300 = vmul.f32 %v10184, %v7936
    %v10301 = vmul.f32 %v10189, %v7941
    %v10302 = vmul.f32 %v10192, %v7946
    %v10303 = vmul.f32 %v10197, %v7951
    %v10304 = vmul.f32 %v10200, %v7956
    %v10305 = vmul.f32 %v10205, %v7961
    %v10306 = vmul.f32 %v10208, %v7966
    %v10307 = vmul.f32 %v10213, %v7971
    %v10308 = vmul.f32 %v10216, %v7976
    %v10309 = vmul.f32 %v10221, %v7981
    %v10310 = vmul.f32 %v10224, %v7986
    %v10311 = vmul.f32 %v10229, %v7991
    %v10312 = vmul.f32 %v10232, %v7996
    %v10313 = vmul.f32 %v10237, %v8001
    %v10314 = vmul.f32 %v10240, %v8006
    %v10315 = vmul.f32 %v10245, %v8011
    %v10316 = vmul.f32 %v10248, %v8016
    %v10317 = vmul.f32 %v10253, %v8021
    %v10318 = vmul.f32 %v10256, %v8026
    %v10319 = vmul.f32 %v10261, %v8031
    %v10320 = vmul.f32 %v10264, %v8036
    %v10321 = vmul.f32 %v10269, %v8041
    %v10322 = vmul.f32 %v10272, %v8046
    %v10323 = vmul.f32 %v10277, %v8051
    %v10324 = vmul.f32 %v10280, %v8056
    %v10325 = vmul.f32 %v10285, %v8061
    %v10326 = vmul.f32 %v10288, %v8066
    %v10327 = vsel %vm8679, %v10291, 0.0
    %v10328 = vsel %vm8679, %v10292, 0.0
    %v10329 = vadd.f32 %v10327, %v10328
    %v10330 = vsel %vm8679, %v10293, 0.0
    %v10331 = vadd.f32 %v10329, %v10330
    %v10332 = vsel %vm8679, %v10294, 0.0
    %v10333 = vadd.f32 %v10331, %v10332
    %v10334 = vsel %vm8679, %v10295, 0.0
    %v10335 = vadd.f32 %v10333, %v10334
    %v10336 = vsel %vm8679, %v10296, 0.0
    %v10337 = vadd.f32 %v10335, %v10336
    %v10338 = vsel %vm8679, %v10297, 0.0
    %v10339 = vadd.f32 %v10337, %v10338
    %v10340 = vsel %vm8679, %v10298, 0.0
    %v10341 = vadd.f32 %v10339, %v10340
    %v10342 = vsel %vm8679, %v10299, 0.0
    %v10343 = vadd.f32 %v10341, %v10342
    %v10344 = vsel %vm8679, %v10300, 0.0
    %v10345 = vadd.f32 %v10343, %v10344
    %v10346 = vsel %vm8679, %v10301, 0.0
    %v10347 = vadd.f32 %v10345, %v10346
    %v10348 = vsel %vm8679, %v10302, 0.0
    %v10349 = vadd.f32 %v10347, %v10348
    %v10350 = vsel %vm8679, %v10303, 0.0
    %v10351 = vadd.f32 %v10349, %v10350
    %v10352 = vsel %vm8679, %v10304, 0.0
    %v10353 = vadd.f32 %v10351, %v10352
    %v10354 = vsel %vm8679, %v10305, 0.0
    %v10355 = vadd.f32 %v10353, %v10354
    %v10356 = vsel %vm8679, %v10306, 0.0
    %v10357 = vadd.f32 %v10355, %v10356
    %v10358 = vsel %vm8679, %v10307, 0.0
    %v10359 = vadd.f32 %v10357, %v10358
    %v10360 = vsel %vm8679, %v10308, 0.0
    %v10361 = vadd.f32 %v10359, %v10360
    %v10362 = vsel %vm8679, %v10309, 0.0
    %v10363 = vadd.f32 %v10361, %v10362
    %v10364 = vsel %vm8679, %v10310, 0.0
    %v10365 = vadd.f32 %v10363, %v10364
    %v10366 = vsel %vm8679, %v10311, 0.0
    %v10367 = vadd.f32 %v10365, %v10366
    %v10368 = vsel %vm8679, %v10312, 0.0
    %v10369 = vadd.f32 %v10367, %v10368
    %v10370 = vsel %vm8679, %v10313, 0.0
    %v10371 = vadd.f32 %v10369, %v10370
    %v10372 = vsel %vm8679, %v10314, 0.0
    %v10373 = vadd.f32 %v10371, %v10372
    %v10374 = vsel %vm8679, %v10315, 0.0
    %v10375 = vadd.f32 %v10373, %v10374
    %v10376 = vsel %vm8679, %v10316, 0.0
    %v10377 = vadd.f32 %v10375, %v10376
    %v10378 = vsel %vm8679, %v10317, 0.0
    %v10379 = vadd.f32 %v10377, %v10378
    %v10380 = vsel %vm8679, %v10318, 0.0
    %v10381 = vadd.f32 %v10379, %v10380
    %v10382 = vsel %vm8679, %v10319, 0.0
    %v10383 = vadd.f32 %v10381, %v10382
    %v10384 = vsel %vm8679, %v10320, 0.0
    %v10385 = vadd.f32 %v10383, %v10384
    %v10386 = vsel %vm8679, %v10321, 0.0
    %v10387 = vadd.f32 %v10385, %v10386
    %v10388 = vsel %vm8679, %v10322, 0.0
    %v10389 = vadd.f32 %v10387, %v10388
    %v10390 = vsel %vm8679, %v10323, 0.0
    %v10391 = vadd.f32 %v10389, %v10390
    %v10392 = vsel %vm8679, %v10324, 0.0
    %v10393 = vadd.f32 %v10391, %v10392
    %v10394 = vsel %vm8679, %v10325, 0.0
    %v10395 = vadd.f32 %v10393, %v10394
    %v10396 = vsel %vm8679, %v10326, 0.0
    %v10397 = vadd.f32 %v10395, %v10396
    %v10398 = vrot.slane %v10397, 4
    %v10399 = vadd.f32 %v10397, %v10398
    %v10400 = vrot.slane %v10399, 2
    %v10401 = vadd.f32 %v10399, %v10400
    %v10402 = vrot.slane %v10401, 1
    %v10403 = vadd.f32 %v10401, %v10402
    %v10404 = vadd.f32 %v9855, %v10403
    %v10405 = vmul.f32 %v10291, %v10291
    %v10406 = vmul.f32 %v10292, %v10292
    %v10407 = vmul.f32 %v10293, %v10293
    %v10408 = vmul.f32 %v10294, %v10294
    %v10409 = vmul.f32 %v10295, %v10295
    %v10410 = vmul.f32 %v10296, %v10296
    %v10411 = vmul.f32 %v10297, %v10297
    %v10412 = vmul.f32 %v10298, %v10298
    %v10413 = vmul.f32 %v10299, %v10299
    %v10414 = vmul.f32 %v10300, %v10300
    %v10415 = vmul.f32 %v10301, %v10301
    %v10416 = vmul.f32 %v10302, %v10302
    %v10417 = vmul.f32 %v10303, %v10303
    %v10418 = vmul.f32 %v10304, %v10304
    %v10419 = vmul.f32 %v10305, %v10305
    %v10420 = vmul.f32 %v10306, %v10306
    %v10421 = vmul.f32 %v10307, %v10307
    %v10422 = vmul.f32 %v10308, %v10308
    %v10423 = vmul.f32 %v10309, %v10309
    %v10424 = vmul.f32 %v10310, %v10310
    %v10425 = vmul.f32 %v10311, %v10311
    %v10426 = vmul.f32 %v10312, %v10312
    %v10427 = vmul.f32 %v10313, %v10313
    %v10428 = vmul.f32 %v10314, %v10314
    %v10429 = vmul.f32 %v10315, %v10315
    %v10430 = vmul.f32 %v10316, %v10316
    %v10431 = vmul.f32 %v10317, %v10317
    %v10432 = vmul.f32 %v10318, %v10318
    %v10433 = vmul.f32 %v10319, %v10319
    %v10434 = vmul.f32 %v10320, %v10320
    %v10435 = vmul.f32 %v10321, %v10321
    %v10436 = vmul.f32 %v10322, %v10322
    %v10437 = vmul.f32 %v10323, %v10323
    %v10438 = vmul.f32 %v10324, %v10324
    %v10439 = vmul.f32 %v10325, %v10325
    %v10440 = vmul.f32 %v10326, %v10326
    %v10441 = vsel %vm8679, %v10405, 0.0
    %v10442 = vsel %vm8679, %v10406, 0.0
    %v10443 = vadd.f32 %v10441, %v10442
    %v10444 = vsel %vm8679, %v10407, 0.0
    %v10445 = vadd.f32 %v10443, %v10444
    %v10446 = vsel %vm8679, %v10408, 0.0
    %v10447 = vadd.f32 %v10445, %v10446
    %v10448 = vsel %vm8679, %v10409, 0.0
    %v10449 = vadd.f32 %v10447, %v10448
    %v10450 = vsel %vm8679, %v10410, 0.0
    %v10451 = vadd.f32 %v10449, %v10450
    %v10452 = vsel %vm8679, %v10411, 0.0
    %v10453 = vadd.f32 %v10451, %v10452
    %v10454 = vsel %vm8679, %v10412, 0.0
    %v10455 = vadd.f32 %v10453, %v10454
    %v10456 = vsel %vm8679, %v10413, 0.0
    %v10457 = vadd.f32 %v10455, %v10456
    %v10458 = vsel %vm8679, %v10414, 0.0
    %v10459 = vadd.f32 %v10457, %v10458
    %v10460 = vsel %vm8679, %v10415, 0.0
    %v10461 = vadd.f32 %v10459, %v10460
    %v10462 = vsel %vm8679, %v10416, 0.0
    %v10463 = vadd.f32 %v10461, %v10462
    %v10464 = vsel %vm8679, %v10417, 0.0
    %v10465 = vadd.f32 %v10463, %v10464
    %v10466 = vsel %vm8679, %v10418, 0.0
    %v10467 = vadd.f32 %v10465, %v10466
    %v10468 = vsel %vm8679, %v10419, 0.0
    %v10469 = vadd.f32 %v10467, %v10468
    %v10470 = vsel %vm8679, %v10420, 0.0
    %v10471 = vadd.f32 %v10469, %v10470
    %v10472 = vsel %vm8679, %v10421, 0.0
    %v10473 = vadd.f32 %v10471, %v10472
    %v10474 = vsel %vm8679, %v10422, 0.0
    %v10475 = vadd.f32 %v10473, %v10474
    %v10476 = vsel %vm8679, %v10423, 0.0
    %v10477 = vadd.f32 %v10475, %v10476
    %v10478 = vsel %vm8679, %v10424, 0.0
    %v10479 = vadd.f32 %v10477, %v10478
    %v10480 = vsel %vm8679, %v10425, 0.0
    %v10481 = vadd.f32 %v10479, %v10480
    %v10482 = vsel %vm8679, %v10426, 0.0
    %v10483 = vadd.f32 %v10481, %v10482
    %v10484 = vsel %vm8679, %v10427, 0.0
    %v10485 = vadd.f32 %v10483, %v10484
    %v10486 = vsel %vm8679, %v10428, 0.0
    %v10487 = vadd.f32 %v10485, %v10486
    %v10488 = vsel %vm8679, %v10429, 0.0
    %v10489 = vadd.f32 %v10487, %v10488
    %v10490 = vsel %vm8679, %v10430, 0.0
    %v10491 = vadd.f32 %v10489, %v10490
    %v10492 = vsel %vm8679, %v10431, 0.0
    %v10493 = vadd.f32 %v10491, %v10492
    %v10494 = vsel %vm8679, %v10432, 0.0
    %v10495 = vadd.f32 %v10493, %v10494
    %v10496 = vsel %vm8679, %v10433, 0.0
    %v10497 = vadd.f32 %v10495, %v10496
    %v10498 = vsel %vm8679, %v10434, 0.0
    %v10499 = vadd.f32 %v10497, %v10498
    %v10500 = vsel %vm8679, %v10435, 0.0
    %v10501 = vadd.f32 %v10499, %v10500
    %v10502 = vsel %vm8679, %v10436, 0.0
    %v10503 = vadd.f32 %v10501, %v10502
    %v10504 = vsel %vm8679, %v10437, 0.0
    %v10505 = vadd.f32 %v10503, %v10504
    %v10506 = vsel %vm8679, %v10438, 0.0
    %v10507 = vadd.f32 %v10505, %v10506
    %v10508 = vsel %vm8679, %v10439, 0.0
    %v10509 = vadd.f32 %v10507, %v10508
    %v10510 = vsel %vm8679, %v10440, 0.0
    %v10511 = vadd.f32 %v10509, %v10510
    %v10512 = vrot.slane %v10511, 4
    %v10513 = vadd.f32 %v10511, %v10512
    %v10514 = vrot.slane %v10513, 2
    %v10515 = vadd.f32 %v10513, %v10514
    %v10516 = vrot.slane %v10515, 1
    %v10517 = vadd.f32 %v10515, %v10516
    %v10518 = vadd.f32 %v9969, %v10517
    %v10519 = vmul.f32 %v10404, %v8296
    %v10520 = vmul.f32 %v10518, %v8296
    %v10521 = vmul.f32 %v10519, %v10519
    %v10522 = vsub.f32 %v10520, %v10521
    %v10523 = vadd.f32 %v10522, 1e-05
    %v10524 = vrsqrt.pop %v10523
    %v10525 = vmul.f32 %v457, %v10524
    %v10526 = vmul.f32 %v10519, %v10525
    %v10527 = vsub.f32 %v458, %v10526
    %v10529 = vlaneseq
    %v10530 = vshrl.u32 %v10529, 7
    %v10531 = vsub.s32 0, %v10530
    %v10532 = vrot.slane %v10525, %v10531
    %v10534 = vmul.f32 %v8501, %v10532
    %v10535 = vmul.f32 %v8504, %v10532
    %v10536 = vmul.f32 %v8509, %v10532
    %v10537 = vmul.f32 %v8512, %v10532
    %v10538 = vmul.f32 %v8517, %v10532
    %v10539 = vmul.f32 %v8520, %v10532
    %v10540 = vmul.f32 %v8525, %v10532
    %v10541 = vmul.f32 %v8528, %v10532
    %v10542 = vmul.f32 %v8533, %v10532
    %v10543 = vmul.f32 %v8536, %v10532
    %v10544 = vmul.f32 %v8541, %v10532
    %v10545 = vmul.f32 %v8544, %v10532
    %v10546 = vmul.f32 %v8549, %v10532
    %v10547 = vmul.f32 %v8552, %v10532
    %v10548 = vmul.f32 %v8557, %v10532
    %v10549 = vmul.f32 %v8560, %v10532
    %v10550 = vmul.f32 %v8565, %v10532
    %v10551 = vmul.f32 %v8568, %v10532
    %v10552 = vmul.f32 %v8573, %v10532
    %v10553 = vmul.f32 %v8576, %v10532
    %v10554 = vmul.f32 %v8581, %v10532
    %v10555 = vmul.f32 %v8584, %v10532
    %v10556 = vmul.f32 %v8589, %v10532
    %v10557 = vmul.f32 %v8592, %v10532
    %v10558 = vmul.f32 %v8597, %v10532
    %v10559 = vmul.f32 %v8600, %v10532
    %v10560 = vmul.f32 %v8605, %v10532
    %v10561 = vmul.f32 %v8608, %v10532
    %v10562 = vmul.f32 %v8613, %v10532
    %v10563 = vmul.f32 %v8616, %v10532
    %v10564 = vmul.f32 %v8621, %v10532
    %v10565 = vmul.f32 %v8624, %v10532
    %v10566 = vmul.f32 %v8629, %v10532
    %v10567 = vmul.f32 %v8632, %v10532
    %v10568 = vmul.f32 %v8637, %v10532
    %v10569 = vmul.f32 %v8640, %v10532
    %v10571 = vlaneseq
    %v10572 = vshrl.u32 %v10571, 7
    %v10573 = vsub.s32 0, %v10572
    %v10574 = vrot.slane %v10527, %v10573
    %v10576 = vadd.f32 %v10534, %v10574
    %v10577 = vadd.f32 %v10535, %v10574
    %v10578 = vadd.f32 %v10536, %v10574
    %v10579 = vadd.f32 %v10537, %v10574
    %v10580 = vadd.f32 %v10538, %v10574
    %v10581 = vadd.f32 %v10539, %v10574
    %v10582 = vadd.f32 %v10540, %v10574
    %v10583 = vadd.f32 %v10541, %v10574
    %v10584 = vadd.f32 %v10542, %v10574
    %v10585 = vadd.f32 %v10543, %v10574
    %v10586 = vadd.f32 %v10544, %v10574
    %v10587 = vadd.f32 %v10545, %v10574
    %v10588 = vadd.f32 %v10546, %v10574
    %v10589 = vadd.f32 %v10547, %v10574
    %v10590 = vadd.f32 %v10548, %v10574
    %v10591 = vadd.f32 %v10549, %v10574
    %v10592 = vadd.f32 %v10550, %v10574
    %v10593 = vadd.f32 %v10551, %v10574
    %v10594 = vadd.f32 %v10552, %v10574
    %v10595 = vadd.f32 %v10553, %v10574
    %v10596 = vadd.f32 %v10554, %v10574
    %v10597 = vadd.f32 %v10555, %v10574
    %v10598 = vadd.f32 %v10556, %v10574
    %v10599 = vadd.f32 %v10557, %v10574
    %v10600 = vadd.f32 %v10558, %v10574
    %v10601 = vadd.f32 %v10559, %v10574
    %v10602 = vadd.f32 %v10560, %v10574
    %v10603 = vadd.f32 %v10561, %v10574
    %v10604 = vadd.f32 %v10562, %v10574
    %v10605 = vadd.f32 %v10563, %v10574
    %v10606 = vadd.f32 %v10564, %v10574
    %v10607 = vadd.f32 %v10565, %v10574
    %v10608 = vadd.f32 %v10566, %v10574
    %v10609 = vadd.f32 %v10567, %v10574
    %v10610 = vadd.f32 %v10568, %v10574
    %v10611 = vadd.f32 %v10569, %v10574
    %v10612 = vmul.f32 %v10576, %v1752
    %v10613 = vmul.f32 %v10577, %v1757
    %v10614 = vmul.f32 %v10578, %v1762
    %v10615 = vmul.f32 %v10579, %v1767
    %v10616 = vmul.f32 %v10580, %v1772
    %v10617 = vmul.f32 %v10581, %v1777
    %v10618 = vmul.f32 %v10582, %v1782
    %v10619 = vmul.f32 %v10583, %v1787
    %v10620 = vmul.f32 %v10584, %v1792
    %v10621 = vmul.f32 %v10585, %v1797
    %v10622 = vmul.f32 %v10586, %v1802
    %v10623 = vmul.f32 %v10587, %v1807
    %v10624 = vmul.f32 %v10588, %v1812
    %v10625 = vmul.f32 %v10589, %v1817
    %v10626 = vmul.f32 %v10590, %v1822
    %v10627 = vmul.f32 %v10591, %v1827
    %v10628 = vmul.f32 %v10592, %v1832
    %v10629 = vmul.f32 %v10593, %v1837
    %v10630 = vmul.f32 %v10594, %v1842
    %v10631 = vmul.f32 %v10595, %v1847
    %v10632 = vmul.f32 %v10596, %v1852
    %v10633 = vmul.f32 %v10597, %v1857
    %v10634 = vmul.f32 %v10598, %v1862
    %v10635 = vmul.f32 %v10599, %v1867
    %v10636 = vmul.f32 %v10600, %v1872
    %v10637 = vmul.f32 %v10601, %v1877
    %v10638 = vmul.f32 %v10602, %v1882
    %v10639 = vmul.f32 %v10603, %v1887
    %v10640 = vmul.f32 %v10604, %v1892
    %v10641 = vmul.f32 %v10605, %v1897
    %v10642 = vmul.f32 %v10606, %v1902
    %v10643 = vmul.f32 %v10607, %v1907
    %v10644 = vmul.f32 %v10608, %v1912
    %v10645 = vmul.f32 %v10609, %v1917
    %v10646 = vmul.f32 %v10610, %v1922
    %v10647 = vmul.f32 %v10611, %v1927
    %v10648 = vmul.f32 %v10612, 1.442695
    %v10649 = vpow.pop %v10648
    %v10650 = vmul.f32 %v10613, 1.442695
    %v10651 = vpow.pop %v10650
    %v10652 = vmul.f32 %v10614, 1.442695
    %v10653 = vpow.pop %v10652
    %v10654 = vmul.f32 %v10615, 1.442695
    %v10655 = vpow.pop %v10654
    %v10656 = vmul.f32 %v10616, 1.442695
    %v10657 = vpow.pop %v10656
    %v10658 = vmul.f32 %v10617, 1.442695
    %v10659 = vpow.pop %v10658
    %v10660 = vmul.f32 %v10618, 1.442695
    %v10661 = vpow.pop %v10660
    %v10662 = vmul.f32 %v10619, 1.442695
    %v10663 = vpow.pop %v10662
    %v10664 = vmul.f32 %v10620, 1.442695
    %v10665 = vpow.pop %v10664
    %v10666 = vmul.f32 %v10621, 1.442695
    %v10667 = vpow.pop %v10666
    %v10668 = vmul.f32 %v10622, 1.442695
    %v10669 = vpow.pop %v10668
    %v10670 = vmul.f32 %v10623, 1.442695
    %v10671 = vpow.pop %v10670
    %v10672 = vmul.f32 %v10624, 1.442695
    %v10673 = vpow.pop %v10672
    %v10674 = vmul.f32 %v10625, 1.442695
    %v10675 = vpow.pop %v10674
    %v10676 = vmul.f32 %v10626, 1.442695
    %v10677 = vpow.pop %v10676
    %v10678 = vmul.f32 %v10627, 1.442695
    %v10679 = vpow.pop %v10678
    %v10680 = vmul.f32 %v10628, 1.442695
    %v10681 = vpow.pop %v10680
    %v10682 = vmul.f32 %v10629, 1.442695
    %v10683 = vpow.pop %v10682
    %v10684 = vmul.f32 %v10630, 1.442695
    %v10685 = vpow.pop %v10684
    %v10686 = vmul.f32 %v10631, 1.442695
    %v10687 = vpow.pop %v10686
    %v10688 = vmul.f32 %v10632, 1.442695
    %v10689 = vpow.pop %v10688
    %v10690 = vmul.f32 %v10633, 1.442695
    %v10691 = vpow.pop %v10690
    %v10692 = vmul.f32 %v10634, 1.442695
    %v10693 = vpow.pop %v10692
    %v10694 = vmul.f32 %v10635, 1.442695
    %v10695 = vpow.pop %v10694
    %v10696 = vmul.f32 %v10636, 1.442695
    %v10697 = vpow.pop %v10696
    %v10698 = vmul.f32 %v10637, 1.442695
    %v10699 = vpow.pop %v10698
    %v10700 = vmul.f32 %v10638, 1.442695
    %v10701 = vpow.pop %v10700
    %v10702 = vmul.f32 %v10639, 1.442695
    %v10703 = vpow.pop %v10702
    %v10704 = vmul.f32 %v10640, 1.442695
    %v10705 = vpow.pop %v10704
    %v10706 = vmul.f32 %v10641, 1.442695
    %v10707 = vpow.pop %v10706
    %v10708 = vmul.f32 %v10642, 1.442695
    %v10709 = vpow.pop %v10708
    %v10710 = vmul.f32 %v10643, 1.442695
    %v10711 = vpow.pop %v10710
    %v10712 = vmul.f32 %v10644, 1.442695
    %v10713 = vpow.pop %v10712
    %v10714 = vmul.f32 %v10645, 1.442695
    %v10715 = vpow.pop %v10714
    %v10716 = vmul.f32 %v10646, 1.442695
    %v10717 = vpow.pop %v10716
    %v10718 = vmul.f32 %v10647, 1.442695
    %v10719 = vpow.pop %v10718
    %v10720 = vtanh.pop %v10649
    %v10721 = vtanh.pop %v10651
    %v10722 = vtanh.pop %v10653
    %v10723 = vtanh.pop %v10655
    %v10724 = vtanh.pop %v10657
    %v10725 = vtanh.pop %v10659
    %v10726 = vtanh.pop %v10661
    %v10727 = vtanh.pop %v10663
    %v10728 = vtanh.pop %v10665
    %v10729 = vtanh.pop %v10667
    %v10730 = vtanh.pop %v10669
    %v10731 = vtanh.pop %v10671
    %v10732 = vtanh.pop %v10673
    %v10733 = vtanh.pop %v10675
    %v10734 = vtanh.pop %v10677
    %v10735 = vtanh.pop %v10679
    %v10736 = vtanh.pop %v10681
    %v10737 = vtanh.pop %v10683
    %v10738 = vtanh.pop %v10685
    %v10739 = vtanh.pop %v10687
    %v10740 = vtanh.pop %v10689
    %v10741 = vtanh.pop %v10691
    %v10742 = vtanh.pop %v10693
    %v10743 = vtanh.pop %v10695
    %v10744 = vtanh.pop %v10697
    %v10745 = vtanh.pop %v10699
    %v10746 = vtanh.pop %v10701
    %v10747 = vtanh.pop %v10703
    %v10748 = vtanh.pop %v10705
    %v10749 = vtanh.pop %v10707
    %v10750 = vtanh.pop %v10709
    %v10751 = vtanh.pop %v10711
    %v10752 = vtanh.pop %v10713
    %v10753 = vtanh.pop %v10715
    %v10754 = vtanh.pop %v10717
    %v10755 = vtanh.pop %v10719
    %v10756 = vmul.f32 %v10612, %v10720
    %v10757 = vmul.f32 %v10613, %v10721
    %v10758 = vmul.f32 %v10614, %v10722
    %v10759 = vmul.f32 %v10615, %v10723
    %v10760 = vmul.f32 %v10616, %v10724
    %v10761 = vmul.f32 %v10617, %v10725
    %v10762 = vmul.f32 %v10618, %v10726
    %v10763 = vmul.f32 %v10619, %v10727
    %v10764 = vmul.f32 %v10620, %v10728
    %v10765 = vmul.f32 %v10621, %v10729
    %v10766 = vmul.f32 %v10622, %v10730
    %v10767 = vmul.f32 %v10623, %v10731
    %v10768 = vmul.f32 %v10624, %v10732
    %v10769 = vmul.f32 %v10625, %v10733
    %v10770 = vmul.f32 %v10626, %v10734
    %v10771 = vmul.f32 %v10627, %v10735
    %v10772 = vmul.f32 %v10628, %v10736
    %v10773 = vmul.f32 %v10629, %v10737
    %v10774 = vmul.f32 %v10630, %v10738
    %v10775 = vmul.f32 %v10631, %v10739
    %v10776 = vmul.f32 %v10632, %v10740
    %v10777 = vmul.f32 %v10633, %v10741
    %v10778 = vmul.f32 %v10634, %v10742
    %v10779 = vmul.f32 %v10635, %v10743
    %v10780 = vmul.f32 %v10636, %v10744
    %v10781 = vmul.f32 %v10637, %v10745
    %v10782 = vmul.f32 %v10638, %v10746
    %v10783 = vmul.f32 %v10639, %v10747
    %v10784 = vmul.f32 %v10640, %v10748
    %v10785 = vmul.f32 %v10641, %v10749
    %v10786 = vmul.f32 %v10642, %v10750
    %v10787 = vmul.f32 %v10643, %v10751
    %v10788 = vmul.f32 %v10644, %v10752
    %v10789 = vmul.f32 %v10645, %v10753
    %v10790 = vmul.f32 %v10646, %v10754
    %v10791 = vmul.f32 %v10647, %v10755
    %v10792 = vmul.f32 %v9051, %v10532
    %v10793 = vmul.f32 %v9059, %v10532
    %v10794 = vmul.f32 %v9067, %v10532
    %v10795 = vmul.f32 %v9075, %v10532
    %v10796 = vmul.f32 %v9083, %v10532
    %v10797 = vmul.f32 %v9091, %v10532
    %v10798 = vmul.f32 %v9099, %v10532
    %v10799 = vmul.f32 %v9107, %v10532
    %v10800 = vmul.f32 %v9115, %v10532
    %v10801 = vmul.f32 %v9123, %v10532
    %v10802 = vmul.f32 %v9131, %v10532
    %v10803 = vmul.f32 %v9139, %v10532
    %v10804 = vmul.f32 %v9147, %v10532
    %v10805 = vmul.f32 %v9155, %v10532
    %v10806 = vmul.f32 %v9163, %v10532
    %v10807 = vmul.f32 %v9171, %v10532
    %v10808 = vmul.f32 %v9179, %v10532
    %v10809 = vmul.f32 %v9187, %v10532
    %v10810 = vadd.f32 %v10792, %v10574
    %v10811 = vadd.f32 %v10793, %v10574
    %v10812 = vadd.f32 %v10794, %v10574
    %v10813 = vadd.f32 %v10795, %v10574
    %v10814 = vadd.f32 %v10796, %v10574
    %v10815 = vadd.f32 %v10797, %v10574
    %v10816 = vadd.f32 %v10798, %v10574
    %v10817 = vadd.f32 %v10799, %v10574
    %v10818 = vadd.f32 %v10800, %v10574
    %v10819 = vadd.f32 %v10801, %v10574
    %v10820 = vadd.f32 %v10802, %v10574
    %v10821 = vadd.f32 %v10803, %v10574
    %v10822 = vadd.f32 %v10804, %v10574
    %v10823 = vadd.f32 %v10805, %v10574
    %v10824 = vadd.f32 %v10806, %v10574
    %v10825 = vadd.f32 %v10807, %v10574
    %v10826 = vadd.f32 %v10808, %v10574
    %v10827 = vadd.f32 %v10809, %v10574
    %v10828 = vmul.f32 %v10810, %v3997
    %v10829 = vmul.f32 %v10811, %v4007
    %v10830 = vmul.f32 %v10812, %v4017
    %v10831 = vmul.f32 %v10813, %v4027
    %v10832 = vmul.f32 %v10814, %v4037
    %v10833 = vmul.f32 %v10815, %v4047
    %v10834 = vmul.f32 %v10816, %v4057
    %v10835 = vmul.f32 %v10817, %v4067
    %v10836 = vmul.f32 %v10818, %v4077
    %v10837 = vmul.f32 %v10819, %v4087
    %v10838 = vmul.f32 %v10820, %v4097
    %v10839 = vmul.f32 %v10821, %v4107
    %v10840 = vmul.f32 %v10822, %v4117
    %v10841 = vmul.f32 %v10823, %v4127
    %v10842 = vmul.f32 %v10824, %v4137
    %v10843 = vmul.f32 %v10825, %v4147
    %v10844 = vmul.f32 %v10826, %v4157
    %v10845 = vmul.f32 %v10827, %v4167
    %v10846 = vmul.f32 %v10828, 1.442695
    %v10847 = vpow.pop %v10846
    %v10848 = vmul.f32 %v10829, 1.442695
    %v10849 = vpow.pop %v10848
    %v10850 = vmul.f32 %v10830, 1.442695
    %v10851 = vpow.pop %v10850
    %v10852 = vmul.f32 %v10831, 1.442695
    %v10853 = vpow.pop %v10852
    %v10854 = vmul.f32 %v10832, 1.442695
    %v10855 = vpow.pop %v10854
    %v10856 = vmul.f32 %v10833, 1.442695
    %v10857 = vpow.pop %v10856
    %v10858 = vmul.f32 %v10834, 1.442695
    %v10859 = vpow.pop %v10858
    %v10860 = vmul.f32 %v10835, 1.442695
    %v10861 = vpow.pop %v10860
    %v10862 = vmul.f32 %v10836, 1.442695
    %v10863 = vpow.pop %v10862
    %v10864 = vmul.f32 %v10837, 1.442695
    %v10865 = vpow.pop %v10864
    %v10866 = vmul.f32 %v10838, 1.442695
    %v10867 = vpow.pop %v10866
    %v10868 = vmul.f32 %v10839, 1.442695
    %v10869 = vpow.pop %v10868
    %v10870 = vmul.f32 %v10840, 1.442695
    %v10871 = vpow.pop %v10870
    %v10872 = vmul.f32 %v10841, 1.442695
    %v10873 = vpow.pop %v10872
    %v10874 = vmul.f32 %v10842, 1.442695
    %v10875 = vpow.pop %v10874
    %v10876 = vmul.f32 %v10843, 1.442695
    %v10877 = vpow.pop %v10876
    %v10878 = vmul.f32 %v10844, 1.442695
    %v10879 = vpow.pop %v10878
    %v10880 = vmul.f32 %v10845, 1.442695
    %v10881 = vpow.pop %v10880
    %v10882 = vtanh.pop %v10847
    %v10883 = vtanh.pop %v10849
    %v10884 = vtanh.pop %v10851
    %v10885 = vtanh.pop %v10853
    %v10886 = vtanh.pop %v10855
    %v10887 = vtanh.pop %v10857
    %v10888 = vtanh.pop %v10859
    %v10889 = vtanh.pop %v10861
    %v10890 = vtanh.pop %v10863
    %v10891 = vtanh.pop %v10865
    %v10892 = vtanh.pop %v10867
    %v10893 = vtanh.pop %v10869
    %v10894 = vtanh.pop %v10871
    %v10895 = vtanh.pop %v10873
    %v10896 = vtanh.pop %v10875
    %v10897 = vtanh.pop %v10877
    %v10898 = vtanh.pop %v10879
    %v10899 = vtanh.pop %v10881
    %v10900 = vmul.f32 %v10828, %v10882
    %v10901 = vmul.f32 %v10829, %v10883
    %v10902 = vmul.f32 %v10830, %v10884
    %v10903 = vmul.f32 %v10831, %v10885
    %v10904 = vmul.f32 %v10832, %v10886
    %v10905 = vmul.f32 %v10833, %v10887
    %v10906 = vmul.f32 %v10834, %v10888
    %v10907 = vmul.f32 %v10835, %v10889
    %v10908 = vmul.f32 %v10836, %v10890
    %v10909 = vmul.f32 %v10837, %v10891
    %v10910 = vmul.f32 %v10838, %v10892
    %v10911 = vmul.f32 %v10839, %v10893
    %v10912 = vmul.f32 %v10840, %v10894
    %v10913 = vmul.f32 %v10841, %v10895
    %v10914 = vmul.f32 %v10842, %v10896
    %v10915 = vmul.f32 %v10843, %v10897
    %v10916 = vmul.f32 %v10844, %v10898
    %v10917 = vmul.f32 %v10845, %v10899
    %v10918 = vmul.f32 %v9600, %v10532
    %v10919 = vmul.f32 %v9603, %v10532
    %v10920 = vmul.f32 %v9608, %v10532
    %v10921 = vmul.f32 %v9611, %v10532
    %v10922 = vmul.f32 %v9616, %v10532
    %v10923 = vmul.f32 %v9619, %v10532
    %v10924 = vmul.f32 %v9624, %v10532
    %v10925 = vmul.f32 %v9627, %v10532
    %v10926 = vmul.f32 %v9632, %v10532
    %v10927 = vmul.f32 %v9635, %v10532
    %v10928 = vmul.f32 %v9640, %v10532
    %v10929 = vmul.f32 %v9643, %v10532
    %v10930 = vmul.f32 %v9648, %v10532
    %v10931 = vmul.f32 %v9651, %v10532
    %v10932 = vmul.f32 %v9656, %v10532
    %v10933 = vmul.f32 %v9659, %v10532
    %v10934 = vmul.f32 %v9672, %v10532
    %v10935 = vmul.f32 %v9675, %v10532
    %v10936 = vmul.f32 %v9680, %v10532
    %v10937 = vmul.f32 %v9683, %v10532
    %v10938 = vmul.f32 %v9688, %v10532
    %v10939 = vmul.f32 %v9691, %v10532
    %v10940 = vmul.f32 %v9696, %v10532
    %v10941 = vmul.f32 %v9699, %v10532
    %v10942 = vmul.f32 %v9704, %v10532
    %v10943 = vmul.f32 %v9707, %v10532
    %v10944 = vmul.f32 %v9712, %v10532
    %v10945 = vmul.f32 %v9715, %v10532
    %v10946 = vmul.f32 %v9720, %v10532
    %v10947 = vmul.f32 %v9723, %v10532
    %v10948 = vmul.f32 %v9728, %v10532
    %v10949 = vmul.f32 %v9731, %v10532
    %v10950 = vadd.f32 %v10918, %v10574
    %v10951 = vadd.f32 %v10919, %v10574
    %v10952 = vadd.f32 %v10920, %v10574
    %v10953 = vadd.f32 %v10921, %v10574
    %v10954 = vadd.f32 %v10922, %v10574
    %v10955 = vadd.f32 %v10923, %v10574
    %v10956 = vadd.f32 %v10924, %v10574
    %v10957 = vadd.f32 %v10925, %v10574
    %v10958 = vadd.f32 %v10926, %v10574
    %v10959 = vadd.f32 %v10927, %v10574
    %v10960 = vadd.f32 %v10928, %v10574
    %v10961 = vadd.f32 %v10929, %v10574
    %v10962 = vadd.f32 %v10930, %v10574
    %v10963 = vadd.f32 %v10931, %v10574
    %v10964 = vadd.f32 %v10932, %v10574
    %v10965 = vadd.f32 %v10933, %v10574
    %v10966 = vadd.f32 %v10934, %v10574
    %v10967 = vadd.f32 %v10935, %v10574
    %v10968 = vadd.f32 %v10936, %v10574
    %v10969 = vadd.f32 %v10937, %v10574
    %v10970 = vadd.f32 %v10938, %v10574
    %v10971 = vadd.f32 %v10939, %v10574
    %v10972 = vadd.f32 %v10940, %v10574
    %v10973 = vadd.f32 %v10941, %v10574
    %v10974 = vadd.f32 %v10942, %v10574
    %v10975 = vadd.f32 %v10943, %v10574
    %v10976 = vadd.f32 %v10944, %v10574
    %v10977 = vadd.f32 %v10945, %v10574
    %v10978 = vadd.f32 %v10946, %v10574
    %v10979 = vadd.f32 %v10947, %v10574
    %v10980 = vadd.f32 %v10948, %v10574
    %v10981 = vadd.f32 %v10949, %v10574
    %v10982 = vmul.f32 %v10950, %v5647
    %v10983 = vmul.f32 %v10951, %v5652
    %v10984 = vmul.f32 %v10952, %v5657
    %v10985 = vmul.f32 %v10953, %v5662
    %v10986 = vmul.f32 %v10954, %v5667
    %v10987 = vmul.f32 %v10955, %v5672
    %v10988 = vmul.f32 %v10956, %v5677
    %v10989 = vmul.f32 %v10957, %v5682
    %v10990 = vmul.f32 %v10958, %v5687
    %v10991 = vmul.f32 %v10959, %v5692
    %v10992 = vmul.f32 %v10960, %v5697
    %v10993 = vmul.f32 %v10961, %v5702
    %v10994 = vmul.f32 %v10962, %v5707
    %v10995 = vmul.f32 %v10963, %v5712
    %v10996 = vmul.f32 %v10964, %v5717
    %v10997 = vmul.f32 %v10965, %v5722
    %v10998 = vmul.f32 %v10966, %v5737
    %v10999 = vmul.f32 %v10967, %v5742
    %v11000 = vmul.f32 %v10968, %v5747
    %v11001 = vmul.f32 %v10969, %v5752
    %v11002 = vmul.f32 %v10970, %v5757
    %v11003 = vmul.f32 %v10971, %v5762
    %v11004 = vmul.f32 %v10972, %v5767
    %v11005 = vmul.f32 %v10973, %v5772
    %v11006 = vmul.f32 %v10974, %v5777
    %v11007 = vmul.f32 %v10975, %v5782
    %v11008 = vmul.f32 %v10976, %v5787
    %v11009 = vmul.f32 %v10977, %v5792
    %v11010 = vmul.f32 %v10978, %v5797
    %v11011 = vmul.f32 %v10979, %v5802
    %v11012 = vmul.f32 %v10980, %v5807
    %v11013 = vmul.f32 %v10981, %v5812
    %v11014 = vmul.f32 %v10982, 1.442695
    %v11015 = vpow.pop %v11014
    %v11016 = vmul.f32 %v10983, 1.442695
    %v11017 = vpow.pop %v11016
    %v11018 = vmul.f32 %v10984, 1.442695
    %v11019 = vpow.pop %v11018
    %v11020 = vmul.f32 %v10985, 1.442695
    %v11021 = vpow.pop %v11020
    %v11022 = vmul.f32 %v10986, 1.442695
    %v11023 = vpow.pop %v11022
    %v11024 = vmul.f32 %v10987, 1.442695
    %v11025 = vpow.pop %v11024
    %v11026 = vmul.f32 %v10988, 1.442695
    %v11027 = vpow.pop %v11026
    %v11028 = vmul.f32 %v10989, 1.442695
    %v11029 = vpow.pop %v11028
    %v11030 = vmul.f32 %v10990, 1.442695
    %v11031 = vpow.pop %v11030
    %v11032 = vmul.f32 %v10991, 1.442695
    %v11033 = vpow.pop %v11032
    %v11034 = vmul.f32 %v10992, 1.442695
    %v11035 = vpow.pop %v11034
    %v11036 = vmul.f32 %v10993, 1.442695
    %v11037 = vpow.pop %v11036
    %v11038 = vmul.f32 %v10994, 1.442695
    %v11039 = vpow.pop %v11038
    %v11040 = vmul.f32 %v10995, 1.442695
    %v11041 = vpow.pop %v11040
    %v11042 = vmul.f32 %v10996, 1.442695
    %v11043 = vpow.pop %v11042
    %v11044 = vmul.f32 %v10997, 1.442695
    %v11045 = vpow.pop %v11044
    %v11046 = vmul.f32 %v10998, 1.442695
    %v11047 = vpow.pop %v11046
    %v11048 = vmul.f32 %v10999, 1.442695
    %v11049 = vpow.pop %v11048
    %v11050 = vmul.f32 %v11000, 1.442695
    %v11051 = vpow.pop %v11050
    %v11052 = vmul.f32 %v11001, 1.442695
    %v11053 = vpow.pop %v11052
    %v11054 = vmul.f32 %v11002, 1.442695
    %v11055 = vpow.pop %v11054
    %v11056 = vmul.f32 %v11003, 1.442695
    %v11057 = vpow.pop %v11056
    %v11058 = vmul.f32 %v11004, 1.442695
    %v11059 = vpow.pop %v11058
    %v11060 = vmul.f32 %v11005, 1.442695
    %v11061 = vpow.pop %v11060
    %v11062 = vmul.f32 %v11006, 1.442695
    %v11063 = vpow.pop %v11062
    %v11064 = vmul.f32 %v11007, 1.442695
    %v11065 = vpow.pop %v11064
    %v11066 = vmul.f32 %v11008, 1.442695
    %v11067 = vpow.pop %v11066
    %v11068 = vmul.f32 %v11009, 1.442695
    %v11069 = vpow.pop %v11068
    %v11070 = vmul.f32 %v11010, 1.442695
    %v11071 = vpow.pop %v11070
    %v11072 = vmul.f32 %v11011, 1.442695
    %v11073 = vpow.pop %v11072
    %v11074 = vmul.f32 %v11012, 1.442695
    %v11075 = vpow.pop %v11074
    %v11076 = vmul.f32 %v11013, 1.442695
    %v11077 = vpow.pop %v11076
    %v11078 = vtanh.pop %v11015
    %v11079 = vtanh.pop %v11017
    %v11080 = vtanh.pop %v11019
    %v11081 = vtanh.pop %v11021
    %v11082 = vtanh.pop %v11023
    %v11083 = vtanh.pop %v11025
    %v11084 = vtanh.pop %v11027
    %v11085 = vtanh.pop %v11029
    %v11086 = vtanh.pop %v11031
    %v11087 = vtanh.pop %v11033
    %v11088 = vtanh.pop %v11035
    %v11089 = vtanh.pop %v11037
    %v11090 = vtanh.pop %v11039
    %v11091 = vtanh.pop %v11041
    %v11092 = vtanh.pop %v11043
    %v11093 = vtanh.pop %v11045
    %v11094 = vtanh.pop %v11047
    %v11095 = vtanh.pop %v11049
    %v11096 = vtanh.pop %v11051
    %v11097 = vtanh.pop %v11053
    %v11098 = vtanh.pop %v11055
    %v11099 = vtanh.pop %v11057
    %v11100 = vtanh.pop %v11059
    %v11101 = vtanh.pop %v11061
    %v11102 = vtanh.pop %v11063
    %v11103 = vtanh.pop %v11065
    %v11104 = vtanh.pop %v11067
    %v11105 = vtanh.pop %v11069
    %v11106 = vtanh.pop %v11071
    %v11107 = vtanh.pop %v11073
    %v11108 = vtanh.pop %v11075
    %v11109 = vtanh.pop %v11077
    %v11110 = vmul.f32 %v10982, %v11078
    %v11111 = vmul.f32 %v10983, %v11079
    %v11112 = vmul.f32 %v10984, %v11080
    %v11113 = vmul.f32 %v10985, %v11081
    %v11114 = vmul.f32 %v10986, %v11082
    %v11115 = vmul.f32 %v10987, %v11083
    %v11116 = vmul.f32 %v10988, %v11084
    %v11117 = vmul.f32 %v10989, %v11085
    %v11118 = vmul.f32 %v10990, %v11086
    %v11119 = vmul.f32 %v10991, %v11087
    %v11120 = vmul.f32 %v10992, %v11088
    %v11121 = vmul.f32 %v10993, %v11089
    %v11122 = vmul.f32 %v10994, %v11090
    %v11123 = vmul.f32 %v10995, %v11091
    %v11124 = vmul.f32 %v10996, %v11092
    %v11125 = vmul.f32 %v10997, %v11093
    %v11126 = vmul.f32 %v10998, %v11094
    %v11127 = vmul.f32 %v10999, %v11095
    %v11128 = vmul.f32 %v11000, %v11096
    %v11129 = vmul.f32 %v11001, %v11097
    %v11130 = vmul.f32 %v11002, %v11098
    %v11131 = vmul.f32 %v11003, %v11099
    %v11132 = vmul.f32 %v11004, %v11100
    %v11133 = vmul.f32 %v11005, %v11101
    %v11134 = vmul.f32 %v11006, %v11102
    %v11135 = vmul.f32 %v11007, %v11103
    %v11136 = vmul.f32 %v11008, %v11104
    %v11137 = vmul.f32 %v11009, %v11105
    %v11138 = vmul.f32 %v11010, %v11106
    %v11139 = vmul.f32 %v11011, %v11107
    %v11140 = vmul.f32 %v11012, %v11108
    %v11141 = vmul.f32 %v11013, %v11109
    %v11142 = vmul.f32 %v10149, %v10532
    %v11143 = vmul.f32 %v10157, %v10532
    %v11144 = vmul.f32 %v10165, %v10532
    %v11145 = vmul.f32 %v10173, %v10532
    %v11146 = vmul.f32 %v10181, %v10532
    %v11147 = vmul.f32 %v10189, %v10532
    %v11148 = vmul.f32 %v10197, %v10532
    %v11149 = vmul.f32 %v10205, %v10532
    %v11150 = vmul.f32 %v10221, %v10532
    %v11151 = vmul.f32 %v10229, %v10532
    %v11152 = vmul.f32 %v10237, %v10532
    %v11153 = vmul.f32 %v10245, %v10532
    %v11154 = vmul.f32 %v10253, %v10532
    %v11155 = vmul.f32 %v10261, %v10532
    %v11156 = vmul.f32 %v10269, %v10532
    %v11157 = vmul.f32 %v10277, %v10532
    %v11158 = vadd.f32 %v11142, %v10574
    %v11159 = vadd.f32 %v11143, %v10574
    %v11160 = vadd.f32 %v11144, %v10574
    %v11161 = vadd.f32 %v11145, %v10574
    %v11162 = vadd.f32 %v11146, %v10574
    %v11163 = vadd.f32 %v11147, %v10574
    %v11164 = vadd.f32 %v11148, %v10574
    %v11165 = vadd.f32 %v11149, %v10574
    %v11166 = vadd.f32 %v11150, %v10574
    %v11167 = vadd.f32 %v11151, %v10574
    %v11168 = vadd.f32 %v11152, %v10574
    %v11169 = vadd.f32 %v11153, %v10574
    %v11170 = vadd.f32 %v11154, %v10574
    %v11171 = vadd.f32 %v11155, %v10574
    %v11172 = vadd.f32 %v11156, %v10574
    %v11173 = vadd.f32 %v11157, %v10574
    %v11174 = vmul.f32 %v11158, %v7891
    %v11175 = vmul.f32 %v11159, %v7901
    %v11176 = vmul.f32 %v11160, %v7911
    %v11177 = vmul.f32 %v11161, %v7921
    %v11178 = vmul.f32 %v11162, %v7931
    %v11179 = vmul.f32 %v11163, %v7941
    %v11180 = vmul.f32 %v11164, %v7951
    %v11181 = vmul.f32 %v11165, %v7961
    %v11182 = vmul.f32 %v11166, %v7981
    %v11183 = vmul.f32 %v11167, %v7991
    %v11184 = vmul.f32 %v11168, %v8001
    %v11185 = vmul.f32 %v11169, %v8011
    %v11186 = vmul.f32 %v11170, %v8021
    %v11187 = vmul.f32 %v11171, %v8031
    %v11188 = vmul.f32 %v11172, %v8041
    %v11189 = vmul.f32 %v11173, %v8051
    %v11190 = vmul.f32 %v11174, 1.442695
    %v11191 = vpow.pop %v11190
    %v11192 = vmul.f32 %v11175, 1.442695
    %v11193 = vpow.pop %v11192
    %v11194 = vmul.f32 %v11176, 1.442695
    %v11195 = vpow.pop %v11194
    %v11196 = vmul.f32 %v11177, 1.442695
    %v11197 = vpow.pop %v11196
    %v11198 = vmul.f32 %v11178, 1.442695
    %v11199 = vpow.pop %v11198
    %v11200 = vmul.f32 %v11179, 1.442695
    %v11201 = vpow.pop %v11200
    %v11202 = vmul.f32 %v11180, 1.442695
    %v11203 = vpow.pop %v11202
    %v11204 = vmul.f32 %v11181, 1.442695
    %v11205 = vpow.pop %v11204
    %v11206 = vmul.f32 %v11182, 1.442695
    %v11207 = vpow.pop %v11206
    %v11208 = vmul.f32 %v11183, 1.442695
    %v11209 = vpow.pop %v11208
    %v11210 = vmul.f32 %v11184, 1.442695
    %v11211 = vpow.pop %v11210
    %v11212 = vmul.f32 %v11185, 1.442695
    %v11213 = vpow.pop %v11212
    %v11214 = vmul.f32 %v11186, 1.442695
    %v11215 = vpow.pop %v11214
    %v11216 = vmul.f32 %v11187, 1.442695
    %v11217 = vpow.pop %v11216
    %v11218 = vmul.f32 %v11188, 1.442695
    %v11219 = vpow.pop %v11218
    %v11220 = vmul.f32 %v11189, 1.442695
    %v11221 = vpow.pop %v11220
    %v11222 = vtanh.pop %v11191
    %v11223 = vtanh.pop %v11193
    %v11224 = vtanh.pop %v11195
    %v11225 = vtanh.pop %v11197
    %v11226 = vtanh.pop %v11199
    %v11227 = vtanh.pop %v11201
    %v11228 = vtanh.pop %v11203
    %v11229 = vtanh.pop %v11205
    %v11230 = vtanh.pop %v11207
    %v11231 = vtanh.pop %v11209
    %v11232 = vtanh.pop %v11211
    %v11233 = vtanh.pop %v11213
    %v11234 = vtanh.pop %v11215
    %v11235 = vtanh.pop %v11217
    %v11236 = vtanh.pop %v11219
    %v11237 = vtanh.pop %v11221
    %v11238 = vmul.f32 %v11174, %v11222
    %v11239 = vmul.f32 %v11175, %v11223
    %v11240 = vmul.f32 %v11176, %v11224
    %v11241 = vmul.f32 %v11177, %v11225
    %v11242 = vmul.f32 %v11178, %v11226
    %v11243 = vmul.f32 %v11179, %v11227
    %v11244 = vmul.f32 %v11180, %v11228
    %v11245 = vmul.f32 %v11181, %v11229
    %v11246 = vmul.f32 %v11182, %v11230
    %v11247 = vmul.f32 %v11183, %v11231
    %v11248 = vmul.f32 %v11184, %v11232
    %v11249 = vmul.f32 %v11185, %v11233
    %v11250 = vmul.f32 %v11186, %v11234
    %v11251 = vmul.f32 %v11187, %v11235
    %v11252 = vmul.f32 %v11188, %v11236
    %v11253 = vmul.f32 %v11189, %v11237
    %v11254 = vlaneseq
    %v11255 = vshrl.u32 %v11254, 7
    %v11256 = vsub.s32 0, %v11255
    %v11257 = vrot.slane %v459, %v11256
    %v11258 = vmul.f32 %v10756, %v11257
    %v11259 = vmul.f32 %v10758, %v11257
    %v11260 = vmul.f32 %v10760, %v11257
    %v11261 = vmul.f32 %v10762, %v11257
    %v11262 = vmul.f32 %v10764, %v11257
    %v11263 = vmul.f32 %v10766, %v11257
    %v11264 = vmul.f32 %v10768, %v11257
    %v11265 = vmul.f32 %v10770, %v11257
    %v11266 = vmul.f32 %v10774, %v11257
    %v11267 = vmul.f32 %v10776, %v11257
    %v11268 = vmul.f32 %v10778, %v11257
    %v11269 = vmul.f32 %v10780, %v11257
    %v11270 = vmul.f32 %v10782, %v11257
    %v11271 = vmul.f32 %v10784, %v11257
    %v11272 = vmul.f32 %v10786, %v11257
    %v11273 = vmul.f32 %v10788, %v11257
    %v11274 = vadd.f32 %v11258, 0.0
    %v11275 = vadd.f32 %v11259, 0.0
    %v11276 = vadd.f32 %v11260, 0.0
    %v11277 = vadd.f32 %v11261, 0.0
    %v11278 = vadd.f32 %v11262, 0.0
    %v11279 = vadd.f32 %v11263, 0.0
    %v11280 = vadd.f32 %v11264, 0.0
    %v11281 = vadd.f32 %v11265, 0.0
    %v11282 = vadd.f32 %v11266, 0.0
    %v11283 = vadd.f32 %v11267, 0.0
    %v11284 = vadd.f32 %v11268, 0.0
    %v11285 = vadd.f32 %v11269, 0.0
    %v11286 = vadd.f32 %v11270, 0.0
    %v11287 = vadd.f32 %v11271, 0.0
    %v11288 = vadd.f32 %v11272, 0.0
    %v11289 = vadd.f32 %v11273, 0.0
    %v11290 = vlaneseq
    %v11291 = vshrl.u32 %v11290, 7
    %v11292 = vsub.s32 0, %v11291
    %v11293 = vrot.slane %v460, %v11292
    %v11294 = vmul.f32 %v11110, %v11293
    %v11295 = vmul.f32 %v11112, %v11293
    %v11296 = vmul.f32 %v11114, %v11293
    %v11297 = vmul.f32 %v11116, %v11293
    %v11298 = vmul.f32 %v11118, %v11293
    %v11299 = vmul.f32 %v11120, %v11293
    %v11300 = vmul.f32 %v11122, %v11293
    %v11301 = vmul.f32 %v11124, %v11293
    %v11302 = vmul.f32 %v11126, %v11293
    %v11303 = vmul.f32 %v11128, %v11293
    %v11304 = vmul.f32 %v11130, %v11293
    %v11305 = vmul.f32 %v11132, %v11293
    %v11306 = vmul.f32 %v11134, %v11293
    %v11307 = vmul.f32 %v11136, %v11293
    %v11308 = vmul.f32 %v11138, %v11293
    %v11309 = vmul.f32 %v11140, %v11293
    %v11310 = vadd.f32 %v11274, %v11294
    %v11311 = vadd.f32 %v11275, %v11295
    %v11312 = vadd.f32 %v11276, %v11296
    %v11313 = vadd.f32 %v11277, %v11297
    %v11314 = vadd.f32 %v11278, %v11298
    %v11315 = vadd.f32 %v11279, %v11299
    %v11316 = vadd.f32 %v11280, %v11300
    %v11317 = vadd.f32 %v11281, %v11301
    %v11318 = vadd.f32 %v11282, %v11302
    %v11319 = vadd.f32 %v11283, %v11303
    %v11320 = vadd.f32 %v11284, %v11304
    %v11321 = vadd.f32 %v11285, %v11305
    %v11322 = vadd.f32 %v11286, %v11306
    %v11323 = vadd.f32 %v11287, %v11307
    %v11324 = vadd.f32 %v11288, %v11308
    %v11325 = vadd.f32 %v11289, %v11309
    %v11326 = vlaneseq
    %v11327 = vshrl.u32 %v11326, 7
    %v11328 = vsub.s32 0, %v11327
    %v11329 = vrot.slane %v461, %v11328
    %v11330 = vmul.f32 %v10758, %v11329
    %v11331 = vmul.f32 %v10760, %v11329
    %v11332 = vmul.f32 %v10762, %v11329
    %v11333 = vmul.f32 %v10764, %v11329
    %v11334 = vmul.f32 %v10766, %v11329
    %v11335 = vmul.f32 %v10768, %v11329
    %v11336 = vmul.f32 %v10770, %v11329
    %v11337 = vmul.f32 %v10772, %v11329
    %v11338 = vmul.f32 %v10776, %v11329
    %v11339 = vmul.f32 %v10778, %v11329
    %v11340 = vmul.f32 %v10780, %v11329
    %v11341 = vmul.f32 %v10782, %v11329
    %v11342 = vmul.f32 %v10784, %v11329
    %v11343 = vmul.f32 %v10786, %v11329
    %v11344 = vmul.f32 %v10788, %v11329
    %v11345 = vmul.f32 %v10790, %v11329
    %v11346 = vadd.f32 %v11310, %v11330
    %v11347 = vadd.f32 %v11311, %v11331
    %v11348 = vadd.f32 %v11312, %v11332
    %v11349 = vadd.f32 %v11313, %v11333
    %v11350 = vadd.f32 %v11314, %v11334
    %v11351 = vadd.f32 %v11315, %v11335
    %v11352 = vadd.f32 %v11316, %v11336
    %v11353 = vadd.f32 %v11317, %v11337
    %v11354 = vadd.f32 %v11318, %v11338
    %v11355 = vadd.f32 %v11319, %v11339
    %v11356 = vadd.f32 %v11320, %v11340
    %v11357 = vadd.f32 %v11321, %v11341
    %v11358 = vadd.f32 %v11322, %v11342
    %v11359 = vadd.f32 %v11323, %v11343
    %v11360 = vadd.f32 %v11324, %v11344
    %v11361 = vadd.f32 %v11325, %v11345
    %v11362 = vlaneseq
    %v11363 = vshrl.u32 %v11362, 7
    %v11364 = vsub.s32 1, %v11363
    %v11365 = vrot.slane %v459, %v11364
    %v11366 = vmul.f32 %v10900, %v11365
    %v11367 = vmul.f32 %v10901, %v11365
    %v11368 = vmul.f32 %v10902, %v11365
    %v11369 = vmul.f32 %v10903, %v11365
    %v11370 = vmul.f32 %v10904, %v11365
    %v11371 = vmul.f32 %v10905, %v11365
    %v11372 = vmul.f32 %v10906, %v11365
    %v11373 = vmul.f32 %v10907, %v11365
    %v11374 = vmul.f32 %v10909, %v11365
    %v11375 = vmul.f32 %v10910, %v11365
    %v11376 = vmul.f32 %v10911, %v11365
    %v11377 = vmul.f32 %v10912, %v11365
    %v11378 = vmul.f32 %v10913, %v11365
    %v11379 = vmul.f32 %v10914, %v11365
    %v11380 = vmul.f32 %v10915, %v11365
    %v11381 = vmul.f32 %v10916, %v11365
    %v11382 = vadd.f32 %v11346, %v11366
    %v11383 = vadd.f32 %v11347, %v11367
    %v11384 = vadd.f32 %v11348, %v11368
    %v11385 = vadd.f32 %v11349, %v11369
    %v11386 = vadd.f32 %v11350, %v11370
    %v11387 = vadd.f32 %v11351, %v11371
    %v11388 = vadd.f32 %v11352, %v11372
    %v11389 = vadd.f32 %v11353, %v11373
    %v11390 = vadd.f32 %v11354, %v11374
    %v11391 = vadd.f32 %v11355, %v11375
    %v11392 = vadd.f32 %v11356, %v11376
    %v11393 = vadd.f32 %v11357, %v11377
    %v11394 = vadd.f32 %v11358, %v11378
    %v11395 = vadd.f32 %v11359, %v11379
    %v11396 = vadd.f32 %v11360, %v11380
    %v11397 = vadd.f32 %v11361, %v11381
    %v11398 = vlaneseq
    %v11399 = vshrl.u32 %v11398, 7
    %v11400 = vsub.s32 1, %v11399
    %v11401 = vrot.slane %v460, %v11400
    %v11402 = vmul.f32 %v11238, %v11401
    %v11403 = vmul.f32 %v11239, %v11401
    %v11404 = vmul.f32 %v11240, %v11401
    %v11405 = vmul.f32 %v11241, %v11401
    %v11406 = vmul.f32 %v11242, %v11401
    %v11407 = vmul.f32 %v11243, %v11401
    %v11408 = vmul.f32 %v11244, %v11401
    %v11409 = vmul.f32 %v11245, %v11401
    %v11410 = vmul.f32 %v11246, %v11401
    %v11411 = vmul.f32 %v11247, %v11401
    %v11412 = vmul.f32 %v11248, %v11401
    %v11413 = vmul.f32 %v11249, %v11401
    %v11414 = vmul.f32 %v11250, %v11401
    %v11415 = vmul.f32 %v11251, %v11401
    %v11416 = vmul.f32 %v11252, %v11401
    %v11417 = vmul.f32 %v11253, %v11401
    %v11418 = vadd.f32 %v11382, %v11402
    %v11419 = vadd.f32 %v11383, %v11403
    %v11420 = vadd.f32 %v11384, %v11404
    %v11421 = vadd.f32 %v11385, %v11405
    %v11422 = vadd.f32 %v11386, %v11406
    %v11423 = vadd.f32 %v11387, %v11407
    %v11424 = vadd.f32 %v11388, %v11408
    %v11425 = vadd.f32 %v11389, %v11409
    %v11426 = vadd.f32 %v11390, %v11410
    %v11427 = vadd.f32 %v11391, %v11411
    %v11428 = vadd.f32 %v11392, %v11412
    %v11429 = vadd.f32 %v11393, %v11413
    %v11430 = vadd.f32 %v11394, %v11414
    %v11431 = vadd.f32 %v11395, %v11415
    %v11432 = vadd.f32 %v11396, %v11416
    %v11433 = vadd.f32 %v11397, %v11417
    %v11434 = vlaneseq
    %v11435 = vshrl.u32 %v11434, 7
    %v11436 = vsub.s32 1, %v11435
    %v11437 = vrot.slane %v461, %v11436
    %v11438 = vmul.f32 %v10901, %v11437
    %v11439 = vmul.f32 %v10902, %v11437
    %v11440 = vmul.f32 %v10903, %v11437
    %v11441 = vmul.f32 %v10904, %v11437
    %v11442 = vmul.f32 %v10905, %v11437
    %v11443 = vmul.f32 %v10906, %v11437
    %v11444 = vmul.f32 %v10907, %v11437
    %v11445 = vmul.f32 %v10908, %v11437
    %v11446 = vmul.f32 %v10910, %v11437
    %v11447 = vmul.f32 %v10911, %v11437
    %v11448 = vmul.f32 %v10912, %v11437
    %v11449 = vmul.f32 %v10913, %v11437
    %v11450 = vmul.f32 %v10914, %v11437
    %v11451 = vmul.f32 %v10915, %v11437
    %v11452 = vmul.f32 %v10916, %v11437
    %v11453 = vmul.f32 %v10917, %v11437
    %v11454 = vadd.f32 %v11418, %v11438
    %v11455 = vadd.f32 %v11419, %v11439
    %v11456 = vadd.f32 %v11420, %v11440
    %v11457 = vadd.f32 %v11421, %v11441
    %v11458 = vadd.f32 %v11422, %v11442
    %v11459 = vadd.f32 %v11423, %v11443
    %v11460 = vadd.f32 %v11424, %v11444
    %v11461 = vadd.f32 %v11425, %v11445
    %v11462 = vadd.f32 %v11426, %v11446
    %v11463 = vadd.f32 %v11427, %v11447
    %v11464 = vadd.f32 %v11428, %v11448
    %v11465 = vadd.f32 %v11429, %v11449
    %v11466 = vadd.f32 %v11430, %v11450
    %v11467 = vadd.f32 %v11431, %v11451
    %v11468 = vadd.f32 %v11432, %v11452
    %v11469 = vadd.f32 %v11433, %v11453
    %v11470 = vlaneseq
    %v11471 = vshrl.u32 %v11470, 7
    %v11472 = vsub.s32 2, %v11471
    %v11473 = vrot.slane %v459, %v11472
    %v11474 = vmul.f32 %v10756, %v11473
    %v11475 = vmul.f32 %v10757, %v11473
    %v11476 = vmul.f32 %v10758, %v11473
    %v11477 = vmul.f32 %v10759, %v11473
    %v11478 = vmul.f32 %v10760, %v11473
    %v11479 = vmul.f32 %v10761, %v11473
    %v11480 = vmul.f32 %v10762, %v11473
    %v11481 = vmul.f32 %v10763, %v11473
    %v11482 = vmul.f32 %v10764, %v11473
    %v11483 = vmul.f32 %v10765, %v11473
    %v11484 = vmul.f32 %v10766, %v11473
    %v11485 = vmul.f32 %v10767, %v11473
    %v11486 = vmul.f32 %v10768, %v11473
    %v11487 = vmul.f32 %v10769, %v11473
    %v11488 = vmul.f32 %v10770, %v11473
    %v11489 = vmul.f32 %v10771, %v11473
    %v11490 = vmul.f32 %v10774, %v11473
    %v11491 = vmul.f32 %v10775, %v11473
    %v11492 = vmul.f32 %v10776, %v11473
    %v11493 = vmul.f32 %v10777, %v11473
    %v11494 = vmul.f32 %v10778, %v11473
    %v11495 = vmul.f32 %v10779, %v11473
    %v11496 = vmul.f32 %v10780, %v11473
    %v11497 = vmul.f32 %v10781, %v11473
    %v11498 = vmul.f32 %v10782, %v11473
    %v11499 = vmul.f32 %v10783, %v11473
    %v11500 = vmul.f32 %v10784, %v11473
    %v11501 = vmul.f32 %v10785, %v11473
    %v11502 = vmul.f32 %v10786, %v11473
    %v11503 = vmul.f32 %v10787, %v11473
    %v11504 = vmul.f32 %v10788, %v11473
    %v11505 = vmul.f32 %v10789, %v11473
    %v11538 = vrot.slane %v11474, 1
    %v11539 = vrot.slane %v11475, 1
    %v11540 = vsel %vm1038, %v11538, %v11539
    %v11541 = vrot.slane %v11476, 1
    %v11542 = vrot.slane %v11477, 1
    %v11543 = vsel %vm1038, %v11541, %v11542
    %v11544 = vrot.slane %v11478, 1
    %v11545 = vrot.slane %v11479, 1
    %v11546 = vsel %vm1038, %v11544, %v11545
    %v11547 = vrot.slane %v11480, 1
    %v11548 = vrot.slane %v11481, 1
    %v11549 = vsel %vm1038, %v11547, %v11548
    %v11550 = vrot.slane %v11482, 1
    %v11551 = vrot.slane %v11483, 1
    %v11552 = vsel %vm1038, %v11550, %v11551
    %v11553 = vrot.slane %v11484, 1
    %v11554 = vrot.slane %v11485, 1
    %v11555 = vsel %vm1038, %v11553, %v11554
    %v11556 = vrot.slane %v11486, 1
    %v11557 = vrot.slane %v11487, 1
    %v11558 = vsel %vm1038, %v11556, %v11557
    %v11559 = vrot.slane %v11488, 1
    %v11560 = vrot.slane %v11489, 1
    %v11561 = vsel %vm1038, %v11559, %v11560
    %v11562 = vrot.slane %v11490, 1
    %v11563 = vrot.slane %v11491, 1
    %v11564 = vsel %vm1038, %v11562, %v11563
    %v11565 = vrot.slane %v11492, 1
    %v11566 = vrot.slane %v11493, 1
    %v11567 = vsel %vm1038, %v11565, %v11566
    %v11568 = vrot.slane %v11494, 1
    %v11569 = vrot.slane %v11495, 1
    %v11570 = vsel %vm1038, %v11568, %v11569
    %v11571 = vrot.slane %v11496, 1
    %v11572 = vrot.slane %v11497, 1
    %v11573 = vsel %vm1038, %v11571, %v11572
    %v11574 = vrot.slane %v11498, 1
    %v11575 = vrot.slane %v11499, 1
    %v11576 = vsel %vm1038, %v11574, %v11575
    %v11577 = vrot.slane %v11500, 1
    %v11578 = vrot.slane %v11501, 1
    %v11579 = vsel %vm1038, %v11577, %v11578
    %v11580 = vrot.slane %v11502, 1
    %v11581 = vrot.slane %v11503, 1
    %v11582 = vsel %vm1038, %v11580, %v11581
    %v11583 = vrot.slane %v11504, 1
    %v11584 = vrot.slane %v11505, 1
    %v11585 = vsel %vm1038, %v11583, %v11584
    %v11602 = vadd.f32 %v11454, %v11540
    %v11603 = vadd.f32 %v11455, %v11543
    %v11604 = vadd.f32 %v11456, %v11546
    %v11605 = vadd.f32 %v11457, %v11549
    %v11606 = vadd.f32 %v11458, %v11552
    %v11607 = vadd.f32 %v11459, %v11555
    %v11608 = vadd.f32 %v11460, %v11558
    %v11609 = vadd.f32 %v11461, %v11561
    %v11610 = vadd.f32 %v11462, %v11564
    %v11611 = vadd.f32 %v11463, %v11567
    %v11612 = vadd.f32 %v11464, %v11570
    %v11613 = vadd.f32 %v11465, %v11573
    %v11614 = vadd.f32 %v11466, %v11576
    %v11615 = vadd.f32 %v11467, %v11579
    %v11616 = vadd.f32 %v11468, %v11582
    %v11617 = vadd.f32 %v11469, %v11585
    %v11618 = vlaneseq
    %v11619 = vshrl.u32 %v11618, 7
    %v11620 = vsub.s32 2, %v11619
    %v11621 = vrot.slane %v460, %v11620
    %v11622 = vmul.f32 %v11110, %v11621
    %v11623 = vmul.f32 %v11111, %v11621
    %v11624 = vmul.f32 %v11112, %v11621
    %v11625 = vmul.f32 %v11113, %v11621
    %v11626 = vmul.f32 %v11114, %v11621
    %v11627 = vmul.f32 %v11115, %v11621
    %v11628 = vmul.f32 %v11116, %v11621
    %v11629 = vmul.f32 %v11117, %v11621
    %v11630 = vmul.f32 %v11118, %v11621
    %v11631 = vmul.f32 %v11119, %v11621
    %v11632 = vmul.f32 %v11120, %v11621
    %v11633 = vmul.f32 %v11121, %v11621
    %v11634 = vmul.f32 %v11122, %v11621
    %v11635 = vmul.f32 %v11123, %v11621
    %v11636 = vmul.f32 %v11124, %v11621
    %v11637 = vmul.f32 %v11125, %v11621
    %v11638 = vmul.f32 %v11126, %v11621
    %v11639 = vmul.f32 %v11127, %v11621
    %v11640 = vmul.f32 %v11128, %v11621
    %v11641 = vmul.f32 %v11129, %v11621
    %v11642 = vmul.f32 %v11130, %v11621
    %v11643 = vmul.f32 %v11131, %v11621
    %v11644 = vmul.f32 %v11132, %v11621
    %v11645 = vmul.f32 %v11133, %v11621
    %v11646 = vmul.f32 %v11134, %v11621
    %v11647 = vmul.f32 %v11135, %v11621
    %v11648 = vmul.f32 %v11136, %v11621
    %v11649 = vmul.f32 %v11137, %v11621
    %v11650 = vmul.f32 %v11138, %v11621
    %v11651 = vmul.f32 %v11139, %v11621
    %v11652 = vmul.f32 %v11140, %v11621
    %v11653 = vmul.f32 %v11141, %v11621
    %v11686 = vrot.slane %v11622, 1
    %v11687 = vrot.slane %v11623, 1
    %v11688 = vsel %vm1038, %v11686, %v11687
    %v11689 = vrot.slane %v11624, 1
    %v11690 = vrot.slane %v11625, 1
    %v11691 = vsel %vm1038, %v11689, %v11690
    %v11692 = vrot.slane %v11626, 1
    %v11693 = vrot.slane %v11627, 1
    %v11694 = vsel %vm1038, %v11692, %v11693
    %v11695 = vrot.slane %v11628, 1
    %v11696 = vrot.slane %v11629, 1
    %v11697 = vsel %vm1038, %v11695, %v11696
    %v11698 = vrot.slane %v11630, 1
    %v11699 = vrot.slane %v11631, 1
    %v11700 = vsel %vm1038, %v11698, %v11699
    %v11701 = vrot.slane %v11632, 1
    %v11702 = vrot.slane %v11633, 1
    %v11703 = vsel %vm1038, %v11701, %v11702
    %v11704 = vrot.slane %v11634, 1
    %v11705 = vrot.slane %v11635, 1
    %v11706 = vsel %vm1038, %v11704, %v11705
    %v11707 = vrot.slane %v11636, 1
    %v11708 = vrot.slane %v11637, 1
    %v11709 = vsel %vm1038, %v11707, %v11708
    %v11710 = vrot.slane %v11638, 1
    %v11711 = vrot.slane %v11639, 1
    %v11712 = vsel %vm1038, %v11710, %v11711
    %v11713 = vrot.slane %v11640, 1
    %v11714 = vrot.slane %v11641, 1
    %v11715 = vsel %vm1038, %v11713, %v11714
    %v11716 = vrot.slane %v11642, 1
    %v11717 = vrot.slane %v11643, 1
    %v11718 = vsel %vm1038, %v11716, %v11717
    %v11719 = vrot.slane %v11644, 1
    %v11720 = vrot.slane %v11645, 1
    %v11721 = vsel %vm1038, %v11719, %v11720
    %v11722 = vrot.slane %v11646, 1
    %v11723 = vrot.slane %v11647, 1
    %v11724 = vsel %vm1038, %v11722, %v11723
    %v11725 = vrot.slane %v11648, 1
    %v11726 = vrot.slane %v11649, 1
    %v11727 = vsel %vm1038, %v11725, %v11726
    %v11728 = vrot.slane %v11650, 1
    %v11729 = vrot.slane %v11651, 1
    %v11730 = vsel %vm1038, %v11728, %v11729
    %v11731 = vrot.slane %v11652, 1
    %v11732 = vrot.slane %v11653, 1
    %v11733 = vsel %vm1038, %v11731, %v11732
    %v11750 = vadd.f32 %v11602, %v11688
    %v11751 = vadd.f32 %v11603, %v11691
    %v11752 = vadd.f32 %v11604, %v11694
    %v11753 = vadd.f32 %v11605, %v11697
    %v11754 = vadd.f32 %v11606, %v11700
    %v11755 = vadd.f32 %v11607, %v11703
    %v11756 = vadd.f32 %v11608, %v11706
    %v11757 = vadd.f32 %v11609, %v11709
    %v11758 = vadd.f32 %v11610, %v11712
    %v11759 = vadd.f32 %v11611, %v11715
    %v11760 = vadd.f32 %v11612, %v11718
    %v11761 = vadd.f32 %v11613, %v11721
    %v11762 = vadd.f32 %v11614, %v11724
    %v11763 = vadd.f32 %v11615, %v11727
    %v11764 = vadd.f32 %v11616, %v11730
    %v11765 = vadd.f32 %v11617, %v11733
    %v11766 = vlaneseq
    %v11767 = vshrl.u32 %v11766, 7
    %v11768 = vsub.s32 2, %v11767
    %v11769 = vrot.slane %v461, %v11768
    %v11770 = vmul.f32 %v10758, %v11769
    %v11771 = vmul.f32 %v10759, %v11769
    %v11772 = vmul.f32 %v10760, %v11769
    %v11773 = vmul.f32 %v10761, %v11769
    %v11774 = vmul.f32 %v10762, %v11769
    %v11775 = vmul.f32 %v10763, %v11769
    %v11776 = vmul.f32 %v10764, %v11769
    %v11777 = vmul.f32 %v10765, %v11769
    %v11778 = vmul.f32 %v10766, %v11769
    %v11779 = vmul.f32 %v10767, %v11769
    %v11780 = vmul.f32 %v10768, %v11769
    %v11781 = vmul.f32 %v10769, %v11769
    %v11782 = vmul.f32 %v10770, %v11769
    %v11783 = vmul.f32 %v10771, %v11769
    %v11784 = vmul.f32 %v10772, %v11769
    %v11785 = vmul.f32 %v10773, %v11769
    %v11786 = vmul.f32 %v10776, %v11769
    %v11787 = vmul.f32 %v10777, %v11769
    %v11788 = vmul.f32 %v10778, %v11769
    %v11789 = vmul.f32 %v10779, %v11769
    %v11790 = vmul.f32 %v10780, %v11769
    %v11791 = vmul.f32 %v10781, %v11769
    %v11792 = vmul.f32 %v10782, %v11769
    %v11793 = vmul.f32 %v10783, %v11769
    %v11794 = vmul.f32 %v10784, %v11769
    %v11795 = vmul.f32 %v10785, %v11769
    %v11796 = vmul.f32 %v10786, %v11769
    %v11797 = vmul.f32 %v10787, %v11769
    %v11798 = vmul.f32 %v10788, %v11769
    %v11799 = vmul.f32 %v10789, %v11769
    %v11800 = vmul.f32 %v10790, %v11769
    %v11801 = vmul.f32 %v10791, %v11769
    %v11834 = vrot.slane %v11770, 1
    %v11835 = vrot.slane %v11771, 1
    %v11836 = vsel %vm1038, %v11834, %v11835
    %v11837 = vrot.slane %v11772, 1
    %v11838 = vrot.slane %v11773, 1
    %v11839 = vsel %vm1038, %v11837, %v11838
    %v11840 = vrot.slane %v11774, 1
    %v11841 = vrot.slane %v11775, 1
    %v11842 = vsel %vm1038, %v11840, %v11841
    %v11843 = vrot.slane %v11776, 1
    %v11844 = vrot.slane %v11777, 1
    %v11845 = vsel %vm1038, %v11843, %v11844
    %v11846 = vrot.slane %v11778, 1
    %v11847 = vrot.slane %v11779, 1
    %v11848 = vsel %vm1038, %v11846, %v11847
    %v11849 = vrot.slane %v11780, 1
    %v11850 = vrot.slane %v11781, 1
    %v11851 = vsel %vm1038, %v11849, %v11850
    %v11852 = vrot.slane %v11782, 1
    %v11853 = vrot.slane %v11783, 1
    %v11854 = vsel %vm1038, %v11852, %v11853
    %v11855 = vrot.slane %v11784, 1
    %v11856 = vrot.slane %v11785, 1
    %v11857 = vsel %vm1038, %v11855, %v11856
    %v11858 = vrot.slane %v11786, 1
    %v11859 = vrot.slane %v11787, 1
    %v11860 = vsel %vm1038, %v11858, %v11859
    %v11861 = vrot.slane %v11788, 1
    %v11862 = vrot.slane %v11789, 1
    %v11863 = vsel %vm1038, %v11861, %v11862
    %v11864 = vrot.slane %v11790, 1
    %v11865 = vrot.slane %v11791, 1
    %v11866 = vsel %vm1038, %v11864, %v11865
    %v11867 = vrot.slane %v11792, 1
    %v11868 = vrot.slane %v11793, 1
    %v11869 = vsel %vm1038, %v11867, %v11868
    %v11870 = vrot.slane %v11794, 1
    %v11871 = vrot.slane %v11795, 1
    %v11872 = vsel %vm1038, %v11870, %v11871
    %v11873 = vrot.slane %v11796, 1
    %v11874 = vrot.slane %v11797, 1
    %v11875 = vsel %vm1038, %v11873, %v11874
    %v11876 = vrot.slane %v11798, 1
    %v11877 = vrot.slane %v11799, 1
    %v11878 = vsel %vm1038, %v11876, %v11877
    %v11879 = vrot.slane %v11800, 1
    %v11880 = vrot.slane %v11801, 1
    %v11881 = vsel %vm1038, %v11879, %v11880
    %v11898 = vadd.f32 %v11750, %v11836
    %v11899 = vadd.f32 %v11751, %v11839
    %v11900 = vadd.f32 %v11752, %v11842
    %v11901 = vadd.f32 %v11753, %v11845
    %v11902 = vadd.f32 %v11754, %v11848
    %v11903 = vadd.f32 %v11755, %v11851
    %v11904 = vadd.f32 %v11756, %v11854
    %v11905 = vadd.f32 %v11757, %v11857
    %v11906 = vadd.f32 %v11758, %v11860
    %v11907 = vadd.f32 %v11759, %v11863
    %v11908 = vadd.f32 %v11760, %v11866
    %v11909 = vadd.f32 %v11761, %v11869
    %v11910 = vadd.f32 %v11762, %v11872
    %v11911 = vadd.f32 %v11763, %v11875
    %v11912 = vadd.f32 %v11764, %v11878
    %v11913 = vadd.f32 %v11765, %v11881
    %v11914 = vsel %vm8679, %v11898, 0.0
    %v11915 = vsel %vm8679, %v11899, 0.0
    %v11916 = vadd.f32 %v11914, %v11915
    %v11917 = vsel %vm8679, %v11900, 0.0
    %v11918 = vadd.f32 %v11916, %v11917
    %v11919 = vsel %vm8679, %v11901, 0.0
    %v11920 = vadd.f32 %v11918, %v11919
    %v11921 = vsel %vm8679, %v11902, 0.0
    %v11922 = vadd.f32 %v11920, %v11921
    %v11923 = vsel %vm8679, %v11903, 0.0
    %v11924 = vadd.f32 %v11922, %v11923
    %v11925 = vsel %vm8679, %v11904, 0.0
    %v11926 = vadd.f32 %v11924, %v11925
    %v11927 = vsel %vm8679, %v11905, 0.0
    %v11928 = vadd.f32 %v11926, %v11927
    %v11929 = vsel %vm8679, %v11906, 0.0
    %v11930 = vadd.f32 %v11928, %v11929
    %v11931 = vsel %vm8679, %v11907, 0.0
    %v11932 = vadd.f32 %v11930, %v11931
    %v11933 = vsel %vm8679, %v11908, 0.0
    %v11934 = vadd.f32 %v11932, %v11933
    %v11935 = vsel %vm8679, %v11909, 0.0
    %v11936 = vadd.f32 %v11934, %v11935
    %v11937 = vsel %vm8679, %v11910, 0.0
    %v11938 = vadd.f32 %v11936, %v11937
    %v11939 = vsel %vm8679, %v11911, 0.0
    %v11940 = vadd.f32 %v11938, %v11939
    %v11941 = vsel %vm8679, %v11912, 0.0
    %v11942 = vadd.f32 %v11940, %v11941
    %v11943 = vsel %vm8679, %v11913, 0.0
    %v11944 = vadd.f32 %v11942, %v11943
    %v11945 = vrot.slane %v11944, 4
    %v11946 = vadd.f32 %v11944, %v11945
    %v11947 = vrot.slane %v11946, 2
    %v11948 = vadd.f32 %v11946, %v11947
    %v11949 = vrot.slane %v11948, 1
    %v11950 = vadd.f32 %v11948, %v11949
    %v11951 = vmul.f32 %v11898, %v11898
    %v11952 = vmul.f32 %v11899, %v11899
    %v11953 = vmul.f32 %v11900, %v11900
    %v11954 = vmul.f32 %v11901, %v11901
    %v11955 = vmul.f32 %v11902, %v11902
    %v11956 = vmul.f32 %v11903, %v11903
    %v11957 = vmul.f32 %v11904, %v11904
    %v11958 = vmul.f32 %v11905, %v11905
    %v11959 = vmul.f32 %v11906, %v11906
    %v11960 = vmul.f32 %v11907, %v11907
    %v11961 = vmul.f32 %v11908, %v11908
    %v11962 = vmul.f32 %v11909, %v11909
    %v11963 = vmul.f32 %v11910, %v11910
    %v11964 = vmul.f32 %v11911, %v11911
    %v11965 = vmul.f32 %v11912, %v11912
    %v11966 = vmul.f32 %v11913, %v11913
    %v11967 = vsel %vm8679, %v11951, 0.0
    %v11968 = vsel %vm8679, %v11952, 0.0
    %v11969 = vadd.f32 %v11967, %v11968
    %v11970 = vsel %vm8679, %v11953, 0.0
    %v11971 = vadd.f32 %v11969, %v11970
    %v11972 = vsel %vm8679, %v11954, 0.0
    %v11973 = vadd.f32 %v11971, %v11972
    %v11974 = vsel %vm8679, %v11955, 0.0
    %v11975 = vadd.f32 %v11973, %v11974
    %v11976 = vsel %vm8679, %v11956, 0.0
    %v11977 = vadd.f32 %v11975, %v11976
    %v11978 = vsel %vm8679, %v11957, 0.0
    %v11979 = vadd.f32 %v11977, %v11978
    %v11980 = vsel %vm8679, %v11958, 0.0
    %v11981 = vadd.f32 %v11979, %v11980
    %v11982 = vsel %vm8679, %v11959, 0.0
    %v11983 = vadd.f32 %v11981, %v11982
    %v11984 = vsel %vm8679, %v11960, 0.0
    %v11985 = vadd.f32 %v11983, %v11984
    %v11986 = vsel %vm8679, %v11961, 0.0
    %v11987 = vadd.f32 %v11985, %v11986
    %v11988 = vsel %vm8679, %v11962, 0.0
    %v11989 = vadd.f32 %v11987, %v11988
    %v11990 = vsel %vm8679, %v11963, 0.0
    %v11991 = vadd.f32 %v11989, %v11990
    %v11992 = vsel %vm8679, %v11964, 0.0
    %v11993 = vadd.f32 %v11991, %v11992
    %v11994 = vsel %vm8679, %v11965, 0.0
    %v11995 = vadd.f32 %v11993, %v11994
    %v11996 = vsel %vm8679, %v11966, 0.0
    %v11997 = vadd.f32 %v11995, %v11996
    %v11998 = vrot.slane %v11997, 4
    %v11999 = vadd.f32 %v11997, %v11998
    %v12000 = vrot.slane %v11999, 2
    %v12001 = vadd.f32 %v11999, %v12000
    %v12002 = vrot.slane %v12001, 1
    %v12003 = vadd.f32 %v12001, %v12002
    %v12004 = vrcp.pop 128.0
    %v12005 = vmul.f32 %v11950, %v12004
    %v12006 = vmul.f32 %v12003, %v12004
    %v12007 = vmul.f32 %v12005, %v12005
    %v12008 = vsub.f32 %v12006, %v12007
    %v12009 = vadd.f32 %v12008, 1e-05
    %v12010 = vrsqrt.pop %v12009
    %v12011 = vmul.f32 %v462, %v12010
    %v12012 = vmul.f32 %v12005, %v12011
    %v12013 = vsub.f32 %v463, %v12012
    %v12015 = vlaneseq
    %v12016 = vshrl.u32 %v12015, 7
    %v12017 = vsub.s32 0, %v12016
    %v12018 = vrot.slane %v12011, %v12017
    %v12020 = vmul.f32 %v11898, %v12018
    %v12021 = vmul.f32 %v11899, %v12018
    %v12022 = vmul.f32 %v11900, %v12018
    %v12023 = vmul.f32 %v11901, %v12018
    %v12024 = vmul.f32 %v11902, %v12018
    %v12025 = vmul.f32 %v11903, %v12018
    %v12026 = vmul.f32 %v11904, %v12018
    %v12027 = vmul.f32 %v11905, %v12018
    %v12028 = vmul.f32 %v11906, %v12018
    %v12029 = vmul.f32 %v11907, %v12018
    %v12030 = vmul.f32 %v11908, %v12018
    %v12031 = vmul.f32 %v11909, %v12018
    %v12032 = vmul.f32 %v11910, %v12018
    %v12033 = vmul.f32 %v11911, %v12018
    %v12034 = vmul.f32 %v11912, %v12018
    %v12035 = vmul.f32 %v11913, %v12018
    %v12037 = vlaneseq
    %v12038 = vshrl.u32 %v12037, 7
    %v12039 = vsub.s32 0, %v12038
    %v12040 = vrot.slane %v12013, %v12039
    %v12042 = vadd.f32 %v12020, %v12040
    %v12043 = vadd.f32 %v12021, %v12040
    %v12044 = vadd.f32 %v12022, %v12040
    %v12045 = vadd.f32 %v12023, %v12040
    %v12046 = vadd.f32 %v12024, %v12040
    %v12047 = vadd.f32 %v12025, %v12040
    %v12048 = vadd.f32 %v12026, %v12040
    %v12049 = vadd.f32 %v12027, %v12040
    %v12050 = vadd.f32 %v12028, %v12040
    %v12051 = vadd.f32 %v12029, %v12040
    %v12052 = vadd.f32 %v12030, %v12040
    %v12053 = vadd.f32 %v12031, %v12040
    %v12054 = vadd.f32 %v12032, %v12040
    %v12055 = vadd.f32 %v12033, %v12040
    %v12056 = vadd.f32 %v12034, %v12040
    %v12057 = vadd.f32 %v12035, %v12040
    %v12058 = vmul.f32 %v12042, 1.442695
    %v12059 = vpow.pop %v12058
    %v12060 = vmul.f32 %v12043, 1.442695
    %v12061 = vpow.pop %v12060
    %v12062 = vmul.f32 %v12044, 1.442695
    %v12063 = vpow.pop %v12062
    %v12064 = vmul.f32 %v12045, 1.442695
    %v12065 = vpow.pop %v12064
    %v12066 = vmul.f32 %v12046, 1.442695
    %v12067 = vpow.pop %v12066
    %v12068 = vmul.f32 %v12047, 1.442695
    %v12069 = vpow.pop %v12068
    %v12070 = vmul.f32 %v12048, 1.442695
    %v12071 = vpow.pop %v12070
    %v12072 = vmul.f32 %v12049, 1.442695
    %v12073 = vpow.pop %v12072
    %v12074 = vmul.f32 %v12050, 1.442695
    %v12075 = vpow.pop %v12074
    %v12076 = vmul.f32 %v12051, 1.442695
    %v12077 = vpow.pop %v12076
    %v12078 = vmul.f32 %v12052, 1.442695
    %v12079 = vpow.pop %v12078
    %v12080 = vmul.f32 %v12053, 1.442695
    %v12081 = vpow.pop %v12080
    %v12082 = vmul.f32 %v12054, 1.442695
    %v12083 = vpow.pop %v12082
    %v12084 = vmul.f32 %v12055, 1.442695
    %v12085 = vpow.pop %v12084
    %v12086 = vmul.f32 %v12056, 1.442695
    %v12087 = vpow.pop %v12086
    %v12088 = vmul.f32 %v12057, 1.442695
    %v12089 = vpow.pop %v12088
    %v12090 = vtanh.pop %v12059
    %v12091 = vtanh.pop %v12061
    %v12092 = vtanh.pop %v12063
    %v12093 = vtanh.pop %v12065
    %v12094 = vtanh.pop %v12067
    %v12095 = vtanh.pop %v12069
    %v12096 = vtanh.pop %v12071
    %v12097 = vtanh.pop %v12073
    %v12098 = vtanh.pop %v12075
    %v12099 = vtanh.pop %v12077
    %v12100 = vtanh.pop %v12079
    %v12101 = vtanh.pop %v12081
    %v12102 = vtanh.pop %v12083
    %v12103 = vtanh.pop %v12085
    %v12104 = vtanh.pop %v12087
    %v12105 = vtanh.pop %v12089
    %v12106 = vmul.f32 %v12042, %v12090
    %v12107 = vmul.f32 %v12043, %v12091
    %v12108 = vmul.f32 %v12044, %v12092
    %v12109 = vmul.f32 %v12045, %v12093
    %v12110 = vmul.f32 %v12046, %v12094
    %v12111 = vmul.f32 %v12047, %v12095
    %v12112 = vmul.f32 %v12048, %v12096
    %v12113 = vmul.f32 %v12049, %v12097
    %v12114 = vmul.f32 %v12050, %v12098
    %v12115 = vmul.f32 %v12051, %v12099
    %v12116 = vmul.f32 %v12052, %v12100
    %v12117 = vmul.f32 %v12053, %v12101
    %v12118 = vmul.f32 %v12054, %v12102
    %v12119 = vmul.f32 %v12055, %v12103
    %v12120 = vmul.f32 %v12056, %v12104
    %v12121 = vmul.f32 %v12057, %v12105
    %v12122 = vpack.c.bf16 %v12107, %v12106
    %v12123 = vpack.c.bf16 %v12109, %v12108
    %v12124 = vpack.c.bf16 %v12111, %v12110
    %v12125 = vpack.c.bf16 %v12113, %v12112
    %v12126 = vpack.c.bf16 %v12115, %v12114
    %v12127 = vpack.c.bf16 %v12117, %v12116
    %v12128 = vpack.c.bf16 %v12119, %v12118
    %v12129 = vpack.c.bf16 %v12121, %v12120
    %v12134 = vunpack.c.l.b16 %v464
    %v12135 = vunpack.c.l.b16 %v465
    %v12136 = vunpack.c.l.b16 %v466
    %v12137 = vunpack.c.l.b16 %v467
    %v12138 = vpack.c.b16 %v12135, %v12134
    %v12139 = vpack.c.b16 %v12137, %v12136
    %v12143 = vsel %vm8679, %v12122, 0
    %v12146 = vsel %vm8679, %v12123, 0
    %v12149 = vsel %vm8679, %v12124, 0
    %v12152 = vsel %vm8679, %v12125, 0
    %v12155 = vsel %vm8679, %v12126, 0
    %v12158 = vsel %vm8679, %v12127, 0
    %v12161 = vsel %vm8679, %v12128, 0
    %v12164 = vsel %vm8679, %v12129, 0
    %12166 = vmatprep.subr.bf16.mxu0 0
    %12167 = vmatpush1.bf16.msra.mxu0 %v12138
    %12168 = vmatprep.subr.bf16.mxu0 0
    %12169 = vmatpush1.bf16.msra.mxu0 %v12139
    %12170 = vmatprep.subr.bf16.mxu0 0
    %12171 = vmatpush1.bf16.msra.mxu0 0
    %12172 = vmatprep.subr.bf16.mxu0 0
    %12173 = vmatpush1.bf16.msra.mxu0 0
    %12174 = vmatprep.subr.bf16.mxu0 0
    %12175 = vmatpush1.bf16.msra.mxu0 0
    %12176 = vmatprep.subr.bf16.mxu0 0
    %12177 = vmatpush1.bf16.msra.mxu0 0
    %12178 = vmatprep.subr.bf16.mxu0 0
    %12179 = vmatpush1.bf16.msra.mxu0 0
    %12180 = vmatprep.subr.bf16.mxu0 0
    %12181 = vmatpush1.bf16.msra.mxu0 0
    %12182 = vmatprep.subr.bf16.mxu0 0
    %12183 = vmatpush1.bf16.msra.mxu0 0
    %12184 = vmatprep.subr.bf16.mxu0 0
    %12185 = vmatpush1.bf16.msra.mxu0 0
    %12186 = vmatprep.subr.bf16.mxu0 0
    %12187 = vmatpush1.bf16.msra.mxu0 0
    %12188 = vmatprep.subr.bf16.mxu0 0
    %12189 = vmatpush1.bf16.msra.mxu0 0
    %12190 = vmatprep.subr.bf16.mxu0 0
    %12191 = vmatpush1.bf16.msra.mxu0 0
    %12192 = vmatprep.subr.bf16.mxu0 0
    %12193 = vmatpush1.bf16.msra.mxu0 0
    %12194 = vmatprep.subr.bf16.mxu0 0
    %12195 = vmatpush1.bf16.msra.mxu0 0
    %12196 = vmatprep.subr.bf16.mxu0 0
    %12197 = vmatpush1.bf16.msra.mxu0 0
    %12198 = vmatprep.mubr.bf16.mxu0 0
    %12199 = vmatmul.mubr.bf16.gmra.mrb[0].mxu0 %v12143
    %v12200 = vpop.f32.mrb[0].mxu0
    %v12201 = vadd.f32 0.0, %v12200
    %v12202 = vpop.f32.mrb[0].mxu0
    %v12203 = vpop.f32.mrb[0].mxu0
    %v12204 = vadd.f32 0.0, %v12203
    %v12205 = vpop.f32.mrb[0].mxu0
    %12206 = vmatprep.mubr.bf16.mxu0 0
    %12207 = vmatmul.mubr.bf16.gmra.mrb[0].mxu0 %v12146
    %v12208 = vpop.f32.mrb[0].mxu0
    %v12209 = vadd.f32 0.0, %v12208
    %v12210 = vpop.f32.mrb[0].mxu0
    %v12211 = vpop.f32.mrb[0].mxu0
    %v12212 = vadd.f32 0.0, %v12211
    %v12213 = vpop.f32.mrb[0].mxu0
    %12214 = vmatprep.mubr.bf16.mxu0 0
    %12215 = vmatmul.mubr.bf16.gmra.mrb[0].mxu0 %v12149
    %v12216 = vpop.f32.mrb[0].mxu0
    %v12217 = vadd.f32 0.0, %v12216
    %v12218 = vpop.f32.mrb[0].mxu0
    %v12219 = vpop.f32.mrb[0].mxu0
    %v12220 = vadd.f32 0.0, %v12219
    %v12221 = vpop.f32.mrb[0].mxu0
    %12222 = vmatprep.mubr.bf16.mxu0 0
    %12223 = vmatmul.mubr.bf16.gmra.mrb[0].mxu0 %v12152
    %v12224 = vpop.f32.mrb[0].mxu0
    %v12225 = vadd.f32 0.0, %v12224
    %v12226 = vpop.f32.mrb[0].mxu0
    %v12227 = vpop.f32.mrb[0].mxu0
    %v12228 = vadd.f32 0.0, %v12227
    %v12229 = vpop.f32.mrb[0].mxu0
    %12230 = vmatprep.mubr.bf16.mxu0 0
    %12231 = vmatmul.mubr.bf16.gmra.mrb[0].mxu0 %v12155
    %v12232 = vpop.f32.mrb[0].mxu0
    %v12233 = vadd.f32 0.0, %v12232
    %v12234 = vpop.f32.mrb[0].mxu0
    %v12235 = vpop.f32.mrb[0].mxu0
    %v12236 = vadd.f32 0.0, %v12235
    %v12237 = vpop.f32.mrb[0].mxu0
    %12238 = vmatprep.mubr.bf16.mxu0 0
    %12239 = vmatmul.mubr.bf16.gmra.mrb[0].mxu0 %v12158
    %v12240 = vpop.f32.mrb[0].mxu0
    %v12241 = vadd.f32 0.0, %v12240
    %v12242 = vpop.f32.mrb[0].mxu0
    %v12243 = vpop.f32.mrb[0].mxu0
    %v12244 = vadd.f32 0.0, %v12243
    %v12245 = vpop.f32.mrb[0].mxu0
    %12246 = vmatprep.mubr.bf16.mxu0 0
    %12247 = vmatmul.mubr.bf16.gmra.mrb[0].mxu0 %v12161
    %v12248 = vpop.f32.mrb[0].mxu0
    %v12249 = vadd.f32 0.0, %v12248
    %v12250 = vpop.f32.mrb[0].mxu0
    %v12251 = vpop.f32.mrb[0].mxu0
    %v12252 = vadd.f32 0.0, %v12251
    %v12253 = vpop.f32.mrb[0].mxu0
    %12254 = vmatprep.mubr.bf16.mxu0 0
    %12255 = vmatmul.mubr.bf16.gmra.mrb[0].mxu0 %v12164
    %v12256 = vpop.f32.mrb[0].mxu0
    %v12257 = vadd.f32 0.0, %v12256
    %v12258 = vpop.f32.mrb[0].mxu0
    %v12259 = vpop.f32.mrb[0].mxu0
    %v12260 = vadd.f32 0.0, %v12259
    %v12261 = vpop.f32.mrb[0].mxu0
    %12262 = vdwg.mxu0
    %vm12263 = vcmask 130048
    %v12264 = vsel %vm12263, %v12201, 0.0
    %v12265 = vsel %vm12263, %v12204, 0.0
    %v12266 = vadd.f32 %v12264, %v12265
    %v12267 = vsel %vm12263, %v12209, 0.0
    %v12268 = vadd.f32 %v12266, %v12267
    %v12269 = vsel %vm12263, %v12212, 0.0
    %v12270 = vadd.f32 %v12268, %v12269
    %v12271 = vsel %vm12263, %v12217, 0.0
    %v12272 = vadd.f32 %v12270, %v12271
    %v12273 = vsel %vm12263, %v12220, 0.0
    %v12274 = vadd.f32 %v12272, %v12273
    %v12275 = vsel %vm12263, %v12225, 0.0
    %v12276 = vadd.f32 %v12274, %v12275
    %v12277 = vsel %vm12263, %v12228, 0.0
    %v12278 = vadd.f32 %v12276, %v12277
    %v12279 = vsel %vm12263, %v12233, 0.0
    %v12280 = vadd.f32 %v12278, %v12279
    %v12281 = vsel %vm12263, %v12236, 0.0
    %v12282 = vadd.f32 %v12280, %v12281
    %v12283 = vsel %vm12263, %v12241, 0.0
    %v12284 = vadd.f32 %v12282, %v12283
    %v12285 = vsel %vm12263, %v12244, 0.0
    %v12286 = vadd.f32 %v12284, %v12285
    %v12287 = vsel %vm12263, %v12249, 0.0
    %v12288 = vadd.f32 %v12286, %v12287
    %v12289 = vsel %vm12263, %v12252, 0.0
    %v12290 = vadd.f32 %v12288, %v12289
    %v12291 = vsel %vm12263, %v12257, 0.0
    %v12292 = vadd.f32 %v12290, %v12291
    %v12293 = vsel %vm12263, %v12260, 0.0
    %v12294 = vadd.f32 %v12292, %v12293
    %v12295 = vrot.slane %v12294, 4
    %v12296 = vadd.f32 %v12294, %v12295
    %v12297 = vrot.slane %v12296, 2
    %v12298 = vadd.f32 %v12296, %v12297
    %v12299 = vrot.slane %v12298, 1
    %v12300 = vadd.f32 %v12298, %v12299
    %v12301 = vmul.f32 %v12201, %v12201
    %v12302 = vmul.f32 %v12204, %v12204
    %v12303 = vmul.f32 %v12209, %v12209
    %v12304 = vmul.f32 %v12212, %v12212
    %v12305 = vmul.f32 %v12217, %v12217
    %v12306 = vmul.f32 %v12220, %v12220
    %v12307 = vmul.f32 %v12225, %v12225
    %v12308 = vmul.f32 %v12228, %v12228
    %v12309 = vmul.f32 %v12233, %v12233
    %v12310 = vmul.f32 %v12236, %v12236
    %v12311 = vmul.f32 %v12241, %v12241
    %v12312 = vmul.f32 %v12244, %v12244
    %v12313 = vmul.f32 %v12249, %v12249
    %v12314 = vmul.f32 %v12252, %v12252
    %v12315 = vmul.f32 %v12257, %v12257
    %v12316 = vmul.f32 %v12260, %v12260
    %v12317 = vsel %vm12263, %v12301, 0.0
    %v12318 = vsel %vm12263, %v12302, 0.0
    %v12319 = vadd.f32 %v12317, %v12318
    %v12320 = vsel %vm12263, %v12303, 0.0
    %v12321 = vadd.f32 %v12319, %v12320
    %v12322 = vsel %vm12263, %v12304, 0.0
    %v12323 = vadd.f32 %v12321, %v12322
    %v12324 = vsel %vm12263, %v12305, 0.0
    %v12325 = vadd.f32 %v12323, %v12324
    %v12326 = vsel %vm12263, %v12306, 0.0
    %v12327 = vadd.f32 %v12325, %v12326
    %v12328 = vsel %vm12263, %v12307, 0.0
    %v12329 = vadd.f32 %v12327, %v12328
    %v12330 = vsel %vm12263, %v12308, 0.0
    %v12331 = vadd.f32 %v12329, %v12330
    %v12332 = vsel %vm12263, %v12309, 0.0
    %v12333 = vadd.f32 %v12331, %v12332
    %v12334 = vsel %vm12263, %v12310, 0.0
    %v12335 = vadd.f32 %v12333, %v12334
    %v12336 = vsel %vm12263, %v12311, 0.0
    %v12337 = vadd.f32 %v12335, %v12336
    %v12338 = vsel %vm12263, %v12312, 0.0
    %v12339 = vadd.f32 %v12337, %v12338
    %v12340 = vsel %vm12263, %v12313, 0.0
    %v12341 = vadd.f32 %v12339, %v12340
    %v12342 = vsel %vm12263, %v12314, 0.0
    %v12343 = vadd.f32 %v12341, %v12342
    %v12344 = vsel %vm12263, %v12315, 0.0
    %v12345 = vadd.f32 %v12343, %v12344
    %v12346 = vsel %vm12263, %v12316, 0.0
    %v12347 = vadd.f32 %v12345, %v12346
    %v12348 = vrot.slane %v12347, 4
    %v12349 = vadd.f32 %v12347, %v12348
    %v12350 = vrot.slane %v12349, 2
    %v12351 = vadd.f32 %v12349, %v12350
    %v12352 = vrot.slane %v12351, 1
    %v12353 = vadd.f32 %v12351, %v12352
    %v12354 = vmul.f32 %v12300, %v12004
    %v12355 = vmul.f32 %v12353, %v12004
    %v12356 = vmul.f32 %v12354, %v12354
    %v12357 = vsub.f32 %v12355, %v12356
    %v12358 = vadd.f32 %v12357, 1e-05
    %v12359 = vrsqrt.pop %v12358
    %v12360 = vmul.f32 %v468, %v12359
    %v12361 = vmul.f32 %v12354, %v12360
    %v12362 = vsub.f32 %v469, %v12361
    %v12364 = vlaneseq
    %v12365 = vshrl.u32 %v12364, 7
    %v12366 = vsub.s32 0, %v12365
    %v12367 = vrot.slane %v12360, %v12366
    %v12369 = vmul.f32 %v12201, %v12367
    %v12370 = vmul.f32 %v12204, %v12367
    %v12371 = vmul.f32 %v12209, %v12367
    %v12372 = vmul.f32 %v12212, %v12367
    %v12373 = vmul.f32 %v12217, %v12367
    %v12374 = vmul.f32 %v12220, %v12367
    %v12375 = vmul.f32 %v12225, %v12367
    %v12376 = vmul.f32 %v12228, %v12367
    %v12377 = vmul.f32 %v12233, %v12367
    %v12378 = vmul.f32 %v12236, %v12367
    %v12379 = vmul.f32 %v12241, %v12367
    %v12380 = vmul.f32 %v12244, %v12367
    %v12381 = vmul.f32 %v12249, %v12367
    %v12382 = vmul.f32 %v12252, %v12367
    %v12383 = vmul.f32 %v12257, %v12367
    %v12384 = vmul.f32 %v12260, %v12367
    %v12386 = vlaneseq
    %v12387 = vshrl.u32 %v12386, 7
    %v12388 = vsub.s32 0, %v12387
    %v12389 = vrot.slane %v12362, %v12388
    %v12391 = vadd.f32 %v12369, %v12389
    %v12392 = vadd.f32 %v12370, %v12389
    %v12393 = vadd.f32 %v12371, %v12389
    %v12394 = vadd.f32 %v12372, %v12389
    %v12395 = vadd.f32 %v12373, %v12389
    %v12396 = vadd.f32 %v12374, %v12389
    %v12397 = vadd.f32 %v12375, %v12389
    %v12398 = vadd.f32 %v12376, %v12389
    %v12399 = vadd.f32 %v12377, %v12389
    %v12400 = vadd.f32 %v12378, %v12389
    %v12401 = vadd.f32 %v12379, %v12389
    %v12402 = vadd.f32 %v12380, %v12389
    %v12403 = vadd.f32 %v12381, %v12389
    %v12404 = vadd.f32 %v12382, %v12389
    %v12405 = vadd.f32 %v12383, %v12389
    %v12406 = vadd.f32 %v12384, %v12389
    %12407 = vst.msk [vmem:[#allocation2] sm:$0xff] %vm12263, %v12391
    %12408 = vst.msk [vmem:[#allocation2 + $0x8] sm:$0xff] %vm12263, %v12392
    %12409 = vst.msk [vmem:[#allocation2 + $0x10] sm:$0xff] %vm12263, %v12393
    %12410 = vst.msk [vmem:[#allocation2 + $0x18] sm:$0xff] %vm12263, %v12394
    %12411 = vst.msk [vmem:[#allocation2 + $0x20] sm:$0xff] %vm12263, %v12395
    %12412 = vst.msk [vmem:[#allocation2 + $0x28] sm:$0xff] %vm12263, %v12396
    %12413 = vst.msk [vmem:[#allocation2 + $0x30] sm:$0xff] %vm12263, %v12397
    %12414 = vst.msk [vmem:[#allocation2 + $0x38] sm:$0xff] %vm12263, %v12398
    %12415 = vst.msk [vmem:[#allocation2 + $0x40] sm:$0xff] %vm12263, %v12399
    %12416 = vst.msk [vmem:[#allocation2 + $0x48] sm:$0xff] %vm12263, %v12400
    %12417 = vst.msk [vmem:[#allocation2 + $0x50] sm:$0xff] %vm12263, %v12401
    %12418 = vst.msk [vmem:[#allocation2 + $0x58] sm:$0xff] %vm12263, %v12402
    %12419 = vst.msk [vmem:[#allocation2 + $0x60] sm:$0xff] %vm12263, %v12403
    %12420 = vst.msk [vmem:[#allocation2 + $0x68] sm:$0xff] %vm12263, %v12404
    %12421 = vst.msk [vmem:[#allocation2 + $0x70] sm:$0xff] %vm12263, %v12405
    %12422 = vst.msk [vmem:[#allocation2 + $0x78] sm:$0xff] %vm12263, %v12406
    // Predicated region
    $region82: #{uib_forward.1} parent=1 // pred_check
      _
    $region83: #{uib_forward.1} parent=1 // pred_check_branch
      %12424 = sbr.rel (0) target = $region85
    $region84: #{uib_forward.1} parent=1 // pred_region
      %s12426 = ssub.s32 2048, 2048
      %12427 = vsyncadd [#allocation3], %s12426
      %s12428 = sshll.u32 [#allocation2], 4
      %s12429 = int_to_ptr.vmem [resolvable:$true] %s12428
      %12434 = dma.vmem_to_hbm [thread:$0]  %s12429, 2048, %s20, [#allocation3], 128, 128, 8
    $region85: #{uib_forward.1} parent=1 // pred_fallthru
      _
    // Predicated region
    $region86: #{uib_forward.1} parent=1 // pred_check
      _
    $region87: #{uib_forward.1} parent=1 // pred_check_branch
      %12436 = sbr.rel (0) target = $region89
    $region88: #{uib_forward.1} parent=1 // pred_region
      %12437 = dma.done [#allocation3], 2048
    $region89: #{uib_forward.1} parent=1 // pred_fallthru
      _
    %12438 = vsyncpa [#allocation3], 1

</llo_original>
